<compile_context>
chip_gen: v5e
topology: v5e:2x2
jax: 0.10.0
libtpu: 0.0.40
codegen_flags: <defaults>
</compile_context>

<pallas_src>
import functools
import math

import jax
import jax.numpy as jnp
import numpy as np
from jax import lax
from jax.experimental import pallas as pl
from jax.experimental.pallas import tpu as pltpu


LANES = 512          # lane width of both parameter slabs (multiple of 128,
                     # >= widest packed matrix: stage-3 fused qkv = 256+128+128)


def _round_up(x, m):
    return (x + m - 1) // m * m


# ----------------------------------------------------------------------------
# Host-side parameter slab packers
# ----------------------------------------------------------------------------
class _MatPacker:
    """Packs 2-D matrices row-wise into one (rows, LANES) slab.

    Every matrix starts at lane 0 and at a 16-row (bf16 (16,128) tile) aligned
    row offset; unused lanes/rows are zero.  Returns static Python row offsets
    used for zero-cost static ref slicing inside the kernel.
    """

    def __init__(self, lanes=LANES):
        self.lanes = lanes
        self.chunks = []
        self.nrows = 0

    def add(self, mat):
        mat = np.asarray(mat, np.float32)
        r, c = mat.shape
        assert c <= self.lanes, (r, c)
        rp = _round_up(r, 16)
        buf = np.zeros((rp, self.lanes), np.float32)
        buf[:r, :c] = mat
        off = self.nrows
        self.chunks.append(buf)
        self.nrows += rp
        return off

    def finalize(self):
        return np.concatenate(self.chunks, axis=0)


class _RowPacker:
    """Packs 1-D vectors (biases / LayerNorm params) as rows of an f32 slab."""

    def __init__(self, lanes=LANES):
        self.lanes = lanes
        self.rows = []

    def add(self, vec):
        vec = np.asarray(vec, np.float32).reshape(-1)
        assert vec.size <= self.lanes
        row = np.zeros((self.lanes,), np.float32)
        row[: vec.size] = vec
        self.rows.append(row)
        return len(self.rows) - 1

    def finalize(self):
        arr = np.stack(self.rows, axis=0)
        rp = _round_up(arr.shape[0], 8)
        if rp != arr.shape[0]:
            pad = np.zeros((rp - arr.shape[0], self.lanes), np.float32)
            arr = np.concatenate([arr, pad], axis=0)
        return arr


# ----------------------------------------------------------------------------
# Model build: synthetic deterministic weights packed into the two slabs,
# plus a static "plan" (Python ints only) that the kernel closes over.
# ----------------------------------------------------------------------------
def _init_block(rng, wp, bp, F, H, FF, scale=0.02):
    """One SwinTransBlock.  q/k/v fused as [v | q(128-pad) | k(128-pad)];
    1/sqrt(H) folded into the q weight/bias columns (review item #5)."""
    pv = max(128, _round_up(F, 128))        # lane offset where the q slot starts
    wtot = pv + 256
    inv = 1.0 / math.sqrt(H)

    wq = rng.normal(size=(F, H)) * scale
    bq = rng.normal(size=(H,)) * scale
    wk = rng.normal(size=(F, H)) * scale
    bk = rng.normal(size=(H,)) * scale
    wv = rng.normal(size=(F, F)) * scale
    bv = rng.normal(size=(F,)) * scale

    wqkv = np.zeros((F, wtot), np.float32)
    wqkv[:, :F] = wv
    wqkv[:, pv:pv + H] = wq * inv
    wqkv[:, pv + 128:pv + 128 + H] = wk
    bqkv = np.zeros((wtot,), np.float32)
    bqkv[:F] = bv
    bqkv[pv:pv + H] = bq * inv
    bqkv[pv + 128:pv + 128 + H] = bk

    w1 = rng.normal(size=(F, FF)) * scale
    b1 = rng.normal(size=(FF,)) * scale
    w2 = rng.normal(size=(FF, F)) * scale
    b2 = rng.normal(size=(F,)) * scale

    return dict(
        g1=bp.add(np.ones(F)), be1=bp.add(np.zeros(F)),
        wqkv=wp.add(wqkv), bqkv=bp.add(bqkv), pv=pv, wtot=wtot,
        g2=bp.add(np.ones(F)), be2=bp.add(np.zeros(F)),
        w1=wp.add(w1), b1=bp.add(b1),
        w2=wp.add(w2), b2=bp.add(b2),
        F=F, FF=FF,
    )


def build_model(patch_size=4, cdim=32, img_size=32, inchannel=3,
                layers_num=(2, 2, 2, 2), hdim=32, ff_dim=32, seed=0):
    # NOTE: like the PyTorch reference, hdim / ff_dim keep a constant value for
    # every stage; only `features` grows.  patch_size must be 4 (the reference
    # hard-codes patch_num = img_size // 4).
    rng = np.random.default_rng(seed)
    wp, bp = _MatPacker(), _RowPacker()

    features = patch_size * patch_size * inchannel
    patch_num = img_size // 4
    tokens = (img_size // patch_size) ** 2
    stages = []
    for i in range(4):
        st = {}
        if i == 0:
            st["merge"] = None
            fin, fout = features, cdim
        else:
            # PatchMerge(P): (P*P, C) -> ((P/2)^2, 4C).  Realised in-kernel as
            # 4 row-gather matmuls with constant 0/1 matrices; the reference's
            # (c, kh, kw) feature order is folded into the stage Linear's row
            # order at build time (synthetic weights -> pure relabeling).
            P, C = patch_num, features
            patch_num //= 2
            n_in, n_out = P * P, (P // 2) ** 2
            g_offs = []
            for kh in range(2):
                for kw in range(2):
                    G = np.zeros((n_out, n_in), np.float32)
                    for ii in range(P // 2):
                        for jj in range(P // 2):
                            G[ii * (P // 2) + jj,
                              (2 * ii + kh) * P + 2 * jj + kw] = 1.0
                    g_offs.append(wp.add(G))
            st["merge"] = dict(g_offs=g_offs, n_in=n_in, n_out=n_out, C=C)
            fin, fout = features * 4, features * 2
            tokens = n_out
        st["w0"] = wp.add(rng.normal(size=(fin, fout)) * 0.02)
        st["b0"] = bp.add(rng.normal(size=(fout,)) * 0.02)
        st["fin"], st["F"], st["N"] = fin, fout, tokens
        features = fout
        # 2*(layers_num[i]-1) blocks: (block, shifted-window block) pairs,
        # exactly like the reference `for j in range(1, layers_num[i])` loop.
        st["blocks"] = [
            _init_block(rng, wp, bp, features, hdim, ff_dim)
            for _ in range(1, layers_num[i]) for _sw in range(2)
        ]
        stages.append(st)

    w_slab = jnp.asarray(wp.finalize()).astype(jnp.bfloat16)   # (~3.3 MiB)
    b_slab = jnp.asarray(bp.finalize())                        # (~0.13 MiB) f32
    plan = dict(patch_size=patch_size, stages=stages,
                out_tokens=tokens, out_features=features)
    return w_slab, b_slab, plan


# ----------------------------------------------------------------------------
# Pallas kernel: the whole forward pass for one batch element per grid step.
# ----------------------------------------------------------------------------
def _layernorm(x, g, b, eps=1e-5):
    mu = jnp.mean(x, axis=-1, keepdims=True)
    var = jnp.mean((x - mu) ** 2, axis=-1, keepdims=True)
    return (x - mu) * lax.rsqrt(var + eps) * g + b


def _swin_block(h, w_ref, b_ref, blk):
    F, FF, pv, wtot = blk["F"], blk["FF"], blk["pv"], blk["wtot"]

    g1 = b_ref[blk["g1"]:blk["g1"] + 1, 0:F]
    be1 = b_ref[blk["be1"]:blk["be1"] + 1, 0:F]
    # Reference reassigns x = lnpre1(x), so the residual uses the post-LN value.
    xn = _layernorm(h, g1, be1)                                   # (N, F) f32
    xb = xn.astype(jnp.bfloat16)

    r = blk["wqkv"]
    qkv = jnp.dot(xb, w_ref[r:r + F, 0:wtot],
                  preferred_element_type=jnp.float32) \
        + b_ref[blk["bqkv"]:blk["bqkv"] + 1, 0:wtot]              # (N, pv+256)
    v = qkv[:, 0:F]                  # starts at lane 0
    q = qkv[:, pv:pv + 128]          # 128-lane aligned; cols >= hdim are zero
    k = qkv[:, pv + 128:pv + 256]    # 128-lane aligned; cols >= hdim are zero

    # 1/sqrt(hdim) already folded into the q columns; zero-padded tail of q/k
    # contributes exactly 0 to the contraction.
    s = lax.dot_general(q.astype(jnp.bfloat16), k.astype(jnp.bfloat16),
                        (((1,), (1,)), ((), ())),
                        preferred_element_type=jnp.float32)       # (N, N)
    s = s - jnp.max(s, axis=-1, keepdims=True)
    p = jnp.exp(s)
    p = p / jnp.sum(p, axis=-1, keepdims=True)                    # exact softmax
    attn = jnp.dot(p.astype(jnp.bfloat16), v.astype(jnp.bfloat16),
                   preferred_element_type=jnp.float32)            # (N, F)
    x1 = attn + xn

    g2 = b_ref[blk["g2"]:blk["g2"] + 1, 0:F]
    be2 = b_ref[blk["be2"]:blk["be2"] + 1, 0:F]
    m = _layernorm(x1, g2, be2)
    r1 = blk["w1"]
    m = jnp.dot(m.astype(jnp.bfloat16), w_ref[r1:r1 + F, 0:FF],
                preferred_element_type=jnp.float32) \
        + b_ref[blk["b1"]:blk["b1"] + 1, 0:FF]
    m = jnp.maximum(m, 0.0)
    r2 = blk["w2"]
    m = jnp.dot(m.astype(jnp.bfloat16), w_ref[r2:r2 + FF, 0:F],
                preferred_element_type=jnp.float32) \
        + b_ref[blk["b2"]:blk["b2"] + 1, 0:F]
    return m + x1


def _swin_kernel(x_ref, w_ref, b_ref, o_ref, *, stages):
    h = x_ref[0]                                  # (L0, F0) f32, one batch item
    for st in stages:
        fin, fout = st["fin"], st["F"]
        w0, b0r = st["w0"], st["b0"]
        b0 = b_ref[b0r:b0r + 1, 0:fout]
        if st["merge"] is None:
            h = jnp.dot(h.astype(jnp.bfloat16), w_ref[w0:w0 + fin, 0:fout],
                        preferred_element_type=jnp.float32) + b0
        else:
            # PatchMerge fused into the stage Linear:
            #   merged @ W0 == sum_o (G_o @ h) @ W0[o*C:(o+1)*C, :]
            # (no in-kernel concat / transpose / reshape needed).
            mg = st["merge"]
            C, n_in, n_out = mg["C"], mg["n_in"], mg["n_out"]
            hb = h.astype(jnp.bfloat16)
            acc = None
            for o, g_off in enumerate(mg["g_offs"]):
                gathered = jnp.dot(w_ref[g_off:g_off + n_out, 0:n_in], hb,
                                   preferred_element_type=jnp.float32)
                part = jnp.dot(gathered.astype(jnp.bfloat16),
                               w_ref[w0 + o * C:w0 + (o + 1) * C, 0:fout],
                               preferred_element_type=jnp.float32)
                acc = part if acc is None else acc + part
            h = acc + b0
        for blk in st["blocks"]:
            h = _swin_block(h, w_ref, b_ref, blk)
    o_ref[0] = h


# ----------------------------------------------------------------------------
# Host wrapper
# ----------------------------------------------------------------------------
def patch_partition(x, p):
    # (B, C, H, W) -> (B, (H/p)*(W/p), C*p*p); matches UnfoldNd(k=p, s=p) +
    # transpose: row-major patch order, channel-major (c, kh, kw) features.
    B, C, H, W = x.shape
    x = x.reshape(B, C, H // p, p, W // p, p)
    x = x.transpose(0, 2, 4, 1, 3, 5)
    return x.reshape(B, (H // p) * (W // p), C * p * p)


def swin_forward(x_img, w_slab, b_slab, plan):
    xp = patch_partition(x_img, plan["patch_size"])
    B, L0, F0 = xp.shape
    nt, nf = plan["out_tokens"], plan["out_features"]
    kernel = functools.partial(_swin_kernel, stages=plan["stages"])
    return pl.pallas_call(
        kernel,
        out_shape=jax.ShapeDtypeStruct((B, nt, nf), jnp.float32),
        grid=(B,),
        in_specs=[
            pl.BlockSpec((1, L0, F0), lambda b: (b, 0, 0)),
            pl.BlockSpec(w_slab.shape, lambda b: (0, 0)),   # whole bf16 slab
            pl.BlockSpec(b_slab.shape, lambda b: (0, 0)),   # whole f32 slab
        ],
        out_specs=pl.BlockSpec((1, nt, nf), lambda b: (b, 0, 0)),
        compiler_params=pltpu.CompilerParams(
            dimension_semantics=("parallel",),        # both TCs on v7x
            vmem_limit_bytes=32 * 1024 * 1024),
    )(xp, w_slab, b_slab)


if __name__ == "__main__":
    # img_size must be divisible by 32 so the three PatchMerge stages survive:
    # tokens per stage are 64 -> 16 -> 4 -> 1.
    B, C, IMG = 2, 3, 32
    w_slab, b_slab, plan = build_model(
        patch_size=4, cdim=32, img_size=IMG, inchannel=C,
        layers_num=(2, 2, 2, 2), hdim=32, ff_dim=32, seed=0)

    x = jax.random.normal(jax.random.PRNGKey(0), (B, C, IMG, IMG), jnp.float32)

    fwd = jax.jit(lambda img, w, b: swin_forward(img, w, b, plan))
    out = fwd(x, w_slab, b_slab)
    jax.block_until_ready(out)
    assert out.shape == (B, 1, 256), out.shape
    assert bool(jnp.all(jnp.isfinite(out)))
    print("KERNEL_OK")
</pallas_src>

<mosaic_0001>
module attributes {stable_mosaic.version = 11 : i64} {
  func.func @_swin_kernel(%arg0: i32, %arg1: memref<1x64x48xf32, #tpu.memory_space<vmem>>, %arg2: memref<3312x512xbf16, #tpu.memory_space<vmem>>, %arg3: memref<64x512xf32, #tpu.memory_space<vmem>>, %arg4: memref<1x1x256xf32, #tpu.memory_space<vmem>>) attributes {dimension_semantics = [#tpu.dimension_semantics<parallel>], iteration_bounds = array<i64: 2>, scalar_prefetch = 0 : i64, scratch_operands = 0 : i64, tpu.core_type = #tpu.core_type<tc>, window_params = [{transform_indices = @transform_0, window_bounds = array<i64: 1, 64, 48>}, {pipeline_mode = #tpu.pipeline_mode<synchronous>, transform_indices = @transform_1, window_bounds = array<i64: 3312, 512>}, {pipeline_mode = #tpu.pipeline_mode<synchronous>, transform_indices = @transform_2, window_bounds = array<i64: 64, 512>}, {transform_indices = @transform_3, window_bounds = array<i64: 1, 1, 256>}]} {
    %c0 = arith.constant 0 : index
    %c0_0 = arith.constant 0 : index
    %c0_1 = arith.constant 0 : index
    %0 = vector.load %arg1[%c0, %c0_0, %c0_1] : memref<1x64x48xf32, #tpu.memory_space<vmem>>, vector<1x64x48xf32>
    %1 = vector.shape_cast %0 : vector<1x64x48xf32> to vector<64x48xf32>
    %c0_2 = arith.constant 0 : index
    %c0_3 = arith.constant 0 : index
    %2 = vector.load %arg3[%c0_2, %c0_3] : memref<64x512xf32, #tpu.memory_space<vmem>>, vector<1x32xf32>
    %3 = arith.truncf %1 : vector<64x48xf32> to vector<64x48xbf16>
    %c0_4 = arith.constant 0 : index
    %c0_5 = arith.constant 0 : index
    %4 = vector.load %arg2[%c0_4, %c0_5] : memref<3312x512xbf16, #tpu.memory_space<vmem>>, vector<48x32xbf16>
    %cst = arith.constant dense<0.000000e+00> : vector<64x32xf32>
    %5 = tpu.matmul %3, %4, %cst {dimension_numbers = #tpu.dot_dimension_numbers<[1], [0], [0], [1], [0, 0, 1, 1], [], []>} : vector<64x48xbf16>, vector<48x32xbf16>, vector<64x32xf32> -> vector<64x32xf32>
    %6 = vector.broadcast %2 : vector<1x32xf32> to vector<64x32xf32>
    %7 = arith.addf %5, %6 : vector<64x32xf32>
    %c1 = arith.constant 1 : index
    %c0_6 = arith.constant 0 : index
    %8 = vector.load %arg3[%c1, %c0_6] : memref<64x512xf32, #tpu.memory_space<vmem>>, vector<1x32xf32>
    %c2 = arith.constant 2 : index
    %c0_7 = arith.constant 0 : index
    %9 = vector.load %arg3[%c2, %c0_7] : memref<64x512xf32, #tpu.memory_space<vmem>>, vector<1x32xf32>
    %cst_8 = arith.constant dense<0.000000e+00> : vector<64xf32>
    %10 = vector.multi_reduction <add>, %7, %cst_8 [1] : vector<64x32xf32> to vector<64xf32>
    %11 = vector.shape_cast %10 : vector<64xf32> to vector<64x1xf32>
    %cst_9 = arith.constant 3.200000e+01 : f32
    %12 = vector.broadcast %cst_9 : f32 to vector<64x1xf32>
    %13 = arith.divf %11, %12 : vector<64x1xf32>
    %14 = vector.broadcast %13 : vector<64x1xf32> to vector<64x32xf32>
    %15 = arith.subf %7, %14 : vector<64x32xf32>
    %16 = arith.mulf %15, %15 : vector<64x32xf32>
    %cst_10 = arith.constant dense<0.000000e+00> : vector<64xf32>
    %17 = vector.multi_reduction <add>, %16, %cst_10 [1] : vector<64x32xf32> to vector<64xf32>
    %18 = vector.shape_cast %17 : vector<64xf32> to vector<64x1xf32>
    %cst_11 = arith.constant 3.200000e+01 : f32
    %19 = vector.broadcast %cst_11 : f32 to vector<64x1xf32>
    %20 = arith.divf %18, %19 : vector<64x1xf32>
    %21 = vector.broadcast %13 : vector<64x1xf32> to vector<64x32xf32>
    %22 = arith.subf %7, %21 : vector<64x32xf32>
    %cst_12 = arith.constant 9.99999974E-6 : f32
    %23 = vector.broadcast %cst_12 : f32 to vector<64x1xf32>
    %24 = arith.addf %20, %23 : vector<64x1xf32>
    %25 = math.rsqrt %24 : vector<64x1xf32>
    %26 = vector.broadcast %25 : vector<64x1xf32> to vector<64x32xf32>
    %27 = arith.mulf %22, %26 : vector<64x32xf32>
    %28 = vector.broadcast %8 : vector<1x32xf32> to vector<64x32xf32>
    %29 = arith.mulf %27, %28 : vector<64x32xf32>
    %30 = vector.broadcast %9 : vector<1x32xf32> to vector<64x32xf32>
    %31 = arith.addf %29, %30 : vector<64x32xf32>
    %32 = arith.truncf %31 : vector<64x32xf32> to vector<64x32xbf16>
    %c48 = arith.constant 48 : index
    %c0_13 = arith.constant 0 : index
    %33 = vector.load %arg2[%c48, %c0_13] : memref<3312x512xbf16, #tpu.memory_space<vmem>>, vector<32x384xbf16>
    %cst_14 = arith.constant dense<0.000000e+00> : vector<64x384xf32>
    %34 = tpu.matmul %32, %33, %cst_14 {dimension_numbers = #tpu.dot_dimension_numbers<[1], [0], [0], [1], [0, 0, 1, 1], [], []>} : vector<64x32xbf16>, vector<32x384xbf16>, vector<64x384xf32> -> vector<64x384xf32>
    %c3 = arith.constant 3 : index
    %c0_15 = arith.constant 0 : index
    %35 = vector.load %arg3[%c3, %c0_15] : memref<64x512xf32, #tpu.memory_space<vmem>>, vector<1x384xf32>
    %36 = vector.broadcast %35 : vector<1x384xf32> to vector<64x384xf32>
    %37 = arith.addf %34, %36 : vector<64x384xf32>
    %38 = vector.extract_strided_slice %37 {offsets = [0, 0], sizes = [64, 32], strides = [1, 1]} : vector<64x384xf32> to vector<64x32xf32>
    %39 = vector.extract_strided_slice %37 {offsets = [0, 128], sizes = [64, 128], strides = [1, 1]} : vector<64x384xf32> to vector<64x128xf32>
    %40 = vector.extract_strided_slice %37 {offsets = [0, 256], sizes = [64, 128], strides = [1, 1]} : vector<64x384xf32> to vector<64x128xf32>
    %41 = arith.truncf %39 : vector<64x128xf32> to vector<64x128xbf16>
    %42 = arith.truncf %40 : vector<64x128xf32> to vector<64x128xbf16>
    %cst_16 = arith.constant dense<0.000000e+00> : vector<64x64xf32>
    %43 = tpu.matmul %41, %42, %cst_16 {dimension_numbers = #tpu.dot_dimension_numbers<[1], [1], [0], [0], [0, 0, 1, 0], [], []>} : vector<64x128xbf16>, vector<64x128xbf16>, vector<64x64xf32> -> vector<64x64xf32>
    %cst_17 = arith.constant dense<0xFF800000> : vector<64xf32>
    %44 = vector.multi_reduction <maximumf>, %43, %cst_17 [1] : vector<64x64xf32> to vector<64xf32>
    %45 = vector.shape_cast %44 : vector<64xf32> to vector<64x1xf32>
    %46 = vector.broadcast %45 : vector<64x1xf32> to vector<64x64xf32>
    %47 = arith.subf %43, %46 : vector<64x64xf32>
    %48 = math.exp %47 : vector<64x64xf32>
    %cst_18 = arith.constant dense<0.000000e+00> : vector<64xf32>
    %49 = vector.multi_reduction <add>, %48, %cst_18 [1] : vector<64x64xf32> to vector<64xf32>
    %50 = vector.shape_cast %49 : vector<64xf32> to vector<64x1xf32>
    %51 = vector.broadcast %50 : vector<64x1xf32> to vector<64x64xf32>
    %52 = arith.divf %48, %51 : vector<64x64xf32>
    %53 = arith.truncf %52 : vector<64x64xf32> to vector<64x64xbf16>
    %54 = arith.truncf %38 : vector<64x32xf32> to vector<64x32xbf16>
    %cst_19 = arith.constant dense<0.000000e+00> : vector<64x32xf32>
    %55 = tpu.matmul %53, %54, %cst_19 {dimension_numbers = #tpu.dot_dimension_numbers<[1], [0], [0], [1], [0, 0, 1, 1], [], []>} : vector<64x64xbf16>, vector<64x32xbf16>, vector<64x32xf32> -> vector<64x32xf32>
    %56 = arith.addf %55, %31 : vector<64x32xf32>
    %c4 = arith.constant 4 : index
    %c0_20 = arith.constant 0 : index
    %57 = vector.load %arg3[%c4, %c0_20] : memref<64x512xf32, #tpu.memory_space<vmem>>, vector<1x32xf32>
    %c5 = arith.constant 5 : index
    %c0_21 = arith.constant 0 : index
    %58 = vector.load %arg3[%c5, %c0_21] : memref<64x512xf32, #tpu.memory_space<vmem>>, vector<1x32xf32>
    %cst_22 = arith.constant dense<0.000000e+00> : vector<64xf32>
    %59 = vector.multi_reduction <add>, %56, %cst_22 [1] : vector<64x32xf32> to vector<64xf32>
    %60 = vector.shape_cast %59 : vector<64xf32> to vector<64x1xf32>
    %cst_23 = arith.constant 3.200000e+01 : f32
    %61 = vector.broadcast %cst_23 : f32 to vector<64x1xf32>
    %62 = arith.divf %60, %61 : vector<64x1xf32>
    %63 = vector.broadcast %62 : vector<64x1xf32> to vector<64x32xf32>
    %64 = arith.subf %56, %63 : vector<64x32xf32>
    %65 = arith.mulf %64, %64 : vector<64x32xf32>
    %cst_24 = arith.constant dense<0.000000e+00> : vector<64xf32>
    %66 = vector.multi_reduction <add>, %65, %cst_24 [1] : vector<64x32xf32> to vector<64xf32>
    %67 = vector.shape_cast %66 : vector<64xf32> to vector<64x1xf32>
    %cst_25 = arith.constant 3.200000e+01 : f32
    %68 = vector.broadcast %cst_25 : f32 to vector<64x1xf32>
    %69 = arith.divf %67, %68 : vector<64x1xf32>
    %70 = vector.broadcast %62 : vector<64x1xf32> to vector<64x32xf32>
    %71 = arith.subf %56, %70 : vector<64x32xf32>
    %cst_26 = arith.constant 9.99999974E-6 : f32
    %72 = vector.broadcast %cst_26 : f32 to vector<64x1xf32>
    %73 = arith.addf %69, %72 : vector<64x1xf32>
    %74 = math.rsqrt %73 : vector<64x1xf32>
    %75 = vector.broadcast %74 : vector<64x1xf32> to vector<64x32xf32>
    %76 = arith.mulf %71, %75 : vector<64x32xf32>
    %77 = vector.broadcast %57 : vector<1x32xf32> to vector<64x32xf32>
    %78 = arith.mulf %76, %77 : vector<64x32xf32>
    %79 = vector.broadcast %58 : vector<1x32xf32> to vector<64x32xf32>
    %80 = arith.addf %78, %79 : vector<64x32xf32>
    %81 = arith.truncf %80 : vector<64x32xf32> to vector<64x32xbf16>
    %c80 = arith.constant 80 : index
    %c0_27 = arith.constant 0 : index
    %82 = vector.load %arg2[%c80, %c0_27] : memref<3312x512xbf16, #tpu.memory_space<vmem>>, vector<32x32xbf16>
    %cst_28 = arith.constant dense<0.000000e+00> : vector<64x32xf32>
    %83 = tpu.matmul %81, %82, %cst_28 {dimension_numbers = #tpu.dot_dimension_numbers<[1], [0], [0], [1], [0, 0, 1, 1], [], []>} : vector<64x32xbf16>, vector<32x32xbf16>, vector<64x32xf32> -> vector<64x32xf32>
    %c6 = arith.constant 6 : index
    %c0_29 = arith.constant 0 : index
    %84 = vector.load %arg3[%c6, %c0_29] : memref<64x512xf32, #tpu.memory_space<vmem>>, vector<1x32xf32>
    %85 = vector.broadcast %84 : vector<1x32xf32> to vector<64x32xf32>
    %86 = arith.addf %83, %85 : vector<64x32xf32>
    %cst_30 = arith.constant 0.000000e+00 : f32
    %87 = vector.broadcast %cst_30 : f32 to vector<64x32xf32>
    %88 = arith.maximumf %86, %87 : vector<64x32xf32>
    %89 = arith.truncf %88 : vector<64x32xf32> to vector<64x32xbf16>
    %c112 = arith.constant 112 : index
    %c0_31 = arith.constant 0 : index
    %90 = vector.load %arg2[%c112, %c0_31] : memref<3312x512xbf16, #tpu.memory_space<vmem>>, vector<32x32xbf16>
    %cst_32 = arith.constant dense<0.000000e+00> : vector<64x32xf32>
    %91 = tpu.matmul %89, %90, %cst_32 {dimension_numbers = #tpu.dot_dimension_numbers<[1], [0], [0], [1], [0, 0, 1, 1], [], []>} : vector<64x32xbf16>, vector<32x32xbf16>, vector<64x32xf32> -> vector<64x32xf32>
    %c7 = arith.constant 7 : index
    %c0_33 = arith.constant 0 : index
    %92 = vector.load %arg3[%c7, %c0_33] : memref<64x512xf32, #tpu.memory_space<vmem>>, vector<1x32xf32>
    %93 = vector.broadcast %92 : vector<1x32xf32> to vector<64x32xf32>
    %94 = arith.addf %91, %93 : vector<64x32xf32>
    %95 = arith.addf %94, %56 : vector<64x32xf32>
    %c8 = arith.constant 8 : index
    %c0_34 = arith.constant 0 : index
    %96 = vector.load %arg3[%c8, %c0_34] : memref<64x512xf32, #tpu.memory_space<vmem>>, vector<1x32xf32>
    %c9 = arith.constant 9 : index
    %c0_35 = arith.constant 0 : index
    %97 = vector.load %arg3[%c9, %c0_35] : memref<64x512xf32, #tpu.memory_space<vmem>>, vector<1x32xf32>
    %cst_36 = arith.constant dense<0.000000e+00> : vector<64xf32>
    %98 = vector.multi_reduction <add>, %95, %cst_36 [1] : vector<64x32xf32> to vector<64xf32>
    %99 = vector.shape_cast %98 : vector<64xf32> to vector<64x1xf32>
    %cst_37 = arith.constant 3.200000e+01 : f32
    %100 = vector.broadcast %cst_37 : f32 to vector<64x1xf32>
    %101 = arith.divf %99, %100 : vector<64x1xf32>
    %102 = vector.broadcast %101 : vector<64x1xf32> to vector<64x32xf32>
    %103 = arith.subf %95, %102 : vector<64x32xf32>
    %104 = arith.mulf %103, %103 : vector<64x32xf32>
    %cst_38 = arith.constant dense<0.000000e+00> : vector<64xf32>
    %105 = vector.multi_reduction <add>, %104, %cst_38 [1] : vector<64x32xf32> to vector<64xf32>
    %106 = vector.shape_cast %105 : vector<64xf32> to vector<64x1xf32>
    %cst_39 = arith.constant 3.200000e+01 : f32
    %107 = vector.broadcast %cst_39 : f32 to vector<64x1xf32>
    %108 = arith.divf %106, %107 : vector<64x1xf32>
    %109 = vector.broadcast %101 : vector<64x1xf32> to vector<64x32xf32>
    %110 = arith.subf %95, %109 : vector<64x32xf32>
    %cst_40 = arith.constant 9.99999974E-6 : f32
    %111 = vector.broadcast %cst_40 : f32 to vector<64x1xf32>
    %112 = arith.addf %108, %111 : vector<64x1xf32>
    %113 = math.rsqrt %112 : vector<64x1xf32>
    %114 = vector.broadcast %113 : vector<64x1xf32> to vector<64x32xf32>
    %115 = arith.mulf %110, %114 : vector<64x32xf32>
    %116 = vector.broadcast %96 : vector<1x32xf32> to vector<64x32xf32>
    %117 = arith.mulf %115, %116 : vector<64x32xf32>
    %118 = vector.broadcast %97 : vector<1x32xf32> to vector<64x32xf32>
    %119 = arith.addf %117, %118 : vector<64x32xf32>
    %120 = arith.truncf %119 : vector<64x32xf32> to vector<64x32xbf16>
    %c144 = arith.constant 144 : index
    %c0_41 = arith.constant 0 : index
    %121 = vector.load %arg2[%c144, %c0_41] : memref<3312x512xbf16, #tpu.memory_space<vmem>>, vector<32x384xbf16>
    %cst_42 = arith.constant dense<0.000000e+00> : vector<64x384xf32>
    %122 = tpu.matmul %120, %121, %cst_42 {dimension_numbers = #tpu.dot_dimension_numbers<[1], [0], [0], [1], [0, 0, 1, 1], [], []>} : vector<64x32xbf16>, vector<32x384xbf16>, vector<64x384xf32> -> vector<64x384xf32>
    %c10 = arith.constant 10 : index
    %c0_43 = arith.constant 0 : index
    %123 = vector.load %arg3[%c10, %c0_43] : memref<64x512xf32, #tpu.memory_space<vmem>>, vector<1x384xf32>
    %124 = vector.broadcast %123 : vector<1x384xf32> to vector<64x384xf32>
    %125 = arith.addf %122, %124 : vector<64x384xf32>
    %126 = vector.extract_strided_slice %125 {offsets = [0, 0], sizes = [64, 32], strides = [1, 1]} : vector<64x384xf32> to vector<64x32xf32>
    %127 = vector.extract_strided_slice %125 {offsets = [0, 128], sizes = [64, 128], strides = [1, 1]} : vector<64x384xf32> to vector<64x128xf32>
    %128 = vector.extract_strided_slice %125 {offsets = [0, 256], sizes = [64, 128], strides = [1, 1]} : vector<64x384xf32> to vector<64x128xf32>
    %129 = arith.truncf %127 : vector<64x128xf32> to vector<64x128xbf16>
    %130 = arith.truncf %128 : vector<64x128xf32> to vector<64x128xbf16>
    %cst_44 = arith.constant dense<0.000000e+00> : vector<64x64xf32>
    %131 = tpu.matmul %129, %130, %cst_44 {dimension_numbers = #tpu.dot_dimension_numbers<[1], [1], [0], [0], [0, 0, 1, 0], [], []>} : vector<64x128xbf16>, vector<64x128xbf16>, vector<64x64xf32> -> vector<64x64xf32>
    %cst_45 = arith.constant dense<0xFF800000> : vector<64xf32>
    %132 = vector.multi_reduction <maximumf>, %131, %cst_45 [1] : vector<64x64xf32> to vector<64xf32>
    %133 = vector.shape_cast %132 : vector<64xf32> to vector<64x1xf32>
    %134 = vector.broadcast %133 : vector<64x1xf32> to vector<64x64xf32>
    %135 = arith.subf %131, %134 : vector<64x64xf32>
    %136 = math.exp %135 : vector<64x64xf32>
    %cst_46 = arith.constant dense<0.000000e+00> : vector<64xf32>
    %137 = vector.multi_reduction <add>, %136, %cst_46 [1] : vector<64x64xf32> to vector<64xf32>
    %138 = vector.shape_cast %137 : vector<64xf32> to vector<64x1xf32>
    %139 = vector.broadcast %138 : vector<64x1xf32> to vector<64x64xf32>
    %140 = arith.divf %136, %139 : vector<64x64xf32>
    %141 = arith.truncf %140 : vector<64x64xf32> to vector<64x64xbf16>
    %142 = arith.truncf %126 : vector<64x32xf32> to vector<64x32xbf16>
    %cst_47 = arith.constant dense<0.000000e+00> : vector<64x32xf32>
    %143 = tpu.matmul %141, %142, %cst_47 {dimension_numbers = #tpu.dot_dimension_numbers<[1], [0], [0], [1], [0, 0, 1, 1], [], []>} : vector<64x64xbf16>, vector<64x32xbf16>, vector<64x32xf32> -> vector<64x32xf32>
    %144 = arith.addf %143, %119 : vector<64x32xf32>
    %c11 = arith.constant 11 : index
    %c0_48 = arith.constant 0 : index
    %145 = vector.load %arg3[%c11, %c0_48] : memref<64x512xf32, #tpu.memory_space<vmem>>, vector<1x32xf32>
    %c12 = arith.constant 12 : index
    %c0_49 = arith.constant 0 : index
    %146 = vector.load %arg3[%c12, %c0_49] : memref<64x512xf32, #tpu.memory_space<vmem>>, vector<1x32xf32>
    %cst_50 = arith.constant dense<0.000000e+00> : vector<64xf32>
    %147 = vector.multi_reduction <add>, %144, %cst_50 [1] : vector<64x32xf32> to vector<64xf32>
    %148 = vector.shape_cast %147 : vector<64xf32> to vector<64x1xf32>
    %cst_51 = arith.constant 3.200000e+01 : f32
    %149 = vector.broadcast %cst_51 : f32 to vector<64x1xf32>
    %150 = arith.divf %148, %149 : vector<64x1xf32>
    %151 = vector.broadcast %150 : vector<64x1xf32> to vector<64x32xf32>
    %152 = arith.subf %144, %151 : vector<64x32xf32>
    %153 = arith.mulf %152, %152 : vector<64x32xf32>
    %cst_52 = arith.constant dense<0.000000e+00> : vector<64xf32>
    %154 = vector.multi_reduction <add>, %153, %cst_52 [1] : vector<64x32xf32> to vector<64xf32>
    %155 = vector.shape_cast %154 : vector<64xf32> to vector<64x1xf32>
    %cst_53 = arith.constant 3.200000e+01 : f32
    %156 = vector.broadcast %cst_53 : f32 to vector<64x1xf32>
    %157 = arith.divf %155, %156 : vector<64x1xf32>
    %158 = vector.broadcast %150 : vector<64x1xf32> to vector<64x32xf32>
    %159 = arith.subf %144, %158 : vector<64x32xf32>
    %cst_54 = arith.constant 9.99999974E-6 : f32
    %160 = vector.broadcast %cst_54 : f32 to vector<64x1xf32>
    %161 = arith.addf %157, %160 : vector<64x1xf32>
    %162 = math.rsqrt %161 : vector<64x1xf32>
    %163 = vector.broadcast %162 : vector<64x1xf32> to vector<64x32xf32>
    %164 = arith.mulf %159, %163 : vector<64x32xf32>
    %165 = vector.broadcast %145 : vector<1x32xf32> to vector<64x32xf32>
    %166 = arith.mulf %164, %165 : vector<64x32xf32>
    %167 = vector.broadcast %146 : vector<1x32xf32> to vector<64x32xf32>
    %168 = arith.addf %166, %167 : vector<64x32xf32>
    %169 = arith.truncf %168 : vector<64x32xf32> to vector<64x32xbf16>
    %c176 = arith.constant 176 : index
    %c0_55 = arith.constant 0 : index
    %170 = vector.load %arg2[%c176, %c0_55] : memref<3312x512xbf16, #tpu.memory_space<vmem>>, vector<32x32xbf16>
    %cst_56 = arith.constant dense<0.000000e+00> : vector<64x32xf32>
    %171 = tpu.matmul %169, %170, %cst_56 {dimension_numbers = #tpu.dot_dimension_numbers<[1], [0], [0], [1], [0, 0, 1, 1], [], []>} : vector<64x32xbf16>, vector<32x32xbf16>, vector<64x32xf32> -> vector<64x32xf32>
    %c13 = arith.constant 13 : index
    %c0_57 = arith.constant 0 : index
    %172 = vector.load %arg3[%c13, %c0_57] : memref<64x512xf32, #tpu.memory_space<vmem>>, vector<1x32xf32>
    %173 = vector.broadcast %172 : vector<1x32xf32> to vector<64x32xf32>
    %174 = arith.addf %171, %173 : vector<64x32xf32>
    %cst_58 = arith.constant 0.000000e+00 : f32
    %175 = vector.broadcast %cst_58 : f32 to vector<64x32xf32>
    %176 = arith.maximumf %174, %175 : vector<64x32xf32>
    %177 = arith.truncf %176 : vector<64x32xf32> to vector<64x32xbf16>
    %c208 = arith.constant 208 : index
    %c0_59 = arith.constant 0 : index
    %178 = vector.load %arg2[%c208, %c0_59] : memref<3312x512xbf16, #tpu.memory_space<vmem>>, vector<32x32xbf16>
    %cst_60 = arith.constant dense<0.000000e+00> : vector<64x32xf32>
    %179 = tpu.matmul %177, %178, %cst_60 {dimension_numbers = #tpu.dot_dimension_numbers<[1], [0], [0], [1], [0, 0, 1, 1], [], []>} : vector<64x32xbf16>, vector<32x32xbf16>, vector<64x32xf32> -> vector<64x32xf32>
    %c14 = arith.constant 14 : index
    %c0_61 = arith.constant 0 : index
    %180 = vector.load %arg3[%c14, %c0_61] : memref<64x512xf32, #tpu.memory_space<vmem>>, vector<1x32xf32>
    %181 = vector.broadcast %180 : vector<1x32xf32> to vector<64x32xf32>
    %182 = arith.addf %179, %181 : vector<64x32xf32>
    %183 = arith.addf %182, %144 : vector<64x32xf32>
    %c15 = arith.constant 15 : index
    %c0_62 = arith.constant 0 : index
    %184 = vector.load %arg3[%c15, %c0_62] : memref<64x512xf32, #tpu.memory_space<vmem>>, vector<1x64xf32>
    %185 = arith.truncf %183 : vector<64x32xf32> to vector<64x32xbf16>
    %c240 = arith.constant 240 : index
    %c0_63 = arith.constant 0 : index
    %186 = vector.load %arg2[%c240, %c0_63] : memref<3312x512xbf16, #tpu.memory_space<vmem>>, vector<16x64xbf16>
    %cst_64 = arith.constant dense<0.000000e+00> : vector<16x32xf32>
    %187 = tpu.matmul %186, %185, %cst_64 {dimension_numbers = #tpu.dot_dimension_numbers<[1], [0], [0], [1], [0, 0, 1, 1], [], []>} : vector<16x64xbf16>, vector<64x32xbf16>, vector<16x32xf32> -> vector<16x32xf32>
    %188 = arith.truncf %187 : vector<16x32xf32> to vector<16x32xbf16>
    %c304 = arith.constant 304 : index
    %c0_65 = arith.constant 0 : index
    %189 = vector.load %arg2[%c304, %c0_65] : memref<3312x512xbf16, #tpu.memory_space<vmem>>, vector<32x64xbf16>
    %cst_66 = arith.constant dense<0.000000e+00> : vector<16x64xf32>
    %190 = tpu.matmul %188, %189, %cst_66 {dimension_numbers = #tpu.dot_dimension_numbers<[1], [0], [0], [1], [0, 0, 1, 1], [], []>} : vector<16x32xbf16>, vector<32x64xbf16>, vector<16x64xf32> -> vector<16x64xf32>
    %c256 = arith.constant 256 : index
    %c0_67 = arith.constant 0 : index
    %191 = vector.load %arg2[%c256, %c0_67] : memref<3312x512xbf16, #tpu.memory_space<vmem>>, vector<16x64xbf16>
    %cst_68 = arith.constant dense<0.000000e+00> : vector<16x32xf32>
    %192 = tpu.matmul %191, %185, %cst_68 {dimension_numbers = #tpu.dot_dimension_numbers<[1], [0], [0], [1], [0, 0, 1, 1], [], []>} : vector<16x64xbf16>, vector<64x32xbf16>, vector<16x32xf32> -> vector<16x32xf32>
    %193 = arith.truncf %192 : vector<16x32xf32> to vector<16x32xbf16>
    %c336 = arith.constant 336 : index
    %c0_69 = arith.constant 0 : index
    %194 = vector.load %arg2[%c336, %c0_69] : memref<3312x512xbf16, #tpu.memory_space<vmem>>, vector<32x64xbf16>
    %cst_70 = arith.constant dense<0.000000e+00> : vector<16x64xf32>
    %195 = tpu.matmul %193, %194, %cst_70 {dimension_numbers = #tpu.dot_dimension_numbers<[1], [0], [0], [1], [0, 0, 1, 1], [], []>} : vector<16x32xbf16>, vector<32x64xbf16>, vector<16x64xf32> -> vector<16x64xf32>
    %196 = arith.addf %190, %195 : vector<16x64xf32>
    %c272 = arith.constant 272 : index
    %c0_71 = arith.constant 0 : index
    %197 = vector.load %arg2[%c272, %c0_71] : memref<3312x512xbf16, #tpu.memory_space<vmem>>, vector<16x64xbf16>
    %cst_72 = arith.constant dense<0.000000e+00> : vector<16x32xf32>
    %198 = tpu.matmul %197, %185, %cst_72 {dimension_numbers = #tpu.dot_dimension_numbers<[1], [0], [0], [1], [0, 0, 1, 1], [], []>} : vector<16x64xbf16>, vector<64x32xbf16>, vector<16x32xf32> -> vector<16x32xf32>
    %199 = arith.truncf %198 : vector<16x32xf32> to vector<16x32xbf16>
    %c368 = arith.constant 368 : index
    %c0_73 = arith.constant 0 : index
    %200 = vector.load %arg2[%c368, %c0_73] : memref<3312x512xbf16, #tpu.memory_space<vmem>>, vector<32x64xbf16>
    %cst_74 = arith.constant dense<0.000000e+00> : vector<16x64xf32>
    %201 = tpu.matmul %199, %200, %cst_74 {dimension_numbers = #tpu.dot_dimension_numbers<[1], [0], [0], [1], [0, 0, 1, 1], [], []>} : vector<16x32xbf16>, vector<32x64xbf16>, vector<16x64xf32> -> vector<16x64xf32>
    %202 = arith.addf %196, %201 : vector<16x64xf32>
    %c288 = arith.constant 288 : index
    %c0_75 = arith.constant 0 : index
    %203 = vector.load %arg2[%c288, %c0_75] : memref<3312x512xbf16, #tpu.memory_space<vmem>>, vector<16x64xbf16>
    %cst_76 = arith.constant dense<0.000000e+00> : vector<16x32xf32>
    %204 = tpu.matmul %203, %185, %cst_76 {dimension_numbers = #tpu.dot_dimension_numbers<[1], [0], [0], [1], [0, 0, 1, 1], [], []>} : vector<16x64xbf16>, vector<64x32xbf16>, vector<16x32xf32> -> vector<16x32xf32>
    %205 = arith.truncf %204 : vector<16x32xf32> to vector<16x32xbf16>
    %c400 = arith.constant 400 : index
    %c0_77 = arith.constant 0 : index
    %206 = vector.load %arg2[%c400, %c0_77] : memref<3312x512xbf16, #tpu.memory_space<vmem>>, vector<32x64xbf16>
    %cst_78 = arith.constant dense<0.000000e+00> : vector<16x64xf32>
    %207 = tpu.matmul %205, %206, %cst_78 {dimension_numbers = #tpu.dot_dimension_numbers<[1], [0], [0], [1], [0, 0, 1, 1], [], []>} : vector<16x32xbf16>, vector<32x64xbf16>, vector<16x64xf32> -> vector<16x64xf32>
    %208 = arith.addf %202, %207 : vector<16x64xf32>
    %209 = vector.broadcast %184 : vector<1x64xf32> to vector<16x64xf32>
    %210 = arith.addf %208, %209 : vector<16x64xf32>
    %c16 = arith.constant 16 : index
    %c0_79 = arith.constant 0 : index
    %211 = vector.load %arg3[%c16, %c0_79] : memref<64x512xf32, #tpu.memory_space<vmem>>, vector<1x64xf32>
    %c17 = arith.constant 17 : index
    %c0_80 = arith.constant 0 : index
    %212 = vector.load %arg3[%c17, %c0_80] : memref<64x512xf32, #tpu.memory_space<vmem>>, vector<1x64xf32>
    %cst_81 = arith.constant dense<0.000000e+00> : vector<16xf32>
    %213 = vector.multi_reduction <add>, %210, %cst_81 [1] : vector<16x64xf32> to vector<16xf32>
    %214 = vector.shape_cast %213 : vector<16xf32> to vector<16x1xf32>
    %cst_82 = arith.constant 6.400000e+01 : f32
    %215 = vector.broadcast %cst_82 : f32 to vector<16x1xf32>
    %216 = arith.divf %214, %215 : vector<16x1xf32>
    %217 = vector.broadcast %216 : vector<16x1xf32> to vector<16x64xf32>
    %218 = arith.subf %210, %217 : vector<16x64xf32>
    %219 = arith.mulf %218, %218 : vector<16x64xf32>
    %cst_83 = arith.constant dense<0.000000e+00> : vector<16xf32>
    %220 = vector.multi_reduction <add>, %219, %cst_83 [1] : vector<16x64xf32> to vector<16xf32>
    %221 = vector.shape_cast %220 : vector<16xf32> to vector<16x1xf32>
    %cst_84 = arith.constant 6.400000e+01 : f32
    %222 = vector.broadcast %cst_84 : f32 to vector<16x1xf32>
    %223 = arith.divf %221, %222 : vector<16x1xf32>
    %224 = vector.broadcast %216 : vector<16x1xf32> to vector<16x64xf32>
    %225 = arith.subf %210, %224 : vector<16x64xf32>
    %cst_85 = arith.constant 9.99999974E-6 : f32
    %226 = vector.broadcast %cst_85 : f32 to vector<16x1xf32>
    %227 = arith.addf %223, %226 : vector<16x1xf32>
    %228 = math.rsqrt %227 : vector<16x1xf32>
    %229 = vector.broadcast %228 : vector<16x1xf32> to vector<16x64xf32>
    %230 = arith.mulf %225, %229 : vector<16x64xf32>
    %231 = vector.broadcast %211 : vector<1x64xf32> to vector<16x64xf32>
    %232 = arith.mulf %230, %231 : vector<16x64xf32>
    %233 = vector.broadcast %212 : vector<1x64xf32> to vector<16x64xf32>
    %234 = arith.addf %232, %233 : vector<16x64xf32>
    %235 = arith.truncf %234 : vector<16x64xf32> to vector<16x64xbf16>
    %c432 = arith.constant 432 : index
    %c0_86 = arith.constant 0 : index
    %236 = vector.load %arg2[%c432, %c0_86] : memref<3312x512xbf16, #tpu.memory_space<vmem>>, vector<64x384xbf16>
    %cst_87 = arith.constant dense<0.000000e+00> : vector<16x384xf32>
    %237 = tpu.matmul %235, %236, %cst_87 {dimension_numbers = #tpu.dot_dimension_numbers<[1], [0], [0], [1], [0, 0, 1, 1], [], []>} : vector<16x64xbf16>, vector<64x384xbf16>, vector<16x384xf32> -> vector<16x384xf32>
    %c18 = arith.constant 18 : index
    %c0_88 = arith.constant 0 : index
    %238 = vector.load %arg3[%c18, %c0_88] : memref<64x512xf32, #tpu.memory_space<vmem>>, vector<1x384xf32>
    %239 = vector.broadcast %238 : vector<1x384xf32> to vector<16x384xf32>
    %240 = arith.addf %237, %239 : vector<16x384xf32>
    %241 = vector.extract_strided_slice %240 {offsets = [0, 0], sizes = [16, 64], strides = [1, 1]} : vector<16x384xf32> to vector<16x64xf32>
    %242 = vector.extract_strided_slice %240 {offsets = [0, 128], sizes = [16, 128], strides = [1, 1]} : vector<16x384xf32> to vector<16x128xf32>
    %243 = vector.extract_strided_slice %240 {offsets = [0, 256], sizes = [16, 128], strides = [1, 1]} : vector<16x384xf32> to vector<16x128xf32>
    %244 = arith.truncf %242 : vector<16x128xf32> to vector<16x128xbf16>
    %245 = arith.truncf %243 : vector<16x128xf32> to vector<16x128xbf16>
    %cst_89 = arith.constant dense<0.000000e+00> : vector<16x16xf32>
    %246 = tpu.matmul %244, %245, %cst_89 {dimension_numbers = #tpu.dot_dimension_numbers<[1], [1], [0], [0], [0, 0, 1, 0], [], []>} : vector<16x128xbf16>, vector<16x128xbf16>, vector<16x16xf32> -> vector<16x16xf32>
    %cst_90 = arith.constant dense<0xFF800000> : vector<16xf32>
    %247 = vector.multi_reduction <maximumf>, %246, %cst_90 [1] : vector<16x16xf32> to vector<16xf32>
    %248 = vector.shape_cast %247 : vector<16xf32> to vector<16x1xf32>
    %249 = vector.broadcast %248 : vector<16x1xf32> to vector<16x16xf32>
    %250 = arith.subf %246, %249 : vector<16x16xf32>
    %251 = math.exp %250 : vector<16x16xf32>
    %cst_91 = arith.constant dense<0.000000e+00> : vector<16xf32>
    %252 = vector.multi_reduction <add>, %251, %cst_91 [1] : vector<16x16xf32> to vector<16xf32>
    %253 = vector.shape_cast %252 : vector<16xf32> to vector<16x1xf32>
    %254 = vector.broadcast %253 : vector<16x1xf32> to vector<16x16xf32>
    %255 = arith.divf %251, %254 : vector<16x16xf32>
    %256 = arith.truncf %255 : vector<16x16xf32> to vector<16x16xbf16>
    %257 = arith.truncf %241 : vector<16x64xf32> to vector<16x64xbf16>
    %cst_92 = arith.constant dense<0.000000e+00> : vector<16x64xf32>
    %258 = tpu.matmul %256, %257, %cst_92 {dimension_numbers = #tpu.dot_dimension_numbers<[1], [0], [0], [1], [0, 0, 1, 1], [], []>} : vector<16x16xbf16>, vector<16x64xbf16>, vector<16x64xf32> -> vector<16x64xf32>
    %259 = arith.addf %258, %234 : vector<16x64xf32>
    %c19 = arith.constant 19 : index
    %c0_93 = arith.constant 0 : index
    %260 = vector.load %arg3[%c19, %c0_93] : memref<64x512xf32, #tpu.memory_space<vmem>>, vector<1x64xf32>
    %c20 = arith.constant 20 : index
    %c0_94 = arith.constant 0 : index
    %261 = vector.load %arg3[%c20, %c0_94] : memref<64x512xf32, #tpu.memory_space<vmem>>, vector<1x64xf32>
    %cst_95 = arith.constant dense<0.000000e+00> : vector<16xf32>
    %262 = vector.multi_reduction <add>, %259, %cst_95 [1] : vector<16x64xf32> to vector<16xf32>
    %263 = vector.shape_cast %262 : vector<16xf32> to vector<16x1xf32>
    %cst_96 = arith.constant 6.400000e+01 : f32
    %264 = vector.broadcast %cst_96 : f32 to vector<16x1xf32>
    %265 = arith.divf %263, %264 : vector<16x1xf32>
    %266 = vector.broadcast %265 : vector<16x1xf32> to vector<16x64xf32>
    %267 = arith.subf %259, %266 : vector<16x64xf32>
    %268 = arith.mulf %267, %267 : vector<16x64xf32>
    %cst_97 = arith.constant dense<0.000000e+00> : vector<16xf32>
    %269 = vector.multi_reduction <add>, %268, %cst_97 [1] : vector<16x64xf32> to vector<16xf32>
    %270 = vector.shape_cast %269 : vector<16xf32> to vector<16x1xf32>
    %cst_98 = arith.constant 6.400000e+01 : f32
    %271 = vector.broadcast %cst_98 : f32 to vector<16x1xf32>
    %272 = arith.divf %270, %271 : vector<16x1xf32>
    %273 = vector.broadcast %265 : vector<16x1xf32> to vector<16x64xf32>
    %274 = arith.subf %259, %273 : vector<16x64xf32>
    %cst_99 = arith.constant 9.99999974E-6 : f32
    %275 = vector.broadcast %cst_99 : f32 to vector<16x1xf32>
    %276 = arith.addf %272, %275 : vector<16x1xf32>
    %277 = math.rsqrt %276 : vector<16x1xf32>
    %278 = vector.broadcast %277 : vector<16x1xf32> to vector<16x64xf32>
    %279 = arith.mulf %274, %278 : vector<16x64xf32>
    %280 = vector.broadcast %260 : vector<1x64xf32> to vector<16x64xf32>
    %281 = arith.mulf %279, %280 : vector<16x64xf32>
    %282 = vector.broadcast %261 : vector<1x64xf32> to vector<16x64xf32>
    %283 = arith.addf %281, %282 : vector<16x64xf32>
    %284 = arith.truncf %283 : vector<16x64xf32> to vector<16x64xbf16>
    %c496 = arith.constant 496 : index
    %c0_100 = arith.constant 0 : index
    %285 = vector.load %arg2[%c496, %c0_100] : memref<3312x512xbf16, #tpu.memory_space<vmem>>, vector<64x32xbf16>
    %cst_101 = arith.constant dense<0.000000e+00> : vector<16x32xf32>
    %286 = tpu.matmul %284, %285, %cst_101 {dimension_numbers = #tpu.dot_dimension_numbers<[1], [0], [0], [1], [0, 0, 1, 1], [], []>} : vector<16x64xbf16>, vector<64x32xbf16>, vector<16x32xf32> -> vector<16x32xf32>
    %c21 = arith.constant 21 : index
    %c0_102 = arith.constant 0 : index
    %287 = vector.load %arg3[%c21, %c0_102] : memref<64x512xf32, #tpu.memory_space<vmem>>, vector<1x32xf32>
    %288 = vector.broadcast %287 : vector<1x32xf32> to vector<16x32xf32>
    %289 = arith.addf %286, %288 : vector<16x32xf32>
    %cst_103 = arith.constant 0.000000e+00 : f32
    %290 = vector.broadcast %cst_103 : f32 to vector<16x32xf32>
    %291 = arith.maximumf %289, %290 : vector<16x32xf32>
    %292 = arith.truncf %291 : vector<16x32xf32> to vector<16x32xbf16>
    %c560 = arith.constant 560 : index
    %c0_104 = arith.constant 0 : index
    %293 = vector.load %arg2[%c560, %c0_104] : memref<3312x512xbf16, #tpu.memory_space<vmem>>, vector<32x64xbf16>
    %cst_105 = arith.constant dense<0.000000e+00> : vector<16x64xf32>
    %294 = tpu.matmul %292, %293, %cst_105 {dimension_numbers = #tpu.dot_dimension_numbers<[1], [0], [0], [1], [0, 0, 1, 1], [], []>} : vector<16x32xbf16>, vector<32x64xbf16>, vector<16x64xf32> -> vector<16x64xf32>
    %c22 = arith.constant 22 : index
    %c0_106 = arith.constant 0 : index
    %295 = vector.load %arg3[%c22, %c0_106] : memref<64x512xf32, #tpu.memory_space<vmem>>, vector<1x64xf32>
    %296 = vector.broadcast %295 : vector<1x64xf32> to vector<16x64xf32>
    %297 = arith.addf %294, %296 : vector<16x64xf32>
    %298 = arith.addf %297, %259 : vector<16x64xf32>
    %c23 = arith.constant 23 : index
    %c0_107 = arith.constant 0 : index
    %299 = vector.load %arg3[%c23, %c0_107] : memref<64x512xf32, #tpu.memory_space<vmem>>, vector<1x64xf32>
    %c24 = arith.constant 24 : index
    %c0_108 = arith.constant 0 : index
    %300 = vector.load %arg3[%c24, %c0_108] : memref<64x512xf32, #tpu.memory_space<vmem>>, vector<1x64xf32>
    %cst_109 = arith.constant dense<0.000000e+00> : vector<16xf32>
    %301 = vector.multi_reduction <add>, %298, %cst_109 [1] : vector<16x64xf32> to vector<16xf32>
    %302 = vector.shape_cast %301 : vector<16xf32> to vector<16x1xf32>
    %cst_110 = arith.constant 6.400000e+01 : f32
    %303 = vector.broadcast %cst_110 : f32 to vector<16x1xf32>
    %304 = arith.divf %302, %303 : vector<16x1xf32>
    %305 = vector.broadcast %304 : vector<16x1xf32> to vector<16x64xf32>
    %306 = arith.subf %298, %305 : vector<16x64xf32>
    %307 = arith.mulf %306, %306 : vector<16x64xf32>
    %cst_111 = arith.constant dense<0.000000e+00> : vector<16xf32>
    %308 = vector.multi_reduction <add>, %307, %cst_111 [1] : vector<16x64xf32> to vector<16xf32>
    %309 = vector.shape_cast %308 : vector<16xf32> to vector<16x1xf32>
    %cst_112 = arith.constant 6.400000e+01 : f32
    %310 = vector.broadcast %cst_112 : f32 to vector<16x1xf32>
    %311 = arith.divf %309, %310 : vector<16x1xf32>
    %312 = vector.broadcast %304 : vector<16x1xf32> to vector<16x64xf32>
    %313 = arith.subf %298, %312 : vector<16x64xf32>
    %cst_113 = arith.constant 9.99999974E-6 : f32
    %314 = vector.broadcast %cst_113 : f32 to vector<16x1xf32>
    %315 = arith.addf %311, %314 : vector<16x1xf32>
    %316 = math.rsqrt %315 : vector<16x1xf32>
    %317 = vector.broadcast %316 : vector<16x1xf32> to vector<16x64xf32>
    %318 = arith.mulf %313, %317 : vector<16x64xf32>
    %319 = vector.broadcast %299 : vector<1x64xf32> to vector<16x64xf32>
    %320 = arith.mulf %318, %319 : vector<16x64xf32>
    %321 = vector.broadcast %300 : vector<1x64xf32> to vector<16x64xf32>
    %322 = arith.addf %320, %321 : vector<16x64xf32>
    %323 = arith.truncf %322 : vector<16x64xf32> to vector<16x64xbf16>
    %c592 = arith.constant 592 : index
    %c0_114 = arith.constant 0 : index
    %324 = vector.load %arg2[%c592, %c0_114] : memref<3312x512xbf16, #tpu.memory_space<vmem>>, vector<64x384xbf16>
    %cst_115 = arith.constant dense<0.000000e+00> : vector<16x384xf32>
    %325 = tpu.matmul %323, %324, %cst_115 {dimension_numbers = #tpu.dot_dimension_numbers<[1], [0], [0], [1], [0, 0, 1, 1], [], []>} : vector<16x64xbf16>, vector<64x384xbf16>, vector<16x384xf32> -> vector<16x384xf32>
    %c25 = arith.constant 25 : index
    %c0_116 = arith.constant 0 : index
    %326 = vector.load %arg3[%c25, %c0_116] : memref<64x512xf32, #tpu.memory_space<vmem>>, vector<1x384xf32>
    %327 = vector.broadcast %326 : vector<1x384xf32> to vector<16x384xf32>
    %328 = arith.addf %325, %327 : vector<16x384xf32>
    %329 = vector.extract_strided_slice %328 {offsets = [0, 0], sizes = [16, 64], strides = [1, 1]} : vector<16x384xf32> to vector<16x64xf32>
    %330 = vector.extract_strided_slice %328 {offsets = [0, 128], sizes = [16, 128], strides = [1, 1]} : vector<16x384xf32> to vector<16x128xf32>
    %331 = vector.extract_strided_slice %328 {offsets = [0, 256], sizes = [16, 128], strides = [1, 1]} : vector<16x384xf32> to vector<16x128xf32>
    %332 = arith.truncf %330 : vector<16x128xf32> to vector<16x128xbf16>
    %333 = arith.truncf %331 : vector<16x128xf32> to vector<16x128xbf16>
    %cst_117 = arith.constant dense<0.000000e+00> : vector<16x16xf32>
    %334 = tpu.matmul %332, %333, %cst_117 {dimension_numbers = #tpu.dot_dimension_numbers<[1], [1], [0], [0], [0, 0, 1, 0], [], []>} : vector<16x128xbf16>, vector<16x128xbf16>, vector<16x16xf32> -> vector<16x16xf32>
    %cst_118 = arith.constant dense<0xFF800000> : vector<16xf32>
    %335 = vector.multi_reduction <maximumf>, %334, %cst_118 [1] : vector<16x16xf32> to vector<16xf32>
    %336 = vector.shape_cast %335 : vector<16xf32> to vector<16x1xf32>
    %337 = vector.broadcast %336 : vector<16x1xf32> to vector<16x16xf32>
    %338 = arith.subf %334, %337 : vector<16x16xf32>
    %339 = math.exp %338 : vector<16x16xf32>
    %cst_119 = arith.constant dense<0.000000e+00> : vector<16xf32>
    %340 = vector.multi_reduction <add>, %339, %cst_119 [1] : vector<16x16xf32> to vector<16xf32>
    %341 = vector.shape_cast %340 : vector<16xf32> to vector<16x1xf32>
    %342 = vector.broadcast %341 : vector<16x1xf32> to vector<16x16xf32>
    %343 = arith.divf %339, %342 : vector<16x16xf32>
    %344 = arith.truncf %343 : vector<16x16xf32> to vector<16x16xbf16>
    %345 = arith.truncf %329 : vector<16x64xf32> to vector<16x64xbf16>
    %cst_120 = arith.constant dense<0.000000e+00> : vector<16x64xf32>
    %346 = tpu.matmul %344, %345, %cst_120 {dimension_numbers = #tpu.dot_dimension_numbers<[1], [0], [0], [1], [0, 0, 1, 1], [], []>} : vector<16x16xbf16>, vector<16x64xbf16>, vector<16x64xf32> -> vector<16x64xf32>
    %347 = arith.addf %346, %322 : vector<16x64xf32>
    %c26 = arith.constant 26 : index
    %c0_121 = arith.constant 0 : index
    %348 = vector.load %arg3[%c26, %c0_121] : memref<64x512xf32, #tpu.memory_space<vmem>>, vector<1x64xf32>
    %c27 = arith.constant 27 : index
    %c0_122 = arith.constant 0 : index
    %349 = vector.load %arg3[%c27, %c0_122] : memref<64x512xf32, #tpu.memory_space<vmem>>, vector<1x64xf32>
    %cst_123 = arith.constant dense<0.000000e+00> : vector<16xf32>
    %350 = vector.multi_reduction <add>, %347, %cst_123 [1] : vector<16x64xf32> to vector<16xf32>
    %351 = vector.shape_cast %350 : vector<16xf32> to vector<16x1xf32>
    %cst_124 = arith.constant 6.400000e+01 : f32
    %352 = vector.broadcast %cst_124 : f32 to vector<16x1xf32>
    %353 = arith.divf %351, %352 : vector<16x1xf32>
    %354 = vector.broadcast %353 : vector<16x1xf32> to vector<16x64xf32>
    %355 = arith.subf %347, %354 : vector<16x64xf32>
    %356 = arith.mulf %355, %355 : vector<16x64xf32>
    %cst_125 = arith.constant dense<0.000000e+00> : vector<16xf32>
    %357 = vector.multi_reduction <add>, %356, %cst_125 [1] : vector<16x64xf32> to vector<16xf32>
    %358 = vector.shape_cast %357 : vector<16xf32> to vector<16x1xf32>
    %cst_126 = arith.constant 6.400000e+01 : f32
    %359 = vector.broadcast %cst_126 : f32 to vector<16x1xf32>
    %360 = arith.divf %358, %359 : vector<16x1xf32>
    %361 = vector.broadcast %353 : vector<16x1xf32> to vector<16x64xf32>
    %362 = arith.subf %347, %361 : vector<16x64xf32>
    %cst_127 = arith.constant 9.99999974E-6 : f32
    %363 = vector.broadcast %cst_127 : f32 to vector<16x1xf32>
    %364 = arith.addf %360, %363 : vector<16x1xf32>
    %365 = math.rsqrt %364 : vector<16x1xf32>
    %366 = vector.broadcast %365 : vector<16x1xf32> to vector<16x64xf32>
    %367 = arith.mulf %362, %366 : vector<16x64xf32>
    %368 = vector.broadcast %348 : vector<1x64xf32> to vector<16x64xf32>
    %369 = arith.mulf %367, %368 : vector<16x64xf32>
    %370 = vector.broadcast %349 : vector<1x64xf32> to vector<16x64xf32>
    %371 = arith.addf %369, %370 : vector<16x64xf32>
    %372 = arith.truncf %371 : vector<16x64xf32> to vector<16x64xbf16>
    %c656 = arith.constant 656 : index
    %c0_128 = arith.constant 0 : index
    %373 = vector.load %arg2[%c656, %c0_128] : memref<3312x512xbf16, #tpu.memory_space<vmem>>, vector<64x32xbf16>
    %cst_129 = arith.constant dense<0.000000e+00> : vector<16x32xf32>
    %374 = tpu.matmul %372, %373, %cst_129 {dimension_numbers = #tpu.dot_dimension_numbers<[1], [0], [0], [1], [0, 0, 1, 1], [], []>} : vector<16x64xbf16>, vector<64x32xbf16>, vector<16x32xf32> -> vector<16x32xf32>
    %c28 = arith.constant 28 : index
    %c0_130 = arith.constant 0 : index
    %375 = vector.load %arg3[%c28, %c0_130] : memref<64x512xf32, #tpu.memory_space<vmem>>, vector<1x32xf32>
    %376 = vector.broadcast %375 : vector<1x32xf32> to vector<16x32xf32>
    %377 = arith.addf %374, %376 : vector<16x32xf32>
    %cst_131 = arith.constant 0.000000e+00 : f32
    %378 = vector.broadcast %cst_131 : f32 to vector<16x32xf32>
    %379 = arith.maximumf %377, %378 : vector<16x32xf32>
    %380 = arith.truncf %379 : vector<16x32xf32> to vector<16x32xbf16>
    %c720 = arith.constant 720 : index
    %c0_132 = arith.constant 0 : index
    %381 = vector.load %arg2[%c720, %c0_132] : memref<3312x512xbf16, #tpu.memory_space<vmem>>, vector<32x64xbf16>
    %cst_133 = arith.constant dense<0.000000e+00> : vector<16x64xf32>
    %382 = tpu.matmul %380, %381, %cst_133 {dimension_numbers = #tpu.dot_dimension_numbers<[1], [0], [0], [1], [0, 0, 1, 1], [], []>} : vector<16x32xbf16>, vector<32x64xbf16>, vector<16x64xf32> -> vector<16x64xf32>
    %c29 = arith.constant 29 : index
    %c0_134 = arith.constant 0 : index
    %383 = vector.load %arg3[%c29, %c0_134] : memref<64x512xf32, #tpu.memory_space<vmem>>, vector<1x64xf32>
    %384 = vector.broadcast %383 : vector<1x64xf32> to vector<16x64xf32>
    %385 = arith.addf %382, %384 : vector<16x64xf32>
    %386 = arith.addf %385, %347 : vector<16x64xf32>
    %c30 = arith.constant 30 : index
    %c0_135 = arith.constant 0 : index
    %387 = vector.load %arg3[%c30, %c0_135] : memref<64x512xf32, #tpu.memory_space<vmem>>, vector<1x128xf32>
    %388 = arith.truncf %386 : vector<16x64xf32> to vector<16x64xbf16>
    %c752 = arith.constant 752 : index
    %c0_136 = arith.constant 0 : index
    %389 = vector.load %arg2[%c752, %c0_136] : memref<3312x512xbf16, #tpu.memory_space<vmem>>, vector<4x16xbf16>
    %cst_137 = arith.constant dense<0.000000e+00> : vector<4x64xf32>
    %390 = tpu.matmul %389, %388, %cst_137 {dimension_numbers = #tpu.dot_dimension_numbers<[1], [0], [0], [1], [0, 0, 1, 1], [], []>} : vector<4x16xbf16>, vector<16x64xbf16>, vector<4x64xf32> -> vector<4x64xf32>
    %391 = arith.truncf %390 : vector<4x64xf32> to vector<4x64xbf16>
    %c816 = arith.constant 816 : index
    %c0_138 = arith.constant 0 : index
    %392 = vector.load %arg2[%c816, %c0_138] : memref<3312x512xbf16, #tpu.memory_space<vmem>>, vector<64x128xbf16>
    %cst_139 = arith.constant dense<0.000000e+00> : vector<4x128xf32>
    %393 = tpu.matmul %391, %392, %cst_139 {dimension_numbers = #tpu.dot_dimension_numbers<[1], [0], [0], [1], [0, 0, 1, 1], [], []>} : vector<4x64xbf16>, vector<64x128xbf16>, vector<4x128xf32> -> vector<4x128xf32>
    %c768 = arith.constant 768 : index
    %c0_140 = arith.constant 0 : index
    %394 = vector.load %arg2[%c768, %c0_140] : memref<3312x512xbf16, #tpu.memory_space<vmem>>, vector<4x16xbf16>
    %cst_141 = arith.constant dense<0.000000e+00> : vector<4x64xf32>
    %395 = tpu.matmul %394, %388, %cst_141 {dimension_numbers = #tpu.dot_dimension_numbers<[1], [0], [0], [1], [0, 0, 1, 1], [], []>} : vector<4x16xbf16>, vector<16x64xbf16>, vector<4x64xf32> -> vector<4x64xf32>
    %396 = arith.truncf %395 : vector<4x64xf32> to vector<4x64xbf16>
    %c880 = arith.constant 880 : index
    %c0_142 = arith.constant 0 : index
    %397 = vector.load %arg2[%c880, %c0_142] : memref<3312x512xbf16, #tpu.memory_space<vmem>>, vector<64x128xbf16>
    %cst_143 = arith.constant dense<0.000000e+00> : vector<4x128xf32>
    %398 = tpu.matmul %396, %397, %cst_143 {dimension_numbers = #tpu.dot_dimension_numbers<[1], [0], [0], [1], [0, 0, 1, 1], [], []>} : vector<4x64xbf16>, vector<64x128xbf16>, vector<4x128xf32> -> vector<4x128xf32>
    %399 = arith.addf %393, %398 : vector<4x128xf32>
    %c784 = arith.constant 784 : index
    %c0_144 = arith.constant 0 : index
    %400 = vector.load %arg2[%c784, %c0_144] : memref<3312x512xbf16, #tpu.memory_space<vmem>>, vector<4x16xbf16>
    %cst_145 = arith.constant dense<0.000000e+00> : vector<4x64xf32>
    %401 = tpu.matmul %400, %388, %cst_145 {dimension_numbers = #tpu.dot_dimension_numbers<[1], [0], [0], [1], [0, 0, 1, 1], [], []>} : vector<4x16xbf16>, vector<16x64xbf16>, vector<4x64xf32> -> vector<4x64xf32>
    %402 = arith.truncf %401 : vector<4x64xf32> to vector<4x64xbf16>
    %c944 = arith.constant 944 : index
    %c0_146 = arith.constant 0 : index
    %403 = vector.load %arg2[%c944, %c0_146] : memref<3312x512xbf16, #tpu.memory_space<vmem>>, vector<64x128xbf16>
    %cst_147 = arith.constant dense<0.000000e+00> : vector<4x128xf32>
    %404 = tpu.matmul %402, %403, %cst_147 {dimension_numbers = #tpu.dot_dimension_numbers<[1], [0], [0], [1], [0, 0, 1, 1], [], []>} : vector<4x64xbf16>, vector<64x128xbf16>, vector<4x128xf32> -> vector<4x128xf32>
    %405 = arith.addf %399, %404 : vector<4x128xf32>
    %c800 = arith.constant 800 : index
    %c0_148 = arith.constant 0 : index
    %406 = vector.load %arg2[%c800, %c0_148] : memref<3312x512xbf16, #tpu.memory_space<vmem>>, vector<4x16xbf16>
    %cst_149 = arith.constant dense<0.000000e+00> : vector<4x64xf32>
    %407 = tpu.matmul %406, %388, %cst_149 {dimension_numbers = #tpu.dot_dimension_numbers<[1], [0], [0], [1], [0, 0, 1, 1], [], []>} : vector<4x16xbf16>, vector<16x64xbf16>, vector<4x64xf32> -> vector<4x64xf32>
    %408 = arith.truncf %407 : vector<4x64xf32> to vector<4x64xbf16>
    %c1008 = arith.constant 1008 : index
    %c0_150 = arith.constant 0 : index
    %409 = vector.load %arg2[%c1008, %c0_150] : memref<3312x512xbf16, #tpu.memory_space<vmem>>, vector<64x128xbf16>
    %cst_151 = arith.constant dense<0.000000e+00> : vector<4x128xf32>
    %410 = tpu.matmul %408, %409, %cst_151 {dimension_numbers = #tpu.dot_dimension_numbers<[1], [0], [0], [1], [0, 0, 1, 1], [], []>} : vector<4x64xbf16>, vector<64x128xbf16>, vector<4x128xf32> -> vector<4x128xf32>
    %411 = arith.addf %405, %410 : vector<4x128xf32>
    %412 = vector.broadcast %387 : vector<1x128xf32> to vector<4x128xf32>
    %413 = arith.addf %411, %412 : vector<4x128xf32>
    %c31 = arith.constant 31 : index
    %c0_152 = arith.constant 0 : index
    %414 = vector.load %arg3[%c31, %c0_152] : memref<64x512xf32, #tpu.memory_space<vmem>>, vector<1x128xf32>
    %c32 = arith.constant 32 : index
    %c0_153 = arith.constant 0 : index
    %415 = vector.load %arg3[%c32, %c0_153] : memref<64x512xf32, #tpu.memory_space<vmem>>, vector<1x128xf32>
    %cst_154 = arith.constant dense<0.000000e+00> : vector<4xf32>
    %416 = vector.multi_reduction <add>, %413, %cst_154 [1] : vector<4x128xf32> to vector<4xf32>
    %417 = vector.shape_cast %416 : vector<4xf32> to vector<4x1xf32>
    %cst_155 = arith.constant 1.280000e+02 : f32
    %418 = vector.broadcast %cst_155 : f32 to vector<4x1xf32>
    %419 = arith.divf %417, %418 : vector<4x1xf32>
    %420 = vector.broadcast %419 : vector<4x1xf32> to vector<4x128xf32>
    %421 = arith.subf %413, %420 : vector<4x128xf32>
    %422 = arith.mulf %421, %421 : vector<4x128xf32>
    %cst_156 = arith.constant dense<0.000000e+00> : vector<4xf32>
    %423 = vector.multi_reduction <add>, %422, %cst_156 [1] : vector<4x128xf32> to vector<4xf32>
    %424 = vector.shape_cast %423 : vector<4xf32> to vector<4x1xf32>
    %cst_157 = arith.constant 1.280000e+02 : f32
    %425 = vector.broadcast %cst_157 : f32 to vector<4x1xf32>
    %426 = arith.divf %424, %425 : vector<4x1xf32>
    %427 = vector.broadcast %419 : vector<4x1xf32> to vector<4x128xf32>
    %428 = arith.subf %413, %427 : vector<4x128xf32>
    %cst_158 = arith.constant 9.99999974E-6 : f32
    %429 = vector.broadcast %cst_158 : f32 to vector<4x1xf32>
    %430 = arith.addf %426, %429 : vector<4x1xf32>
    %431 = math.rsqrt %430 : vector<4x1xf32>
    %432 = vector.broadcast %431 : vector<4x1xf32> to vector<4x128xf32>
    %433 = arith.mulf %428, %432 : vector<4x128xf32>
    %434 = vector.broadcast %414 : vector<1x128xf32> to vector<4x128xf32>
    %435 = arith.mulf %433, %434 : vector<4x128xf32>
    %436 = vector.broadcast %415 : vector<1x128xf32> to vector<4x128xf32>
    %437 = arith.addf %435, %436 : vector<4x128xf32>
    %438 = arith.truncf %437 : vector<4x128xf32> to vector<4x128xbf16>
    %c1072 = arith.constant 1072 : index
    %c0_159 = arith.constant 0 : index
    %439 = vector.load %arg2[%c1072, %c0_159] : memref<3312x512xbf16, #tpu.memory_space<vmem>>, vector<128x384xbf16>
    %cst_160 = arith.constant dense<0.000000e+00> : vector<4x384xf32>
    %440 = tpu.matmul %438, %439, %cst_160 {dimension_numbers = #tpu.dot_dimension_numbers<[1], [0], [0], [1], [0, 0, 1, 1], [], []>} : vector<4x128xbf16>, vector<128x384xbf16>, vector<4x384xf32> -> vector<4x384xf32>
    %c33 = arith.constant 33 : index
    %c0_161 = arith.constant 0 : index
    %441 = vector.load %arg3[%c33, %c0_161] : memref<64x512xf32, #tpu.memory_space<vmem>>, vector<1x384xf32>
    %442 = vector.broadcast %441 : vector<1x384xf32> to vector<4x384xf32>
    %443 = arith.addf %440, %442 : vector<4x384xf32>
    %444 = vector.extract_strided_slice %443 {offsets = [0, 0], sizes = [4, 128], strides = [1, 1]} : vector<4x384xf32> to vector<4x128xf32>
    %445 = vector.extract_strided_slice %443 {offsets = [0, 128], sizes = [4, 128], strides = [1, 1]} : vector<4x384xf32> to vector<4x128xf32>
    %446 = vector.extract_strided_slice %443 {offsets = [0, 256], sizes = [4, 128], strides = [1, 1]} : vector<4x384xf32> to vector<4x128xf32>
    %447 = arith.truncf %445 : vector<4x128xf32> to vector<4x128xbf16>
    %448 = arith.truncf %446 : vector<4x128xf32> to vector<4x128xbf16>
    %cst_162 = arith.constant dense<0.000000e+00> : vector<4x4xf32>
    %449 = tpu.matmul %447, %448, %cst_162 {dimension_numbers = #tpu.dot_dimension_numbers<[1], [1], [0], [0], [0, 0, 1, 0], [], []>} : vector<4x128xbf16>, vector<4x128xbf16>, vector<4x4xf32> -> vector<4x4xf32>
    %cst_163 = arith.constant dense<0xFF800000> : vector<4xf32>
    %450 = vector.multi_reduction <maximumf>, %449, %cst_163 [1] : vector<4x4xf32> to vector<4xf32>
    %451 = vector.shape_cast %450 : vector<4xf32> to vector<4x1xf32>
    %452 = vector.broadcast %451 : vector<4x1xf32> to vector<4x4xf32>
    %453 = arith.subf %449, %452 : vector<4x4xf32>
    %454 = math.exp %453 : vector<4x4xf32>
    %cst_164 = arith.constant dense<0.000000e+00> : vector<4xf32>
    %455 = vector.multi_reduction <add>, %454, %cst_164 [1] : vector<4x4xf32> to vector<4xf32>
    %456 = vector.shape_cast %455 : vector<4xf32> to vector<4x1xf32>
    %457 = vector.broadcast %456 : vector<4x1xf32> to vector<4x4xf32>
    %458 = arith.divf %454, %457 : vector<4x4xf32>
    %459 = arith.truncf %458 : vector<4x4xf32> to vector<4x4xbf16>
    %460 = arith.truncf %444 : vector<4x128xf32> to vector<4x128xbf16>
    %cst_165 = arith.constant dense<0.000000e+00> : vector<4x128xf32>
    %461 = tpu.matmul %459, %460, %cst_165 {dimension_numbers = #tpu.dot_dimension_numbers<[1], [0], [0], [1], [0, 0, 1, 1], [], []>} : vector<4x4xbf16>, vector<4x128xbf16>, vector<4x128xf32> -> vector<4x128xf32>
    %462 = arith.addf %461, %437 : vector<4x128xf32>
    %c34 = arith.constant 34 : index
    %c0_166 = arith.constant 0 : index
    %463 = vector.load %arg3[%c34, %c0_166] : memref<64x512xf32, #tpu.memory_space<vmem>>, vector<1x128xf32>
    %c35 = arith.constant 35 : index
    %c0_167 = arith.constant 0 : index
    %464 = vector.load %arg3[%c35, %c0_167] : memref<64x512xf32, #tpu.memory_space<vmem>>, vector<1x128xf32>
    %cst_168 = arith.constant dense<0.000000e+00> : vector<4xf32>
    %465 = vector.multi_reduction <add>, %462, %cst_168 [1] : vector<4x128xf32> to vector<4xf32>
    %466 = vector.shape_cast %465 : vector<4xf32> to vector<4x1xf32>
    %cst_169 = arith.constant 1.280000e+02 : f32
    %467 = vector.broadcast %cst_169 : f32 to vector<4x1xf32>
    %468 = arith.divf %466, %467 : vector<4x1xf32>
    %469 = vector.broadcast %468 : vector<4x1xf32> to vector<4x128xf32>
    %470 = arith.subf %462, %469 : vector<4x128xf32>
    %471 = arith.mulf %470, %470 : vector<4x128xf32>
    %cst_170 = arith.constant dense<0.000000e+00> : vector<4xf32>
    %472 = vector.multi_reduction <add>, %471, %cst_170 [1] : vector<4x128xf32> to vector<4xf32>
    %473 = vector.shape_cast %472 : vector<4xf32> to vector<4x1xf32>
    %cst_171 = arith.constant 1.280000e+02 : f32
    %474 = vector.broadcast %cst_171 : f32 to vector<4x1xf32>
    %475 = arith.divf %473, %474 : vector<4x1xf32>
    %476 = vector.broadcast %468 : vector<4x1xf32> to vector<4x128xf32>
    %477 = arith.subf %462, %476 : vector<4x128xf32>
    %cst_172 = arith.constant 9.99999974E-6 : f32
    %478 = vector.broadcast %cst_172 : f32 to vector<4x1xf32>
    %479 = arith.addf %475, %478 : vector<4x1xf32>
    %480 = math.rsqrt %479 : vector<4x1xf32>
    %481 = vector.broadcast %480 : vector<4x1xf32> to vector<4x128xf32>
    %482 = arith.mulf %477, %481 : vector<4x128xf32>
    %483 = vector.broadcast %463 : vector<1x128xf32> to vector<4x128xf32>
    %484 = arith.mulf %482, %483 : vector<4x128xf32>
    %485 = vector.broadcast %464 : vector<1x128xf32> to vector<4x128xf32>
    %486 = arith.addf %484, %485 : vector<4x128xf32>
    %487 = arith.truncf %486 : vector<4x128xf32> to vector<4x128xbf16>
    %c1200 = arith.constant 1200 : index
    %c0_173 = arith.constant 0 : index
    %488 = vector.load %arg2[%c1200, %c0_173] : memref<3312x512xbf16, #tpu.memory_space<vmem>>, vector<128x32xbf16>
    %cst_174 = arith.constant dense<0.000000e+00> : vector<4x32xf32>
    %489 = tpu.matmul %487, %488, %cst_174 {dimension_numbers = #tpu.dot_dimension_numbers<[1], [0], [0], [1], [0, 0, 1, 1], [], []>} : vector<4x128xbf16>, vector<128x32xbf16>, vector<4x32xf32> -> vector<4x32xf32>
    %c36 = arith.constant 36 : index
    %c0_175 = arith.constant 0 : index
    %490 = vector.load %arg3[%c36, %c0_175] : memref<64x512xf32, #tpu.memory_space<vmem>>, vector<1x32xf32>
    %491 = vector.broadcast %490 : vector<1x32xf32> to vector<4x32xf32>
    %492 = arith.addf %489, %491 : vector<4x32xf32>
    %cst_176 = arith.constant 0.000000e+00 : f32
    %493 = vector.broadcast %cst_176 : f32 to vector<4x32xf32>
    %494 = arith.maximumf %492, %493 : vector<4x32xf32>
    %495 = arith.truncf %494 : vector<4x32xf32> to vector<4x32xbf16>
    %c1328 = arith.constant 1328 : index
    %c0_177 = arith.constant 0 : index
    %496 = vector.load %arg2[%c1328, %c0_177] : memref<3312x512xbf16, #tpu.memory_space<vmem>>, vector<32x128xbf16>
    %cst_178 = arith.constant dense<0.000000e+00> : vector<4x128xf32>
    %497 = tpu.matmul %495, %496, %cst_178 {dimension_numbers = #tpu.dot_dimension_numbers<[1], [0], [0], [1], [0, 0, 1, 1], [], []>} : vector<4x32xbf16>, vector<32x128xbf16>, vector<4x128xf32> -> vector<4x128xf32>
    %c37 = arith.constant 37 : index
    %c0_179 = arith.constant 0 : index
    %498 = vector.load %arg3[%c37, %c0_179] : memref<64x512xf32, #tpu.memory_space<vmem>>, vector<1x128xf32>
    %499 = vector.broadcast %498 : vector<1x128xf32> to vector<4x128xf32>
    %500 = arith.addf %497, %499 : vector<4x128xf32>
    %501 = arith.addf %500, %462 : vector<4x128xf32>
    %c38 = arith.constant 38 : index
    %c0_180 = arith.constant 0 : index
    %502 = vector.load %arg3[%c38, %c0_180] : memref<64x512xf32, #tpu.memory_space<vmem>>, vector<1x128xf32>
    %c39 = arith.constant 39 : index
    %c0_181 = arith.constant 0 : index
    %503 = vector.load %arg3[%c39, %c0_181] : memref<64x512xf32, #tpu.memory_space<vmem>>, vector<1x128xf32>
    %cst_182 = arith.constant dense<0.000000e+00> : vector<4xf32>
    %504 = vector.multi_reduction <add>, %501, %cst_182 [1] : vector<4x128xf32> to vector<4xf32>
    %505 = vector.shape_cast %504 : vector<4xf32> to vector<4x1xf32>
    %cst_183 = arith.constant 1.280000e+02 : f32
    %506 = vector.broadcast %cst_183 : f32 to vector<4x1xf32>
    %507 = arith.divf %505, %506 : vector<4x1xf32>
    %508 = vector.broadcast %507 : vector<4x1xf32> to vector<4x128xf32>
    %509 = arith.subf %501, %508 : vector<4x128xf32>
    %510 = arith.mulf %509, %509 : vector<4x128xf32>
    %cst_184 = arith.constant dense<0.000000e+00> : vector<4xf32>
    %511 = vector.multi_reduction <add>, %510, %cst_184 [1] : vector<4x128xf32> to vector<4xf32>
    %512 = vector.shape_cast %511 : vector<4xf32> to vector<4x1xf32>
    %cst_185 = arith.constant 1.280000e+02 : f32
    %513 = vector.broadcast %cst_185 : f32 to vector<4x1xf32>
    %514 = arith.divf %512, %513 : vector<4x1xf32>
    %515 = vector.broadcast %507 : vector<4x1xf32> to vector<4x128xf32>
    %516 = arith.subf %501, %515 : vector<4x128xf32>
    %cst_186 = arith.constant 9.99999974E-6 : f32
    %517 = vector.broadcast %cst_186 : f32 to vector<4x1xf32>
    %518 = arith.addf %514, %517 : vector<4x1xf32>
    %519 = math.rsqrt %518 : vector<4x1xf32>
    %520 = vector.broadcast %519 : vector<4x1xf32> to vector<4x128xf32>
    %521 = arith.mulf %516, %520 : vector<4x128xf32>
    %522 = vector.broadcast %502 : vector<1x128xf32> to vector<4x128xf32>
    %523 = arith.mulf %521, %522 : vector<4x128xf32>
    %524 = vector.broadcast %503 : vector<1x128xf32> to vector<4x128xf32>
    %525 = arith.addf %523, %524 : vector<4x128xf32>
    %526 = arith.truncf %525 : vector<4x128xf32> to vector<4x128xbf16>
    %c1360 = arith.constant 1360 : index
    %c0_187 = arith.constant 0 : index
    %527 = vector.load %arg2[%c1360, %c0_187] : memref<3312x512xbf16, #tpu.memory_space<vmem>>, vector<128x384xbf16>
    %cst_188 = arith.constant dense<0.000000e+00> : vector<4x384xf32>
    %528 = tpu.matmul %526, %527, %cst_188 {dimension_numbers = #tpu.dot_dimension_numbers<[1], [0], [0], [1], [0, 0, 1, 1], [], []>} : vector<4x128xbf16>, vector<128x384xbf16>, vector<4x384xf32> -> vector<4x384xf32>
    %c40 = arith.constant 40 : index
    %c0_189 = arith.constant 0 : index
    %529 = vector.load %arg3[%c40, %c0_189] : memref<64x512xf32, #tpu.memory_space<vmem>>, vector<1x384xf32>
    %530 = vector.broadcast %529 : vector<1x384xf32> to vector<4x384xf32>
    %531 = arith.addf %528, %530 : vector<4x384xf32>
    %532 = vector.extract_strided_slice %531 {offsets = [0, 0], sizes = [4, 128], strides = [1, 1]} : vector<4x384xf32> to vector<4x128xf32>
    %533 = vector.extract_strided_slice %531 {offsets = [0, 128], sizes = [4, 128], strides = [1, 1]} : vector<4x384xf32> to vector<4x128xf32>
    %534 = vector.extract_strided_slice %531 {offsets = [0, 256], sizes = [4, 128], strides = [1, 1]} : vector<4x384xf32> to vector<4x128xf32>
    %535 = arith.truncf %533 : vector<4x128xf32> to vector<4x128xbf16>
    %536 = arith.truncf %534 : vector<4x128xf32> to vector<4x128xbf16>
    %cst_190 = arith.constant dense<0.000000e+00> : vector<4x4xf32>
    %537 = tpu.matmul %535, %536, %cst_190 {dimension_numbers = #tpu.dot_dimension_numbers<[1], [1], [0], [0], [0, 0, 1, 0], [], []>} : vector<4x128xbf16>, vector<4x128xbf16>, vector<4x4xf32> -> vector<4x4xf32>
    %cst_191 = arith.constant dense<0xFF800000> : vector<4xf32>
    %538 = vector.multi_reduction <maximumf>, %537, %cst_191 [1] : vector<4x4xf32> to vector<4xf32>
    %539 = vector.shape_cast %538 : vector<4xf32> to vector<4x1xf32>
    %540 = vector.broadcast %539 : vector<4x1xf32> to vector<4x4xf32>
    %541 = arith.subf %537, %540 : vector<4x4xf32>
    %542 = math.exp %541 : vector<4x4xf32>
    %cst_192 = arith.constant dense<0.000000e+00> : vector<4xf32>
    %543 = vector.multi_reduction <add>, %542, %cst_192 [1] : vector<4x4xf32> to vector<4xf32>
    %544 = vector.shape_cast %543 : vector<4xf32> to vector<4x1xf32>
    %545 = vector.broadcast %544 : vector<4x1xf32> to vector<4x4xf32>
    %546 = arith.divf %542, %545 : vector<4x4xf32>
    %547 = arith.truncf %546 : vector<4x4xf32> to vector<4x4xbf16>
    %548 = arith.truncf %532 : vector<4x128xf32> to vector<4x128xbf16>
    %cst_193 = arith.constant dense<0.000000e+00> : vector<4x128xf32>
    %549 = tpu.matmul %547, %548, %cst_193 {dimension_numbers = #tpu.dot_dimension_numbers<[1], [0], [0], [1], [0, 0, 1, 1], [], []>} : vector<4x4xbf16>, vector<4x128xbf16>, vector<4x128xf32> -> vector<4x128xf32>
    %550 = arith.addf %549, %525 : vector<4x128xf32>
    %c41 = arith.constant 41 : index
    %c0_194 = arith.constant 0 : index
    %551 = vector.load %arg3[%c41, %c0_194] : memref<64x512xf32, #tpu.memory_space<vmem>>, vector<1x128xf32>
    %c42 = arith.constant 42 : index
    %c0_195 = arith.constant 0 : index
    %552 = vector.load %arg3[%c42, %c0_195] : memref<64x512xf32, #tpu.memory_space<vmem>>, vector<1x128xf32>
    %cst_196 = arith.constant dense<0.000000e+00> : vector<4xf32>
    %553 = vector.multi_reduction <add>, %550, %cst_196 [1] : vector<4x128xf32> to vector<4xf32>
    %554 = vector.shape_cast %553 : vector<4xf32> to vector<4x1xf32>
    %cst_197 = arith.constant 1.280000e+02 : f32
    %555 = vector.broadcast %cst_197 : f32 to vector<4x1xf32>
    %556 = arith.divf %554, %555 : vector<4x1xf32>
    %557 = vector.broadcast %556 : vector<4x1xf32> to vector<4x128xf32>
    %558 = arith.subf %550, %557 : vector<4x128xf32>
    %559 = arith.mulf %558, %558 : vector<4x128xf32>
    %cst_198 = arith.constant dense<0.000000e+00> : vector<4xf32>
    %560 = vector.multi_reduction <add>, %559, %cst_198 [1] : vector<4x128xf32> to vector<4xf32>
    %561 = vector.shape_cast %560 : vector<4xf32> to vector<4x1xf32>
    %cst_199 = arith.constant 1.280000e+02 : f32
    %562 = vector.broadcast %cst_199 : f32 to vector<4x1xf32>
    %563 = arith.divf %561, %562 : vector<4x1xf32>
    %564 = vector.broadcast %556 : vector<4x1xf32> to vector<4x128xf32>
    %565 = arith.subf %550, %564 : vector<4x128xf32>
    %cst_200 = arith.constant 9.99999974E-6 : f32
    %566 = vector.broadcast %cst_200 : f32 to vector<4x1xf32>
    %567 = arith.addf %563, %566 : vector<4x1xf32>
    %568 = math.rsqrt %567 : vector<4x1xf32>
    %569 = vector.broadcast %568 : vector<4x1xf32> to vector<4x128xf32>
    %570 = arith.mulf %565, %569 : vector<4x128xf32>
    %571 = vector.broadcast %551 : vector<1x128xf32> to vector<4x128xf32>
    %572 = arith.mulf %570, %571 : vector<4x128xf32>
    %573 = vector.broadcast %552 : vector<1x128xf32> to vector<4x128xf32>
    %574 = arith.addf %572, %573 : vector<4x128xf32>
    %575 = arith.truncf %574 : vector<4x128xf32> to vector<4x128xbf16>
    %c1488 = arith.constant 1488 : index
    %c0_201 = arith.constant 0 : index
    %576 = vector.load %arg2[%c1488, %c0_201] : memref<3312x512xbf16, #tpu.memory_space<vmem>>, vector<128x32xbf16>
    %cst_202 = arith.constant dense<0.000000e+00> : vector<4x32xf32>
    %577 = tpu.matmul %575, %576, %cst_202 {dimension_numbers = #tpu.dot_dimension_numbers<[1], [0], [0], [1], [0, 0, 1, 1], [], []>} : vector<4x128xbf16>, vector<128x32xbf16>, vector<4x32xf32> -> vector<4x32xf32>
    %c43 = arith.constant 43 : index
    %c0_203 = arith.constant 0 : index
    %578 = vector.load %arg3[%c43, %c0_203] : memref<64x512xf32, #tpu.memory_space<vmem>>, vector<1x32xf32>
    %579 = vector.broadcast %578 : vector<1x32xf32> to vector<4x32xf32>
    %580 = arith.addf %577, %579 : vector<4x32xf32>
    %cst_204 = arith.constant 0.000000e+00 : f32
    %581 = vector.broadcast %cst_204 : f32 to vector<4x32xf32>
    %582 = arith.maximumf %580, %581 : vector<4x32xf32>
    %583 = arith.truncf %582 : vector<4x32xf32> to vector<4x32xbf16>
    %c1616 = arith.constant 1616 : index
    %c0_205 = arith.constant 0 : index
    %584 = vector.load %arg2[%c1616, %c0_205] : memref<3312x512xbf16, #tpu.memory_space<vmem>>, vector<32x128xbf16>
    %cst_206 = arith.constant dense<0.000000e+00> : vector<4x128xf32>
    %585 = tpu.matmul %583, %584, %cst_206 {dimension_numbers = #tpu.dot_dimension_numbers<[1], [0], [0], [1], [0, 0, 1, 1], [], []>} : vector<4x32xbf16>, vector<32x128xbf16>, vector<4x128xf32> -> vector<4x128xf32>
    %c44 = arith.constant 44 : index
    %c0_207 = arith.constant 0 : index
    %586 = vector.load %arg3[%c44, %c0_207] : memref<64x512xf32, #tpu.memory_space<vmem>>, vector<1x128xf32>
    %587 = vector.broadcast %586 : vector<1x128xf32> to vector<4x128xf32>
    %588 = arith.addf %585, %587 : vector<4x128xf32>
    %589 = arith.addf %588, %550 : vector<4x128xf32>
    %c45 = arith.constant 45 : index
    %c0_208 = arith.constant 0 : index
    %590 = vector.load %arg3[%c45, %c0_208] : memref<64x512xf32, #tpu.memory_space<vmem>>, vector<1x256xf32>
    %591 = arith.truncf %589 : vector<4x128xf32> to vector<4x128xbf16>
    %c1648 = arith.constant 1648 : index
    %c0_209 = arith.constant 0 : index
    %592 = vector.load %arg2[%c1648, %c0_209] : memref<3312x512xbf16, #tpu.memory_space<vmem>>, vector<1x4xbf16>
    %cst_210 = arith.constant dense<0.000000e+00> : vector<1x128xf32>
    %593 = tpu.matmul %592, %591, %cst_210 {dimension_numbers = #tpu.dot_dimension_numbers<[1], [0], [0], [1], [0, 0, 1, 1], [], []>} : vector<1x4xbf16>, vector<4x128xbf16>, vector<1x128xf32> -> vector<1x128xf32>
    %594 = arith.truncf %593 : vector<1x128xf32> to vector<1x128xbf16>
    %c1712 = arith.constant 1712 : index
    %c0_211 = arith.constant 0 : index
    %595 = vector.load %arg2[%c1712, %c0_211] : memref<3312x512xbf16, #tpu.memory_space<vmem>>, vector<128x256xbf16>
    %cst_212 = arith.constant dense<0.000000e+00> : vector<1x256xf32>
    %596 = tpu.matmul %594, %595, %cst_212 {dimension_numbers = #tpu.dot_dimension_numbers<[1], [0], [0], [1], [0, 0, 1, 1], [], []>} : vector<1x128xbf16>, vector<128x256xbf16>, vector<1x256xf32> -> vector<1x256xf32>
    %c1664 = arith.constant 1664 : index
    %c0_213 = arith.constant 0 : index
    %597 = vector.load %arg2[%c1664, %c0_213] : memref<3312x512xbf16, #tpu.memory_space<vmem>>, vector<1x4xbf16>
    %cst_214 = arith.constant dense<0.000000e+00> : vector<1x128xf32>
    %598 = tpu.matmul %597, %591, %cst_214 {dimension_numbers = #tpu.dot_dimension_numbers<[1], [0], [0], [1], [0, 0, 1, 1], [], []>} : vector<1x4xbf16>, vector<4x128xbf16>, vector<1x128xf32> -> vector<1x128xf32>
    %599 = arith.truncf %598 : vector<1x128xf32> to vector<1x128xbf16>
    %c1840 = arith.constant 1840 : index
    %c0_215 = arith.constant 0 : index
    %600 = vector.load %arg2[%c1840, %c0_215] : memref<3312x512xbf16, #tpu.memory_space<vmem>>, vector<128x256xbf16>
    %cst_216 = arith.constant dense<0.000000e+00> : vector<1x256xf32>
    %601 = tpu.matmul %599, %600, %cst_216 {dimension_numbers = #tpu.dot_dimension_numbers<[1], [0], [0], [1], [0, 0, 1, 1], [], []>} : vector<1x128xbf16>, vector<128x256xbf16>, vector<1x256xf32> -> vector<1x256xf32>
    %602 = arith.addf %596, %601 : vector<1x256xf32>
    %c1680 = arith.constant 1680 : index
    %c0_217 = arith.constant 0 : index
    %603 = vector.load %arg2[%c1680, %c0_217] : memref<3312x512xbf16, #tpu.memory_space<vmem>>, vector<1x4xbf16>
    %cst_218 = arith.constant dense<0.000000e+00> : vector<1x128xf32>
    %604 = tpu.matmul %603, %591, %cst_218 {dimension_numbers = #tpu.dot_dimension_numbers<[1], [0], [0], [1], [0, 0, 1, 1], [], []>} : vector<1x4xbf16>, vector<4x128xbf16>, vector<1x128xf32> -> vector<1x128xf32>
    %605 = arith.truncf %604 : vector<1x128xf32> to vector<1x128xbf16>
    %c1968 = arith.constant 1968 : index
    %c0_219 = arith.constant 0 : index
    %606 = vector.load %arg2[%c1968, %c0_219] : memref<3312x512xbf16, #tpu.memory_space<vmem>>, vector<128x256xbf16>
    %cst_220 = arith.constant dense<0.000000e+00> : vector<1x256xf32>
    %607 = tpu.matmul %605, %606, %cst_220 {dimension_numbers = #tpu.dot_dimension_numbers<[1], [0], [0], [1], [0, 0, 1, 1], [], []>} : vector<1x128xbf16>, vector<128x256xbf16>, vector<1x256xf32> -> vector<1x256xf32>
    %608 = arith.addf %602, %607 : vector<1x256xf32>
    %c1696 = arith.constant 1696 : index
    %c0_221 = arith.constant 0 : index
    %609 = vector.load %arg2[%c1696, %c0_221] : memref<3312x512xbf16, #tpu.memory_space<vmem>>, vector<1x4xbf16>
    %cst_222 = arith.constant dense<0.000000e+00> : vector<1x128xf32>
    %610 = tpu.matmul %609, %591, %cst_222 {dimension_numbers = #tpu.dot_dimension_numbers<[1], [0], [0], [1], [0, 0, 1, 1], [], []>} : vector<1x4xbf16>, vector<4x128xbf16>, vector<1x128xf32> -> vector<1x128xf32>
    %611 = arith.truncf %610 : vector<1x128xf32> to vector<1x128xbf16>
    %c2096 = arith.constant 2096 : index
    %c0_223 = arith.constant 0 : index
    %612 = vector.load %arg2[%c2096, %c0_223] : memref<3312x512xbf16, #tpu.memory_space<vmem>>, vector<128x256xbf16>
    %cst_224 = arith.constant dense<0.000000e+00> : vector<1x256xf32>
    %613 = tpu.matmul %611, %612, %cst_224 {dimension_numbers = #tpu.dot_dimension_numbers<[1], [0], [0], [1], [0, 0, 1, 1], [], []>} : vector<1x128xbf16>, vector<128x256xbf16>, vector<1x256xf32> -> vector<1x256xf32>
    %614 = arith.addf %608, %613 : vector<1x256xf32>
    %615 = arith.addf %614, %590 : vector<1x256xf32>
    %c46 = arith.constant 46 : index
    %c0_225 = arith.constant 0 : index
    %616 = vector.load %arg3[%c46, %c0_225] : memref<64x512xf32, #tpu.memory_space<vmem>>, vector<1x256xf32>
    %c47 = arith.constant 47 : index
    %c0_226 = arith.constant 0 : index
    %617 = vector.load %arg3[%c47, %c0_226] : memref<64x512xf32, #tpu.memory_space<vmem>>, vector<1x256xf32>
    %cst_227 = arith.constant dense<0.000000e+00> : vector<1xf32>
    %618 = vector.multi_reduction <add>, %615, %cst_227 [1] : vector<1x256xf32> to vector<1xf32>
    %619 = vector.shape_cast %618 : vector<1xf32> to vector<1x1xf32>
    %cst_228 = arith.constant 2.560000e+02 : f32
    %620 = vector.broadcast %cst_228 : f32 to vector<1x1xf32>
    %621 = arith.divf %619, %620 : vector<1x1xf32>
    %622 = vector.broadcast %621 : vector<1x1xf32> to vector<1x256xf32>
    %623 = arith.subf %615, %622 : vector<1x256xf32>
    %624 = arith.mulf %623, %623 : vector<1x256xf32>
    %cst_229 = arith.constant dense<0.000000e+00> : vector<1xf32>
    %625 = vector.multi_reduction <add>, %624, %cst_229 [1] : vector<1x256xf32> to vector<1xf32>
    %626 = vector.shape_cast %625 : vector<1xf32> to vector<1x1xf32>
    %cst_230 = arith.constant 2.560000e+02 : f32
    %627 = vector.broadcast %cst_230 : f32 to vector<1x1xf32>
    %628 = arith.divf %626, %627 : vector<1x1xf32>
    %629 = vector.broadcast %621 : vector<1x1xf32> to vector<1x256xf32>
    %630 = arith.subf %615, %629 : vector<1x256xf32>
    %cst_231 = arith.constant 9.99999974E-6 : f32
    %631 = vector.broadcast %cst_231 : f32 to vector<1x1xf32>
    %632 = arith.addf %628, %631 : vector<1x1xf32>
    %633 = math.rsqrt %632 : vector<1x1xf32>
    %634 = vector.broadcast %633 : vector<1x1xf32> to vector<1x256xf32>
    %635 = arith.mulf %630, %634 : vector<1x256xf32>
    %636 = arith.mulf %635, %616 : vector<1x256xf32>
    %637 = arith.addf %636, %617 : vector<1x256xf32>
    %638 = arith.truncf %637 : vector<1x256xf32> to vector<1x256xbf16>
    %c2224 = arith.constant 2224 : index
    %c0_232 = arith.constant 0 : index
    %639 = vector.load %arg2[%c2224, %c0_232] : memref<3312x512xbf16, #tpu.memory_space<vmem>>, vector<256x512xbf16>
    %cst_233 = arith.constant dense<0.000000e+00> : vector<1x512xf32>
    %640 = tpu.matmul %638, %639, %cst_233 {dimension_numbers = #tpu.dot_dimension_numbers<[1], [0], [0], [1], [0, 0, 1, 1], [], []>} : vector<1x256xbf16>, vector<256x512xbf16>, vector<1x512xf32> -> vector<1x512xf32>
    %c48_234 = arith.constant 48 : index
    %c0_235 = arith.constant 0 : index
    %641 = vector.load %arg3[%c48_234, %c0_235] : memref<64x512xf32, #tpu.memory_space<vmem>>, vector<1x512xf32>
    %642 = arith.addf %640, %641 : vector<1x512xf32>
    %643 = vector.extract_strided_slice %642 {offsets = [0, 0], sizes = [1, 256], strides = [1, 1]} : vector<1x512xf32> to vector<1x256xf32>
    %644 = vector.extract_strided_slice %642 {offsets = [0, 256], sizes = [1, 128], strides = [1, 1]} : vector<1x512xf32> to vector<1x128xf32>
    %645 = vector.extract_strided_slice %642 {offsets = [0, 384], sizes = [1, 128], strides = [1, 1]} : vector<1x512xf32> to vector<1x128xf32>
    %646 = arith.truncf %644 : vector<1x128xf32> to vector<1x128xbf16>
    %647 = arith.truncf %645 : vector<1x128xf32> to vector<1x128xbf16>
    %648 = arith.extf %646 : vector<1x128xbf16> to vector<1x128xf32>
    %649 = arith.extf %647 : vector<1x128xbf16> to vector<1x128xf32>
    %cst_236 = arith.constant dense<0.000000e+00> : vector<1xf32>
    %650 = arith.mulf %648, %649 : vector<1x128xf32>
    %651 = vector.multi_reduction <add>, %650, %cst_236 [1] : vector<1x128xf32> to vector<1xf32>
    %652 = vector.shape_cast %651 : vector<1xf32> to vector<1x1xf32>
    %cst_237 = arith.constant dense<0xFF800000> : vector<1xf32>
    %653 = vector.multi_reduction <maximumf>, %652, %cst_237 [1] : vector<1x1xf32> to vector<1xf32>
    %654 = vector.shape_cast %653 : vector<1xf32> to vector<1x1xf32>
    %655 = arith.subf %652, %654 : vector<1x1xf32>
    %656 = math.exp %655 : vector<1x1xf32>
    %cst_238 = arith.constant dense<0.000000e+00> : vector<1xf32>
    %657 = vector.multi_reduction <add>, %656, %cst_238 [1] : vector<1x1xf32> to vector<1xf32>
    %658 = vector.shape_cast %657 : vector<1xf32> to vector<1x1xf32>
    %659 = arith.divf %656, %658 : vector<1x1xf32>
    %660 = arith.truncf %659 : vector<1x1xf32> to vector<1x1xbf16>
    %661 = arith.truncf %643 : vector<1x256xf32> to vector<1x256xbf16>
    %cst_239 = arith.constant dense<0.000000e+00> : vector<1x256xf32>
    %662 = tpu.matmul %660, %661, %cst_239 {dimension_numbers = #tpu.dot_dimension_numbers<[1], [0], [0], [1], [0, 0, 1, 1], [], []>} : vector<1x1xbf16>, vector<1x256xbf16>, vector<1x256xf32> -> vector<1x256xf32>
    %663 = arith.addf %662, %637 : vector<1x256xf32>
    %c49 = arith.constant 49 : index
    %c0_240 = arith.constant 0 : index
    %664 = vector.load %arg3[%c49, %c0_240] : memref<64x512xf32, #tpu.memory_space<vmem>>, vector<1x256xf32>
    %c50 = arith.constant 50 : index
    %c0_241 = arith.constant 0 : index
    %665 = vector.load %arg3[%c50, %c0_241] : memref<64x512xf32, #tpu.memory_space<vmem>>, vector<1x256xf32>
    %cst_242 = arith.constant dense<0.000000e+00> : vector<1xf32>
    %666 = vector.multi_reduction <add>, %663, %cst_242 [1] : vector<1x256xf32> to vector<1xf32>
    %667 = vector.shape_cast %666 : vector<1xf32> to vector<1x1xf32>
    %cst_243 = arith.constant 2.560000e+02 : f32
    %668 = vector.broadcast %cst_243 : f32 to vector<1x1xf32>
    %669 = arith.divf %667, %668 : vector<1x1xf32>
    %670 = vector.broadcast %669 : vector<1x1xf32> to vector<1x256xf32>
    %671 = arith.subf %663, %670 : vector<1x256xf32>
    %672 = arith.mulf %671, %671 : vector<1x256xf32>
    %cst_244 = arith.constant dense<0.000000e+00> : vector<1xf32>
    %673 = vector.multi_reduction <add>, %672, %cst_244 [1] : vector<1x256xf32> to vector<1xf32>
    %674 = vector.shape_cast %673 : vector<1xf32> to vector<1x1xf32>
    %cst_245 = arith.constant 2.560000e+02 : f32
    %675 = vector.broadcast %cst_245 : f32 to vector<1x1xf32>
    %676 = arith.divf %674, %675 : vector<1x1xf32>
    %677 = vector.broadcast %669 : vector<1x1xf32> to vector<1x256xf32>
    %678 = arith.subf %663, %677 : vector<1x256xf32>
    %cst_246 = arith.constant 9.99999974E-6 : f32
    %679 = vector.broadcast %cst_246 : f32 to vector<1x1xf32>
    %680 = arith.addf %676, %679 : vector<1x1xf32>
    %681 = math.rsqrt %680 : vector<1x1xf32>
    %682 = vector.broadcast %681 : vector<1x1xf32> to vector<1x256xf32>
    %683 = arith.mulf %678, %682 : vector<1x256xf32>
    %684 = arith.mulf %683, %664 : vector<1x256xf32>
    %685 = arith.addf %684, %665 : vector<1x256xf32>
    %686 = arith.truncf %685 : vector<1x256xf32> to vector<1x256xbf16>
    %c2480 = arith.constant 2480 : index
    %c0_247 = arith.constant 0 : index
    %687 = vector.load %arg2[%c2480, %c0_247] : memref<3312x512xbf16, #tpu.memory_space<vmem>>, vector<256x32xbf16>
    %cst_248 = arith.constant dense<0.000000e+00> : vector<1x32xf32>
    %688 = tpu.matmul %686, %687, %cst_248 {dimension_numbers = #tpu.dot_dimension_numbers<[1], [0], [0], [1], [0, 0, 1, 1], [], []>} : vector<1x256xbf16>, vector<256x32xbf16>, vector<1x32xf32> -> vector<1x32xf32>
    %c51 = arith.constant 51 : index
    %c0_249 = arith.constant 0 : index
    %689 = vector.load %arg3[%c51, %c0_249] : memref<64x512xf32, #tpu.memory_space<vmem>>, vector<1x32xf32>
    %690 = arith.addf %688, %689 : vector<1x32xf32>
    %cst_250 = arith.constant 0.000000e+00 : f32
    %691 = vector.broadcast %cst_250 : f32 to vector<1x32xf32>
    %692 = arith.maximumf %690, %691 : vector<1x32xf32>
    %693 = arith.truncf %692 : vector<1x32xf32> to vector<1x32xbf16>
    %c2736 = arith.constant 2736 : index
    %c0_251 = arith.constant 0 : index
    %694 = vector.load %arg2[%c2736, %c0_251] : memref<3312x512xbf16, #tpu.memory_space<vmem>>, vector<32x256xbf16>
    %cst_252 = arith.constant dense<0.000000e+00> : vector<1x256xf32>
    %695 = tpu.matmul %693, %694, %cst_252 {dimension_numbers = #tpu.dot_dimension_numbers<[1], [0], [0], [1], [0, 0, 1, 1], [], []>} : vector<1x32xbf16>, vector<32x256xbf16>, vector<1x256xf32> -> vector<1x256xf32>
    %c52 = arith.constant 52 : index
    %c0_253 = arith.constant 0 : index
    %696 = vector.load %arg3[%c52, %c0_253] : memref<64x512xf32, #tpu.memory_space<vmem>>, vector<1x256xf32>
    %697 = arith.addf %695, %696 : vector<1x256xf32>
    %698 = arith.addf %697, %663 : vector<1x256xf32>
    %c53 = arith.constant 53 : index
    %c0_254 = arith.constant 0 : index
    %699 = vector.load %arg3[%c53, %c0_254] : memref<64x512xf32, #tpu.memory_space<vmem>>, vector<1x256xf32>
    %c54 = arith.constant 54 : index
    %c0_255 = arith.constant 0 : index
    %700 = vector.load %arg3[%c54, %c0_255] : memref<64x512xf32, #tpu.memory_space<vmem>>, vector<1x256xf32>
    %cst_256 = arith.constant dense<0.000000e+00> : vector<1xf32>
    %701 = vector.multi_reduction <add>, %698, %cst_256 [1] : vector<1x256xf32> to vector<1xf32>
    %702 = vector.shape_cast %701 : vector<1xf32> to vector<1x1xf32>
    %cst_257 = arith.constant 2.560000e+02 : f32
    %703 = vector.broadcast %cst_257 : f32 to vector<1x1xf32>
    %704 = arith.divf %702, %703 : vector<1x1xf32>
    %705 = vector.broadcast %704 : vector<1x1xf32> to vector<1x256xf32>
    %706 = arith.subf %698, %705 : vector<1x256xf32>
    %707 = arith.mulf %706, %706 : vector<1x256xf32>
    %cst_258 = arith.constant dense<0.000000e+00> : vector<1xf32>
    %708 = vector.multi_reduction <add>, %707, %cst_258 [1] : vector<1x256xf32> to vector<1xf32>
    %709 = vector.shape_cast %708 : vector<1xf32> to vector<1x1xf32>
    %cst_259 = arith.constant 2.560000e+02 : f32
    %710 = vector.broadcast %cst_259 : f32 to vector<1x1xf32>
    %711 = arith.divf %709, %710 : vector<1x1xf32>
    %712 = vector.broadcast %704 : vector<1x1xf32> to vector<1x256xf32>
    %713 = arith.subf %698, %712 : vector<1x256xf32>
    %cst_260 = arith.constant 9.99999974E-6 : f32
    %714 = vector.broadcast %cst_260 : f32 to vector<1x1xf32>
    %715 = arith.addf %711, %714 : vector<1x1xf32>
    %716 = math.rsqrt %715 : vector<1x1xf32>
    %717 = vector.broadcast %716 : vector<1x1xf32> to vector<1x256xf32>
    %718 = arith.mulf %713, %717 : vector<1x256xf32>
    %719 = arith.mulf %718, %699 : vector<1x256xf32>
    %720 = arith.addf %719, %700 : vector<1x256xf32>
    %721 = arith.truncf %720 : vector<1x256xf32> to vector<1x256xbf16>
    %c2768 = arith.constant 2768 : index
    %c0_261 = arith.constant 0 : index
    %722 = vector.load %arg2[%c2768, %c0_261] : memref<3312x512xbf16, #tpu.memory_space<vmem>>, vector<256x512xbf16>
    %cst_262 = arith.constant dense<0.000000e+00> : vector<1x512xf32>
    %723 = tpu.matmul %721, %722, %cst_262 {dimension_numbers = #tpu.dot_dimension_numbers<[1], [0], [0], [1], [0, 0, 1, 1], [], []>} : vector<1x256xbf16>, vector<256x512xbf16>, vector<1x512xf32> -> vector<1x512xf32>
    %c55 = arith.constant 55 : index
    %c0_263 = arith.constant 0 : index
    %724 = vector.load %arg3[%c55, %c0_263] : memref<64x512xf32, #tpu.memory_space<vmem>>, vector<1x512xf32>
    %725 = arith.addf %723, %724 : vector<1x512xf32>
    %726 = vector.extract_strided_slice %725 {offsets = [0, 0], sizes = [1, 256], strides = [1, 1]} : vector<1x512xf32> to vector<1x256xf32>
    %727 = vector.extract_strided_slice %725 {offsets = [0, 256], sizes = [1, 128], strides = [1, 1]} : vector<1x512xf32> to vector<1x128xf32>
    %728 = vector.extract_strided_slice %725 {offsets = [0, 384], sizes = [1, 128], strides = [1, 1]} : vector<1x512xf32> to vector<1x128xf32>
    %729 = arith.truncf %727 : vector<1x128xf32> to vector<1x128xbf16>
    %730 = arith.truncf %728 : vector<1x128xf32> to vector<1x128xbf16>
    %731 = arith.extf %729 : vector<1x128xbf16> to vector<1x128xf32>
    %732 = arith.extf %730 : vector<1x128xbf16> to vector<1x128xf32>
    %cst_264 = arith.constant dense<0.000000e+00> : vector<1xf32>
    %733 = arith.mulf %731, %732 : vector<1x128xf32>
    %734 = vector.multi_reduction <add>, %733, %cst_264 [1] : vector<1x128xf32> to vector<1xf32>
    %735 = vector.shape_cast %734 : vector<1xf32> to vector<1x1xf32>
    %cst_265 = arith.constant dense<0xFF800000> : vector<1xf32>
    %736 = vector.multi_reduction <maximumf>, %735, %cst_265 [1] : vector<1x1xf32> to vector<1xf32>
    %737 = vector.shape_cast %736 : vector<1xf32> to vector<1x1xf32>
    %738 = arith.subf %735, %737 : vector<1x1xf32>
    %739 = math.exp %738 : vector<1x1xf32>
    %cst_266 = arith.constant dense<0.000000e+00> : vector<1xf32>
    %740 = vector.multi_reduction <add>, %739, %cst_266 [1] : vector<1x1xf32> to vector<1xf32>
    %741 = vector.shape_cast %740 : vector<1xf32> to vector<1x1xf32>
    %742 = arith.divf %739, %741 : vector<1x1xf32>
    %743 = arith.truncf %742 : vector<1x1xf32> to vector<1x1xbf16>
    %744 = arith.truncf %726 : vector<1x256xf32> to vector<1x256xbf16>
    %cst_267 = arith.constant dense<0.000000e+00> : vector<1x256xf32>
    %745 = tpu.matmul %743, %744, %cst_267 {dimension_numbers = #tpu.dot_dimension_numbers<[1], [0], [0], [1], [0, 0, 1, 1], [], []>} : vector<1x1xbf16>, vector<1x256xbf16>, vector<1x256xf32> -> vector<1x256xf32>
    %746 = arith.addf %745, %720 : vector<1x256xf32>
    %c56 = arith.constant 56 : index
    %c0_268 = arith.constant 0 : index
    %747 = vector.load %arg3[%c56, %c0_268] : memref<64x512xf32, #tpu.memory_space<vmem>>, vector<1x256xf32>
    %c57 = arith.constant 57 : index
    %c0_269 = arith.constant 0 : index
    %748 = vector.load %arg3[%c57, %c0_269] : memref<64x512xf32, #tpu.memory_space<vmem>>, vector<1x256xf32>
    %cst_270 = arith.constant dense<0.000000e+00> : vector<1xf32>
    %749 = vector.multi_reduction <add>, %746, %cst_270 [1] : vector<1x256xf32> to vector<1xf32>
    %750 = vector.shape_cast %749 : vector<1xf32> to vector<1x1xf32>
    %cst_271 = arith.constant 2.560000e+02 : f32
    %751 = vector.broadcast %cst_271 : f32 to vector<1x1xf32>
    %752 = arith.divf %750, %751 : vector<1x1xf32>
    %753 = vector.broadcast %752 : vector<1x1xf32> to vector<1x256xf32>
    %754 = arith.subf %746, %753 : vector<1x256xf32>
    %755 = arith.mulf %754, %754 : vector<1x256xf32>
    %cst_272 = arith.constant dense<0.000000e+00> : vector<1xf32>
    %756 = vector.multi_reduction <add>, %755, %cst_272 [1] : vector<1x256xf32> to vector<1xf32>
    %757 = vector.shape_cast %756 : vector<1xf32> to vector<1x1xf32>
    %cst_273 = arith.constant 2.560000e+02 : f32
    %758 = vector.broadcast %cst_273 : f32 to vector<1x1xf32>
    %759 = arith.divf %757, %758 : vector<1x1xf32>
    %760 = vector.broadcast %752 : vector<1x1xf32> to vector<1x256xf32>
    %761 = arith.subf %746, %760 : vector<1x256xf32>
    %cst_274 = arith.constant 9.99999974E-6 : f32
    %762 = vector.broadcast %cst_274 : f32 to vector<1x1xf32>
    %763 = arith.addf %759, %762 : vector<1x1xf32>
    %764 = math.rsqrt %763 : vector<1x1xf32>
    %765 = vector.broadcast %764 : vector<1x1xf32> to vector<1x256xf32>
    %766 = arith.mulf %761, %765 : vector<1x256xf32>
    %767 = arith.mulf %766, %747 : vector<1x256xf32>
    %768 = arith.addf %767, %748 : vector<1x256xf32>
    %769 = arith.truncf %768 : vector<1x256xf32> to vector<1x256xbf16>
    %c3024 = arith.constant 3024 : index
    %c0_275 = arith.constant 0 : index
    %770 = vector.load %arg2[%c3024, %c0_275] : memref<3312x512xbf16, #tpu.memory_space<vmem>>, vector<256x32xbf16>
    %cst_276 = arith.constant dense<0.000000e+00> : vector<1x32xf32>
    %771 = tpu.matmul %769, %770, %cst_276 {dimension_numbers = #tpu.dot_dimension_numbers<[1], [0], [0], [1], [0, 0, 1, 1], [], []>} : vector<1x256xbf16>, vector<256x32xbf16>, vector<1x32xf32> -> vector<1x32xf32>
    %c58 = arith.constant 58 : index
    %c0_277 = arith.constant 0 : index
    %772 = vector.load %arg3[%c58, %c0_277] : memref<64x512xf32, #tpu.memory_space<vmem>>, vector<1x32xf32>
    %773 = arith.addf %771, %772 : vector<1x32xf32>
    %cst_278 = arith.constant 0.000000e+00 : f32
    %774 = vector.broadcast %cst_278 : f32 to vector<1x32xf32>
    %775 = arith.maximumf %773, %774 : vector<1x32xf32>
    %776 = arith.truncf %775 : vector<1x32xf32> to vector<1x32xbf16>
    %c3280 = arith.constant 3280 : index
    %c0_279 = arith.constant 0 : index
    %777 = vector.load %arg2[%c3280, %c0_279] : memref<3312x512xbf16, #tpu.memory_space<vmem>>, vector<32x256xbf16>
    %cst_280 = arith.constant dense<0.000000e+00> : vector<1x256xf32>
    %778 = tpu.matmul %776, %777, %cst_280 {dimension_numbers = #tpu.dot_dimension_numbers<[1], [0], [0], [1], [0, 0, 1, 1], [], []>} : vector<1x32xbf16>, vector<32x256xbf16>, vector<1x256xf32> -> vector<1x256xf32>
    %c59 = arith.constant 59 : index
    %c0_281 = arith.constant 0 : index
    %779 = vector.load %arg3[%c59, %c0_281] : memref<64x512xf32, #tpu.memory_space<vmem>>, vector<1x256xf32>
    %780 = arith.addf %778, %779 : vector<1x256xf32>
    %781 = arith.addf %780, %746 : vector<1x256xf32>
    %c0_282 = arith.constant 0 : index
    %c0_283 = arith.constant 0 : index
    %c0_284 = arith.constant 0 : index
    %782 = vector.load %arg4[%c0_282, %c0_283, %c0_284] : memref<1x1x256xf32, #tpu.memory_space<vmem>>, vector<1x1x256xf32>
    %783 = vector.shape_cast %782 : vector<1x1x256xf32> to vector<1x256xf32>
    %784 = vector.shape_cast %781 : vector<1x256xf32> to vector<1x1x256xf32>
    tpu.vector_store %arg4[%c0_282, %c0_283, %c0_284], %784 {strides = array<i32>} : memref<1x1x256xf32, #tpu.memory_space<vmem>>, vector<1x1x256xf32>,
    return
  }
  func.func @transform_0(%arg0: i32) -> (i32, i32, i32) {
    %c0_i32 = arith.constant 0 : i32
    %c0_i32_0 = arith.constant 0 : i32
    %c0_i32_1 = arith.constant 0 : i32
    return %arg0, %c0_i32, %c0_i32_0 : i32, i32, i32
  }
  func.func @transform_1(%arg0: i32) -> (i32, i32) {
    %c0_i32 = arith.constant 0 : i32
    %c0_i32_0 = arith.constant 0 : i32
    %c0_i32_1 = arith.constant 0 : i32
    return %c0_i32, %c0_i32_0 : i32, i32
  }
  func.func @transform_2(%arg0: i32) -> (i32, i32) {
    %c0_i32 = arith.constant 0 : i32
    %c0_i32_0 = arith.constant 0 : i32
    %c0_i32_1 = arith.constant 0 : i32
    return %c0_i32, %c0_i32_0 : i32, i32
  }
  func.func @transform_3(%arg0: i32) -> (i32, i32, i32) {
    %c0_i32 = arith.constant 0 : i32
    %c0_i32_0 = arith.constant 0 : i32
    %c0_i32_1 = arith.constant 0 : i32
    return %arg0, %c0_i32, %c0_i32_0 : i32, i32, i32
  }
}

</mosaic_0001>

<llo_original>
// kernel: _lambda_.1
$region0: #{_lambda_.1}
  #allocation0 [shape = 'u32[]', space=smem, size = 0x4, offset = 0x4, fixed_abs, tag = 'smem constant byte address 0x4 - core index']
  #allocation1 [shape = 'u32[72,128]{1,0:T(1,128)}', space=vmem, size = 0x9000, scoped, tag = 'internal scratch']
  %s0 = inlined_call_operand.vmem [shape: f32[2,64,48], index: 0, kind: input, shape index: {}]
  %s1 = inlined_call_operand.hbm [shape: bf16[3312,512], index: 1, kind: input, shape index: {}]
  %s2 = inlined_call_operand.hbm [shape: f32[64,512], index: 2, kind: input, shape index: {}]
  %s3 = inlined_call_operand.hbm [shape: f32[2,1,256], index: 3, kind: output, shape index: {}]
  %s4 = sld [smem:[#allocation0]]
  $region53: #{_lambda_.1} parent=0
    _
  %s6 = ssub.s32 1, %s4
  %s7 = scalar_select 0, %s6, %s4
  $region1: #{_lambda_.1} parent=0
    #allocation2 [shape = 'u8[3391488]{0}', space=vmem, size = 0x33c000, scoped, tag = 'input window, operand 1, single buffered']
    #allocation3 [shape = 's32[2]{0}', space=sflag, size = 0x8, scoped, tag = 'scoped memory for _lambda_.1']
    #allocation4 [shape = 's32[2]{0}', space=sflag, size = 0x8, scoped, tag = 'scoped memory for _lambda_.1']
    #allocation5 [shape = 'u8[131072]{0}', space=vmem, size = 0x20000, scoped, tag = 'input window, operand 2, single buffered']
    #allocation6 [shape = 's32[1]{0}', space=sflag, size = 0x4, scoped, tag = 'scoped memory for _lambda_.1']
    #allocation7 [shape = 'u8[2048]{0}', space=vmem, size = 0x800, scoped, tag = 'output window, operand 0']
    %8 = vsyncpa [#allocation3], 0
    %9 = vsyncpa [#allocation6], 0
    %10 = vsyncpa [#allocation4], 0
    %s11 = scalar_lea.sflag [#allocation4], 1
    %12 = vsyncpa %s11, 0
    loop: start=0, step=1, limit=4
    $region2: #{_lambda_.1} parent=1 // loop_pre_header
      _
    $region3: #{_lambda_.1} parent=1 // loop_header
      %s14 = sphi 0, %s18
      %p15 = scmp.ge.s32.totalorder %s14, 4
      %s24 = sphi 0, %s26
      %s27 = sphi 0, %s24
      %s28 = sphi 0, %s27
      %s44 = sphi 0, %s28
      %s48 = sphi 0, %s48
      %s50 = sphi 0, %s48
      %s51 = sphi 0, %s50
      %s65 = sphi 0, %s51
      %s69 = sphi 0, %s69
      %s71 = sphi 0, %s69
      %s72 = sphi 0, %s71
      %s86 = sphi 0, %s72
      %s92 = sphi 0, %s94
      %s95 = sphi 0, %s92
      %s96 = sphi 0, %s95
      %s112 = sphi 0, %s96
    $region4: #{_lambda_.1} parent=1 // loop_header_branch
      %17 = sbr.rel (%p15) target = $region8
    $region5: #{_lambda_.1} parent=1 // loop_body
      %s19 = ssub.s32 %s14, 1
      %s20 = ssub.s32 %s14, 2
      %s21 = sadd.s32 %s14, 1
      %s22 = ssub.s32 %s14, %s21
      %p23 = scmp.eq.s32.totalorder %s22, 0
      %s25 = sadd.s32 %s24, 1
      %s26 = scalar_select %p23, %s24, %s25
      %p29 = pneg %p23
      %p30 = scmp.eq.s32.totalorder %s14, 1
      %p31 = por %p29, %p30
      %p32 = scmp.ne.s32.totalorder %s24, %s27
      %p33 = scmp.eq.s32.totalorder %s14, 0
      %p34 = por %p32, %p33
      %p35 = scmp.ne.s32.totalorder %s24, %s27
      %p36 = scmp.eq.s32.totalorder %s19, 1
      %p37 = por %p35, %p36
      %p38 = scmp.ne.s32.totalorder %s27, %s28
      %p39 = scmp.eq.s32.totalorder %s19, 0
      %p40 = por %p38, %p39
      %p41 = scmp.ne.s32.totalorder %s27, %s28
      %p42 = scmp.eq.s32.totalorder %s20, 1
      %p43 = por %p41, %p42
      %p45 = scmp.ne.s32.totalorder %s28, %s44
      %p46 = scmp.eq.s32.totalorder %s20, 0
      %p47 = por %p45, %p46
      %s49 = sadd.s32 %s48, 1
      %p52 = scmp.eq.s32.totalorder %s14, 1
      %p53 = scmp.ne.s32.totalorder %s48, %s50
      %p54 = scmp.eq.s32.totalorder %s14, 0
      %p55 = por %p53, %p54
      %p56 = scmp.ne.s32.totalorder %s48, %s50
      %p57 = scmp.eq.s32.totalorder %s19, 1
      %p58 = por %p56, %p57
      %p59 = scmp.ne.s32.totalorder %s50, %s51
      %p60 = scmp.eq.s32.totalorder %s19, 0
      %p61 = por %p59, %p60
      %p62 = scmp.ne.s32.totalorder %s50, %s51
      %p63 = scmp.eq.s32.totalorder %s20, 1
      %p64 = por %p62, %p63
      %p66 = scmp.ne.s32.totalorder %s51, %s65
      %p67 = scmp.eq.s32.totalorder %s20, 0
      %p68 = por %p66, %p67
      %s70 = sadd.s32 %s69, 1
      %p73 = scmp.eq.s32.totalorder %s14, 1
      %p74 = scmp.ne.s32.totalorder %s69, %s71
      %p75 = scmp.eq.s32.totalorder %s14, 0
      %p76 = por %p74, %p75
      %p77 = scmp.ne.s32.totalorder %s69, %s71
      %p78 = scmp.eq.s32.totalorder %s19, 1
      %p79 = por %p77, %p78
      %p80 = scmp.ne.s32.totalorder %s71, %s72
      %p81 = scmp.eq.s32.totalorder %s19, 0
      %p82 = por %p80, %p81
      %p83 = scmp.ne.s32.totalorder %s71, %s72
      %p84 = scmp.eq.s32.totalorder %s20, 1
      %p85 = por %p83, %p84
      %p87 = scmp.ne.s32.totalorder %s72, %s86
      %p88 = scmp.eq.s32.totalorder %s20, 0
      %p89 = por %p87, %p88
      %s90 = ssub.s32 %s14, %s21
      %p91 = scmp.eq.s32.totalorder %s90, 0
      %s93 = sadd.s32 %s92, 1
      %s94 = scalar_select %p91, %s92, %s93
      %p97 = pneg %p91
      %p98 = scmp.eq.s32.totalorder %s14, 1
      %p99 = por %p97, %p98
      %p100 = scmp.ne.s32.totalorder %s92, %s95
      %p101 = scmp.eq.s32.totalorder %s14, 0
      %p102 = por %p100, %p101
      %p103 = scmp.ne.s32.totalorder %s92, %s95
      %p104 = scmp.eq.s32.totalorder %s19, 1
      %p105 = por %p103, %p104
      %p106 = scmp.ne.s32.totalorder %s95, %s96
      %p107 = scmp.eq.s32.totalorder %s19, 0
      %p108 = por %p106, %p107
      %p109 = scmp.ne.s32.totalorder %s95, %s96
      %p110 = scmp.eq.s32.totalorder %s20, 1
      %p111 = por %p109, %p110
      %p113 = scmp.ne.s32.totalorder %s96, %s112
      %p114 = scmp.eq.s32.totalorder %s20, 0
      %p115 = por %p113, %p114
      %p116 = scmp.le.s32.totalorder 1, %s14
      %p117 = scmp.lt.s32.totalorder %s14, 3
      %p118 = pnand %p116, %p117
      %p119 = pneg %p118
      // Predicated region
      $region9: #{_lambda_.1} parent=5 // pred_check
        _
      $region10: #{_lambda_.1} parent=5 // pred_check_branch
        %121 = sbr.rel (%p118) target = $region12
      $region11: #{_lambda_.1} parent=5 // pred_region
        %s122 = ssub.s32 %s14, 1
        // Predicated region
        $region13: #{_lambda_.1} parent=11 // pred_check
          %p123 = pneg %p61
        $region14: #{_lambda_.1} parent=11 // pred_check_branch
          %125 = sbr.rel (%p123) target = $region16
        $region15: #{_lambda_.1} parent=11 // pred_region
          %127 = vsyncadd [#allocation3], 0
          %s128 = sshll.u32 %s1, 4
          %s129 = int_to_ptr.hbm [resolvable:$true] %s128
          %s130 = sshll.u32 [#allocation2], 4
          %s131 = int_to_ptr.vmem [resolvable:$true] %s130
          %136 = dma.hbm_to_vmem [thread:$0]  %s129, 105984, %s131, [#allocation3], 256, 256, 16
        $region16: #{_lambda_.1} parent=11 // pred_fallthru
          _
        // Predicated region
        $region17: #{_lambda_.1} parent=11 // pred_check
          %p137 = pneg %p82
        $region18: #{_lambda_.1} parent=11 // pred_check_branch
          %139 = sbr.rel (%p137) target = $region20
        $region19: #{_lambda_.1} parent=11 // pred_region
          %141 = vsyncadd [#allocation6], 0
          %s142 = sshll.u32 %s2, 4
          %s143 = int_to_ptr.hbm [resolvable:$true] %s142
          %s144 = sshll.u32 [#allocation5], 4
          %s145 = int_to_ptr.vmem [resolvable:$true] %s144
          %150 = dma.hbm_to_vmem [thread:$0]  %s143, 4096, %s145, [#allocation6], 512, 512, 32
        $region20: #{_lambda_.1} parent=11 // pred_fallthru
          _
      $region12: #{_lambda_.1} parent=5 // pred_fallthru
        _
      %p151 = scmp.lt.s32.totalorder %s14, 2
      // Predicated region
      $region21: #{_lambda_.1} parent=5 // pred_check
        %p152 = pneg %p151
      $region22: #{_lambda_.1} parent=5 // pred_check_branch
        %154 = sbr.rel (%p152) target = $region24
      $region23: #{_lambda_.1} parent=5 // pred_region
        // Predicated region
        $region25: #{_lambda_.1} parent=23 // pred_check
          %p155 = pneg %p34
        $region26: #{_lambda_.1} parent=23 // pred_check_branch
          %157 = sbr.rel (%p155) target = $region28
        $region27: #{_lambda_.1} parent=23 // pred_region
          %p158 = scmp.lt.s32.totalorder %s14, 1
          %s159 = scalar_select %p158, %s14, 1
          %s160 = smul.addr %s159, 8
          %s161 = smul.addr %s160, 8
          %s162 = scalar_lea.vmem %s0, %s161
        $region28: #{_lambda_.1} parent=23 // pred_fallthru
          _
      $region24: #{_lambda_.1} parent=5 // pred_fallthru
        _
      %p163 = scmp.le.s32.totalorder 1, %s14
      %p164 = scmp.lt.s32.totalorder %s14, 3
      %p165 = pnand %p163, %p164
      %p166 = pneg %p165
      // Predicated region
      $region29: #{_lambda_.1} parent=5 // pred_check
        _
      $region30: #{_lambda_.1} parent=5 // pred_check_branch
        %168 = sbr.rel (%p165) target = $region32
      $region31: #{_lambda_.1} parent=5 // pred_region
        %s169 = ssub.s32 %s14, 1
        // Predicated region
        $region33: #{_lambda_.1} parent=31 // pred_check
          %p170 = pneg %p61
        $region34: #{_lambda_.1} parent=31 // pred_check_branch
          %172 = sbr.rel (%p170) target = $region36
        $region35: #{_lambda_.1} parent=31 // pred_region
          %174 = dma.done [#allocation3], 105984
        $region36: #{_lambda_.1} parent=31 // pred_fallthru
          _
        // Predicated region
        $region37: #{_lambda_.1} parent=31 // pred_check
          %p175 = pneg %p82
        $region38: #{_lambda_.1} parent=31 // pred_check_branch
          %177 = sbr.rel (%p175) target = $region40
        $region39: #{_lambda_.1} parent=31 // pred_region
          %179 = dma.done [#allocation6], 4096
        $region40: #{_lambda_.1} parent=31 // pred_fallthru
          _
        %p180 = scmp.lt.s32.totalorder %s19, 1
        %s181 = scalar_select %p180, %s19, 1
        %s182 = smul.addr %s181, 8
        %s183 = smul.addr %s182, 8
        %s184 = scalar_lea.vmem %s0, %s183
        %p185 = pneg %p40
        %p186 = pneg %p37
        %p187 = pneg %p61
        %p188 = pneg %p58
        %p189 = pneg %p82
        %p190 = pneg %p79
        %p191 = pneg %p108
        %p192 = pneg %p105
        %s193 = sand.u32 %s95, 1
        %s194 = scalar_lea.sflag [#allocation4], %s193
        %s195 = sand.u32 %s95, 1
        %s196 = smul.addr %s195, 2
        %s197 = scalar_lea.vmem [#allocation7], %s196
        %p198 = scmp.lt.s32.totalorder %s19, 1
        %s199 = scalar_select %p198, %s19, 1
        %s200 = smul.addr %s199, 8
        %s201 = smul.addr %s200, 8
        %s202 = scalar_lea.vmem %s0, %s201
        %v204 = vld [vmem:[%s202] sm:$0xff]
        %v205 = vld [vmem:[%s202 + $0x8] sm:$0xff]
        %v206 = vld [vmem:[%s202 + $0x10] sm:$0xff]
        %v207 = vld [vmem:[%s202 + $0x18] sm:$0xff]
        %v208 = vld [vmem:[%s202 + $0x20] sm:$0xff]
        %v209 = vld [vmem:[%s202 + $0x28] sm:$0xff]
        %v210 = vld [vmem:[%s202 + $0x30] sm:$0xff]
        %v211 = vld [vmem:[%s202 + $0x38] sm:$0xff]
        %v212 = vld [vmem:[#allocation5] ss:$0 sm:$0xff]
        %v213 = vpack.c.bf16 %v205, %v204
        %v214 = vpack.c.bf16 %v207, %v206
        %v215 = vpack.c.bf16 %v209, %v208
        %v216 = vpack.c.bf16 %v211, %v210
        %v217 = vld [vmem:[#allocation2] sm:$0xf]
        %v218 = vld [vmem:[#allocation2 + $0x10] sm:$0xf]
        %v219 = vld [vmem:[#allocation2 + $0x20] sm:$0xf]
        %v220 = vld [vmem:[#allocation2 + $0x30] sm:$0xf]
        %v221 = vld [vmem:[#allocation2 + $0x40] sm:$0xf]
        %v222 = vld [vmem:[#allocation2 + $0x50] sm:$0xf]
        %v229 = vunpack.c.l.b16 %v217
        %v230 = vunpack.c.l.b16 %v218
        %v231 = vunpack.c.l.b16 %v219
        %v232 = vunpack.c.l.b16 %v220
        %v233 = vunpack.c.l.b16 %v221
        %v234 = vunpack.c.l.b16 %v222
        %v235 = vpack.c.b16 %v230, %v229
        %v236 = vpack.c.b16 %v232, %v231
        %v237 = vpack.c.b16 %v234, %v233
        %vm241 = vcmask 392192
        %v243 = vsel %vm241, %v213, 0
        %v246 = vsel %vm241, %v214, 0
        %v249 = vsel %vm241, %v215, 0
        %v252 = vsel %vm241, %v216, 0
        %254 = vmatpush.bf16.msra.mxu0 0
        %255 = vmatpush.bf16.msra.mxu0 0
        %256 = vmatpush.bf16.msra.mxu0 0
        %257 = vmatpush.bf16.msra.mxu0 0
        %258 = vmatpush.bf16.msra.mxu0 0
        %259 = vmatpush.bf16.msra.mxu0 %v237
        %260 = vmatpush.bf16.msra.mxu0 %v236
        %261 = vmatpush.bf16.msra.mxu0 %v235
        %262 = vmatmul.bf16.gmra.mxu0 %v243
        %v263 = vpop.f32.mrf.mxu0
        %v264 = vadd.f32 %v212, %v263
        %v265 = vpop.f32.mrf.mxu0
        %v266 = vadd.f32 %v212, %v265
        %267 = vmatmul.bf16.gmra.mxu0 %v246
        %v268 = vpop.f32.mrf.mxu0
        %v269 = vadd.f32 %v212, %v268
        %v270 = vpop.f32.mrf.mxu0
        %v271 = vadd.f32 %v212, %v270
        %272 = vmatmul.bf16.gmra.mxu0 %v249
        %v273 = vpop.f32.mrf.mxu0
        %v274 = vadd.f32 %v212, %v273
        %v275 = vpop.f32.mrf.mxu0
        %v276 = vadd.f32 %v212, %v275
        %277 = vmatmul.bf16.gmra.mxu0 %v252
        %v278 = vpop.f32.mrf.mxu0
        %v279 = vadd.f32 %v212, %v278
        %v280 = vpop.f32.mrf.mxu0
        %v281 = vadd.f32 %v212, %v280
        %282 = vdwg.mxu0
        %v283 = vld [vmem:[#allocation5 + $0x1] ss:$0 sm:$0xff]
        %v284 = vld [vmem:[#allocation5 + $0x2] ss:$0 sm:$0xff]
        %vm285 = vcmask 261120
        %v286 = vsel %vm285, %v264, 0.0
        %287 = vadd.xlane.f32.xlu0 %v286
        %v288 = vpop.xlane.xlu0 %287
        %v289 = vsel %vm285, %v266, 0.0
        %290 = vadd.xlane.f32.xlu0 %v289
        %v291 = vpop.xlane.xlu0 %290
        %v292 = vsel %vm285, %v269, 0.0
        %293 = vadd.xlane.f32.xlu0 %v292
        %v294 = vpop.xlane.xlu0 %293
        %v295 = vsel %vm285, %v271, 0.0
        %296 = vadd.xlane.f32.xlu0 %v295
        %v297 = vpop.xlane.xlu0 %296
        %v298 = vsel %vm285, %v274, 0.0
        %299 = vadd.xlane.f32.xlu0 %v298
        %v300 = vpop.xlane.xlu0 %299
        %v301 = vsel %vm285, %v276, 0.0
        %302 = vadd.xlane.f32.xlu0 %v301
        %v303 = vpop.xlane.xlu0 %302
        %v304 = vsel %vm285, %v279, 0.0
        %305 = vadd.xlane.f32.xlu0 %v304
        %v306 = vpop.xlane.xlu0 %305
        %v307 = vsel %vm285, %v281, 0.0
        %308 = vadd.xlane.f32.xlu0 %v307
        %v309 = vpop.xlane.xlu0 %308
        %v310 = vrcp.pop 32.0
        %v311 = vmul.f32 32.0, %v310
        %v312 = vsub.f32 1.0, %v311
        %v313 = vmul.f32 %v310, %v312
        %v314 = vadd.f32 %v310, %v313
        %vm315 = vweird.f32 %v310
        %v316 = vsel %vm315, %v310, %v314
        %v317 = vmul.f32 %v288, %v316
        %v318 = vmul.f32 %v291, %v316
        %v319 = vmul.f32 %v294, %v316
        %v320 = vmul.f32 %v297, %v316
        %v321 = vmul.f32 %v300, %v316
        %v322 = vmul.f32 %v303, %v316
        %v323 = vmul.f32 %v306, %v316
        %v324 = vmul.f32 %v309, %v316
        %v325 = vsub.f32 %v264, %v317
        %v326 = vsub.f32 %v266, %v318
        %v327 = vsub.f32 %v269, %v319
        %v328 = vsub.f32 %v271, %v320
        %v329 = vsub.f32 %v274, %v321
        %v330 = vsub.f32 %v276, %v322
        %v331 = vsub.f32 %v279, %v323
        %v332 = vsub.f32 %v281, %v324
        %v333 = vmul.f32 %v325, %v325
        %v334 = vmul.f32 %v326, %v326
        %v335 = vmul.f32 %v327, %v327
        %v336 = vmul.f32 %v328, %v328
        %v337 = vmul.f32 %v329, %v329
        %v338 = vmul.f32 %v330, %v330
        %v339 = vmul.f32 %v331, %v331
        %v340 = vmul.f32 %v332, %v332
        %v341 = vsel %vm285, %v333, 0.0
        %342 = vadd.xlane.f32.xlu0 %v341
        %v343 = vpop.xlane.xlu0 %342
        %v344 = vsel %vm285, %v334, 0.0
        %345 = vadd.xlane.f32.xlu0 %v344
        %v346 = vpop.xlane.xlu0 %345
        %v347 = vsel %vm285, %v335, 0.0
        %348 = vadd.xlane.f32.xlu0 %v347
        %v349 = vpop.xlane.xlu0 %348
        %v350 = vsel %vm285, %v336, 0.0
        %351 = vadd.xlane.f32.xlu0 %v350
        %v352 = vpop.xlane.xlu0 %351
        %v353 = vsel %vm285, %v337, 0.0
        %354 = vadd.xlane.f32.xlu0 %v353
        %v355 = vpop.xlane.xlu0 %354
        %v356 = vsel %vm285, %v338, 0.0
        %357 = vadd.xlane.f32.xlu0 %v356
        %v358 = vpop.xlane.xlu0 %357
        %v359 = vsel %vm285, %v339, 0.0
        %360 = vadd.xlane.f32.xlu0 %v359
        %v361 = vpop.xlane.xlu0 %360
        %v362 = vsel %vm285, %v340, 0.0
        %363 = vadd.xlane.f32.xlu0 %v362
        %v364 = vpop.xlane.xlu0 %363
        %v365 = vmul.f32 %v343, %v316
        %v366 = vmul.f32 %v346, %v316
        %v367 = vmul.f32 %v349, %v316
        %v368 = vmul.f32 %v352, %v316
        %v369 = vmul.f32 %v355, %v316
        %v370 = vmul.f32 %v358, %v316
        %v371 = vmul.f32 %v361, %v316
        %v372 = vmul.f32 %v364, %v316
        %v373 = vadd.f32 %v365, 1e-05
        %v374 = vadd.f32 %v366, 1e-05
        %v375 = vadd.f32 %v367, 1e-05
        %v376 = vadd.f32 %v368, 1e-05
        %v377 = vadd.f32 %v369, 1e-05
        %v378 = vadd.f32 %v370, 1e-05
        %v379 = vadd.f32 %v371, 1e-05
        %v380 = vadd.f32 %v372, 1e-05
        %v381 = vrsqrt.pop %v373
        %v382 = vmul.f32 %v381, %v373
        %v383 = vmul.f32 %v382, %v381
        %v384 = vmul.f32 0.5, %v383
        %v385 = vsub.f32 1.5, %v384
        %v386 = vmul.f32 %v381, %v385
        %vm387 = vweird.f32 %v373
        %vm388 = vweird.f32 %v381
        %vm389 = vmor %vm387, %vm388
        %v390 = vsel %vm389, %v381, %v386
        %v391 = vrsqrt.pop %v374
        %v392 = vmul.f32 %v391, %v374
        %v393 = vmul.f32 %v392, %v391
        %v394 = vmul.f32 0.5, %v393
        %v395 = vsub.f32 1.5, %v394
        %v396 = vmul.f32 %v391, %v395
        %vm397 = vweird.f32 %v374
        %vm398 = vweird.f32 %v391
        %vm399 = vmor %vm397, %vm398
        %v400 = vsel %vm399, %v391, %v396
        %v401 = vrsqrt.pop %v375
        %v402 = vmul.f32 %v401, %v375
        %v403 = vmul.f32 %v402, %v401
        %v404 = vmul.f32 0.5, %v403
        %v405 = vsub.f32 1.5, %v404
        %v406 = vmul.f32 %v401, %v405
        %vm407 = vweird.f32 %v375
        %vm408 = vweird.f32 %v401
        %vm409 = vmor %vm407, %vm408
        %v410 = vsel %vm409, %v401, %v406
        %v411 = vrsqrt.pop %v376
        %v412 = vmul.f32 %v411, %v376
        %v413 = vmul.f32 %v412, %v411
        %v414 = vmul.f32 0.5, %v413
        %v415 = vsub.f32 1.5, %v414
        %v416 = vmul.f32 %v411, %v415
        %vm417 = vweird.f32 %v376
        %vm418 = vweird.f32 %v411
        %vm419 = vmor %vm417, %vm418
        %v420 = vsel %vm419, %v411, %v416
        %v421 = vrsqrt.pop %v377
        %v422 = vmul.f32 %v421, %v377
        %v423 = vmul.f32 %v422, %v421
        %v424 = vmul.f32 0.5, %v423
        %v425 = vsub.f32 1.5, %v424
        %v426 = vmul.f32 %v421, %v425
        %vm427 = vweird.f32 %v377
        %vm428 = vweird.f32 %v421
        %vm429 = vmor %vm427, %vm428
        %v430 = vsel %vm429, %v421, %v426
        %v431 = vrsqrt.pop %v378
        %v432 = vmul.f32 %v431, %v378
        %v433 = vmul.f32 %v432, %v431
        %v434 = vmul.f32 0.5, %v433
        %v435 = vsub.f32 1.5, %v434
        %v436 = vmul.f32 %v431, %v435
        %vm437 = vweird.f32 %v378
        %vm438 = vweird.f32 %v431
        %vm439 = vmor %vm437, %vm438
        %v440 = vsel %vm439, %v431, %v436
        %v441 = vrsqrt.pop %v379
        %v442 = vmul.f32 %v441, %v379
        %v443 = vmul.f32 %v442, %v441
        %v444 = vmul.f32 0.5, %v443
        %v445 = vsub.f32 1.5, %v444
        %v446 = vmul.f32 %v441, %v445
        %vm447 = vweird.f32 %v379
        %vm448 = vweird.f32 %v441
        %vm449 = vmor %vm447, %vm448
        %v450 = vsel %vm449, %v441, %v446
        %v451 = vrsqrt.pop %v380
        %v452 = vmul.f32 %v451, %v380
        %v453 = vmul.f32 %v452, %v451
        %v454 = vmul.f32 0.5, %v453
        %v455 = vsub.f32 1.5, %v454
        %v456 = vmul.f32 %v451, %v455
        %vm457 = vweird.f32 %v380
        %vm458 = vweird.f32 %v451
        %vm459 = vmor %vm457, %vm458
        %v460 = vsel %vm459, %v451, %v456
        %v461 = vmul.f32 %v325, %v390
        %v462 = vmul.f32 %v326, %v400
        %v463 = vmul.f32 %v327, %v410
        %v464 = vmul.f32 %v328, %v420
        %v465 = vmul.f32 %v329, %v430
        %v466 = vmul.f32 %v330, %v440
        %v467 = vmul.f32 %v331, %v450
        %v468 = vmul.f32 %v332, %v460
        %v469 = vmul.f32 %v461, %v283
        %v470 = vmul.f32 %v462, %v283
        %v471 = vmul.f32 %v463, %v283
        %v472 = vmul.f32 %v464, %v283
        %v473 = vmul.f32 %v465, %v283
        %v474 = vmul.f32 %v466, %v283
        %v475 = vmul.f32 %v467, %v283
        %v476 = vmul.f32 %v468, %v283
        %v477 = vadd.f32 %v469, %v284
        %v478 = vadd.f32 %v470, %v284
        %v479 = vadd.f32 %v471, %v284
        %v480 = vadd.f32 %v472, %v284
        %v481 = vadd.f32 %v473, %v284
        %v482 = vadd.f32 %v474, %v284
        %v483 = vadd.f32 %v475, %v284
        %v484 = vadd.f32 %v476, %v284
        %v485 = vpack.c.bf16 %v478, %v477
        %v486 = vpack.c.bf16 %v480, %v479
        %v487 = vpack.c.bf16 %v482, %v481
        %v488 = vpack.c.bf16 %v484, %v483
        %v489 = vld [vmem:[#allocation2 + $0x60] sm:$0xff]
        %v490 = vld [vmem:[#allocation2 + $0x68] sm:$0xf]
        %v491 = vld [vmem:[#allocation2 + $0x70] sm:$0xff]
        %v492 = vld [vmem:[#allocation2 + $0x78] sm:$0xf]
        %v493 = vld [vmem:[#allocation2 + $0x80] sm:$0xff]
        %v494 = vld [vmem:[#allocation2 + $0x88] sm:$0xf]
        %v495 = vld [vmem:[#allocation2 + $0x90] sm:$0xff]
        %v496 = vld [vmem:[#allocation2 + $0x98] sm:$0xf]
        %s497 = scalar_lea.vmem [#allocation5], 3
        %v498 = vld [vmem:[%s497] ss:$8 sm:$0x7]
        %v500 = vperm.slane %v498, 0
        %v501 = vperm.slane %v498, 1
        %v502 = vperm.slane %v498, 2
        %v514 = vunpack.c.l.b16 %v489
        %v515 = vunpack.c.h.b16 %v489
        %v516 = vunpack.c.l.b16 %v490
        %v517 = vunpack.c.l.b16 %v491
        %v518 = vunpack.c.h.b16 %v491
        %v519 = vunpack.c.l.b16 %v492
        %v520 = vunpack.c.l.b16 %v493
        %v521 = vunpack.c.h.b16 %v493
        %v522 = vunpack.c.l.b16 %v494
        %v523 = vunpack.c.l.b16 %v495
        %v524 = vunpack.c.h.b16 %v495
        %v525 = vunpack.c.l.b16 %v496
        %v526 = vpack.c.b16 %v517, %v514
        %v527 = vpack.c.b16 %v518, %v515
        %v528 = vpack.c.b16 %v519, %v516
        %v529 = vpack.c.b16 %v523, %v520
        %v530 = vpack.c.b16 %v524, %v521
        %v531 = vpack.c.b16 %v525, %v522
        %v539 = vsel %vm285, %v485, 0
        %v542 = vsel %vm285, %v486, 0
        %v545 = vsel %vm285, %v487, 0
        %v548 = vsel %vm285, %v488, 0
        %550 = vmatpush.bf16.msra.mxu0 0
        %551 = vmatpush.bf16.msra.mxu0 0
        %552 = vmatpush.bf16.msra.mxu0 0
        %553 = vmatpush.bf16.msra.mxu0 0
        %554 = vmatpush.bf16.msra.mxu0 0
        %555 = vmatpush.bf16.msra.mxu0 0
        %556 = vmatpush.bf16.msra.mxu0 %v529
        %557 = vmatpush.bf16.msra.mxu0 %v526
        %558 = vmatmul.bf16.gmra.mxu0 %v539
        %v559 = vpop.f32.mrf.mxu0
        %v560 = vadd.f32 %v500, %v559
        %v561 = vpop.f32.mrf.mxu0
        %v562 = vadd.f32 %v500, %v561
        %563 = vmatmul.bf16.gmra.mxu0 %v542
        %v564 = vpop.f32.mrf.mxu0
        %v565 = vadd.f32 %v500, %v564
        %v566 = vpop.f32.mrf.mxu0
        %v567 = vadd.f32 %v500, %v566
        %568 = vmatmul.bf16.gmra.mxu0 %v545
        %v569 = vpop.f32.mrf.mxu0
        %v570 = vadd.f32 %v500, %v569
        %v571 = vpop.f32.mrf.mxu0
        %v572 = vadd.f32 %v500, %v571
        %573 = vmatmul.bf16.gmra.mxu0 %v548
        %v574 = vpop.f32.mrf.mxu0
        %v575 = vadd.f32 %v500, %v574
        %v576 = vpop.f32.mrf.mxu0
        %v577 = vadd.f32 %v500, %v576
        %578 = vdwg.mxu0
        %579 = vmatpush.bf16.msra.mxu0 0
        %580 = vmatpush.bf16.msra.mxu0 0
        %581 = vmatpush.bf16.msra.mxu0 0
        %582 = vmatpush.bf16.msra.mxu0 0
        %583 = vmatpush.bf16.msra.mxu0 0
        %584 = vmatpush.bf16.msra.mxu0 0
        %585 = vmatpush.bf16.msra.mxu0 %v530
        %586 = vmatpush.bf16.msra.mxu0 %v527
        %587 = vmatmul.bf16.gmra.mxu0 %v539
        %v588 = vpop.f32.mrf.mxu0
        %v589 = vadd.f32 %v501, %v588
        %v590 = vpop.f32.mrf.mxu0
        %v591 = vadd.f32 %v501, %v590
        %592 = vmatmul.bf16.gmra.mxu0 %v542
        %v593 = vpop.f32.mrf.mxu0
        %v594 = vadd.f32 %v501, %v593
        %v595 = vpop.f32.mrf.mxu0
        %v596 = vadd.f32 %v501, %v595
        %597 = vmatmul.bf16.gmra.mxu0 %v545
        %v598 = vpop.f32.mrf.mxu0
        %v599 = vadd.f32 %v501, %v598
        %v600 = vpop.f32.mrf.mxu0
        %v601 = vadd.f32 %v501, %v600
        %602 = vmatmul.bf16.gmra.mxu0 %v548
        %v603 = vpop.f32.mrf.mxu0
        %v604 = vadd.f32 %v501, %v603
        %v605 = vpop.f32.mrf.mxu0
        %v606 = vadd.f32 %v501, %v605
        %607 = vdwg.mxu0
        %608 = vmatpush.bf16.msra.mxu0 0
        %609 = vmatpush.bf16.msra.mxu0 0
        %610 = vmatpush.bf16.msra.mxu0 0
        %611 = vmatpush.bf16.msra.mxu0 0
        %612 = vmatpush.bf16.msra.mxu0 0
        %613 = vmatpush.bf16.msra.mxu0 0
        %614 = vmatpush.bf16.msra.mxu0 %v531
        %615 = vmatpush.bf16.msra.mxu0 %v528
        %616 = vmatmul.bf16.gmra.mxu0 %v539
        %v617 = vpop.f32.mrf.mxu0
        %v618 = vadd.f32 %v502, %v617
        %v619 = vpop.f32.mrf.mxu0
        %v620 = vadd.f32 %v502, %v619
        %621 = vmatmul.bf16.gmra.mxu0 %v542
        %v622 = vpop.f32.mrf.mxu0
        %v623 = vadd.f32 %v502, %v622
        %v624 = vpop.f32.mrf.mxu0
        %v625 = vadd.f32 %v502, %v624
        %626 = vmatmul.bf16.gmra.mxu0 %v545
        %v627 = vpop.f32.mrf.mxu0
        %v628 = vadd.f32 %v502, %v627
        %v629 = vpop.f32.mrf.mxu0
        %v630 = vadd.f32 %v502, %v629
        %631 = vmatmul.bf16.gmra.mxu0 %v548
        %v632 = vpop.f32.mrf.mxu0
        %v633 = vadd.f32 %v502, %v632
        %v634 = vpop.f32.mrf.mxu0
        %v635 = vadd.f32 %v502, %v634
        %636 = vdwg.mxu0
        %v637 = vpack.c.bf16 %v591, %v589
        %v638 = vpack.c.bf16 %v596, %v594
        %v639 = vpack.c.bf16 %v601, %v599
        %v640 = vpack.c.bf16 %v606, %v604
        %v641 = vpack.c.bf16 %v620, %v618
        %v642 = vpack.c.bf16 %v625, %v623
        %v643 = vpack.c.bf16 %v630, %v628
        %v644 = vpack.c.bf16 %v635, %v633
        %645 = vmatpush.bf16.xpose.msra.mxu0 0
        %646 = vmatpush.bf16.xpose.msra.mxu0 0
        %647 = vmatpush.bf16.xpose.msra.mxu0 0
        %648 = vmatpush.bf16.xpose.msra.mxu0 0
        %649 = vmatpush.bf16.xpose.msra.mxu0 %v644
        %650 = vmatpush.bf16.xpose.msra.mxu0 %v643
        %651 = vmatpush.bf16.xpose.msra.mxu0 %v642
        %652 = vmatpush.bf16.xpose.msra.mxu0 %v641
        %653 = vmatmul.bf16.gmra.mxu0 %v637
        %v654 = vpop.f32.mrf.mxu0
        %v655 = vadd.f32 0.0, %v654
        %v656 = vpop.f32.mrf.mxu0
        %v657 = vadd.f32 0.0, %v656
        %658 = vmatmul.bf16.gmra.mxu0 %v638
        %v659 = vpop.f32.mrf.mxu0
        %v660 = vadd.f32 0.0, %v659
        %v661 = vpop.f32.mrf.mxu0
        %v662 = vadd.f32 0.0, %v661
        %663 = vmatmul.bf16.gmra.mxu0 %v639
        %v664 = vpop.f32.mrf.mxu0
        %v665 = vadd.f32 0.0, %v664
        %v666 = vpop.f32.mrf.mxu0
        %v667 = vadd.f32 0.0, %v666
        %668 = vmatmul.bf16.gmra.mxu0 %v640
        %v669 = vpop.f32.mrf.mxu0
        %v670 = vadd.f32 0.0, %v669
        %v671 = vpop.f32.mrf.mxu0
        %v672 = vadd.f32 0.0, %v671
        %673 = vdwg.mxu0
        %vm674 = vcmask 523264
        %v675 = vsel %vm674, %v655, -inf
        %676 = vmax.xlane.f32.xlu0 %v675
        %v677 = vpop.xlane.xlu0 %676
        %v678 = vsel %vm674, %v657, -inf
        %679 = vmax.xlane.f32.xlu0 %v678
        %v680 = vpop.xlane.xlu0 %679
        %v681 = vsel %vm674, %v660, -inf
        %682 = vmax.xlane.f32.xlu0 %v681
        %v683 = vpop.xlane.xlu0 %682
        %v684 = vsel %vm674, %v662, -inf
        %685 = vmax.xlane.f32.xlu0 %v684
        %v686 = vpop.xlane.xlu0 %685
        %v687 = vsel %vm674, %v665, -inf
        %688 = vmax.xlane.f32.xlu0 %v687
        %v689 = vpop.xlane.xlu0 %688
        %v690 = vsel %vm674, %v667, -inf
        %691 = vmax.xlane.f32.xlu0 %v690
        %v692 = vpop.xlane.xlu0 %691
        %v693 = vsel %vm674, %v670, -inf
        %694 = vmax.xlane.f32.xlu0 %v693
        %v695 = vpop.xlane.xlu0 %694
        %v696 = vsel %vm674, %v672, -inf
        %697 = vmax.xlane.f32.xlu0 %v696
        %v698 = vpop.xlane.xlu0 %697
        %v699 = vsub.f32 %v655, %v677
        %v700 = vsub.f32 %v657, %v680
        %v701 = vsub.f32 %v660, %v683
        %v702 = vsub.f32 %v662, %v686
        %v703 = vsub.f32 %v665, %v689
        %v704 = vsub.f32 %v667, %v692
        %v705 = vsub.f32 %v670, %v695
        %v706 = vsub.f32 %v672, %v698
        %v707 = vmul.f32 %v699, 1.442695
        %v708 = vpow.pop %v707
        %v709 = vmul.f32 %v700, 1.442695
        %v710 = vpow.pop %v709
        %v711 = vmul.f32 %v701, 1.442695
        %v712 = vpow.pop %v711
        %v713 = vmul.f32 %v702, 1.442695
        %v714 = vpow.pop %v713
        %v715 = vmul.f32 %v703, 1.442695
        %v716 = vpow.pop %v715
        %v717 = vmul.f32 %v704, 1.442695
        %v718 = vpow.pop %v717
        %v719 = vmul.f32 %v705, 1.442695
        %v720 = vpow.pop %v719
        %v721 = vmul.f32 %v706, 1.442695
        %v722 = vpow.pop %v721
        %v723 = vsel %vm674, %v708, 0.0
        %724 = vadd.xlane.f32.xlu0 %v723
        %v725 = vpop.xlane.xlu0 %724
        %v726 = vsel %vm674, %v710, 0.0
        %727 = vadd.xlane.f32.xlu0 %v726
        %v728 = vpop.xlane.xlu0 %727
        %v729 = vsel %vm674, %v712, 0.0
        %730 = vadd.xlane.f32.xlu0 %v729
        %v731 = vpop.xlane.xlu0 %730
        %v732 = vsel %vm674, %v714, 0.0
        %733 = vadd.xlane.f32.xlu0 %v732
        %v734 = vpop.xlane.xlu0 %733
        %v735 = vsel %vm674, %v716, 0.0
        %736 = vadd.xlane.f32.xlu0 %v735
        %v737 = vpop.xlane.xlu0 %736
        %v738 = vsel %vm674, %v718, 0.0
        %739 = vadd.xlane.f32.xlu0 %v738
        %v740 = vpop.xlane.xlu0 %739
        %v741 = vsel %vm674, %v720, 0.0
        %742 = vadd.xlane.f32.xlu0 %v741
        %v743 = vpop.xlane.xlu0 %742
        %v744 = vsel %vm674, %v722, 0.0
        %745 = vadd.xlane.f32.xlu0 %v744
        %v746 = vpop.xlane.xlu0 %745
        %v747 = vrcp.pop %v725
        %v748 = vmul.f32 %v725, %v747
        %v749 = vsub.f32 1.0, %v748
        %v750 = vmul.f32 %v747, %v749
        %v751 = vadd.f32 %v747, %v750
        %vm752 = vweird.f32 %v725
        %vm753 = vweird.f32 %v747
        %vm754 = vmor %vm752, %vm753
        %v755 = vsel %vm754, %v747, %v751
        %v756 = vand.u32 2147483647, %v725
        %vm757 = vcmp.eq.f32.partialorder %v756, 8.507059e+37
        %v758 = vand.u32 %v725, 2147483648
        %v759 = vor.u32 1.1754944e-38, %v758
        %v760 = vsel %vm757, %v759, %v755
        %v761 = vmul.f32 %v708, %v760
        %v762 = vrcp.pop %v728
        %v763 = vmul.f32 %v728, %v762
        %v764 = vsub.f32 1.0, %v763
        %v765 = vmul.f32 %v762, %v764
        %v766 = vadd.f32 %v762, %v765
        %vm767 = vweird.f32 %v728
        %vm768 = vweird.f32 %v762
        %vm769 = vmor %vm767, %vm768
        %v770 = vsel %vm769, %v762, %v766
        %v771 = vand.u32 2147483647, %v728
        %vm772 = vcmp.eq.f32.partialorder %v771, 8.507059e+37
        %v773 = vand.u32 %v728, 2147483648
        %v774 = vor.u32 1.1754944e-38, %v773
        %v775 = vsel %vm772, %v774, %v770
        %v776 = vmul.f32 %v710, %v775
        %v777 = vrcp.pop %v731
        %v778 = vmul.f32 %v731, %v777
        %v779 = vsub.f32 1.0, %v778
        %v780 = vmul.f32 %v777, %v779
        %v781 = vadd.f32 %v777, %v780
        %vm782 = vweird.f32 %v731
        %vm783 = vweird.f32 %v777
        %vm784 = vmor %vm782, %vm783
        %v785 = vsel %vm784, %v777, %v781
        %v786 = vand.u32 2147483647, %v731
        %vm787 = vcmp.eq.f32.partialorder %v786, 8.507059e+37
        %v788 = vand.u32 %v731, 2147483648
        %v789 = vor.u32 1.1754944e-38, %v788
        %v790 = vsel %vm787, %v789, %v785
        %v791 = vmul.f32 %v712, %v790
        %v792 = vrcp.pop %v734
        %v793 = vmul.f32 %v734, %v792
        %v794 = vsub.f32 1.0, %v793
        %v795 = vmul.f32 %v792, %v794
        %v796 = vadd.f32 %v792, %v795
        %vm797 = vweird.f32 %v734
        %vm798 = vweird.f32 %v792
        %vm799 = vmor %vm797, %vm798
        %v800 = vsel %vm799, %v792, %v796
        %v801 = vand.u32 2147483647, %v734
        %vm802 = vcmp.eq.f32.partialorder %v801, 8.507059e+37
        %v803 = vand.u32 %v734, 2147483648
        %v804 = vor.u32 1.1754944e-38, %v803
        %v805 = vsel %vm802, %v804, %v800
        %v806 = vmul.f32 %v714, %v805
        %v807 = vrcp.pop %v737
        %v808 = vmul.f32 %v737, %v807
        %v809 = vsub.f32 1.0, %v808
        %v810 = vmul.f32 %v807, %v809
        %v811 = vadd.f32 %v807, %v810
        %vm812 = vweird.f32 %v737
        %vm813 = vweird.f32 %v807
        %vm814 = vmor %vm812, %vm813
        %v815 = vsel %vm814, %v807, %v811
        %v816 = vand.u32 2147483647, %v737
        %vm817 = vcmp.eq.f32.partialorder %v816, 8.507059e+37
        %v818 = vand.u32 %v737, 2147483648
        %v819 = vor.u32 1.1754944e-38, %v818
        %v820 = vsel %vm817, %v819, %v815
        %v821 = vmul.f32 %v716, %v820
        %v822 = vrcp.pop %v740
        %v823 = vmul.f32 %v740, %v822
        %v824 = vsub.f32 1.0, %v823
        %v825 = vmul.f32 %v822, %v824
        %v826 = vadd.f32 %v822, %v825
        %vm827 = vweird.f32 %v740
        %vm828 = vweird.f32 %v822
        %vm829 = vmor %vm827, %vm828
        %v830 = vsel %vm829, %v822, %v826
        %v831 = vand.u32 2147483647, %v740
        %vm832 = vcmp.eq.f32.partialorder %v831, 8.507059e+37
        %v833 = vand.u32 %v740, 2147483648
        %v834 = vor.u32 1.1754944e-38, %v833
        %v835 = vsel %vm832, %v834, %v830
        %v836 = vmul.f32 %v718, %v835
        %v837 = vrcp.pop %v743
        %v838 = vmul.f32 %v743, %v837
        %v839 = vsub.f32 1.0, %v838
        %v840 = vmul.f32 %v837, %v839
        %v841 = vadd.f32 %v837, %v840
        %vm842 = vweird.f32 %v743
        %vm843 = vweird.f32 %v837
        %vm844 = vmor %vm842, %vm843
        %v845 = vsel %vm844, %v837, %v841
        %v846 = vand.u32 2147483647, %v743
        %vm847 = vcmp.eq.f32.partialorder %v846, 8.507059e+37
        %v848 = vand.u32 %v743, 2147483648
        %v849 = vor.u32 1.1754944e-38, %v848
        %v850 = vsel %vm847, %v849, %v845
        %v851 = vmul.f32 %v720, %v850
        %v852 = vrcp.pop %v746
        %v853 = vmul.f32 %v746, %v852
        %v854 = vsub.f32 1.0, %v853
        %v855 = vmul.f32 %v852, %v854
        %v856 = vadd.f32 %v852, %v855
        %vm857 = vweird.f32 %v746
        %vm858 = vweird.f32 %v852
        %vm859 = vmor %vm857, %vm858
        %v860 = vsel %vm859, %v852, %v856
        %v861 = vand.u32 2147483647, %v746
        %vm862 = vcmp.eq.f32.partialorder %v861, 8.507059e+37
        %v863 = vand.u32 %v746, 2147483648
        %v864 = vor.u32 1.1754944e-38, %v863
        %v865 = vsel %vm862, %v864, %v860
        %v866 = vmul.f32 %v722, %v865
        %v867 = vpack.c.bf16 %v776, %v761
        %v868 = vpack.c.bf16 %v806, %v791
        %v869 = vpack.c.bf16 %v836, %v821
        %v870 = vpack.c.bf16 %v866, %v851
        %v871 = vpack.c.bf16 %v562, %v560
        %v872 = vpack.c.bf16 %v567, %v565
        %v873 = vpack.c.bf16 %v572, %v570
        %v874 = vpack.c.bf16 %v577, %v575
        %v876 = vsel %vm674, %v867, 0
        %v879 = vsel %vm674, %v868, 0
        %v882 = vsel %vm674, %v869, 0
        %v885 = vsel %vm674, %v870, 0
        %887 = vmatpush.bf16.msra.mxu0 0
        %888 = vmatpush.bf16.msra.mxu0 0
        %889 = vmatpush.bf16.msra.mxu0 0
        %890 = vmatpush.bf16.msra.mxu0 0
        %891 = vmatpush.bf16.msra.mxu0 %v874
        %892 = vmatpush.bf16.msra.mxu0 %v873
        %893 = vmatpush.bf16.msra.mxu0 %v872
        %894 = vmatpush.bf16.msra.mxu0 %v871
        %895 = vmatmul.bf16.gmra.mxu0 %v876
        %v896 = vpop.f32.mrf.mxu0
        %v897 = vadd.f32 %v477, %v896
        %v898 = vpop.f32.mrf.mxu0
        %v899 = vadd.f32 %v478, %v898
        %900 = vmatmul.bf16.gmra.mxu0 %v879
        %v901 = vpop.f32.mrf.mxu0
        %v902 = vadd.f32 %v479, %v901
        %v903 = vpop.f32.mrf.mxu0
        %v904 = vadd.f32 %v480, %v903
        %905 = vmatmul.bf16.gmra.mxu0 %v882
        %v906 = vpop.f32.mrf.mxu0
        %v907 = vadd.f32 %v481, %v906
        %v908 = vpop.f32.mrf.mxu0
        %v909 = vadd.f32 %v482, %v908
        %910 = vmatmul.bf16.gmra.mxu0 %v885
        %v911 = vpop.f32.mrf.mxu0
        %v912 = vadd.f32 %v483, %v911
        %v913 = vpop.f32.mrf.mxu0
        %v914 = vadd.f32 %v484, %v913
        %915 = vdwg.mxu0
        %v916 = vld [vmem:[#allocation5 + $0x4] ss:$0 sm:$0xff]
        %v917 = vld [vmem:[#allocation5 + $0x5] ss:$0 sm:$0xff]
        %v918 = vsel %vm285, %v897, 0.0
        %919 = vadd.xlane.f32.xlu0 %v918
        %v920 = vpop.xlane.xlu0 %919
        %v921 = vsel %vm285, %v899, 0.0
        %922 = vadd.xlane.f32.xlu0 %v921
        %v923 = vpop.xlane.xlu0 %922
        %v924 = vsel %vm285, %v902, 0.0
        %925 = vadd.xlane.f32.xlu0 %v924
        %v926 = vpop.xlane.xlu0 %925
        %v927 = vsel %vm285, %v904, 0.0
        %928 = vadd.xlane.f32.xlu0 %v927
        %v929 = vpop.xlane.xlu0 %928
        %v930 = vsel %vm285, %v907, 0.0
        %931 = vadd.xlane.f32.xlu0 %v930
        %v932 = vpop.xlane.xlu0 %931
        %v933 = vsel %vm285, %v909, 0.0
        %934 = vadd.xlane.f32.xlu0 %v933
        %v935 = vpop.xlane.xlu0 %934
        %v936 = vsel %vm285, %v912, 0.0
        %937 = vadd.xlane.f32.xlu0 %v936
        %v938 = vpop.xlane.xlu0 %937
        %v939 = vsel %vm285, %v914, 0.0
        %940 = vadd.xlane.f32.xlu0 %v939
        %v941 = vpop.xlane.xlu0 %940
        %v942 = vmul.f32 %v920, %v316
        %v943 = vmul.f32 %v923, %v316
        %v944 = vmul.f32 %v926, %v316
        %v945 = vmul.f32 %v929, %v316
        %v946 = vmul.f32 %v932, %v316
        %v947 = vmul.f32 %v935, %v316
        %v948 = vmul.f32 %v938, %v316
        %v949 = vmul.f32 %v941, %v316
        %v950 = vsub.f32 %v897, %v942
        %v951 = vsub.f32 %v899, %v943
        %v952 = vsub.f32 %v902, %v944
        %v953 = vsub.f32 %v904, %v945
        %v954 = vsub.f32 %v907, %v946
        %v955 = vsub.f32 %v909, %v947
        %v956 = vsub.f32 %v912, %v948
        %v957 = vsub.f32 %v914, %v949
        %v958 = vmul.f32 %v950, %v950
        %v959 = vmul.f32 %v951, %v951
        %v960 = vmul.f32 %v952, %v952
        %v961 = vmul.f32 %v953, %v953
        %v962 = vmul.f32 %v954, %v954
        %v963 = vmul.f32 %v955, %v955
        %v964 = vmul.f32 %v956, %v956
        %v965 = vmul.f32 %v957, %v957
        %v966 = vsel %vm285, %v958, 0.0
        %967 = vadd.xlane.f32.xlu0 %v966
        %v968 = vpop.xlane.xlu0 %967
        %v969 = vsel %vm285, %v959, 0.0
        %970 = vadd.xlane.f32.xlu0 %v969
        %v971 = vpop.xlane.xlu0 %970
        %v972 = vsel %vm285, %v960, 0.0
        %973 = vadd.xlane.f32.xlu0 %v972
        %v974 = vpop.xlane.xlu0 %973
        %v975 = vsel %vm285, %v961, 0.0
        %976 = vadd.xlane.f32.xlu0 %v975
        %v977 = vpop.xlane.xlu0 %976
        %v978 = vsel %vm285, %v962, 0.0
        %979 = vadd.xlane.f32.xlu0 %v978
        %v980 = vpop.xlane.xlu0 %979
        %v981 = vsel %vm285, %v963, 0.0
        %982 = vadd.xlane.f32.xlu0 %v981
        %v983 = vpop.xlane.xlu0 %982
        %v984 = vsel %vm285, %v964, 0.0
        %985 = vadd.xlane.f32.xlu0 %v984
        %v986 = vpop.xlane.xlu0 %985
        %v987 = vsel %vm285, %v965, 0.0
        %988 = vadd.xlane.f32.xlu0 %v987
        %v989 = vpop.xlane.xlu0 %988
        %v990 = vmul.f32 %v968, %v316
        %v991 = vmul.f32 %v971, %v316
        %v992 = vmul.f32 %v974, %v316
        %v993 = vmul.f32 %v977, %v316
        %v994 = vmul.f32 %v980, %v316
        %v995 = vmul.f32 %v983, %v316
        %v996 = vmul.f32 %v986, %v316
        %v997 = vmul.f32 %v989, %v316
        %v998 = vadd.f32 %v990, 1e-05
        %v999 = vadd.f32 %v991, 1e-05
        %v1000 = vadd.f32 %v992, 1e-05
        %v1001 = vadd.f32 %v993, 1e-05
        %v1002 = vadd.f32 %v994, 1e-05
        %v1003 = vadd.f32 %v995, 1e-05
        %v1004 = vadd.f32 %v996, 1e-05
        %v1005 = vadd.f32 %v997, 1e-05
        %v1006 = vrsqrt.pop %v998
        %v1007 = vmul.f32 %v1006, %v998
        %v1008 = vmul.f32 %v1007, %v1006
        %v1009 = vmul.f32 0.5, %v1008
        %v1010 = vsub.f32 1.5, %v1009
        %v1011 = vmul.f32 %v1006, %v1010
        %vm1012 = vweird.f32 %v998
        %vm1013 = vweird.f32 %v1006
        %vm1014 = vmor %vm1012, %vm1013
        %v1015 = vsel %vm1014, %v1006, %v1011
        %v1016 = vrsqrt.pop %v999
        %v1017 = vmul.f32 %v1016, %v999
        %v1018 = vmul.f32 %v1017, %v1016
        %v1019 = vmul.f32 0.5, %v1018
        %v1020 = vsub.f32 1.5, %v1019
        %v1021 = vmul.f32 %v1016, %v1020
        %vm1022 = vweird.f32 %v999
        %vm1023 = vweird.f32 %v1016
        %vm1024 = vmor %vm1022, %vm1023
        %v1025 = vsel %vm1024, %v1016, %v1021
        %v1026 = vrsqrt.pop %v1000
        %v1027 = vmul.f32 %v1026, %v1000
        %v1028 = vmul.f32 %v1027, %v1026
        %v1029 = vmul.f32 0.5, %v1028
        %v1030 = vsub.f32 1.5, %v1029
        %v1031 = vmul.f32 %v1026, %v1030
        %vm1032 = vweird.f32 %v1000
        %vm1033 = vweird.f32 %v1026
        %vm1034 = vmor %vm1032, %vm1033
        %v1035 = vsel %vm1034, %v1026, %v1031
        %v1036 = vrsqrt.pop %v1001
        %v1037 = vmul.f32 %v1036, %v1001
        %v1038 = vmul.f32 %v1037, %v1036
        %v1039 = vmul.f32 0.5, %v1038
        %v1040 = vsub.f32 1.5, %v1039
        %v1041 = vmul.f32 %v1036, %v1040
        %vm1042 = vweird.f32 %v1001
        %vm1043 = vweird.f32 %v1036
        %vm1044 = vmor %vm1042, %vm1043
        %v1045 = vsel %vm1044, %v1036, %v1041
        %v1046 = vrsqrt.pop %v1002
        %v1047 = vmul.f32 %v1046, %v1002
        %v1048 = vmul.f32 %v1047, %v1046
        %v1049 = vmul.f32 0.5, %v1048
        %v1050 = vsub.f32 1.5, %v1049
        %v1051 = vmul.f32 %v1046, %v1050
        %vm1052 = vweird.f32 %v1002
        %vm1053 = vweird.f32 %v1046
        %vm1054 = vmor %vm1052, %vm1053
        %v1055 = vsel %vm1054, %v1046, %v1051
        %v1056 = vrsqrt.pop %v1003
        %v1057 = vmul.f32 %v1056, %v1003
        %v1058 = vmul.f32 %v1057, %v1056
        %v1059 = vmul.f32 0.5, %v1058
        %v1060 = vsub.f32 1.5, %v1059
        %v1061 = vmul.f32 %v1056, %v1060
        %vm1062 = vweird.f32 %v1003
        %vm1063 = vweird.f32 %v1056
        %vm1064 = vmor %vm1062, %vm1063
        %v1065 = vsel %vm1064, %v1056, %v1061
        %v1066 = vrsqrt.pop %v1004
        %v1067 = vmul.f32 %v1066, %v1004
        %v1068 = vmul.f32 %v1067, %v1066
        %v1069 = vmul.f32 0.5, %v1068
        %v1070 = vsub.f32 1.5, %v1069
        %v1071 = vmul.f32 %v1066, %v1070
        %vm1072 = vweird.f32 %v1004
        %vm1073 = vweird.f32 %v1066
        %vm1074 = vmor %vm1072, %vm1073
        %v1075 = vsel %vm1074, %v1066, %v1071
        %v1076 = vrsqrt.pop %v1005
        %v1077 = vmul.f32 %v1076, %v1005
        %v1078 = vmul.f32 %v1077, %v1076
        %v1079 = vmul.f32 0.5, %v1078
        %v1080 = vsub.f32 1.5, %v1079
        %v1081 = vmul.f32 %v1076, %v1080
        %vm1082 = vweird.f32 %v1005
        %vm1083 = vweird.f32 %v1076
        %vm1084 = vmor %vm1082, %vm1083
        %v1085 = vsel %vm1084, %v1076, %v1081
        %v1086 = vmul.f32 %v950, %v1015
        %v1087 = vmul.f32 %v951, %v1025
        %v1088 = vmul.f32 %v952, %v1035
        %v1089 = vmul.f32 %v953, %v1045
        %v1090 = vmul.f32 %v954, %v1055
        %v1091 = vmul.f32 %v955, %v1065
        %v1092 = vmul.f32 %v956, %v1075
        %v1093 = vmul.f32 %v957, %v1085
        %v1094 = vmul.f32 %v1086, %v916
        %v1095 = vmul.f32 %v1087, %v916
        %v1096 = vmul.f32 %v1088, %v916
        %v1097 = vmul.f32 %v1089, %v916
        %v1098 = vmul.f32 %v1090, %v916
        %v1099 = vmul.f32 %v1091, %v916
        %v1100 = vmul.f32 %v1092, %v916
        %v1101 = vmul.f32 %v1093, %v916
        %v1102 = vadd.f32 %v1094, %v917
        %v1103 = vadd.f32 %v1095, %v917
        %v1104 = vadd.f32 %v1096, %v917
        %v1105 = vadd.f32 %v1097, %v917
        %v1106 = vadd.f32 %v1098, %v917
        %v1107 = vadd.f32 %v1099, %v917
        %v1108 = vadd.f32 %v1100, %v917
        %v1109 = vadd.f32 %v1101, %v917
        %v1110 = vpack.c.bf16 %v1103, %v1102
        %v1111 = vpack.c.bf16 %v1105, %v1104
        %v1112 = vpack.c.bf16 %v1107, %v1106
        %v1113 = vpack.c.bf16 %v1109, %v1108
        %v1114 = vld [vmem:[#allocation2 + $0xa0] sm:$0xf]
        %v1115 = vld [vmem:[#allocation2 + $0xb0] sm:$0xf]
        %v1116 = vld [vmem:[#allocation2 + $0xc0] sm:$0xf]
        %v1117 = vld [vmem:[#allocation2 + $0xd0] sm:$0xf]
        %v1118 = vld [vmem:[#allocation5 + $0x6] ss:$0 sm:$0xff]
        %v1123 = vunpack.c.l.b16 %v1114
        %v1124 = vunpack.c.l.b16 %v1115
        %v1125 = vunpack.c.l.b16 %v1116
        %v1126 = vunpack.c.l.b16 %v1117
        %v1127 = vpack.c.b16 %v1124, %v1123
        %v1128 = vpack.c.b16 %v1126, %v1125
        %v1132 = vsel %vm285, %v1110, 0
        %v1135 = vsel %vm285, %v1111, 0
        %v1138 = vsel %vm285, %v1112, 0
        %v1141 = vsel %vm285, %v1113, 0
        %1143 = vmatpush.bf16.msra.mxu0 0
        %1144 = vmatpush.bf16.msra.mxu0 0
        %1145 = vmatpush.bf16.msra.mxu0 0
        %1146 = vmatpush.bf16.msra.mxu0 0
        %1147 = vmatpush.bf16.msra.mxu0 0
        %1148 = vmatpush.bf16.msra.mxu0 0
        %1149 = vmatpush.bf16.msra.mxu0 %v1128
        %1150 = vmatpush.bf16.msra.mxu0 %v1127
        %1151 = vmatmul.bf16.gmra.mxu0 %v1132
        %v1152 = vpop.f32.mrf.mxu0
        %v1153 = vadd.f32 %v1118, %v1152
        %v1154 = vpop.f32.mrf.mxu0
        %v1155 = vadd.f32 %v1118, %v1154
        %1156 = vmatmul.bf16.gmra.mxu0 %v1135
        %v1157 = vpop.f32.mrf.mxu0
        %v1158 = vadd.f32 %v1118, %v1157
        %v1159 = vpop.f32.mrf.mxu0
        %v1160 = vadd.f32 %v1118, %v1159
        %1161 = vmatmul.bf16.gmra.mxu0 %v1138
        %v1162 = vpop.f32.mrf.mxu0
        %v1163 = vadd.f32 %v1118, %v1162
        %v1164 = vpop.f32.mrf.mxu0
        %v1165 = vadd.f32 %v1118, %v1164
        %1166 = vmatmul.bf16.gmra.mxu0 %v1141
        %v1167 = vpop.f32.mrf.mxu0
        %v1168 = vadd.f32 %v1118, %v1167
        %v1169 = vpop.f32.mrf.mxu0
        %v1170 = vadd.f32 %v1118, %v1169
        %1171 = vdwg.mxu0
        %v1172 = vmax.f32 %v1153, 0.0
        %v1173 = vmax.f32 %v1155, 0.0
        %v1174 = vmax.f32 %v1158, 0.0
        %v1175 = vmax.f32 %v1160, 0.0
        %v1176 = vmax.f32 %v1163, 0.0
        %v1177 = vmax.f32 %v1165, 0.0
        %v1178 = vmax.f32 %v1168, 0.0
        %v1179 = vmax.f32 %v1170, 0.0
        %v1180 = vpack.c.bf16 %v1173, %v1172
        %v1181 = vpack.c.bf16 %v1175, %v1174
        %v1182 = vpack.c.bf16 %v1177, %v1176
        %v1183 = vpack.c.bf16 %v1179, %v1178
        %v1184 = vld [vmem:[#allocation2 + $0xe0] sm:$0xf]
        %v1185 = vld [vmem:[#allocation2 + $0xf0] sm:$0xf]
        %v1186 = vld [vmem:[#allocation2 + $0x100] sm:$0xf]
        %v1187 = vld [vmem:[#allocation2 + $0x110] sm:$0xf]
        %v1188 = vld [vmem:[#allocation5 + $0x7] ss:$0 sm:$0xff]
        %v1193 = vunpack.c.l.b16 %v1184
        %v1194 = vunpack.c.l.b16 %v1185
        %v1195 = vunpack.c.l.b16 %v1186
        %v1196 = vunpack.c.l.b16 %v1187
        %v1197 = vpack.c.b16 %v1194, %v1193
        %v1198 = vpack.c.b16 %v1196, %v1195
        %v1202 = vsel %vm285, %v1180, 0
        %v1205 = vsel %vm285, %v1181, 0
        %v1208 = vsel %vm285, %v1182, 0
        %v1211 = vsel %vm285, %v1183, 0
        %1213 = vmatpush.bf16.msra.mxu0 0
        %1214 = vmatpush.bf16.msra.mxu0 0
        %1215 = vmatpush.bf16.msra.mxu0 0
        %1216 = vmatpush.bf16.msra.mxu0 0
        %1217 = vmatpush.bf16.msra.mxu0 0
        %1218 = vmatpush.bf16.msra.mxu0 0
        %1219 = vmatpush.bf16.msra.mxu0 %v1198
        %1220 = vmatpush.bf16.msra.mxu0 %v1197
        %1221 = vmatmul.bf16.gmra.mxu0 %v1202
        %v1222 = vpop.f32.mrf.mxu0
        %v1223 = vadd.f32 %v1188, %v1222
        %v1224 = vpop.f32.mrf.mxu0
        %v1225 = vadd.f32 %v1188, %v1224
        %1226 = vmatmul.bf16.gmra.mxu0 %v1205
        %v1227 = vpop.f32.mrf.mxu0
        %v1228 = vadd.f32 %v1188, %v1227
        %v1229 = vpop.f32.mrf.mxu0
        %v1230 = vadd.f32 %v1188, %v1229
        %1231 = vmatmul.bf16.gmra.mxu0 %v1208
        %v1232 = vpop.f32.mrf.mxu0
        %v1233 = vadd.f32 %v1188, %v1232
        %v1234 = vpop.f32.mrf.mxu0
        %v1235 = vadd.f32 %v1188, %v1234
        %1236 = vmatmul.bf16.gmra.mxu0 %v1211
        %v1237 = vpop.f32.mrf.mxu0
        %v1238 = vadd.f32 %v1188, %v1237
        %v1239 = vpop.f32.mrf.mxu0
        %v1240 = vadd.f32 %v1188, %v1239
        %1241 = vdwg.mxu0
        %v1242 = vadd.f32 %v1223, %v897
        %v1243 = vadd.f32 %v1225, %v899
        %v1244 = vadd.f32 %v1228, %v902
        %v1245 = vadd.f32 %v1230, %v904
        %v1246 = vadd.f32 %v1233, %v907
        %v1247 = vadd.f32 %v1235, %v909
        %v1248 = vadd.f32 %v1238, %v912
        %v1249 = vadd.f32 %v1240, %v914
        %v1250 = vld [vmem:[#allocation5 + $0x20] ss:$0 sm:$0xff]
        %v1251 = vld [vmem:[#allocation5 + $0x21] ss:$0 sm:$0xff]
        %v1252 = vsel %vm285, %v1242, 0.0
        %1253 = vadd.xlane.f32.xlu0 %v1252
        %v1254 = vpop.xlane.xlu0 %1253
        %v1255 = vsel %vm285, %v1243, 0.0
        %1256 = vadd.xlane.f32.xlu0 %v1255
        %v1257 = vpop.xlane.xlu0 %1256
        %v1258 = vsel %vm285, %v1244, 0.0
        %1259 = vadd.xlane.f32.xlu0 %v1258
        %v1260 = vpop.xlane.xlu0 %1259
        %v1261 = vsel %vm285, %v1245, 0.0
        %1262 = vadd.xlane.f32.xlu0 %v1261
        %v1263 = vpop.xlane.xlu0 %1262
        %v1264 = vsel %vm285, %v1246, 0.0
        %1265 = vadd.xlane.f32.xlu0 %v1264
        %v1266 = vpop.xlane.xlu0 %1265
        %v1267 = vsel %vm285, %v1247, 0.0
        %1268 = vadd.xlane.f32.xlu0 %v1267
        %v1269 = vpop.xlane.xlu0 %1268
        %v1270 = vsel %vm285, %v1248, 0.0
        %1271 = vadd.xlane.f32.xlu0 %v1270
        %v1272 = vpop.xlane.xlu0 %1271
        %v1273 = vsel %vm285, %v1249, 0.0
        %1274 = vadd.xlane.f32.xlu0 %v1273
        %v1275 = vpop.xlane.xlu0 %1274
        %v1276 = vmul.f32 %v1254, %v316
        %v1277 = vmul.f32 %v1257, %v316
        %v1278 = vmul.f32 %v1260, %v316
        %v1279 = vmul.f32 %v1263, %v316
        %v1280 = vmul.f32 %v1266, %v316
        %v1281 = vmul.f32 %v1269, %v316
        %v1282 = vmul.f32 %v1272, %v316
        %v1283 = vmul.f32 %v1275, %v316
        %v1284 = vsub.f32 %v1242, %v1276
        %v1285 = vsub.f32 %v1243, %v1277
        %v1286 = vsub.f32 %v1244, %v1278
        %v1287 = vsub.f32 %v1245, %v1279
        %v1288 = vsub.f32 %v1246, %v1280
        %v1289 = vsub.f32 %v1247, %v1281
        %v1290 = vsub.f32 %v1248, %v1282
        %v1291 = vsub.f32 %v1249, %v1283
        %v1292 = vmul.f32 %v1284, %v1284
        %v1293 = vmul.f32 %v1285, %v1285
        %v1294 = vmul.f32 %v1286, %v1286
        %v1295 = vmul.f32 %v1287, %v1287
        %v1296 = vmul.f32 %v1288, %v1288
        %v1297 = vmul.f32 %v1289, %v1289
        %v1298 = vmul.f32 %v1290, %v1290
        %v1299 = vmul.f32 %v1291, %v1291
        %v1300 = vsel %vm285, %v1292, 0.0
        %1301 = vadd.xlane.f32.xlu0 %v1300
        %v1302 = vpop.xlane.xlu0 %1301
        %v1303 = vsel %vm285, %v1293, 0.0
        %1304 = vadd.xlane.f32.xlu0 %v1303
        %v1305 = vpop.xlane.xlu0 %1304
        %v1306 = vsel %vm285, %v1294, 0.0
        %1307 = vadd.xlane.f32.xlu0 %v1306
        %v1308 = vpop.xlane.xlu0 %1307
        %v1309 = vsel %vm285, %v1295, 0.0
        %1310 = vadd.xlane.f32.xlu0 %v1309
        %v1311 = vpop.xlane.xlu0 %1310
        %v1312 = vsel %vm285, %v1296, 0.0
        %1313 = vadd.xlane.f32.xlu0 %v1312
        %v1314 = vpop.xlane.xlu0 %1313
        %v1315 = vsel %vm285, %v1297, 0.0
        %1316 = vadd.xlane.f32.xlu0 %v1315
        %v1317 = vpop.xlane.xlu0 %1316
        %v1318 = vsel %vm285, %v1298, 0.0
        %1319 = vadd.xlane.f32.xlu0 %v1318
        %v1320 = vpop.xlane.xlu0 %1319
        %v1321 = vsel %vm285, %v1299, 0.0
        %1322 = vadd.xlane.f32.xlu0 %v1321
        %v1323 = vpop.xlane.xlu0 %1322
        %v1324 = vmul.f32 %v1302, %v316
        %v1325 = vmul.f32 %v1305, %v316
        %v1326 = vmul.f32 %v1308, %v316
        %v1327 = vmul.f32 %v1311, %v316
        %v1328 = vmul.f32 %v1314, %v316
        %v1329 = vmul.f32 %v1317, %v316
        %v1330 = vmul.f32 %v1320, %v316
        %v1331 = vmul.f32 %v1323, %v316
        %v1332 = vadd.f32 %v1324, 1e-05
        %v1333 = vadd.f32 %v1325, 1e-05
        %v1334 = vadd.f32 %v1326, 1e-05
        %v1335 = vadd.f32 %v1327, 1e-05
        %v1336 = vadd.f32 %v1328, 1e-05
        %v1337 = vadd.f32 %v1329, 1e-05
        %v1338 = vadd.f32 %v1330, 1e-05
        %v1339 = vadd.f32 %v1331, 1e-05
        %v1340 = vrsqrt.pop %v1332
        %v1341 = vmul.f32 %v1340, %v1332
        %v1342 = vmul.f32 %v1341, %v1340
        %v1343 = vmul.f32 0.5, %v1342
        %v1344 = vsub.f32 1.5, %v1343
        %v1345 = vmul.f32 %v1340, %v1344
        %vm1346 = vweird.f32 %v1332
        %vm1347 = vweird.f32 %v1340
        %vm1348 = vmor %vm1346, %vm1347
        %v1349 = vsel %vm1348, %v1340, %v1345
        %v1350 = vrsqrt.pop %v1333
        %v1351 = vmul.f32 %v1350, %v1333
        %v1352 = vmul.f32 %v1351, %v1350
        %v1353 = vmul.f32 0.5, %v1352
        %v1354 = vsub.f32 1.5, %v1353
        %v1355 = vmul.f32 %v1350, %v1354
        %vm1356 = vweird.f32 %v1333
        %vm1357 = vweird.f32 %v1350
        %vm1358 = vmor %vm1356, %vm1357
        %v1359 = vsel %vm1358, %v1350, %v1355
        %v1360 = vrsqrt.pop %v1334
        %v1361 = vmul.f32 %v1360, %v1334
        %v1362 = vmul.f32 %v1361, %v1360
        %v1363 = vmul.f32 0.5, %v1362
        %v1364 = vsub.f32 1.5, %v1363
        %v1365 = vmul.f32 %v1360, %v1364
        %vm1366 = vweird.f32 %v1334
        %vm1367 = vweird.f32 %v1360
        %vm1368 = vmor %vm1366, %vm1367
        %v1369 = vsel %vm1368, %v1360, %v1365
        %v1370 = vrsqrt.pop %v1335
        %v1371 = vmul.f32 %v1370, %v1335
        %v1372 = vmul.f32 %v1371, %v1370
        %v1373 = vmul.f32 0.5, %v1372
        %v1374 = vsub.f32 1.5, %v1373
        %v1375 = vmul.f32 %v1370, %v1374
        %vm1376 = vweird.f32 %v1335
        %vm1377 = vweird.f32 %v1370
        %vm1378 = vmor %vm1376, %vm1377
        %v1379 = vsel %vm1378, %v1370, %v1375
        %v1380 = vrsqrt.pop %v1336
        %v1381 = vmul.f32 %v1380, %v1336
        %v1382 = vmul.f32 %v1381, %v1380
        %v1383 = vmul.f32 0.5, %v1382
        %v1384 = vsub.f32 1.5, %v1383
        %v1385 = vmul.f32 %v1380, %v1384
        %vm1386 = vweird.f32 %v1336
        %vm1387 = vweird.f32 %v1380
        %vm1388 = vmor %vm1386, %vm1387
        %v1389 = vsel %vm1388, %v1380, %v1385
        %v1390 = vrsqrt.pop %v1337
        %v1391 = vmul.f32 %v1390, %v1337
        %v1392 = vmul.f32 %v1391, %v1390
        %v1393 = vmul.f32 0.5, %v1392
        %v1394 = vsub.f32 1.5, %v1393
        %v1395 = vmul.f32 %v1390, %v1394
        %vm1396 = vweird.f32 %v1337
        %vm1397 = vweird.f32 %v1390
        %vm1398 = vmor %vm1396, %vm1397
        %v1399 = vsel %vm1398, %v1390, %v1395
        %v1400 = vrsqrt.pop %v1338
        %v1401 = vmul.f32 %v1400, %v1338
        %v1402 = vmul.f32 %v1401, %v1400
        %v1403 = vmul.f32 0.5, %v1402
        %v1404 = vsub.f32 1.5, %v1403
        %v1405 = vmul.f32 %v1400, %v1404
        %vm1406 = vweird.f32 %v1338
        %vm1407 = vweird.f32 %v1400
        %vm1408 = vmor %vm1406, %vm1407
        %v1409 = vsel %vm1408, %v1400, %v1405
        %v1410 = vrsqrt.pop %v1339
        %v1411 = vmul.f32 %v1410, %v1339
        %v1412 = vmul.f32 %v1411, %v1410
        %v1413 = vmul.f32 0.5, %v1412
        %v1414 = vsub.f32 1.5, %v1413
        %v1415 = vmul.f32 %v1410, %v1414
        %vm1416 = vweird.f32 %v1339
        %vm1417 = vweird.f32 %v1410
        %vm1418 = vmor %vm1416, %vm1417
        %v1419 = vsel %vm1418, %v1410, %v1415
        %v1420 = vmul.f32 %v1284, %v1349
        %v1421 = vmul.f32 %v1285, %v1359
        %v1422 = vmul.f32 %v1286, %v1369
        %v1423 = vmul.f32 %v1287, %v1379
        %v1424 = vmul.f32 %v1288, %v1389
        %v1425 = vmul.f32 %v1289, %v1399
        %v1426 = vmul.f32 %v1290, %v1409
        %v1427 = vmul.f32 %v1291, %v1419
        %v1428 = vmul.f32 %v1420, %v1250
        %v1429 = vmul.f32 %v1421, %v1250
        %v1430 = vmul.f32 %v1422, %v1250
        %v1431 = vmul.f32 %v1423, %v1250
        %v1432 = vmul.f32 %v1424, %v1250
        %v1433 = vmul.f32 %v1425, %v1250
        %v1434 = vmul.f32 %v1426, %v1250
        %v1435 = vmul.f32 %v1427, %v1250
        %v1436 = vadd.f32 %v1428, %v1251
        %v1437 = vadd.f32 %v1429, %v1251
        %v1438 = vadd.f32 %v1430, %v1251
        %v1439 = vadd.f32 %v1431, %v1251
        %v1440 = vadd.f32 %v1432, %v1251
        %v1441 = vadd.f32 %v1433, %v1251
        %v1442 = vadd.f32 %v1434, %v1251
        %v1443 = vadd.f32 %v1435, %v1251
        %v1444 = vpack.c.bf16 %v1437, %v1436
        %v1445 = vpack.c.bf16 %v1439, %v1438
        %v1446 = vpack.c.bf16 %v1441, %v1440
        %v1447 = vpack.c.bf16 %v1443, %v1442
        %v1448 = vld [vmem:[#allocation2 + $0x120] sm:$0xff]
        %v1449 = vld [vmem:[#allocation2 + $0x128] sm:$0xf]
        %v1450 = vld [vmem:[#allocation2 + $0x130] sm:$0xff]
        %v1451 = vld [vmem:[#allocation2 + $0x138] sm:$0xf]
        %v1452 = vld [vmem:[#allocation2 + $0x140] sm:$0xff]
        %v1453 = vld [vmem:[#allocation2 + $0x148] sm:$0xf]
        %v1454 = vld [vmem:[#allocation2 + $0x150] sm:$0xff]
        %v1455 = vld [vmem:[#allocation2 + $0x158] sm:$0xf]
        %s1456 = scalar_lea.vmem [#allocation5], 34
        %v1457 = vld [vmem:[%s1456] ss:$8 sm:$0x7]
        %v1459 = vperm.slane %v1457, 0
        %v1460 = vperm.slane %v1457, 1
        %v1461 = vperm.slane %v1457, 2
        %v1473 = vunpack.c.l.b16 %v1448
        %v1474 = vunpack.c.h.b16 %v1448
        %v1475 = vunpack.c.l.b16 %v1449
        %v1476 = vunpack.c.l.b16 %v1450
        %v1477 = vunpack.c.h.b16 %v1450
        %v1478 = vunpack.c.l.b16 %v1451
        %v1479 = vunpack.c.l.b16 %v1452
        %v1480 = vunpack.c.h.b16 %v1452
        %v1481 = vunpack.c.l.b16 %v1453
        %v1482 = vunpack.c.l.b16 %v1454
        %v1483 = vunpack.c.h.b16 %v1454
        %v1484 = vunpack.c.l.b16 %v1455
        %v1485 = vpack.c.b16 %v1476, %v1473
        %v1486 = vpack.c.b16 %v1477, %v1474
        %v1487 = vpack.c.b16 %v1478, %v1475
        %v1488 = vpack.c.b16 %v1482, %v1479
        %v1489 = vpack.c.b16 %v1483, %v1480
        %v1490 = vpack.c.b16 %v1484, %v1481
        %v1498 = vsel %vm285, %v1444, 0
        %v1501 = vsel %vm285, %v1445, 0
        %v1504 = vsel %vm285, %v1446, 0
        %v1507 = vsel %vm285, %v1447, 0
        %1509 = vmatpush.bf16.msra.mxu0 0
        %1510 = vmatpush.bf16.msra.mxu0 0
        %1511 = vmatpush.bf16.msra.mxu0 0
        %1512 = vmatpush.bf16.msra.mxu0 0
        %1513 = vmatpush.bf16.msra.mxu0 0
        %1514 = vmatpush.bf16.msra.mxu0 0
        %1515 = vmatpush.bf16.msra.mxu0 %v1488
        %1516 = vmatpush.bf16.msra.mxu0 %v1485
        %1517 = vmatmul.bf16.gmra.mxu0 %v1498
        %v1518 = vpop.f32.mrf.mxu0
        %v1519 = vadd.f32 %v1459, %v1518
        %v1520 = vpop.f32.mrf.mxu0
        %v1521 = vadd.f32 %v1459, %v1520
        %1522 = vmatmul.bf16.gmra.mxu0 %v1501
        %v1523 = vpop.f32.mrf.mxu0
        %v1524 = vadd.f32 %v1459, %v1523
        %v1525 = vpop.f32.mrf.mxu0
        %v1526 = vadd.f32 %v1459, %v1525
        %1527 = vmatmul.bf16.gmra.mxu0 %v1504
        %v1528 = vpop.f32.mrf.mxu0
        %v1529 = vadd.f32 %v1459, %v1528
        %v1530 = vpop.f32.mrf.mxu0
        %v1531 = vadd.f32 %v1459, %v1530
        %1532 = vmatmul.bf16.gmra.mxu0 %v1507
        %v1533 = vpop.f32.mrf.mxu0
        %v1534 = vadd.f32 %v1459, %v1533
        %v1535 = vpop.f32.mrf.mxu0
        %v1536 = vadd.f32 %v1459, %v1535
        %1537 = vdwg.mxu0
        %1538 = vmatpush.bf16.msra.mxu0 0
        %1539 = vmatpush.bf16.msra.mxu0 0
        %1540 = vmatpush.bf16.msra.mxu0 0
        %1541 = vmatpush.bf16.msra.mxu0 0
        %1542 = vmatpush.bf16.msra.mxu0 0
        %1543 = vmatpush.bf16.msra.mxu0 0
        %1544 = vmatpush.bf16.msra.mxu0 %v1489
        %1545 = vmatpush.bf16.msra.mxu0 %v1486
        %1546 = vmatmul.bf16.gmra.mxu0 %v1498
        %v1547 = vpop.f32.mrf.mxu0
        %v1548 = vadd.f32 %v1460, %v1547
        %v1549 = vpop.f32.mrf.mxu0
        %v1550 = vadd.f32 %v1460, %v1549
        %1551 = vmatmul.bf16.gmra.mxu0 %v1501
        %v1552 = vpop.f32.mrf.mxu0
        %v1553 = vadd.f32 %v1460, %v1552
        %v1554 = vpop.f32.mrf.mxu0
        %v1555 = vadd.f32 %v1460, %v1554
        %1556 = vmatmul.bf16.gmra.mxu0 %v1504
        %v1557 = vpop.f32.mrf.mxu0
        %v1558 = vadd.f32 %v1460, %v1557
        %v1559 = vpop.f32.mrf.mxu0
        %v1560 = vadd.f32 %v1460, %v1559
        %1561 = vmatmul.bf16.gmra.mxu0 %v1507
        %v1562 = vpop.f32.mrf.mxu0
        %v1563 = vadd.f32 %v1460, %v1562
        %v1564 = vpop.f32.mrf.mxu0
        %v1565 = vadd.f32 %v1460, %v1564
        %1566 = vdwg.mxu0
        %1567 = vmatpush.bf16.msra.mxu0 0
        %1568 = vmatpush.bf16.msra.mxu0 0
        %1569 = vmatpush.bf16.msra.mxu0 0
        %1570 = vmatpush.bf16.msra.mxu0 0
        %1571 = vmatpush.bf16.msra.mxu0 0
        %1572 = vmatpush.bf16.msra.mxu0 0
        %1573 = vmatpush.bf16.msra.mxu0 %v1490
        %1574 = vmatpush.bf16.msra.mxu0 %v1487
        %1575 = vmatmul.bf16.gmra.mxu0 %v1498
        %v1576 = vpop.f32.mrf.mxu0
        %v1577 = vadd.f32 %v1461, %v1576
        %v1578 = vpop.f32.mrf.mxu0
        %v1579 = vadd.f32 %v1461, %v1578
        %1580 = vmatmul.bf16.gmra.mxu0 %v1501
        %v1581 = vpop.f32.mrf.mxu0
        %v1582 = vadd.f32 %v1461, %v1581
        %v1583 = vpop.f32.mrf.mxu0
        %v1584 = vadd.f32 %v1461, %v1583
        %1585 = vmatmul.bf16.gmra.mxu0 %v1504
        %v1586 = vpop.f32.mrf.mxu0
        %v1587 = vadd.f32 %v1461, %v1586
        %v1588 = vpop.f32.mrf.mxu0
        %v1589 = vadd.f32 %v1461, %v1588
        %1590 = vmatmul.bf16.gmra.mxu0 %v1507
        %v1591 = vpop.f32.mrf.mxu0
        %v1592 = vadd.f32 %v1461, %v1591
        %v1593 = vpop.f32.mrf.mxu0
        %v1594 = vadd.f32 %v1461, %v1593
        %1595 = vdwg.mxu0
        %v1596 = vpack.c.bf16 %v1550, %v1548
        %v1597 = vpack.c.bf16 %v1555, %v1553
        %v1598 = vpack.c.bf16 %v1560, %v1558
        %v1599 = vpack.c.bf16 %v1565, %v1563
        %v1600 = vpack.c.bf16 %v1579, %v1577
        %v1601 = vpack.c.bf16 %v1584, %v1582
        %v1602 = vpack.c.bf16 %v1589, %v1587
        %v1603 = vpack.c.bf16 %v1594, %v1592
        %1604 = vmatpush.bf16.xpose.msra.mxu0 0
        %1605 = vmatpush.bf16.xpose.msra.mxu0 0
        %1606 = vmatpush.bf16.xpose.msra.mxu0 0
        %1607 = vmatpush.bf16.xpose.msra.mxu0 0
        %1608 = vmatpush.bf16.xpose.msra.mxu0 %v1603
        %1609 = vmatpush.bf16.xpose.msra.mxu0 %v1602
        %1610 = vmatpush.bf16.xpose.msra.mxu0 %v1601
        %1611 = vmatpush.bf16.xpose.msra.mxu0 %v1600
        %1612 = vmatmul.bf16.gmra.mxu0 %v1596
        %v1613 = vpop.f32.mrf.mxu0
        %v1614 = vadd.f32 0.0, %v1613
        %v1615 = vpop.f32.mrf.mxu0
        %v1616 = vadd.f32 0.0, %v1615
        %1617 = vmatmul.bf16.gmra.mxu0 %v1597
        %v1618 = vpop.f32.mrf.mxu0
        %v1619 = vadd.f32 0.0, %v1618
        %v1620 = vpop.f32.mrf.mxu0
        %v1621 = vadd.f32 0.0, %v1620
        %1622 = vmatmul.bf16.gmra.mxu0 %v1598
        %v1623 = vpop.f32.mrf.mxu0
        %v1624 = vadd.f32 0.0, %v1623
        %v1625 = vpop.f32.mrf.mxu0
        %v1626 = vadd.f32 0.0, %v1625
        %1627 = vmatmul.bf16.gmra.mxu0 %v1599
        %v1628 = vpop.f32.mrf.mxu0
        %v1629 = vadd.f32 0.0, %v1628
        %v1630 = vpop.f32.mrf.mxu0
        %v1631 = vadd.f32 0.0, %v1630
        %1632 = vdwg.mxu0
        %v1633 = vsel %vm674, %v1614, -inf
        %1634 = vmax.xlane.f32.xlu0 %v1633
        %v1635 = vpop.xlane.xlu0 %1634
        %v1636 = vsel %vm674, %v1616, -inf
        %1637 = vmax.xlane.f32.xlu0 %v1636
        %v1638 = vpop.xlane.xlu0 %1637
        %v1639 = vsel %vm674, %v1619, -inf
        %1640 = vmax.xlane.f32.xlu0 %v1639
        %v1641 = vpop.xlane.xlu0 %1640
        %v1642 = vsel %vm674, %v1621, -inf
        %1643 = vmax.xlane.f32.xlu0 %v1642
        %v1644 = vpop.xlane.xlu0 %1643
        %v1645 = vsel %vm674, %v1624, -inf
        %1646 = vmax.xlane.f32.xlu0 %v1645
        %v1647 = vpop.xlane.xlu0 %1646
        %v1648 = vsel %vm674, %v1626, -inf
        %1649 = vmax.xlane.f32.xlu0 %v1648
        %v1650 = vpop.xlane.xlu0 %1649
        %v1651 = vsel %vm674, %v1629, -inf
        %1652 = vmax.xlane.f32.xlu0 %v1651
        %v1653 = vpop.xlane.xlu0 %1652
        %v1654 = vsel %vm674, %v1631, -inf
        %1655 = vmax.xlane.f32.xlu0 %v1654
        %v1656 = vpop.xlane.xlu0 %1655
        %v1657 = vsub.f32 %v1614, %v1635
        %v1658 = vsub.f32 %v1616, %v1638
        %v1659 = vsub.f32 %v1619, %v1641
        %v1660 = vsub.f32 %v1621, %v1644
        %v1661 = vsub.f32 %v1624, %v1647
        %v1662 = vsub.f32 %v1626, %v1650
        %v1663 = vsub.f32 %v1629, %v1653
        %v1664 = vsub.f32 %v1631, %v1656
        %v1665 = vmul.f32 %v1657, 1.442695
        %v1666 = vpow.pop %v1665
        %v1667 = vmul.f32 %v1658, 1.442695
        %v1668 = vpow.pop %v1667
        %v1669 = vmul.f32 %v1659, 1.442695
        %v1670 = vpow.pop %v1669
        %v1671 = vmul.f32 %v1660, 1.442695
        %v1672 = vpow.pop %v1671
        %v1673 = vmul.f32 %v1661, 1.442695
        %v1674 = vpow.pop %v1673
        %v1675 = vmul.f32 %v1662, 1.442695
        %v1676 = vpow.pop %v1675
        %v1677 = vmul.f32 %v1663, 1.442695
        %v1678 = vpow.pop %v1677
        %v1679 = vmul.f32 %v1664, 1.442695
        %v1680 = vpow.pop %v1679
        %v1681 = vsel %vm674, %v1666, 0.0
        %1682 = vadd.xlane.f32.xlu0 %v1681
        %v1683 = vpop.xlane.xlu0 %1682
        %v1684 = vsel %vm674, %v1668, 0.0
        %1685 = vadd.xlane.f32.xlu0 %v1684
        %v1686 = vpop.xlane.xlu0 %1685
        %v1687 = vsel %vm674, %v1670, 0.0
        %1688 = vadd.xlane.f32.xlu0 %v1687
        %v1689 = vpop.xlane.xlu0 %1688
        %v1690 = vsel %vm674, %v1672, 0.0
        %1691 = vadd.xlane.f32.xlu0 %v1690
        %v1692 = vpop.xlane.xlu0 %1691
        %v1693 = vsel %vm674, %v1674, 0.0
        %1694 = vadd.xlane.f32.xlu0 %v1693
        %v1695 = vpop.xlane.xlu0 %1694
        %v1696 = vsel %vm674, %v1676, 0.0
        %1697 = vadd.xlane.f32.xlu0 %v1696
        %v1698 = vpop.xlane.xlu0 %1697
        %v1699 = vsel %vm674, %v1678, 0.0
        %1700 = vadd.xlane.f32.xlu0 %v1699
        %v1701 = vpop.xlane.xlu0 %1700
        %v1702 = vsel %vm674, %v1680, 0.0
        %1703 = vadd.xlane.f32.xlu0 %v1702
        %v1704 = vpop.xlane.xlu0 %1703
        %v1705 = vrcp.pop %v1683
        %v1706 = vmul.f32 %v1683, %v1705
        %v1707 = vsub.f32 1.0, %v1706
        %v1708 = vmul.f32 %v1705, %v1707
        %v1709 = vadd.f32 %v1705, %v1708
        %vm1710 = vweird.f32 %v1683
        %vm1711 = vweird.f32 %v1705
        %vm1712 = vmor %vm1710, %vm1711
        %v1713 = vsel %vm1712, %v1705, %v1709
        %v1714 = vand.u32 2147483647, %v1683
        %vm1715 = vcmp.eq.f32.partialorder %v1714, 8.507059e+37
        %v1716 = vand.u32 %v1683, 2147483648
        %v1717 = vor.u32 1.1754944e-38, %v1716
        %v1718 = vsel %vm1715, %v1717, %v1713
        %v1719 = vmul.f32 %v1666, %v1718
        %v1720 = vrcp.pop %v1686
        %v1721 = vmul.f32 %v1686, %v1720
        %v1722 = vsub.f32 1.0, %v1721
        %v1723 = vmul.f32 %v1720, %v1722
        %v1724 = vadd.f32 %v1720, %v1723
        %vm1725 = vweird.f32 %v1686
        %vm1726 = vweird.f32 %v1720
        %vm1727 = vmor %vm1725, %vm1726
        %v1728 = vsel %vm1727, %v1720, %v1724
        %v1729 = vand.u32 2147483647, %v1686
        %vm1730 = vcmp.eq.f32.partialorder %v1729, 8.507059e+37
        %v1731 = vand.u32 %v1686, 2147483648
        %v1732 = vor.u32 1.1754944e-38, %v1731
        %v1733 = vsel %vm1730, %v1732, %v1728
        %v1734 = vmul.f32 %v1668, %v1733
        %v1735 = vrcp.pop %v1689
        %v1736 = vmul.f32 %v1689, %v1735
        %v1737 = vsub.f32 1.0, %v1736
        %v1738 = vmul.f32 %v1735, %v1737
        %v1739 = vadd.f32 %v1735, %v1738
        %vm1740 = vweird.f32 %v1689
        %vm1741 = vweird.f32 %v1735
        %vm1742 = vmor %vm1740, %vm1741
        %v1743 = vsel %vm1742, %v1735, %v1739
        %v1744 = vand.u32 2147483647, %v1689
        %vm1745 = vcmp.eq.f32.partialorder %v1744, 8.507059e+37
        %v1746 = vand.u32 %v1689, 2147483648
        %v1747 = vor.u32 1.1754944e-38, %v1746
        %v1748 = vsel %vm1745, %v1747, %v1743
        %v1749 = vmul.f32 %v1670, %v1748
        %v1750 = vrcp.pop %v1692
        %v1751 = vmul.f32 %v1692, %v1750
        %v1752 = vsub.f32 1.0, %v1751
        %v1753 = vmul.f32 %v1750, %v1752
        %v1754 = vadd.f32 %v1750, %v1753
        %vm1755 = vweird.f32 %v1692
        %vm1756 = vweird.f32 %v1750
        %vm1757 = vmor %vm1755, %vm1756
        %v1758 = vsel %vm1757, %v1750, %v1754
        %v1759 = vand.u32 2147483647, %v1692
        %vm1760 = vcmp.eq.f32.partialorder %v1759, 8.507059e+37
        %v1761 = vand.u32 %v1692, 2147483648
        %v1762 = vor.u32 1.1754944e-38, %v1761
        %v1763 = vsel %vm1760, %v1762, %v1758
        %v1764 = vmul.f32 %v1672, %v1763
        %v1765 = vrcp.pop %v1695
        %v1766 = vmul.f32 %v1695, %v1765
        %v1767 = vsub.f32 1.0, %v1766
        %v1768 = vmul.f32 %v1765, %v1767
        %v1769 = vadd.f32 %v1765, %v1768
        %vm1770 = vweird.f32 %v1695
        %vm1771 = vweird.f32 %v1765
        %vm1772 = vmor %vm1770, %vm1771
        %v1773 = vsel %vm1772, %v1765, %v1769
        %v1774 = vand.u32 2147483647, %v1695
        %vm1775 = vcmp.eq.f32.partialorder %v1774, 8.507059e+37
        %v1776 = vand.u32 %v1695, 2147483648
        %v1777 = vor.u32 1.1754944e-38, %v1776
        %v1778 = vsel %vm1775, %v1777, %v1773
        %v1779 = vmul.f32 %v1674, %v1778
        %v1780 = vrcp.pop %v1698
        %v1781 = vmul.f32 %v1698, %v1780
        %v1782 = vsub.f32 1.0, %v1781
        %v1783 = vmul.f32 %v1780, %v1782
        %v1784 = vadd.f32 %v1780, %v1783
        %vm1785 = vweird.f32 %v1698
        %vm1786 = vweird.f32 %v1780
        %vm1787 = vmor %vm1785, %vm1786
        %v1788 = vsel %vm1787, %v1780, %v1784
        %v1789 = vand.u32 2147483647, %v1698
        %vm1790 = vcmp.eq.f32.partialorder %v1789, 8.507059e+37
        %v1791 = vand.u32 %v1698, 2147483648
        %v1792 = vor.u32 1.1754944e-38, %v1791
        %v1793 = vsel %vm1790, %v1792, %v1788
        %v1794 = vmul.f32 %v1676, %v1793
        %v1795 = vrcp.pop %v1701
        %v1796 = vmul.f32 %v1701, %v1795
        %v1797 = vsub.f32 1.0, %v1796
        %v1798 = vmul.f32 %v1795, %v1797
        %v1799 = vadd.f32 %v1795, %v1798
        %vm1800 = vweird.f32 %v1701
        %vm1801 = vweird.f32 %v1795
        %vm1802 = vmor %vm1800, %vm1801
        %v1803 = vsel %vm1802, %v1795, %v1799
        %v1804 = vand.u32 2147483647, %v1701
        %vm1805 = vcmp.eq.f32.partialorder %v1804, 8.507059e+37
        %v1806 = vand.u32 %v1701, 2147483648
        %v1807 = vor.u32 1.1754944e-38, %v1806
        %v1808 = vsel %vm1805, %v1807, %v1803
        %v1809 = vmul.f32 %v1678, %v1808
        %v1810 = vrcp.pop %v1704
        %v1811 = vmul.f32 %v1704, %v1810
        %v1812 = vsub.f32 1.0, %v1811
        %v1813 = vmul.f32 %v1810, %v1812
        %v1814 = vadd.f32 %v1810, %v1813
        %vm1815 = vweird.f32 %v1704
        %vm1816 = vweird.f32 %v1810
        %vm1817 = vmor %vm1815, %vm1816
        %v1818 = vsel %vm1817, %v1810, %v1814
        %v1819 = vand.u32 2147483647, %v1704
        %vm1820 = vcmp.eq.f32.partialorder %v1819, 8.507059e+37
        %v1821 = vand.u32 %v1704, 2147483648
        %v1822 = vor.u32 1.1754944e-38, %v1821
        %v1823 = vsel %vm1820, %v1822, %v1818
        %v1824 = vmul.f32 %v1680, %v1823
        %v1825 = vpack.c.bf16 %v1734, %v1719
        %v1826 = vpack.c.bf16 %v1764, %v1749
        %v1827 = vpack.c.bf16 %v1794, %v1779
        %v1828 = vpack.c.bf16 %v1824, %v1809
        %v1829 = vpack.c.bf16 %v1521, %v1519
        %v1830 = vpack.c.bf16 %v1526, %v1524
        %v1831 = vpack.c.bf16 %v1531, %v1529
        %v1832 = vpack.c.bf16 %v1536, %v1534
        %v1834 = vsel %vm674, %v1825, 0
        %v1837 = vsel %vm674, %v1826, 0
        %v1840 = vsel %vm674, %v1827, 0
        %v1843 = vsel %vm674, %v1828, 0
        %1845 = vmatpush.bf16.msra.mxu0 0
        %1846 = vmatpush.bf16.msra.mxu0 0
        %1847 = vmatpush.bf16.msra.mxu0 0
        %1848 = vmatpush.bf16.msra.mxu0 0
        %1849 = vmatpush.bf16.msra.mxu0 %v1832
        %1850 = vmatpush.bf16.msra.mxu0 %v1831
        %1851 = vmatpush.bf16.msra.mxu0 %v1830
        %1852 = vmatpush.bf16.msra.mxu0 %v1829
        %1853 = vmatmul.bf16.gmra.mxu0 %v1834
        %v1854 = vpop.f32.mrf.mxu0
        %v1855 = vadd.f32 %v1436, %v1854
        %v1856 = vpop.f32.mrf.mxu0
        %v1857 = vadd.f32 %v1437, %v1856
        %1858 = vmatmul.bf16.gmra.mxu0 %v1837
        %v1859 = vpop.f32.mrf.mxu0
        %v1860 = vadd.f32 %v1438, %v1859
        %v1861 = vpop.f32.mrf.mxu0
        %v1862 = vadd.f32 %v1439, %v1861
        %1863 = vmatmul.bf16.gmra.mxu0 %v1840
        %v1864 = vpop.f32.mrf.mxu0
        %v1865 = vadd.f32 %v1440, %v1864
        %v1866 = vpop.f32.mrf.mxu0
        %v1867 = vadd.f32 %v1441, %v1866
        %1868 = vmatmul.bf16.gmra.mxu0 %v1843
        %v1869 = vpop.f32.mrf.mxu0
        %v1870 = vadd.f32 %v1442, %v1869
        %v1871 = vpop.f32.mrf.mxu0
        %v1872 = vadd.f32 %v1443, %v1871
        %1873 = vdwg.mxu0
        %v1874 = vld [vmem:[#allocation5 + $0x23] ss:$0 sm:$0xff]
        %v1875 = vld [vmem:[#allocation5 + $0x24] ss:$0 sm:$0xff]
        %v1876 = vsel %vm285, %v1855, 0.0
        %1877 = vadd.xlane.f32.xlu0 %v1876
        %v1878 = vpop.xlane.xlu0 %1877
        %v1879 = vsel %vm285, %v1857, 0.0
        %1880 = vadd.xlane.f32.xlu0 %v1879
        %v1881 = vpop.xlane.xlu0 %1880
        %v1882 = vsel %vm285, %v1860, 0.0
        %1883 = vadd.xlane.f32.xlu0 %v1882
        %v1884 = vpop.xlane.xlu0 %1883
        %v1885 = vsel %vm285, %v1862, 0.0
        %1886 = vadd.xlane.f32.xlu0 %v1885
        %v1887 = vpop.xlane.xlu0 %1886
        %v1888 = vsel %vm285, %v1865, 0.0
        %1889 = vadd.xlane.f32.xlu0 %v1888
        %v1890 = vpop.xlane.xlu0 %1889
        %v1891 = vsel %vm285, %v1867, 0.0
        %1892 = vadd.xlane.f32.xlu0 %v1891
        %v1893 = vpop.xlane.xlu0 %1892
        %v1894 = vsel %vm285, %v1870, 0.0
        %1895 = vadd.xlane.f32.xlu0 %v1894
        %v1896 = vpop.xlane.xlu0 %1895
        %v1897 = vsel %vm285, %v1872, 0.0
        %1898 = vadd.xlane.f32.xlu0 %v1897
        %v1899 = vpop.xlane.xlu0 %1898
        %v1900 = vmul.f32 %v1878, %v316
        %v1901 = vmul.f32 %v1881, %v316
        %v1902 = vmul.f32 %v1884, %v316
        %v1903 = vmul.f32 %v1887, %v316
        %v1904 = vmul.f32 %v1890, %v316
        %v1905 = vmul.f32 %v1893, %v316
        %v1906 = vmul.f32 %v1896, %v316
        %v1907 = vmul.f32 %v1899, %v316
        %v1908 = vsub.f32 %v1855, %v1900
        %v1909 = vsub.f32 %v1857, %v1901
        %v1910 = vsub.f32 %v1860, %v1902
        %v1911 = vsub.f32 %v1862, %v1903
        %v1912 = vsub.f32 %v1865, %v1904
        %v1913 = vsub.f32 %v1867, %v1905
        %v1914 = vsub.f32 %v1870, %v1906
        %v1915 = vsub.f32 %v1872, %v1907
        %v1916 = vmul.f32 %v1908, %v1908
        %v1917 = vmul.f32 %v1909, %v1909
        %v1918 = vmul.f32 %v1910, %v1910
        %v1919 = vmul.f32 %v1911, %v1911
        %v1920 = vmul.f32 %v1912, %v1912
        %v1921 = vmul.f32 %v1913, %v1913
        %v1922 = vmul.f32 %v1914, %v1914
        %v1923 = vmul.f32 %v1915, %v1915
        %v1924 = vsel %vm285, %v1916, 0.0
        %1925 = vadd.xlane.f32.xlu0 %v1924
        %v1926 = vpop.xlane.xlu0 %1925
        %v1927 = vsel %vm285, %v1917, 0.0
        %1928 = vadd.xlane.f32.xlu0 %v1927
        %v1929 = vpop.xlane.xlu0 %1928
        %v1930 = vsel %vm285, %v1918, 0.0
        %1931 = vadd.xlane.f32.xlu0 %v1930
        %v1932 = vpop.xlane.xlu0 %1931
        %v1933 = vsel %vm285, %v1919, 0.0
        %1934 = vadd.xlane.f32.xlu0 %v1933
        %v1935 = vpop.xlane.xlu0 %1934
        %v1936 = vsel %vm285, %v1920, 0.0
        %1937 = vadd.xlane.f32.xlu0 %v1936
        %v1938 = vpop.xlane.xlu0 %1937
        %v1939 = vsel %vm285, %v1921, 0.0
        %1940 = vadd.xlane.f32.xlu0 %v1939
        %v1941 = vpop.xlane.xlu0 %1940
        %v1942 = vsel %vm285, %v1922, 0.0
        %1943 = vadd.xlane.f32.xlu0 %v1942
        %v1944 = vpop.xlane.xlu0 %1943
        %v1945 = vsel %vm285, %v1923, 0.0
        %1946 = vadd.xlane.f32.xlu0 %v1945
        %v1947 = vpop.xlane.xlu0 %1946
        %v1948 = vmul.f32 %v1926, %v316
        %v1949 = vmul.f32 %v1929, %v316
        %v1950 = vmul.f32 %v1932, %v316
        %v1951 = vmul.f32 %v1935, %v316
        %v1952 = vmul.f32 %v1938, %v316
        %v1953 = vmul.f32 %v1941, %v316
        %v1954 = vmul.f32 %v1944, %v316
        %v1955 = vmul.f32 %v1947, %v316
        %v1956 = vadd.f32 %v1948, 1e-05
        %v1957 = vadd.f32 %v1949, 1e-05
        %v1958 = vadd.f32 %v1950, 1e-05
        %v1959 = vadd.f32 %v1951, 1e-05
        %v1960 = vadd.f32 %v1952, 1e-05
        %v1961 = vadd.f32 %v1953, 1e-05
        %v1962 = vadd.f32 %v1954, 1e-05
        %v1963 = vadd.f32 %v1955, 1e-05
        %v1964 = vrsqrt.pop %v1956
        %v1965 = vmul.f32 %v1964, %v1956
        %v1966 = vmul.f32 %v1965, %v1964
        %v1967 = vmul.f32 0.5, %v1966
        %v1968 = vsub.f32 1.5, %v1967
        %v1969 = vmul.f32 %v1964, %v1968
        %vm1970 = vweird.f32 %v1956
        %vm1971 = vweird.f32 %v1964
        %vm1972 = vmor %vm1970, %vm1971
        %v1973 = vsel %vm1972, %v1964, %v1969
        %v1974 = vrsqrt.pop %v1957
        %v1975 = vmul.f32 %v1974, %v1957
        %v1976 = vmul.f32 %v1975, %v1974
        %v1977 = vmul.f32 0.5, %v1976
        %v1978 = vsub.f32 1.5, %v1977
        %v1979 = vmul.f32 %v1974, %v1978
        %vm1980 = vweird.f32 %v1957
        %vm1981 = vweird.f32 %v1974
        %vm1982 = vmor %vm1980, %vm1981
        %v1983 = vsel %vm1982, %v1974, %v1979
        %v1984 = vrsqrt.pop %v1958
        %v1985 = vmul.f32 %v1984, %v1958
        %v1986 = vmul.f32 %v1985, %v1984
        %v1987 = vmul.f32 0.5, %v1986
        %v1988 = vsub.f32 1.5, %v1987
        %v1989 = vmul.f32 %v1984, %v1988
        %vm1990 = vweird.f32 %v1958
        %vm1991 = vweird.f32 %v1984
        %vm1992 = vmor %vm1990, %vm1991
        %v1993 = vsel %vm1992, %v1984, %v1989
        %v1994 = vrsqrt.pop %v1959
        %v1995 = vmul.f32 %v1994, %v1959
        %v1996 = vmul.f32 %v1995, %v1994
        %v1997 = vmul.f32 0.5, %v1996
        %v1998 = vsub.f32 1.5, %v1997
        %v1999 = vmul.f32 %v1994, %v1998
        %vm2000 = vweird.f32 %v1959
        %vm2001 = vweird.f32 %v1994
        %vm2002 = vmor %vm2000, %vm2001
        %v2003 = vsel %vm2002, %v1994, %v1999
        %v2004 = vrsqrt.pop %v1960
        %v2005 = vmul.f32 %v2004, %v1960
        %v2006 = vmul.f32 %v2005, %v2004
        %v2007 = vmul.f32 0.5, %v2006
        %v2008 = vsub.f32 1.5, %v2007
        %v2009 = vmul.f32 %v2004, %v2008
        %vm2010 = vweird.f32 %v1960
        %vm2011 = vweird.f32 %v2004
        %vm2012 = vmor %vm2010, %vm2011
        %v2013 = vsel %vm2012, %v2004, %v2009
        %v2014 = vrsqrt.pop %v1961
        %v2015 = vmul.f32 %v2014, %v1961
        %v2016 = vmul.f32 %v2015, %v2014
        %v2017 = vmul.f32 0.5, %v2016
        %v2018 = vsub.f32 1.5, %v2017
        %v2019 = vmul.f32 %v2014, %v2018
        %vm2020 = vweird.f32 %v1961
        %vm2021 = vweird.f32 %v2014
        %vm2022 = vmor %vm2020, %vm2021
        %v2023 = vsel %vm2022, %v2014, %v2019
        %v2024 = vrsqrt.pop %v1962
        %v2025 = vmul.f32 %v2024, %v1962
        %v2026 = vmul.f32 %v2025, %v2024
        %v2027 = vmul.f32 0.5, %v2026
        %v2028 = vsub.f32 1.5, %v2027
        %v2029 = vmul.f32 %v2024, %v2028
        %vm2030 = vweird.f32 %v1962
        %vm2031 = vweird.f32 %v2024
        %vm2032 = vmor %vm2030, %vm2031
        %v2033 = vsel %vm2032, %v2024, %v2029
        %v2034 = vrsqrt.pop %v1963
        %v2035 = vmul.f32 %v2034, %v1963
        %v2036 = vmul.f32 %v2035, %v2034
        %v2037 = vmul.f32 0.5, %v2036
        %v2038 = vsub.f32 1.5, %v2037
        %v2039 = vmul.f32 %v2034, %v2038
        %vm2040 = vweird.f32 %v1963
        %vm2041 = vweird.f32 %v2034
        %vm2042 = vmor %vm2040, %vm2041
        %v2043 = vsel %vm2042, %v2034, %v2039
        %v2044 = vmul.f32 %v1908, %v1973
        %v2045 = vmul.f32 %v1909, %v1983
        %v2046 = vmul.f32 %v1910, %v1993
        %v2047 = vmul.f32 %v1911, %v2003
        %v2048 = vmul.f32 %v1912, %v2013
        %v2049 = vmul.f32 %v1913, %v2023
        %v2050 = vmul.f32 %v1914, %v2033
        %v2051 = vmul.f32 %v1915, %v2043
        %v2052 = vmul.f32 %v2044, %v1874
        %v2053 = vmul.f32 %v2045, %v1874
        %v2054 = vmul.f32 %v2046, %v1874
        %v2055 = vmul.f32 %v2047, %v1874
        %v2056 = vmul.f32 %v2048, %v1874
        %v2057 = vmul.f32 %v2049, %v1874
        %v2058 = vmul.f32 %v2050, %v1874
        %v2059 = vmul.f32 %v2051, %v1874
        %v2060 = vadd.f32 %v2052, %v1875
        %v2061 = vadd.f32 %v2053, %v1875
        %v2062 = vadd.f32 %v2054, %v1875
        %v2063 = vadd.f32 %v2055, %v1875
        %v2064 = vadd.f32 %v2056, %v1875
        %v2065 = vadd.f32 %v2057, %v1875
        %v2066 = vadd.f32 %v2058, %v1875
        %v2067 = vadd.f32 %v2059, %v1875
        %v2068 = vpack.c.bf16 %v2061, %v2060
        %v2069 = vpack.c.bf16 %v2063, %v2062
        %v2070 = vpack.c.bf16 %v2065, %v2064
        %v2071 = vpack.c.bf16 %v2067, %v2066
        %v2072 = vld [vmem:[#allocation2 + $0x160] sm:$0xf]
        %v2073 = vld [vmem:[#allocation2 + $0x170] sm:$0xf]
        %v2074 = vld [vmem:[#allocation2 + $0x180] sm:$0xf]
        %v2075 = vld [vmem:[#allocation2 + $0x190] sm:$0xf]
        %v2076 = vld [vmem:[#allocation5 + $0x25] ss:$0 sm:$0xff]
        %v2081 = vunpack.c.l.b16 %v2072
        %v2082 = vunpack.c.l.b16 %v2073
        %v2083 = vunpack.c.l.b16 %v2074
        %v2084 = vunpack.c.l.b16 %v2075
        %v2085 = vpack.c.b16 %v2082, %v2081
        %v2086 = vpack.c.b16 %v2084, %v2083
        %v2090 = vsel %vm285, %v2068, 0
        %v2093 = vsel %vm285, %v2069, 0
        %v2096 = vsel %vm285, %v2070, 0
        %v2099 = vsel %vm285, %v2071, 0
        %2101 = vmatpush.bf16.msra.mxu0 0
        %2102 = vmatpush.bf16.msra.mxu0 0
        %2103 = vmatpush.bf16.msra.mxu0 0
        %2104 = vmatpush.bf16.msra.mxu0 0
        %2105 = vmatpush.bf16.msra.mxu0 0
        %2106 = vmatpush.bf16.msra.mxu0 0
        %2107 = vmatpush.bf16.msra.mxu0 %v2086
        %2108 = vmatpush.bf16.msra.mxu0 %v2085
        %2109 = vmatmul.bf16.gmra.mxu0 %v2090
        %v2110 = vpop.f32.mrf.mxu0
        %v2111 = vadd.f32 %v2076, %v2110
        %v2112 = vpop.f32.mrf.mxu0
        %v2113 = vadd.f32 %v2076, %v2112
        %2114 = vmatmul.bf16.gmra.mxu0 %v2093
        %v2115 = vpop.f32.mrf.mxu0
        %v2116 = vadd.f32 %v2076, %v2115
        %v2117 = vpop.f32.mrf.mxu0
        %v2118 = vadd.f32 %v2076, %v2117
        %2119 = vmatmul.bf16.gmra.mxu0 %v2096
        %v2120 = vpop.f32.mrf.mxu0
        %v2121 = vadd.f32 %v2076, %v2120
        %v2122 = vpop.f32.mrf.mxu0
        %v2123 = vadd.f32 %v2076, %v2122
        %2124 = vmatmul.bf16.gmra.mxu0 %v2099
        %v2125 = vpop.f32.mrf.mxu0
        %v2126 = vadd.f32 %v2076, %v2125
        %v2127 = vpop.f32.mrf.mxu0
        %v2128 = vadd.f32 %v2076, %v2127
        %2129 = vdwg.mxu0
        %v2130 = vmax.f32 %v2111, 0.0
        %v2131 = vmax.f32 %v2113, 0.0
        %v2132 = vmax.f32 %v2116, 0.0
        %v2133 = vmax.f32 %v2118, 0.0
        %v2134 = vmax.f32 %v2121, 0.0
        %v2135 = vmax.f32 %v2123, 0.0
        %v2136 = vmax.f32 %v2126, 0.0
        %v2137 = vmax.f32 %v2128, 0.0
        %v2138 = vpack.c.bf16 %v2131, %v2130
        %v2139 = vpack.c.bf16 %v2133, %v2132
        %v2140 = vpack.c.bf16 %v2135, %v2134
        %v2141 = vpack.c.bf16 %v2137, %v2136
        %v2142 = vld [vmem:[#allocation2 + $0x1a0] sm:$0xf]
        %v2143 = vld [vmem:[#allocation2 + $0x1b0] sm:$0xf]
        %v2144 = vld [vmem:[#allocation2 + $0x1c0] sm:$0xf]
        %v2145 = vld [vmem:[#allocation2 + $0x1d0] sm:$0xf]
        %v2146 = vld [vmem:[#allocation5 + $0x26] ss:$0 sm:$0xff]
        %v2151 = vunpack.c.l.b16 %v2142
        %v2152 = vunpack.c.l.b16 %v2143
        %v2153 = vunpack.c.l.b16 %v2144
        %v2154 = vunpack.c.l.b16 %v2145
        %v2155 = vpack.c.b16 %v2152, %v2151
        %v2156 = vpack.c.b16 %v2154, %v2153
        %v2160 = vsel %vm285, %v2138, 0
        %v2163 = vsel %vm285, %v2139, 0
        %v2166 = vsel %vm285, %v2140, 0
        %v2169 = vsel %vm285, %v2141, 0
        %2171 = vmatpush.bf16.msra.mxu0 0
        %2172 = vmatpush.bf16.msra.mxu0 0
        %2173 = vmatpush.bf16.msra.mxu0 0
        %2174 = vmatpush.bf16.msra.mxu0 0
        %2175 = vmatpush.bf16.msra.mxu0 0
        %2176 = vmatpush.bf16.msra.mxu0 0
        %2177 = vmatpush.bf16.msra.mxu0 %v2156
        %2178 = vmatpush.bf16.msra.mxu0 %v2155
        %2179 = vmatmul.bf16.gmra.mxu0 %v2160
        %v2180 = vpop.f32.mrf.mxu0
        %v2181 = vadd.f32 %v2146, %v2180
        %v2182 = vpop.f32.mrf.mxu0
        %v2183 = vadd.f32 %v2146, %v2182
        %2184 = vmatmul.bf16.gmra.mxu0 %v2163
        %v2185 = vpop.f32.mrf.mxu0
        %v2186 = vadd.f32 %v2146, %v2185
        %v2187 = vpop.f32.mrf.mxu0
        %v2188 = vadd.f32 %v2146, %v2187
        %2189 = vmatmul.bf16.gmra.mxu0 %v2166
        %v2190 = vpop.f32.mrf.mxu0
        %v2191 = vadd.f32 %v2146, %v2190
        %v2192 = vpop.f32.mrf.mxu0
        %v2193 = vadd.f32 %v2146, %v2192
        %2194 = vmatmul.bf16.gmra.mxu0 %v2169
        %v2195 = vpop.f32.mrf.mxu0
        %v2196 = vadd.f32 %v2146, %v2195
        %v2197 = vpop.f32.mrf.mxu0
        %v2198 = vadd.f32 %v2146, %v2197
        %2199 = vdwg.mxu0
        %v2200 = vadd.f32 %v2181, %v1855
        %v2201 = vadd.f32 %v2183, %v1857
        %v2202 = vadd.f32 %v2186, %v1860
        %v2203 = vadd.f32 %v2188, %v1862
        %v2204 = vadd.f32 %v2191, %v1865
        %v2205 = vadd.f32 %v2193, %v1867
        %v2206 = vadd.f32 %v2196, %v1870
        %v2207 = vadd.f32 %v2198, %v1872
        %v2208 = vld [vmem:[#allocation5 + $0x27] ss:$0 sm:$0xff]
        %v2209 = vpack.c.bf16 %v2201, %v2200
        %v2210 = vpack.c.bf16 %v2203, %v2202
        %v2211 = vpack.c.bf16 %v2205, %v2204
        %v2212 = vpack.c.bf16 %v2207, %v2206
        %v2213 = vld [vmem:[#allocation2 + $0x1e0] sm:$0xf]
        %v2214 = vld [vmem:[#allocation2 + $0x1f0] sm:$0xf]
        %v2217 = vunpack.c.l.b16 %v2213
        %v2218 = vunpack.c.l.b16 %v2214
        %v2219 = vpack.c.b16 %v2218, %v2217
        %v2221 = vsel %vm674, %v2219, 0
        %2223 = vmatpush.bf16.msra.mxu0 0
        %2224 = vmatpush.bf16.msra.mxu0 0
        %2225 = vmatpush.bf16.msra.mxu0 0
        %2226 = vmatpush.bf16.msra.mxu0 0
        %2227 = vmatpush.bf16.msra.mxu0 %v2212
        %2228 = vmatpush.bf16.msra.mxu0 %v2211
        %2229 = vmatpush.bf16.msra.mxu0 %v2210
        %2230 = vmatpush.bf16.msra.mxu0 %v2209
        %2231 = vmatmul.bf16.gmra.mxu0 %v2221
        %v2232 = vpop.f32.mrf.mxu0
        %v2233 = vadd.f32 0.0, %v2232
        %v2234 = vpop.f32.mrf.mxu0
        %v2235 = vadd.f32 0.0, %v2234
        %2236 = vdwg.mxu0
        %v2237 = vpack.c.bf16 %v2235, %v2233
        %v2238 = vld [vmem:[#allocation2 + $0x260] sm:$0xf]
        %v2239 = vld [vmem:[#allocation2 + $0x270] sm:$0xf]
        %v2240 = vld [vmem:[#allocation2 + $0x280] sm:$0xf]
        %v2241 = vld [vmem:[#allocation2 + $0x290] sm:$0xf]
        %v2242 = vld [vmem:[#allocation2 + $0x200] sm:$0xf]
        %v2243 = vld [vmem:[#allocation2 + $0x210] sm:$0xf]
        %v2246 = vunpack.c.l.b16 %v2242
        %v2247 = vunpack.c.l.b16 %v2243
        %v2248 = vpack.c.b16 %v2247, %v2246
        %v2250 = vsel %vm674, %v2248, 0
        %2252 = vmatpush.bf16.msra.mxu0 0
        %2253 = vmatpush.bf16.msra.mxu0 0
        %2254 = vmatpush.bf16.msra.mxu0 0
        %2255 = vmatpush.bf16.msra.mxu0 0
        %2256 = vmatpush.bf16.msra.mxu0 %v2212
        %2257 = vmatpush.bf16.msra.mxu0 %v2211
        %2258 = vmatpush.bf16.msra.mxu0 %v2210
        %2259 = vmatpush.bf16.msra.mxu0 %v2209
        %2260 = vmatmul.bf16.gmra.mxu0 %v2250
        %v2261 = vpop.f32.mrf.mxu0
        %v2262 = vadd.f32 0.0, %v2261
        %v2263 = vpop.f32.mrf.mxu0
        %v2264 = vadd.f32 0.0, %v2263
        %2265 = vdwg.mxu0
        %v2266 = vpack.c.bf16 %v2264, %v2262
        %v2267 = vld [vmem:[#allocation2 + $0x2a0] sm:$0xf]
        %v2268 = vld [vmem:[#allocation2 + $0x2b0] sm:$0xf]
        %v2269 = vld [vmem:[#allocation2 + $0x2c0] sm:$0xf]
        %v2270 = vld [vmem:[#allocation2 + $0x2d0] sm:$0xf]
        %v2275 = vunpack.c.l.b16 %v2267
        %v2276 = vunpack.c.l.b16 %v2268
        %v2277 = vunpack.c.l.b16 %v2269
        %v2278 = vunpack.c.l.b16 %v2270
        %v2279 = vpack.c.b16 %v2276, %v2275
        %v2280 = vpack.c.b16 %v2278, %v2277
        %v2284 = vsel %vm285, %v2266, 0
        %2286 = vmatpush.bf16.msra.mxu0 0
        %2287 = vmatpush.bf16.msra.mxu0 0
        %2288 = vmatpush.bf16.msra.mxu0 0
        %2289 = vmatpush.bf16.msra.mxu0 0
        %2290 = vmatpush.bf16.msra.mxu0 0
        %2291 = vmatpush.bf16.msra.mxu0 0
        %2292 = vmatpush.bf16.msra.mxu0 %v2280
        %2293 = vmatpush.bf16.msra.mxu0 %v2279
        %2294 = vmatmul.bf16.gmra.mxu0 %v2284
        %v2295 = vpop.f32.mrf.mxu0
        %v2296 = vadd.f32 0.0, %v2295
        %v2297 = vpop.f32.mrf.mxu0
        %v2298 = vadd.f32 0.0, %v2297
        %2299 = vdwg.mxu0
        %v2304 = vunpack.c.l.b16 %v2238
        %v2305 = vunpack.c.l.b16 %v2239
        %v2306 = vunpack.c.l.b16 %v2240
        %v2307 = vunpack.c.l.b16 %v2241
        %v2308 = vpack.c.b16 %v2305, %v2304
        %v2309 = vpack.c.b16 %v2307, %v2306
        %v2313 = vsel %vm285, %v2237, 0
        %2315 = vmatpush.bf16.msra.mxu0 0
        %2316 = vmatpush.bf16.msra.mxu0 0
        %2317 = vmatpush.bf16.msra.mxu0 0
        %2318 = vmatpush.bf16.msra.mxu0 0
        %2319 = vmatpush.bf16.msra.mxu0 0
        %2320 = vmatpush.bf16.msra.mxu0 0
        %2321 = vmatpush.bf16.msra.mxu0 %v2309
        %2322 = vmatpush.bf16.msra.mxu0 %v2308
        %2323 = vmatmul.bf16.gmra.mxu0 %v2313
        %v2324 = vpop.f32.mrf.mxu0
        %v2325 = vadd.f32 %v2296, %v2324
        %v2326 = vpop.f32.mrf.mxu0
        %v2327 = vadd.f32 %v2298, %v2326
        %2328 = vdwg.mxu0
        %v2329 = vld [vmem:[#allocation2 + $0x220] sm:$0xf]
        %v2330 = vld [vmem:[#allocation2 + $0x230] sm:$0xf]
        %v2333 = vunpack.c.l.b16 %v2329
        %v2334 = vunpack.c.l.b16 %v2330
        %v2335 = vpack.c.b16 %v2334, %v2333
        %v2337 = vsel %vm674, %v2335, 0
        %2339 = vmatpush.bf16.msra.mxu0 0
        %2340 = vmatpush.bf16.msra.mxu0 0
        %2341 = vmatpush.bf16.msra.mxu0 0
        %2342 = vmatpush.bf16.msra.mxu0 0
        %2343 = vmatpush.bf16.msra.mxu0 %v2212
        %2344 = vmatpush.bf16.msra.mxu0 %v2211
        %2345 = vmatpush.bf16.msra.mxu0 %v2210
        %2346 = vmatpush.bf16.msra.mxu0 %v2209
        %2347 = vmatmul.bf16.gmra.mxu0 %v2337
        %v2348 = vpop.f32.mrf.mxu0
        %v2349 = vadd.f32 0.0, %v2348
        %v2350 = vpop.f32.mrf.mxu0
        %v2351 = vadd.f32 0.0, %v2350
        %2352 = vdwg.mxu0
        %v2353 = vpack.c.bf16 %v2351, %v2349
        %v2354 = vld [vmem:[#allocation2 + $0x2e0] sm:$0xf]
        %v2355 = vld [vmem:[#allocation2 + $0x2f0] sm:$0xf]
        %v2356 = vld [vmem:[#allocation2 + $0x300] sm:$0xf]
        %v2357 = vld [vmem:[#allocation2 + $0x310] sm:$0xf]
        %v2362 = vunpack.c.l.b16 %v2354
        %v2363 = vunpack.c.l.b16 %v2355
        %v2364 = vunpack.c.l.b16 %v2356
        %v2365 = vunpack.c.l.b16 %v2357
        %v2366 = vpack.c.b16 %v2363, %v2362
        %v2367 = vpack.c.b16 %v2365, %v2364
        %v2371 = vsel %vm285, %v2353, 0
        %2373 = vmatpush.bf16.msra.mxu0 0
        %2374 = vmatpush.bf16.msra.mxu0 0
        %2375 = vmatpush.bf16.msra.mxu0 0
        %2376 = vmatpush.bf16.msra.mxu0 0
        %2377 = vmatpush.bf16.msra.mxu0 0
        %2378 = vmatpush.bf16.msra.mxu0 0
        %2379 = vmatpush.bf16.msra.mxu0 %v2367
        %2380 = vmatpush.bf16.msra.mxu0 %v2366
        %2381 = vmatmul.bf16.gmra.mxu0 %v2371
        %v2382 = vpop.f32.mrf.mxu0
        %v2383 = vadd.f32 0.0, %v2382
        %v2384 = vpop.f32.mrf.mxu0
        %v2385 = vadd.f32 0.0, %v2384
        %2386 = vdwg.mxu0
        %v2387 = vadd.f32 %v2325, %v2383
        %v2388 = vadd.f32 %v2327, %v2385
        %v2389 = vld [vmem:[#allocation2 + $0x240] sm:$0xf]
        %v2390 = vld [vmem:[#allocation2 + $0x250] sm:$0xf]
        %v2393 = vunpack.c.l.b16 %v2389
        %v2394 = vunpack.c.l.b16 %v2390
        %v2395 = vpack.c.b16 %v2394, %v2393
        %v2397 = vsel %vm674, %v2395, 0
        %2399 = vmatpush.bf16.msra.mxu0 0
        %2400 = vmatpush.bf16.msra.mxu0 0
        %2401 = vmatpush.bf16.msra.mxu0 0
        %2402 = vmatpush.bf16.msra.mxu0 0
        %2403 = vmatpush.bf16.msra.mxu0 %v2212
        %2404 = vmatpush.bf16.msra.mxu0 %v2211
        %2405 = vmatpush.bf16.msra.mxu0 %v2210
        %2406 = vmatpush.bf16.msra.mxu0 %v2209
        %2407 = vmatmul.bf16.gmra.mxu0 %v2397
        %v2408 = vpop.f32.mrf.mxu0
        %v2409 = vadd.f32 0.0, %v2408
        %v2410 = vpop.f32.mrf.mxu0
        %v2411 = vadd.f32 0.0, %v2410
        %2412 = vdwg.mxu0
        %v2413 = vpack.c.bf16 %v2411, %v2409
        %v2414 = vld [vmem:[#allocation2 + $0x320] sm:$0xf]
        %v2415 = vld [vmem:[#allocation2 + $0x330] sm:$0xf]
        %v2416 = vld [vmem:[#allocation2 + $0x340] sm:$0xf]
        %v2417 = vld [vmem:[#allocation2 + $0x350] sm:$0xf]
        %v2422 = vunpack.c.l.b16 %v2414
        %v2423 = vunpack.c.l.b16 %v2415
        %v2424 = vunpack.c.l.b16 %v2416
        %v2425 = vunpack.c.l.b16 %v2417
        %v2426 = vpack.c.b16 %v2423, %v2422
        %v2427 = vpack.c.b16 %v2425, %v2424
        %v2431 = vsel %vm285, %v2413, 0
        %2433 = vmatpush.bf16.msra.mxu0 0
        %2434 = vmatpush.bf16.msra.mxu0 0
        %2435 = vmatpush.bf16.msra.mxu0 0
        %2436 = vmatpush.bf16.msra.mxu0 0
        %2437 = vmatpush.bf16.msra.mxu0 0
        %2438 = vmatpush.bf16.msra.mxu0 0
        %2439 = vmatpush.bf16.msra.mxu0 %v2427
        %2440 = vmatpush.bf16.msra.mxu0 %v2426
        %2441 = vmatmul.bf16.gmra.mxu0 %v2431
        %v2442 = vpop.f32.mrf.mxu0
        %v2443 = vadd.f32 0.0, %v2442
        %v2444 = vpop.f32.mrf.mxu0
        %v2445 = vadd.f32 0.0, %v2444
        %2446 = vdwg.mxu0
        %v2447 = vadd.f32 %v2387, %v2443
        %v2448 = vadd.f32 %v2388, %v2445
        %v2449 = vadd.f32 %v2447, %v2208
        %v2450 = vadd.f32 %v2448, %v2208
        %v2451 = vld [vmem:[#allocation5 + $0x40] ss:$0 sm:$0xff]
        %v2452 = vld [vmem:[#allocation5 + $0x41] ss:$0 sm:$0xff]
        %v2453 = vsel %vm674, %v2449, 0.0
        %2454 = vadd.xlane.f32.xlu0 %v2453
        %v2455 = vpop.xlane.xlu0 %2454
        %v2456 = vsel %vm674, %v2450, 0.0
        %2457 = vadd.xlane.f32.xlu0 %v2456
        %v2458 = vpop.xlane.xlu0 %2457
        %v2459 = vrcp.pop 64.0
        %v2460 = vmul.f32 64.0, %v2459
        %v2461 = vsub.f32 1.0, %v2460
        %v2462 = vmul.f32 %v2459, %v2461
        %v2463 = vadd.f32 %v2459, %v2462
        %vm2464 = vweird.f32 %v2459
        %v2465 = vsel %vm2464, %v2459, %v2463
        %v2466 = vmul.f32 %v2455, %v2465
        %v2467 = vmul.f32 %v2458, %v2465
        %v2468 = vsub.f32 %v2449, %v2466
        %v2469 = vsub.f32 %v2450, %v2467
        %v2470 = vmul.f32 %v2468, %v2468
        %v2471 = vmul.f32 %v2469, %v2469
        %v2472 = vsel %vm674, %v2470, 0.0
        %2473 = vadd.xlane.f32.xlu0 %v2472
        %v2474 = vpop.xlane.xlu0 %2473
        %v2475 = vsel %vm674, %v2471, 0.0
        %2476 = vadd.xlane.f32.xlu0 %v2475
        %v2477 = vpop.xlane.xlu0 %2476
        %v2478 = vmul.f32 %v2474, %v2465
        %v2479 = vmul.f32 %v2477, %v2465
        %v2480 = vadd.f32 %v2478, 1e-05
        %v2481 = vadd.f32 %v2479, 1e-05
        %v2482 = vrsqrt.pop %v2480
        %v2483 = vmul.f32 %v2482, %v2480
        %v2484 = vmul.f32 %v2483, %v2482
        %v2485 = vmul.f32 0.5, %v2484
        %v2486 = vsub.f32 1.5, %v2485
        %v2487 = vmul.f32 %v2482, %v2486
        %vm2488 = vweird.f32 %v2480
        %vm2489 = vweird.f32 %v2482
        %vm2490 = vmor %vm2488, %vm2489
        %v2491 = vsel %vm2490, %v2482, %v2487
        %v2492 = vrsqrt.pop %v2481
        %v2493 = vmul.f32 %v2492, %v2481
        %v2494 = vmul.f32 %v2493, %v2492
        %v2495 = vmul.f32 0.5, %v2494
        %v2496 = vsub.f32 1.5, %v2495
        %v2497 = vmul.f32 %v2492, %v2496
        %vm2498 = vweird.f32 %v2481
        %vm2499 = vweird.f32 %v2492
        %vm2500 = vmor %vm2498, %vm2499
        %v2501 = vsel %vm2500, %v2492, %v2497
        %v2502 = vmul.f32 %v2468, %v2491
        %v2503 = vmul.f32 %v2469, %v2501
        %v2504 = vmul.f32 %v2502, %v2451
        %v2505 = vmul.f32 %v2503, %v2451
        %v2506 = vadd.f32 %v2504, %v2452
        %v2507 = vadd.f32 %v2505, %v2452
        %v2508 = vpack.c.bf16 %v2507, %v2506
        %v2509 = vld [vmem:[#allocation2 + $0x360] sm:$0xff]
        %v2510 = vld [vmem:[#allocation2 + $0x368] sm:$0xf]
        %v2511 = vld [vmem:[#allocation2 + $0x370] sm:$0xff]
        %v2512 = vld [vmem:[#allocation2 + $0x378] sm:$0xf]
        %v2513 = vld [vmem:[#allocation2 + $0x380] sm:$0xff]
        %v2514 = vld [vmem:[#allocation2 + $0x388] sm:$0xf]
        %v2515 = vld [vmem:[#allocation2 + $0x390] sm:$0xff]
        %v2516 = vld [vmem:[#allocation2 + $0x398] sm:$0xf]
        %v2517 = vld [vmem:[#allocation2 + $0x3a0] sm:$0xff]
        %v2518 = vld [vmem:[#allocation2 + $0x3a8] sm:$0xf]
        %v2519 = vld [vmem:[#allocation2 + $0x3b0] sm:$0xff]
        %v2520 = vld [vmem:[#allocation2 + $0x3b8] sm:$0xf]
        %v2521 = vld [vmem:[#allocation2 + $0x3c0] sm:$0xff]
        %v2522 = vld [vmem:[#allocation2 + $0x3c8] sm:$0xf]
        %v2523 = vld [vmem:[#allocation2 + $0x3d0] sm:$0xff]
        %v2524 = vld [vmem:[#allocation2 + $0x3d8] sm:$0xf]
        %s2525 = scalar_lea.vmem [#allocation5], 66
        %v2526 = vld [vmem:[%s2525] ss:$8 sm:$0x7]
        %v2528 = vperm.slane %v2526, 0
        %v2529 = vperm.slane %v2526, 1
        %v2530 = vperm.slane %v2526, 2
        %v2550 = vunpack.c.l.b16 %v2509
        %v2551 = vunpack.c.h.b16 %v2509
        %v2552 = vunpack.c.l.b16 %v2510
        %v2553 = vunpack.c.l.b16 %v2511
        %v2554 = vunpack.c.h.b16 %v2511
        %v2555 = vunpack.c.l.b16 %v2512
        %v2556 = vunpack.c.l.b16 %v2513
        %v2557 = vunpack.c.h.b16 %v2513
        %v2558 = vunpack.c.l.b16 %v2514
        %v2559 = vunpack.c.l.b16 %v2515
        %v2560 = vunpack.c.h.b16 %v2515
        %v2561 = vunpack.c.l.b16 %v2516
        %v2562 = vunpack.c.l.b16 %v2517
        %v2563 = vunpack.c.h.b16 %v2517
        %v2564 = vunpack.c.l.b16 %v2518
        %v2565 = vunpack.c.l.b16 %v2519
        %v2566 = vunpack.c.h.b16 %v2519
        %v2567 = vunpack.c.l.b16 %v2520
        %v2568 = vunpack.c.l.b16 %v2521
        %v2569 = vunpack.c.h.b16 %v2521
        %v2570 = vunpack.c.l.b16 %v2522
        %v2571 = vunpack.c.l.b16 %v2523
        %v2572 = vunpack.c.h.b16 %v2523
        %v2573 = vunpack.c.l.b16 %v2524
        %v2574 = vpack.c.b16 %v2553, %v2550
        %v2575 = vpack.c.b16 %v2554, %v2551
        %v2576 = vpack.c.b16 %v2555, %v2552
        %v2577 = vpack.c.b16 %v2559, %v2556
        %v2578 = vpack.c.b16 %v2560, %v2557
        %v2579 = vpack.c.b16 %v2561, %v2558
        %v2580 = vpack.c.b16 %v2565, %v2562
        %v2581 = vpack.c.b16 %v2566, %v2563
        %v2582 = vpack.c.b16 %v2567, %v2564
        %v2583 = vpack.c.b16 %v2571, %v2568
        %v2584 = vpack.c.b16 %v2572, %v2569
        %v2585 = vpack.c.b16 %v2573, %v2570
        %v2599 = vsel %vm674, %v2508, 0
        %2601 = vmatpush.bf16.msra.mxu0 0
        %2602 = vmatpush.bf16.msra.mxu0 0
        %2603 = vmatpush.bf16.msra.mxu0 0
        %2604 = vmatpush.bf16.msra.mxu0 0
        %2605 = vmatpush.bf16.msra.mxu0 %v2583
        %2606 = vmatpush.bf16.msra.mxu0 %v2580
        %2607 = vmatpush.bf16.msra.mxu0 %v2577
        %2608 = vmatpush.bf16.msra.mxu0 %v2574
        %2609 = vmatmul.bf16.gmra.mxu0 %v2599
        %v2610 = vpop.f32.mrf.mxu0
        %v2611 = vadd.f32 %v2528, %v2610
        %v2612 = vpop.f32.mrf.mxu0
        %v2613 = vadd.f32 %v2528, %v2612
        %2614 = vdwg.mxu0
        %2615 = vmatpush.bf16.msra.mxu0 0
        %2616 = vmatpush.bf16.msra.mxu0 0
        %2617 = vmatpush.bf16.msra.mxu0 0
        %2618 = vmatpush.bf16.msra.mxu0 0
        %2619 = vmatpush.bf16.msra.mxu0 %v2584
        %2620 = vmatpush.bf16.msra.mxu0 %v2581
        %2621 = vmatpush.bf16.msra.mxu0 %v2578
        %2622 = vmatpush.bf16.msra.mxu0 %v2575
        %2623 = vmatmul.bf16.gmra.mxu0 %v2599
        %v2624 = vpop.f32.mrf.mxu0
        %v2625 = vadd.f32 %v2529, %v2624
        %v2626 = vpop.f32.mrf.mxu0
        %v2627 = vadd.f32 %v2529, %v2626
        %2628 = vdwg.mxu0
        %2629 = vmatpush.bf16.msra.mxu0 0
        %2630 = vmatpush.bf16.msra.mxu0 0
        %2631 = vmatpush.bf16.msra.mxu0 0
        %2632 = vmatpush.bf16.msra.mxu0 0
        %2633 = vmatpush.bf16.msra.mxu0 %v2585
        %2634 = vmatpush.bf16.msra.mxu0 %v2582
        %2635 = vmatpush.bf16.msra.mxu0 %v2579
        %2636 = vmatpush.bf16.msra.mxu0 %v2576
        %2637 = vmatmul.bf16.gmra.mxu0 %v2599
        %v2638 = vpop.f32.mrf.mxu0
        %v2639 = vadd.f32 %v2530, %v2638
        %v2640 = vpop.f32.mrf.mxu0
        %v2641 = vadd.f32 %v2530, %v2640
        %2642 = vdwg.mxu0
        %v2643 = vpack.c.bf16 %v2627, %v2625
        %v2644 = vpack.c.bf16 %v2641, %v2639
        %2645 = vmatpush.bf16.xpose.msra.mxu0 0
        %2646 = vmatpush.bf16.xpose.msra.mxu0 0
        %2647 = vmatpush.bf16.xpose.msra.mxu0 0
        %2648 = vmatpush.bf16.xpose.msra.mxu0 0
        %2649 = vmatpush.bf16.xpose.msra.mxu0 0
        %2650 = vmatpush.bf16.xpose.msra.mxu0 0
        %2651 = vmatpush.bf16.xpose.msra.mxu0 0
        %2652 = vmatpush.bf16.xpose.msra.mxu0 %v2644
        %2653 = vmatmul.bf16.gmra.mxu0 %v2643
        %v2654 = vpop.f32.mrf.mxu0
        %v2655 = vadd.f32 0.0, %v2654
        %v2656 = vpop.f32.mrf.mxu0
        %v2657 = vadd.f32 0.0, %v2656
        %2658 = vdwg.mxu0
        %vm2659 = vcmask 130048
        %v2660 = vsel %vm2659, %v2655, -inf
        %2661 = vmax.xlane.f32.xlu0 %v2660
        %v2662 = vpop.xlane.xlu0 %2661
        %v2663 = vsel %vm2659, %v2657, -inf
        %2664 = vmax.xlane.f32.xlu0 %v2663
        %v2665 = vpop.xlane.xlu0 %2664
        %v2666 = vsub.f32 %v2655, %v2662
        %v2667 = vsub.f32 %v2657, %v2665
        %v2668 = vmul.f32 %v2666, 1.442695
        %v2669 = vpow.pop %v2668
        %v2670 = vmul.f32 %v2667, 1.442695
        %v2671 = vpow.pop %v2670
        %v2672 = vsel %vm2659, %v2669, 0.0
        %2673 = vadd.xlane.f32.xlu0 %v2672
        %v2674 = vpop.xlane.xlu0 %2673
        %v2675 = vsel %vm2659, %v2671, 0.0
        %2676 = vadd.xlane.f32.xlu0 %v2675
        %v2677 = vpop.xlane.xlu0 %2676
        %v2678 = vrcp.pop %v2674
        %v2679 = vmul.f32 %v2674, %v2678
        %v2680 = vsub.f32 1.0, %v2679
        %v2681 = vmul.f32 %v2678, %v2680
        %v2682 = vadd.f32 %v2678, %v2681
        %vm2683 = vweird.f32 %v2674
        %vm2684 = vweird.f32 %v2678
        %vm2685 = vmor %vm2683, %vm2684
        %v2686 = vsel %vm2685, %v2678, %v2682
        %v2687 = vand.u32 2147483647, %v2674
        %vm2688 = vcmp.eq.f32.partialorder %v2687, 8.507059e+37
        %v2689 = vand.u32 %v2674, 2147483648
        %v2690 = vor.u32 1.1754944e-38, %v2689
        %v2691 = vsel %vm2688, %v2690, %v2686
        %v2692 = vmul.f32 %v2669, %v2691
        %v2693 = vrcp.pop %v2677
        %v2694 = vmul.f32 %v2677, %v2693
        %v2695 = vsub.f32 1.0, %v2694
        %v2696 = vmul.f32 %v2693, %v2695
        %v2697 = vadd.f32 %v2693, %v2696
        %vm2698 = vweird.f32 %v2677
        %vm2699 = vweird.f32 %v2693
        %vm2700 = vmor %vm2698, %vm2699
        %v2701 = vsel %vm2700, %v2693, %v2697
        %v2702 = vand.u32 2147483647, %v2677
        %vm2703 = vcmp.eq.f32.partialorder %v2702, 8.507059e+37
        %v2704 = vand.u32 %v2677, 2147483648
        %v2705 = vor.u32 1.1754944e-38, %v2704
        %v2706 = vsel %vm2703, %v2705, %v2701
        %v2707 = vmul.f32 %v2671, %v2706
        %v2708 = vpack.c.bf16 %v2707, %v2692
        %v2709 = vpack.c.bf16 %v2613, %v2611
        %v2711 = vsel %vm2659, %v2708, 0
        %2713 = vmatpush.bf16.msra.mxu0 0
        %2714 = vmatpush.bf16.msra.mxu0 0
        %2715 = vmatpush.bf16.msra.mxu0 0
        %2716 = vmatpush.bf16.msra.mxu0 0
        %2717 = vmatpush.bf16.msra.mxu0 0
        %2718 = vmatpush.bf16.msra.mxu0 0
        %2719 = vmatpush.bf16.msra.mxu0 0
        %2720 = vmatpush.bf16.msra.mxu0 %v2709
        %2721 = vmatmul.bf16.gmra.mxu0 %v2711
        %v2722 = vpop.f32.mrf.mxu0
        %v2723 = vadd.f32 %v2506, %v2722
        %v2724 = vpop.f32.mrf.mxu0
        %v2725 = vadd.f32 %v2507, %v2724
        %2726 = vdwg.mxu0
        %v2727 = vld [vmem:[#allocation5 + $0x43] ss:$0 sm:$0xff]
        %v2728 = vld [vmem:[#allocation5 + $0x44] ss:$0 sm:$0xff]
        %v2729 = vsel %vm674, %v2723, 0.0
        %2730 = vadd.xlane.f32.xlu0 %v2729
        %v2731 = vpop.xlane.xlu0 %2730
        %v2732 = vsel %vm674, %v2725, 0.0
        %2733 = vadd.xlane.f32.xlu0 %v2732
        %v2734 = vpop.xlane.xlu0 %2733
        %v2735 = vmul.f32 %v2731, %v2465
        %v2736 = vmul.f32 %v2734, %v2465
        %v2737 = vsub.f32 %v2723, %v2735
        %v2738 = vsub.f32 %v2725, %v2736
        %v2739 = vmul.f32 %v2737, %v2737
        %v2740 = vmul.f32 %v2738, %v2738
        %v2741 = vsel %vm674, %v2739, 0.0
        %2742 = vadd.xlane.f32.xlu0 %v2741
        %v2743 = vpop.xlane.xlu0 %2742
        %v2744 = vsel %vm674, %v2740, 0.0
        %2745 = vadd.xlane.f32.xlu0 %v2744
        %v2746 = vpop.xlane.xlu0 %2745
        %v2747 = vmul.f32 %v2743, %v2465
        %v2748 = vmul.f32 %v2746, %v2465
        %v2749 = vadd.f32 %v2747, 1e-05
        %v2750 = vadd.f32 %v2748, 1e-05
        %v2751 = vrsqrt.pop %v2749
        %v2752 = vmul.f32 %v2751, %v2749
        %v2753 = vmul.f32 %v2752, %v2751
        %v2754 = vmul.f32 0.5, %v2753
        %v2755 = vsub.f32 1.5, %v2754
        %v2756 = vmul.f32 %v2751, %v2755
        %vm2757 = vweird.f32 %v2749
        %vm2758 = vweird.f32 %v2751
        %vm2759 = vmor %vm2757, %vm2758
        %v2760 = vsel %vm2759, %v2751, %v2756
        %v2761 = vrsqrt.pop %v2750
        %v2762 = vmul.f32 %v2761, %v2750
        %v2763 = vmul.f32 %v2762, %v2761
        %v2764 = vmul.f32 0.5, %v2763
        %v2765 = vsub.f32 1.5, %v2764
        %v2766 = vmul.f32 %v2761, %v2765
        %vm2767 = vweird.f32 %v2750
        %vm2768 = vweird.f32 %v2761
        %vm2769 = vmor %vm2767, %vm2768
        %v2770 = vsel %vm2769, %v2761, %v2766
        %v2771 = vmul.f32 %v2737, %v2760
        %v2772 = vmul.f32 %v2738, %v2770
        %v2773 = vmul.f32 %v2771, %v2727
        %v2774 = vmul.f32 %v2772, %v2727
        %v2775 = vadd.f32 %v2773, %v2728
        %v2776 = vadd.f32 %v2774, %v2728
        %v2777 = vpack.c.bf16 %v2776, %v2775
        %v2778 = vld [vmem:[#allocation2 + $0x3e0] sm:$0xf]
        %v2779 = vld [vmem:[#allocation2 + $0x3f0] sm:$0xf]
        %v2780 = vld [vmem:[#allocation2 + $0x400] sm:$0xf]
        %v2781 = vld [vmem:[#allocation2 + $0x410] sm:$0xf]
        %v2782 = vld [vmem:[#allocation2 + $0x420] sm:$0xf]
        %v2783 = vld [vmem:[#allocation2 + $0x430] sm:$0xf]
        %v2784 = vld [vmem:[#allocation2 + $0x440] sm:$0xf]
        %v2785 = vld [vmem:[#allocation2 + $0x450] sm:$0xf]
        %v2786 = vld [vmem:[#allocation5 + $0x45] ss:$0 sm:$0xff]
        %v2795 = vunpack.c.l.b16 %v2778
        %v2796 = vunpack.c.l.b16 %v2779
        %v2797 = vunpack.c.l.b16 %v2780
        %v2798 = vunpack.c.l.b16 %v2781
        %v2799 = vunpack.c.l.b16 %v2782
        %v2800 = vunpack.c.l.b16 %v2783
        %v2801 = vunpack.c.l.b16 %v2784
        %v2802 = vunpack.c.l.b16 %v2785
        %v2803 = vpack.c.b16 %v2796, %v2795
        %v2804 = vpack.c.b16 %v2798, %v2797
        %v2805 = vpack.c.b16 %v2800, %v2799
        %v2806 = vpack.c.b16 %v2802, %v2801
        %v2812 = vsel %vm674, %v2777, 0
        %2814 = vmatpush.bf16.msra.mxu0 0
        %2815 = vmatpush.bf16.msra.mxu0 0
        %2816 = vmatpush.bf16.msra.mxu0 0
        %2817 = vmatpush.bf16.msra.mxu0 0
        %2818 = vmatpush.bf16.msra.mxu0 %v2806
        %2819 = vmatpush.bf16.msra.mxu0 %v2805
        %2820 = vmatpush.bf16.msra.mxu0 %v2804
        %2821 = vmatpush.bf16.msra.mxu0 %v2803
        %2822 = vmatmul.bf16.gmra.mxu0 %v2812
        %v2823 = vpop.f32.mrf.mxu0
        %v2824 = vadd.f32 %v2786, %v2823
        %v2825 = vpop.f32.mrf.mxu0
        %v2826 = vadd.f32 %v2786, %v2825
        %2827 = vdwg.mxu0
        %v2828 = vmax.f32 %v2824, 0.0
        %v2829 = vmax.f32 %v2826, 0.0
        %v2830 = vpack.c.bf16 %v2829, %v2828
        %v2831 = vld [vmem:[#allocation2 + $0x460] sm:$0xf]
        %v2832 = vld [vmem:[#allocation2 + $0x470] sm:$0xf]
        %v2833 = vld [vmem:[#allocation2 + $0x480] sm:$0xf]
        %v2834 = vld [vmem:[#allocation2 + $0x490] sm:$0xf]
        %v2835 = vld [vmem:[#allocation5 + $0x46] ss:$0 sm:$0xff]
        %v2840 = vunpack.c.l.b16 %v2831
        %v2841 = vunpack.c.l.b16 %v2832
        %v2842 = vunpack.c.l.b16 %v2833
        %v2843 = vunpack.c.l.b16 %v2834
        %v2844 = vpack.c.b16 %v2841, %v2840
        %v2845 = vpack.c.b16 %v2843, %v2842
        %v2849 = vsel %vm285, %v2830, 0
        %2851 = vmatpush.bf16.msra.mxu0 0
        %2852 = vmatpush.bf16.msra.mxu0 0
        %2853 = vmatpush.bf16.msra.mxu0 0
        %2854 = vmatpush.bf16.msra.mxu0 0
        %2855 = vmatpush.bf16.msra.mxu0 0
        %2856 = vmatpush.bf16.msra.mxu0 0
        %2857 = vmatpush.bf16.msra.mxu0 %v2845
        %2858 = vmatpush.bf16.msra.mxu0 %v2844
        %2859 = vmatmul.bf16.gmra.mxu0 %v2849
        %v2860 = vpop.f32.mrf.mxu0
        %v2861 = vadd.f32 %v2835, %v2860
        %v2862 = vpop.f32.mrf.mxu0
        %v2863 = vadd.f32 %v2835, %v2862
        %2864 = vdwg.mxu0
        %v2865 = vadd.f32 %v2861, %v2723
        %v2866 = vadd.f32 %v2863, %v2725
        %v2867 = vld [vmem:[#allocation5 + $0x47] ss:$0 sm:$0xff]
        %v2868 = vld [vmem:[#allocation5 + $0x60] ss:$0 sm:$0xff]
        %v2869 = vsel %vm674, %v2865, 0.0
        %2870 = vadd.xlane.f32.xlu0 %v2869
        %v2871 = vpop.xlane.xlu0 %2870
        %v2872 = vsel %vm674, %v2866, 0.0
        %2873 = vadd.xlane.f32.xlu0 %v2872
        %v2874 = vpop.xlane.xlu0 %2873
        %v2875 = vmul.f32 %v2871, %v2465
        %v2876 = vmul.f32 %v2874, %v2465
        %v2877 = vsub.f32 %v2865, %v2875
        %v2878 = vsub.f32 %v2866, %v2876
        %v2879 = vmul.f32 %v2877, %v2877
        %v2880 = vmul.f32 %v2878, %v2878
        %v2881 = vsel %vm674, %v2879, 0.0
        %2882 = vadd.xlane.f32.xlu0 %v2881
        %v2883 = vpop.xlane.xlu0 %2882
        %v2884 = vsel %vm674, %v2880, 0.0
        %2885 = vadd.xlane.f32.xlu0 %v2884
        %v2886 = vpop.xlane.xlu0 %2885
        %v2887 = vmul.f32 %v2883, %v2465
        %v2888 = vmul.f32 %v2886, %v2465
        %v2889 = vadd.f32 %v2887, 1e-05
        %v2890 = vadd.f32 %v2888, 1e-05
        %v2891 = vrsqrt.pop %v2889
        %v2892 = vmul.f32 %v2891, %v2889
        %v2893 = vmul.f32 %v2892, %v2891
        %v2894 = vmul.f32 0.5, %v2893
        %v2895 = vsub.f32 1.5, %v2894
        %v2896 = vmul.f32 %v2891, %v2895
        %vm2897 = vweird.f32 %v2889
        %vm2898 = vweird.f32 %v2891
        %vm2899 = vmor %vm2897, %vm2898
        %v2900 = vsel %vm2899, %v2891, %v2896
        %v2901 = vrsqrt.pop %v2890
        %v2902 = vmul.f32 %v2901, %v2890
        %v2903 = vmul.f32 %v2902, %v2901
        %v2904 = vmul.f32 0.5, %v2903
        %v2905 = vsub.f32 1.5, %v2904
        %v2906 = vmul.f32 %v2901, %v2905
        %vm2907 = vweird.f32 %v2890
        %vm2908 = vweird.f32 %v2901
        %vm2909 = vmor %vm2907, %vm2908
        %v2910 = vsel %vm2909, %v2901, %v2906
        %v2911 = vmul.f32 %v2877, %v2900
        %v2912 = vmul.f32 %v2878, %v2910
        %v2913 = vmul.f32 %v2911, %v2867
        %v2914 = vmul.f32 %v2912, %v2867
        %v2915 = vadd.f32 %v2913, %v2868
        %v2916 = vadd.f32 %v2914, %v2868
        %v2917 = vpack.c.bf16 %v2916, %v2915
        %v2918 = vld [vmem:[#allocation2 + $0x4a0] sm:$0xff]
        %v2919 = vld [vmem:[#allocation2 + $0x4a8] sm:$0xf]
        %v2920 = vld [vmem:[#allocation2 + $0x4b0] sm:$0xff]
        %v2921 = vld [vmem:[#allocation2 + $0x4b8] sm:$0xf]
        %v2922 = vld [vmem:[#allocation2 + $0x4c0] sm:$0xff]
        %v2923 = vld [vmem:[#allocation2 + $0x4c8] sm:$0xf]
        %v2924 = vld [vmem:[#allocation2 + $0x4d0] sm:$0xff]
        %v2925 = vld [vmem:[#allocation2 + $0x4d8] sm:$0xf]
        %v2926 = vld [vmem:[#allocation2 + $0x4e0] sm:$0xff]
        %v2927 = vld [vmem:[#allocation2 + $0x4e8] sm:$0xf]
        %v2928 = vld [vmem:[#allocation2 + $0x4f0] sm:$0xff]
        %v2929 = vld [vmem:[#allocation2 + $0x4f8] sm:$0xf]
        %v2930 = vld [vmem:[#allocation2 + $0x500] sm:$0xff]
        %v2931 = vld [vmem:[#allocation2 + $0x508] sm:$0xf]
        %v2932 = vld [vmem:[#allocation2 + $0x510] sm:$0xff]
        %v2933 = vld [vmem:[#allocation2 + $0x518] sm:$0xf]
        %s2934 = scalar_lea.vmem [#allocation5], 97
        %v2935 = vld [vmem:[%s2934] ss:$8 sm:$0x7]
        %v2937 = vperm.slane %v2935, 0
        %v2938 = vperm.slane %v2935, 1
        %v2939 = vperm.slane %v2935, 2
        %v2959 = vunpack.c.l.b16 %v2918
        %v2960 = vunpack.c.h.b16 %v2918
        %v2961 = vunpack.c.l.b16 %v2919
        %v2962 = vunpack.c.l.b16 %v2920
        %v2963 = vunpack.c.h.b16 %v2920
        %v2964 = vunpack.c.l.b16 %v2921
        %v2965 = vunpack.c.l.b16 %v2922
        %v2966 = vunpack.c.h.b16 %v2922
        %v2967 = vunpack.c.l.b16 %v2923
        %v2968 = vunpack.c.l.b16 %v2924
        %v2969 = vunpack.c.h.b16 %v2924
        %v2970 = vunpack.c.l.b16 %v2925
        %v2971 = vunpack.c.l.b16 %v2926
        %v2972 = vunpack.c.h.b16 %v2926
        %v2973 = vunpack.c.l.b16 %v2927
        %v2974 = vunpack.c.l.b16 %v2928
        %v2975 = vunpack.c.h.b16 %v2928
        %v2976 = vunpack.c.l.b16 %v2929
        %v2977 = vunpack.c.l.b16 %v2930
        %v2978 = vunpack.c.h.b16 %v2930
        %v2979 = vunpack.c.l.b16 %v2931
        %v2980 = vunpack.c.l.b16 %v2932
        %v2981 = vunpack.c.h.b16 %v2932
        %v2982 = vunpack.c.l.b16 %v2933
        %v2983 = vpack.c.b16 %v2962, %v2959
        %v2984 = vpack.c.b16 %v2963, %v2960
        %v2985 = vpack.c.b16 %v2964, %v2961
        %v2986 = vpack.c.b16 %v2968, %v2965
        %v2987 = vpack.c.b16 %v2969, %v2966
        %v2988 = vpack.c.b16 %v2970, %v2967
        %v2989 = vpack.c.b16 %v2974, %v2971
        %v2990 = vpack.c.b16 %v2975, %v2972
        %v2991 = vpack.c.b16 %v2976, %v2973
        %v2992 = vpack.c.b16 %v2980, %v2977
        %v2993 = vpack.c.b16 %v2981, %v2978
        %v2994 = vpack.c.b16 %v2982, %v2979
        %v3008 = vsel %vm674, %v2917, 0
        %3010 = vmatpush.bf16.msra.mxu0 0
        %3011 = vmatpush.bf16.msra.mxu0 0
        %3012 = vmatpush.bf16.msra.mxu0 0
        %3013 = vmatpush.bf16.msra.mxu0 0
        %3014 = vmatpush.bf16.msra.mxu0 %v2992
        %3015 = vmatpush.bf16.msra.mxu0 %v2989
        %3016 = vmatpush.bf16.msra.mxu0 %v2986
        %3017 = vmatpush.bf16.msra.mxu0 %v2983
        %3018 = vmatmul.bf16.gmra.mxu0 %v3008
        %v3019 = vpop.f32.mrf.mxu0
        %v3020 = vadd.f32 %v2937, %v3019
        %v3021 = vpop.f32.mrf.mxu0
        %v3022 = vadd.f32 %v2937, %v3021
        %3023 = vdwg.mxu0
        %3024 = vmatpush.bf16.msra.mxu0 0
        %3025 = vmatpush.bf16.msra.mxu0 0
        %3026 = vmatpush.bf16.msra.mxu0 0
        %3027 = vmatpush.bf16.msra.mxu0 0
        %3028 = vmatpush.bf16.msra.mxu0 %v2993
        %3029 = vmatpush.bf16.msra.mxu0 %v2990
        %3030 = vmatpush.bf16.msra.mxu0 %v2987
        %3031 = vmatpush.bf16.msra.mxu0 %v2984
        %3032 = vmatmul.bf16.gmra.mxu0 %v3008
        %v3033 = vpop.f32.mrf.mxu0
        %v3034 = vadd.f32 %v2938, %v3033
        %v3035 = vpop.f32.mrf.mxu0
        %v3036 = vadd.f32 %v2938, %v3035
        %3037 = vdwg.mxu0
        %3038 = vmatpush.bf16.msra.mxu0 0
        %3039 = vmatpush.bf16.msra.mxu0 0
        %3040 = vmatpush.bf16.msra.mxu0 0
        %3041 = vmatpush.bf16.msra.mxu0 0
        %3042 = vmatpush.bf16.msra.mxu0 %v2994
        %3043 = vmatpush.bf16.msra.mxu0 %v2991
        %3044 = vmatpush.bf16.msra.mxu0 %v2988
        %3045 = vmatpush.bf16.msra.mxu0 %v2985
        %3046 = vmatmul.bf16.gmra.mxu0 %v3008
        %v3047 = vpop.f32.mrf.mxu0
        %v3048 = vadd.f32 %v2939, %v3047
        %v3049 = vpop.f32.mrf.mxu0
        %v3050 = vadd.f32 %v2939, %v3049
        %3051 = vdwg.mxu0
        %v3052 = vpack.c.bf16 %v3036, %v3034
        %v3053 = vpack.c.bf16 %v3050, %v3048
        %3054 = vmatpush.bf16.xpose.msra.mxu0 0
        %3055 = vmatpush.bf16.xpose.msra.mxu0 0
        %3056 = vmatpush.bf16.xpose.msra.mxu0 0
        %3057 = vmatpush.bf16.xpose.msra.mxu0 0
        %3058 = vmatpush.bf16.xpose.msra.mxu0 0
        %3059 = vmatpush.bf16.xpose.msra.mxu0 0
        %3060 = vmatpush.bf16.xpose.msra.mxu0 0
        %3061 = vmatpush.bf16.xpose.msra.mxu0 %v3053
        %3062 = vmatmul.bf16.gmra.mxu0 %v3052
        %v3063 = vpop.f32.mrf.mxu0
        %v3064 = vadd.f32 0.0, %v3063
        %v3065 = vpop.f32.mrf.mxu0
        %v3066 = vadd.f32 0.0, %v3065
        %3067 = vdwg.mxu0
        %v3068 = vsel %vm2659, %v3064, -inf
        %3069 = vmax.xlane.f32.xlu0 %v3068
        %v3070 = vpop.xlane.xlu0 %3069
        %v3071 = vsel %vm2659, %v3066, -inf
        %3072 = vmax.xlane.f32.xlu0 %v3071
        %v3073 = vpop.xlane.xlu0 %3072
        %v3074 = vsub.f32 %v3064, %v3070
        %v3075 = vsub.f32 %v3066, %v3073
        %v3076 = vmul.f32 %v3074, 1.442695
        %v3077 = vpow.pop %v3076
        %v3078 = vmul.f32 %v3075, 1.442695
        %v3079 = vpow.pop %v3078
        %v3080 = vsel %vm2659, %v3077, 0.0
        %3081 = vadd.xlane.f32.xlu0 %v3080
        %v3082 = vpop.xlane.xlu0 %3081
        %v3083 = vsel %vm2659, %v3079, 0.0
        %3084 = vadd.xlane.f32.xlu0 %v3083
        %v3085 = vpop.xlane.xlu0 %3084
        %v3086 = vrcp.pop %v3082
        %v3087 = vmul.f32 %v3082, %v3086
        %v3088 = vsub.f32 1.0, %v3087
        %v3089 = vmul.f32 %v3086, %v3088
        %v3090 = vadd.f32 %v3086, %v3089
        %vm3091 = vweird.f32 %v3082
        %vm3092 = vweird.f32 %v3086
        %vm3093 = vmor %vm3091, %vm3092
        %v3094 = vsel %vm3093, %v3086, %v3090
        %v3095 = vand.u32 2147483647, %v3082
        %vm3096 = vcmp.eq.f32.partialorder %v3095, 8.507059e+37
        %v3097 = vand.u32 %v3082, 2147483648
        %v3098 = vor.u32 1.1754944e-38, %v3097
        %v3099 = vsel %vm3096, %v3098, %v3094
        %v3100 = vmul.f32 %v3077, %v3099
        %v3101 = vrcp.pop %v3085
        %v3102 = vmul.f32 %v3085, %v3101
        %v3103 = vsub.f32 1.0, %v3102
        %v3104 = vmul.f32 %v3101, %v3103
        %v3105 = vadd.f32 %v3101, %v3104
        %vm3106 = vweird.f32 %v3085
        %vm3107 = vweird.f32 %v3101
        %vm3108 = vmor %vm3106, %vm3107
        %v3109 = vsel %vm3108, %v3101, %v3105
        %v3110 = vand.u32 2147483647, %v3085
        %vm3111 = vcmp.eq.f32.partialorder %v3110, 8.507059e+37
        %v3112 = vand.u32 %v3085, 2147483648
        %v3113 = vor.u32 1.1754944e-38, %v3112
        %v3114 = vsel %vm3111, %v3113, %v3109
        %v3115 = vmul.f32 %v3079, %v3114
        %v3116 = vpack.c.bf16 %v3115, %v3100
        %v3117 = vpack.c.bf16 %v3022, %v3020
        %v3119 = vsel %vm2659, %v3116, 0
        %3121 = vmatpush.bf16.msra.mxu0 0
        %3122 = vmatpush.bf16.msra.mxu0 0
        %3123 = vmatpush.bf16.msra.mxu0 0
        %3124 = vmatpush.bf16.msra.mxu0 0
        %3125 = vmatpush.bf16.msra.mxu0 0
        %3126 = vmatpush.bf16.msra.mxu0 0
        %3127 = vmatpush.bf16.msra.mxu0 0
        %3128 = vmatpush.bf16.msra.mxu0 %v3117
        %3129 = vmatmul.bf16.gmra.mxu0 %v3119
        %v3130 = vpop.f32.mrf.mxu0
        %v3131 = vadd.f32 %v2915, %v3130
        %v3132 = vpop.f32.mrf.mxu0
        %v3133 = vadd.f32 %v2916, %v3132
        %3134 = vdwg.mxu0
        %v3135 = vld [vmem:[#allocation5 + $0x62] ss:$0 sm:$0xff]
        %v3136 = vld [vmem:[#allocation5 + $0x63] ss:$0 sm:$0xff]
        %v3137 = vsel %vm674, %v3131, 0.0
        %3138 = vadd.xlane.f32.xlu0 %v3137
        %v3139 = vpop.xlane.xlu0 %3138
        %v3140 = vsel %vm674, %v3133, 0.0
        %3141 = vadd.xlane.f32.xlu0 %v3140
        %v3142 = vpop.xlane.xlu0 %3141
        %v3143 = vmul.f32 %v3139, %v2465
        %v3144 = vmul.f32 %v3142, %v2465
        %v3145 = vsub.f32 %v3131, %v3143
        %v3146 = vsub.f32 %v3133, %v3144
        %v3147 = vmul.f32 %v3145, %v3145
        %v3148 = vmul.f32 %v3146, %v3146
        %v3149 = vsel %vm674, %v3147, 0.0
        %3150 = vadd.xlane.f32.xlu0 %v3149
        %v3151 = vpop.xlane.xlu0 %3150
        %v3152 = vsel %vm674, %v3148, 0.0
        %3153 = vadd.xlane.f32.xlu0 %v3152
        %v3154 = vpop.xlane.xlu0 %3153
        %v3155 = vmul.f32 %v3151, %v2465
        %v3156 = vmul.f32 %v3154, %v2465
        %v3157 = vadd.f32 %v3155, 1e-05
        %v3158 = vadd.f32 %v3156, 1e-05
        %v3159 = vrsqrt.pop %v3157
        %v3160 = vmul.f32 %v3159, %v3157
        %v3161 = vmul.f32 %v3160, %v3159
        %v3162 = vmul.f32 0.5, %v3161
        %v3163 = vsub.f32 1.5, %v3162
        %v3164 = vmul.f32 %v3159, %v3163
        %vm3165 = vweird.f32 %v3157
        %vm3166 = vweird.f32 %v3159
        %vm3167 = vmor %vm3165, %vm3166
        %v3168 = vsel %vm3167, %v3159, %v3164
        %v3169 = vrsqrt.pop %v3158
        %v3170 = vmul.f32 %v3169, %v3158
        %v3171 = vmul.f32 %v3170, %v3169
        %v3172 = vmul.f32 0.5, %v3171
        %v3173 = vsub.f32 1.5, %v3172
        %v3174 = vmul.f32 %v3169, %v3173
        %vm3175 = vweird.f32 %v3158
        %vm3176 = vweird.f32 %v3169
        %vm3177 = vmor %vm3175, %vm3176
        %v3178 = vsel %vm3177, %v3169, %v3174
        %v3179 = vmul.f32 %v3145, %v3168
        %v3180 = vmul.f32 %v3146, %v3178
        %v3181 = vmul.f32 %v3179, %v3135
        %v3182 = vmul.f32 %v3180, %v3135
        %v3183 = vadd.f32 %v3181, %v3136
        %v3184 = vadd.f32 %v3182, %v3136
        %v3185 = vpack.c.bf16 %v3184, %v3183
        %v3186 = vld [vmem:[#allocation2 + $0x520] sm:$0xf]
        %v3187 = vld [vmem:[#allocation2 + $0x530] sm:$0xf]
        %v3188 = vld [vmem:[#allocation2 + $0x540] sm:$0xf]
        %v3189 = vld [vmem:[#allocation2 + $0x550] sm:$0xf]
        %v3190 = vld [vmem:[#allocation2 + $0x560] sm:$0xf]
        %v3191 = vld [vmem:[#allocation2 + $0x570] sm:$0xf]
        %v3192 = vld [vmem:[#allocation2 + $0x580] sm:$0xf]
        %v3193 = vld [vmem:[#allocation2 + $0x590] sm:$0xf]
        %v3194 = vld [vmem:[#allocation5 + $0x64] ss:$0 sm:$0xff]
        %v3203 = vunpack.c.l.b16 %v3186
        %v3204 = vunpack.c.l.b16 %v3187
        %v3205 = vunpack.c.l.b16 %v3188
        %v3206 = vunpack.c.l.b16 %v3189
        %v3207 = vunpack.c.l.b16 %v3190
        %v3208 = vunpack.c.l.b16 %v3191
        %v3209 = vunpack.c.l.b16 %v3192
        %v3210 = vunpack.c.l.b16 %v3193
        %v3211 = vpack.c.b16 %v3204, %v3203
        %v3212 = vpack.c.b16 %v3206, %v3205
        %v3213 = vpack.c.b16 %v3208, %v3207
        %v3214 = vpack.c.b16 %v3210, %v3209
        %v3220 = vsel %vm674, %v3185, 0
        %3222 = vmatpush.bf16.msra.mxu0 0
        %3223 = vmatpush.bf16.msra.mxu0 0
        %3224 = vmatpush.bf16.msra.mxu0 0
        %3225 = vmatpush.bf16.msra.mxu0 0
        %3226 = vmatpush.bf16.msra.mxu0 %v3214
        %3227 = vmatpush.bf16.msra.mxu0 %v3213
        %3228 = vmatpush.bf16.msra.mxu0 %v3212
        %3229 = vmatpush.bf16.msra.mxu0 %v3211
        %3230 = vmatmul.bf16.gmra.mxu0 %v3220
        %v3231 = vpop.f32.mrf.mxu0
        %v3232 = vadd.f32 %v3194, %v3231
        %v3233 = vpop.f32.mrf.mxu0
        %v3234 = vadd.f32 %v3194, %v3233
        %3235 = vdwg.mxu0
        %v3236 = vmax.f32 %v3232, 0.0
        %v3237 = vmax.f32 %v3234, 0.0
        %v3238 = vpack.c.bf16 %v3237, %v3236
        %v3239 = vld [vmem:[#allocation2 + $0x5a0] sm:$0xf]
        %v3240 = vld [vmem:[#allocation2 + $0x5b0] sm:$0xf]
        %v3241 = vld [vmem:[#allocation2 + $0x5c0] sm:$0xf]
        %v3242 = vld [vmem:[#allocation2 + $0x5d0] sm:$0xf]
        %v3243 = vld [vmem:[#allocation5 + $0x65] ss:$0 sm:$0xff]
        %v3248 = vunpack.c.l.b16 %v3239
        %v3249 = vunpack.c.l.b16 %v3240
        %v3250 = vunpack.c.l.b16 %v3241
        %v3251 = vunpack.c.l.b16 %v3242
        %v3252 = vpack.c.b16 %v3249, %v3248
        %v3253 = vpack.c.b16 %v3251, %v3250
        %v3257 = vsel %vm285, %v3238, 0
        %3259 = vmatpush.bf16.msra.mxu0 0
        %3260 = vmatpush.bf16.msra.mxu0 0
        %3261 = vmatpush.bf16.msra.mxu0 0
        %3262 = vmatpush.bf16.msra.mxu0 0
        %3263 = vmatpush.bf16.msra.mxu0 0
        %3264 = vmatpush.bf16.msra.mxu0 0
        %3265 = vmatpush.bf16.msra.mxu0 %v3253
        %3266 = vmatpush.bf16.msra.mxu0 %v3252
        %3267 = vmatmul.bf16.gmra.mxu0 %v3257
        %v3268 = vpop.f32.mrf.mxu0
        %v3269 = vadd.f32 %v3243, %v3268
        %v3270 = vpop.f32.mrf.mxu0
        %v3271 = vadd.f32 %v3243, %v3270
        %3272 = vdwg.mxu0
        %v3273 = vadd.f32 %v3269, %v3131
        %v3274 = vadd.f32 %v3271, %v3133
        %v3275 = vld [vmem:[#allocation5 + $0x66] ss:$0 sm:$0xff]
        %v3276 = vpack.c.bf16 %v3274, %v3273
        %v3277 = vld [vmem:[#allocation2 + $0x5e0] sm:$0x3]
        %v3279 = vsel %vm2659, %v3277, 0
        %3281 = vmatpush.bf16.msra.mxu0 0
        %3282 = vmatpush.bf16.msra.mxu0 0
        %3283 = vmatpush.bf16.msra.mxu0 0
        %3284 = vmatpush.bf16.msra.mxu0 0
        %3285 = vmatpush.bf16.msra.mxu0 0
        %3286 = vmatpush.bf16.msra.mxu0 0
        %3287 = vmatpush.bf16.msra.mxu0 0
        %3288 = vmatpush.bf16.msra.mxu0 %v3276
        %3289 = vmatmul.bf16.gmra.mxu0 %v3279
        %v3290 = vpop.f32.mrf.mxu0
        %v3291 = vadd.f32 0.0, %v3290
        %v3292 = vpop.f32.mrf.mxu0
        %3293 = vdwg.mxu0
        %v3294 = vpack.c.bf16 %v3291, %v3291
        %v3295 = vld [vmem:[#allocation2 + $0x660] sm:$0xf]
        %v3296 = vld [vmem:[#allocation2 + $0x670] sm:$0xf]
        %v3297 = vld [vmem:[#allocation2 + $0x680] sm:$0xf]
        %v3298 = vld [vmem:[#allocation2 + $0x690] sm:$0xf]
        %v3299 = vld [vmem:[#allocation2 + $0x6a0] sm:$0xf]
        %v3300 = vld [vmem:[#allocation2 + $0x6b0] sm:$0xf]
        %v3301 = vld [vmem:[#allocation2 + $0x6c0] sm:$0xf]
        %v3302 = vld [vmem:[#allocation2 + $0x6d0] sm:$0xf]
        %v3303 = vld [vmem:[#allocation2 + $0x600] sm:$0x3]
        %v3305 = vsel %vm2659, %v3303, 0
        %3307 = vmatpush.bf16.msra.mxu0 0
        %3308 = vmatpush.bf16.msra.mxu0 0
        %3309 = vmatpush.bf16.msra.mxu0 0
        %3310 = vmatpush.bf16.msra.mxu0 0
        %3311 = vmatpush.bf16.msra.mxu0 0
        %3312 = vmatpush.bf16.msra.mxu0 0
        %3313 = vmatpush.bf16.msra.mxu0 0
        %3314 = vmatpush.bf16.msra.mxu0 %v3276
        %3315 = vmatmul.bf16.gmra.mxu0 %v3305
        %v3316 = vpop.f32.mrf.mxu0
        %v3317 = vadd.f32 0.0, %v3316
        %v3318 = vpop.f32.mrf.mxu0
        %3319 = vdwg.mxu0
        %v3320 = vpack.c.bf16 %v3317, %v3317
        %v3321 = vld [vmem:[#allocation2 + $0x6e0] sm:$0xf]
        %v3322 = vld [vmem:[#allocation2 + $0x6f0] sm:$0xf]
        %v3323 = vld [vmem:[#allocation2 + $0x700] sm:$0xf]
        %v3324 = vld [vmem:[#allocation2 + $0x710] sm:$0xf]
        %v3325 = vld [vmem:[#allocation2 + $0x720] sm:$0xf]
        %v3326 = vld [vmem:[#allocation2 + $0x730] sm:$0xf]
        %v3327 = vld [vmem:[#allocation2 + $0x740] sm:$0xf]
        %v3328 = vld [vmem:[#allocation2 + $0x750] sm:$0xf]
        %v3337 = vunpack.c.l.b16 %v3321
        %v3338 = vunpack.c.l.b16 %v3322
        %v3339 = vunpack.c.l.b16 %v3323
        %v3340 = vunpack.c.l.b16 %v3324
        %v3341 = vunpack.c.l.b16 %v3325
        %v3342 = vunpack.c.l.b16 %v3326
        %v3343 = vunpack.c.l.b16 %v3327
        %v3344 = vunpack.c.l.b16 %v3328
        %v3345 = vpack.c.b16 %v3338, %v3337
        %v3346 = vpack.c.b16 %v3340, %v3339
        %v3347 = vpack.c.b16 %v3342, %v3341
        %v3348 = vpack.c.b16 %v3344, %v3343
        %v3354 = vsel %vm674, %v3320, 0
        %3356 = vmatpush.bf16.msra.mxu0 0
        %3357 = vmatpush.bf16.msra.mxu0 0
        %3358 = vmatpush.bf16.msra.mxu0 0
        %3359 = vmatpush.bf16.msra.mxu0 0
        %3360 = vmatpush.bf16.msra.mxu0 %v3348
        %3361 = vmatpush.bf16.msra.mxu0 %v3347
        %3362 = vmatpush.bf16.msra.mxu0 %v3346
        %3363 = vmatpush.bf16.msra.mxu0 %v3345
        %3364 = vmatmul.bf16.gmra.mxu0 %v3354
        %v3365 = vpop.f32.mrf.mxu0
        %v3366 = vadd.f32 0.0, %v3365
        %v3367 = vpop.f32.mrf.mxu0
        %3368 = vdwg.mxu0
        %v3377 = vunpack.c.l.b16 %v3295
        %v3378 = vunpack.c.l.b16 %v3296
        %v3379 = vunpack.c.l.b16 %v3297
        %v3380 = vunpack.c.l.b16 %v3298
        %v3381 = vunpack.c.l.b16 %v3299
        %v3382 = vunpack.c.l.b16 %v3300
        %v3383 = vunpack.c.l.b16 %v3301
        %v3384 = vunpack.c.l.b16 %v3302
        %v3385 = vpack.c.b16 %v3378, %v3377
        %v3386 = vpack.c.b16 %v3380, %v3379
        %v3387 = vpack.c.b16 %v3382, %v3381
        %v3388 = vpack.c.b16 %v3384, %v3383
        %v3394 = vsel %vm674, %v3294, 0
        %3396 = vmatpush.bf16.msra.mxu0 0
        %3397 = vmatpush.bf16.msra.mxu0 0
        %3398 = vmatpush.bf16.msra.mxu0 0
        %3399 = vmatpush.bf16.msra.mxu0 0
        %3400 = vmatpush.bf16.msra.mxu0 %v3388
        %3401 = vmatpush.bf16.msra.mxu0 %v3387
        %3402 = vmatpush.bf16.msra.mxu0 %v3386
        %3403 = vmatpush.bf16.msra.mxu0 %v3385
        %3404 = vmatmul.bf16.gmra.mxu0 %v3394
        %v3405 = vpop.f32.mrf.mxu0
        %v3406 = vadd.f32 %v3366, %v3405
        %v3407 = vpop.f32.mrf.mxu0
        %3408 = vdwg.mxu0
        %v3409 = vld [vmem:[#allocation2 + $0x620] sm:$0x3]
        %v3411 = vsel %vm2659, %v3409, 0
        %3413 = vmatpush.bf16.msra.mxu0 0
        %3414 = vmatpush.bf16.msra.mxu0 0
        %3415 = vmatpush.bf16.msra.mxu0 0
        %3416 = vmatpush.bf16.msra.mxu0 0
        %3417 = vmatpush.bf16.msra.mxu0 0
        %3418 = vmatpush.bf16.msra.mxu0 0
        %3419 = vmatpush.bf16.msra.mxu0 0
        %3420 = vmatpush.bf16.msra.mxu0 %v3276
        %3421 = vmatmul.bf16.gmra.mxu0 %v3411
        %v3422 = vpop.f32.mrf.mxu0
        %v3423 = vadd.f32 0.0, %v3422
        %v3424 = vpop.f32.mrf.mxu0
        %3425 = vdwg.mxu0
        %v3426 = vpack.c.bf16 %v3423, %v3423
        %v3427 = vld [vmem:[#allocation2 + $0x760] sm:$0xf]
        %v3428 = vld [vmem:[#allocation2 + $0x770] sm:$0xf]
        %v3429 = vld [vmem:[#allocation2 + $0x780] sm:$0xf]
        %v3430 = vld [vmem:[#allocation2 + $0x790] sm:$0xf]
        %v3431 = vld [vmem:[#allocation2 + $0x7a0] sm:$0xf]
        %v3432 = vld [vmem:[#allocation2 + $0x7b0] sm:$0xf]
        %v3433 = vld [vmem:[#allocation2 + $0x7c0] sm:$0xf]
        %v3434 = vld [vmem:[#allocation2 + $0x7d0] sm:$0xf]
        %v3443 = vunpack.c.l.b16 %v3427
        %v3444 = vunpack.c.l.b16 %v3428
        %v3445 = vunpack.c.l.b16 %v3429
        %v3446 = vunpack.c.l.b16 %v3430
        %v3447 = vunpack.c.l.b16 %v3431
        %v3448 = vunpack.c.l.b16 %v3432
        %v3449 = vunpack.c.l.b16 %v3433
        %v3450 = vunpack.c.l.b16 %v3434
        %v3451 = vpack.c.b16 %v3444, %v3443
        %v3452 = vpack.c.b16 %v3446, %v3445
        %v3453 = vpack.c.b16 %v3448, %v3447
        %v3454 = vpack.c.b16 %v3450, %v3449
        %v3460 = vsel %vm674, %v3426, 0
        %3462 = vmatpush.bf16.msra.mxu0 0
        %3463 = vmatpush.bf16.msra.mxu0 0
        %3464 = vmatpush.bf16.msra.mxu0 0
        %3465 = vmatpush.bf16.msra.mxu0 0
        %3466 = vmatpush.bf16.msra.mxu0 %v3454
        %3467 = vmatpush.bf16.msra.mxu0 %v3453
        %3468 = vmatpush.bf16.msra.mxu0 %v3452
        %3469 = vmatpush.bf16.msra.mxu0 %v3451
        %3470 = vmatmul.bf16.gmra.mxu0 %v3460
        %v3471 = vpop.f32.mrf.mxu0
        %v3472 = vadd.f32 0.0, %v3471
        %v3473 = vpop.f32.mrf.mxu0
        %3474 = vdwg.mxu0
        %v3475 = vadd.f32 %v3406, %v3472
        %v3476 = vld [vmem:[#allocation2 + $0x640] sm:$0x3]
        %v3478 = vsel %vm2659, %v3476, 0
        %3480 = vmatpush.bf16.msra.mxu0 0
        %3481 = vmatpush.bf16.msra.mxu0 0
        %3482 = vmatpush.bf16.msra.mxu0 0
        %3483 = vmatpush.bf16.msra.mxu0 0
        %3484 = vmatpush.bf16.msra.mxu0 0
        %3485 = vmatpush.bf16.msra.mxu0 0
        %3486 = vmatpush.bf16.msra.mxu0 0
        %3487 = vmatpush.bf16.msra.mxu0 %v3276
        %3488 = vmatmul.bf16.gmra.mxu0 %v3478
        %v3489 = vpop.f32.mrf.mxu0
        %v3490 = vadd.f32 0.0, %v3489
        %v3491 = vpop.f32.mrf.mxu0
        %3492 = vdwg.mxu0
        %v3493 = vpack.c.bf16 %v3490, %v3490
        %v3494 = vld [vmem:[#allocation2 + $0x7e0] sm:$0xf]
        %v3495 = vld [vmem:[#allocation2 + $0x7f0] sm:$0xf]
        %v3496 = vld [vmem:[#allocation2 + $0x800] sm:$0xf]
        %v3497 = vld [vmem:[#allocation2 + $0x810] sm:$0xf]
        %v3498 = vld [vmem:[#allocation2 + $0x820] sm:$0xf]
        %v3499 = vld [vmem:[#allocation2 + $0x830] sm:$0xf]
        %v3500 = vld [vmem:[#allocation2 + $0x840] sm:$0xf]
        %v3501 = vld [vmem:[#allocation2 + $0x850] sm:$0xf]
        %v3510 = vunpack.c.l.b16 %v3494
        %v3511 = vunpack.c.l.b16 %v3495
        %v3512 = vunpack.c.l.b16 %v3496
        %v3513 = vunpack.c.l.b16 %v3497
        %v3514 = vunpack.c.l.b16 %v3498
        %v3515 = vunpack.c.l.b16 %v3499
        %v3516 = vunpack.c.l.b16 %v3500
        %v3517 = vunpack.c.l.b16 %v3501
        %v3518 = vpack.c.b16 %v3511, %v3510
        %v3519 = vpack.c.b16 %v3513, %v3512
        %v3520 = vpack.c.b16 %v3515, %v3514
        %v3521 = vpack.c.b16 %v3517, %v3516
        %v3527 = vsel %vm674, %v3493, 0
        %3529 = vmatpush.bf16.msra.mxu0 0
        %3530 = vmatpush.bf16.msra.mxu0 0
        %3531 = vmatpush.bf16.msra.mxu0 0
        %3532 = vmatpush.bf16.msra.mxu0 0
        %3533 = vmatpush.bf16.msra.mxu0 %v3521
        %3534 = vmatpush.bf16.msra.mxu0 %v3520
        %3535 = vmatpush.bf16.msra.mxu0 %v3519
        %3536 = vmatpush.bf16.msra.mxu0 %v3518
        %3537 = vmatmul.bf16.gmra.mxu0 %v3527
        %v3538 = vpop.f32.mrf.mxu0
        %v3539 = vadd.f32 0.0, %v3538
        %v3540 = vpop.f32.mrf.mxu0
        %3541 = vdwg.mxu0
        %v3542 = vadd.f32 %v3475, %v3539
        %v3543 = vadd.f32 %v3542, %v3275
        %v3544 = vld [vmem:[#allocation5 + $0x67] ss:$0 sm:$0xff]
        %v3545 = vld [vmem:[#allocation5 + $0x80] ss:$0 sm:$0xff]
        %vm3546 = vcmask 1043456
        %v3547 = vsel %vm3546, %v3543, 0.0
        %3548 = vadd.xlane.f32.xlu0 %v3547
        %v3549 = vpop.xlane.xlu0 %3548
        %v3550 = vrcp.pop 128.0
        %v3551 = vmul.f32 128.0, %v3550
        %v3552 = vsub.f32 1.0, %v3551
        %v3553 = vmul.f32 %v3550, %v3552
        %v3554 = vadd.f32 %v3550, %v3553
        %vm3555 = vweird.f32 %v3550
        %v3556 = vsel %vm3555, %v3550, %v3554
        %v3557 = vmul.f32 %v3549, %v3556
        %v3558 = vsub.f32 %v3543, %v3557
        %v3559 = vmul.f32 %v3558, %v3558
        %v3560 = vsel %vm3546, %v3559, 0.0
        %3561 = vadd.xlane.f32.xlu0 %v3560
        %v3562 = vpop.xlane.xlu0 %3561
        %v3563 = vmul.f32 %v3562, %v3556
        %v3564 = vadd.f32 %v3563, 1e-05
        %v3565 = vrsqrt.pop %v3564
        %v3566 = vmul.f32 %v3565, %v3564
        %v3567 = vmul.f32 %v3566, %v3565
        %v3568 = vmul.f32 0.5, %v3567
        %v3569 = vsub.f32 1.5, %v3568
        %v3570 = vmul.f32 %v3565, %v3569
        %vm3571 = vweird.f32 %v3564
        %vm3572 = vweird.f32 %v3565
        %vm3573 = vmor %vm3571, %vm3572
        %v3574 = vsel %vm3573, %v3565, %v3570
        %v3575 = vmul.f32 %v3558, %v3574
        %v3576 = vmul.f32 %v3575, %v3544
        %v3577 = vadd.f32 %v3576, %v3545
        %v3578 = vpack.c.bf16 %v3577, %v3577
        %v3579 = vld [vmem:[#allocation2 + $0x860] sm:$0xff]
        %v3580 = vld [vmem:[#allocation2 + $0x868] sm:$0xf]
        %v3581 = vld [vmem:[#allocation2 + $0x870] sm:$0xff]
        %v3582 = vld [vmem:[#allocation2 + $0x878] sm:$0xf]
        %v3583 = vld [vmem:[#allocation2 + $0x880] sm:$0xff]
        %v3584 = vld [vmem:[#allocation2 + $0x888] sm:$0xf]
        %v3585 = vld [vmem:[#allocation2 + $0x890] sm:$0xff]
        %v3586 = vld [vmem:[#allocation2 + $0x898] sm:$0xf]
        %v3587 = vld [vmem:[#allocation2 + $0x8a0] sm:$0xff]
        %v3588 = vld [vmem:[#allocation2 + $0x8a8] sm:$0xf]
        %v3589 = vld [vmem:[#allocation2 + $0x8b0] sm:$0xff]
        %v3590 = vld [vmem:[#allocation2 + $0x8b8] sm:$0xf]
        %v3591 = vld [vmem:[#allocation2 + $0x8c0] sm:$0xff]
        %v3592 = vld [vmem:[#allocation2 + $0x8c8] sm:$0xf]
        %v3593 = vld [vmem:[#allocation2 + $0x8d0] sm:$0xff]
        %v3594 = vld [vmem:[#allocation2 + $0x8d8] sm:$0xf]
        %v3595 = vld [vmem:[#allocation2 + $0x8e0] sm:$0xff]
        %v3596 = vld [vmem:[#allocation2 + $0x8e8] sm:$0xf]
        %v3597 = vld [vmem:[#allocation2 + $0x8f0] sm:$0xff]
        %v3598 = vld [vmem:[#allocation2 + $0x8f8] sm:$0xf]
        %v3599 = vld [vmem:[#allocation2 + $0x900] sm:$0xff]
        %v3600 = vld [vmem:[#allocation2 + $0x908] sm:$0xf]
        %v3601 = vld [vmem:[#allocation2 + $0x910] sm:$0xff]
        %v3602 = vld [vmem:[#allocation2 + $0x918] sm:$0xf]
        %v3603 = vld [vmem:[#allocation2 + $0x920] sm:$0xff]
        %v3604 = vld [vmem:[#allocation2 + $0x928] sm:$0xf]
        %v3605 = vld [vmem:[#allocation2 + $0x930] sm:$0xff]
        %v3606 = vld [vmem:[#allocation2 + $0x938] sm:$0xf]
        %v3607 = vld [vmem:[#allocation2 + $0x940] sm:$0xff]
        %v3608 = vld [vmem:[#allocation2 + $0x948] sm:$0xf]
        %v3609 = vld [vmem:[#allocation2 + $0x950] sm:$0xff]
        %v3610 = vld [vmem:[#allocation2 + $0x958] sm:$0xf]
        %s3611 = scalar_lea.vmem [#allocation5], 129
        %v3612 = vld [vmem:[%s3611] ss:$8 sm:$0x7]
        %v3614 = vperm.slane %v3612, 0
        %v3615 = vperm.slane %v3612, 1
        %v3616 = vperm.slane %v3612, 2
        %v3652 = vunpack.c.l.b16 %v3579
        %v3653 = vunpack.c.h.b16 %v3579
        %v3654 = vunpack.c.l.b16 %v3580
        %v3655 = vunpack.c.l.b16 %v3581
        %v3656 = vunpack.c.h.b16 %v3581
        %v3657 = vunpack.c.l.b16 %v3582
        %v3658 = vunpack.c.l.b16 %v3583
        %v3659 = vunpack.c.h.b16 %v3583
        %v3660 = vunpack.c.l.b16 %v3584
        %v3661 = vunpack.c.l.b16 %v3585
        %v3662 = vunpack.c.h.b16 %v3585
        %v3663 = vunpack.c.l.b16 %v3586
        %v3664 = vunpack.c.l.b16 %v3587
        %v3665 = vunpack.c.h.b16 %v3587
        %v3666 = vunpack.c.l.b16 %v3588
        %v3667 = vunpack.c.l.b16 %v3589
        %v3668 = vunpack.c.h.b16 %v3589
        %v3669 = vunpack.c.l.b16 %v3590
        %v3670 = vunpack.c.l.b16 %v3591
        %v3671 = vunpack.c.h.b16 %v3591
        %v3672 = vunpack.c.l.b16 %v3592
        %v3673 = vunpack.c.l.b16 %v3593
        %v3674 = vunpack.c.h.b16 %v3593
        %v3675 = vunpack.c.l.b16 %v3594
        %v3676 = vunpack.c.l.b16 %v3595
        %v3677 = vunpack.c.h.b16 %v3595
        %v3678 = vunpack.c.l.b16 %v3596
        %v3679 = vunpack.c.l.b16 %v3597
        %v3680 = vunpack.c.h.b16 %v3597
        %v3681 = vunpack.c.l.b16 %v3598
        %v3682 = vunpack.c.l.b16 %v3599
        %v3683 = vunpack.c.h.b16 %v3599
        %v3684 = vunpack.c.l.b16 %v3600
        %v3685 = vunpack.c.l.b16 %v3601
        %v3686 = vunpack.c.h.b16 %v3601
        %v3687 = vunpack.c.l.b16 %v3602
        %v3688 = vunpack.c.l.b16 %v3603
        %v3689 = vunpack.c.h.b16 %v3603
        %v3690 = vunpack.c.l.b16 %v3604
        %v3691 = vunpack.c.l.b16 %v3605
        %v3692 = vunpack.c.h.b16 %v3605
        %v3693 = vunpack.c.l.b16 %v3606
        %v3694 = vunpack.c.l.b16 %v3607
        %v3695 = vunpack.c.h.b16 %v3607
        %v3696 = vunpack.c.l.b16 %v3608
        %v3697 = vunpack.c.l.b16 %v3609
        %v3698 = vunpack.c.h.b16 %v3609
        %v3699 = vunpack.c.l.b16 %v3610
        %v3700 = vpack.c.b16 %v3655, %v3652
        %v3701 = vpack.c.b16 %v3656, %v3653
        %v3702 = vpack.c.b16 %v3657, %v3654
        %v3703 = vpack.c.b16 %v3661, %v3658
        %v3704 = vpack.c.b16 %v3662, %v3659
        %v3705 = vpack.c.b16 %v3663, %v3660
        %v3706 = vpack.c.b16 %v3667, %v3664
        %v3707 = vpack.c.b16 %v3668, %v3665
        %v3708 = vpack.c.b16 %v3669, %v3666
        %v3709 = vpack.c.b16 %v3673, %v3670
        %v3710 = vpack.c.b16 %v3674, %v3671
        %v3711 = vpack.c.b16 %v3675, %v3672
        %v3712 = vpack.c.b16 %v3679, %v3676
        %v3713 = vpack.c.b16 %v3680, %v3677
        %v3714 = vpack.c.b16 %v3681, %v3678
        %v3715 = vpack.c.b16 %v3685, %v3682
        %v3716 = vpack.c.b16 %v3686, %v3683
        %v3717 = vpack.c.b16 %v3687, %v3684
        %v3718 = vpack.c.b16 %v3691, %v3688
        %v3719 = vpack.c.b16 %v3692, %v3689
        %v3720 = vpack.c.b16 %v3693, %v3690
        %v3721 = vpack.c.b16 %v3697, %v3694
        %v3722 = vpack.c.b16 %v3698, %v3695
        %v3723 = vpack.c.b16 %v3699, %v3696
        %3748 = vmatpush.bf16.msra.mxu0 %v3721
        %3749 = vmatpush.bf16.msra.mxu0 %v3718
        %3750 = vmatpush.bf16.msra.mxu0 %v3715
        %3751 = vmatpush.bf16.msra.mxu0 %v3712
        %3752 = vmatpush.bf16.msra.mxu0 %v3709
        %3753 = vmatpush.bf16.msra.mxu0 %v3706
        %3754 = vmatpush.bf16.msra.mxu0 %v3703
        %3755 = vmatpush.bf16.msra.mxu0 %v3700
        %3756 = vmatmul.bf16.gmra.mxu0 %v3578
        %v3757 = vpop.f32.mrf.mxu0
        %v3758 = vadd.f32 %v3614, %v3757
        %v3759 = vpop.f32.mrf.mxu0
        %3760 = vdwg.mxu0
        %3761 = vmatpush.bf16.msra.mxu0 %v3722
        %3762 = vmatpush.bf16.msra.mxu0 %v3719
        %3763 = vmatpush.bf16.msra.mxu0 %v3716
        %3764 = vmatpush.bf16.msra.mxu0 %v3713
        %3765 = vmatpush.bf16.msra.mxu0 %v3710
        %3766 = vmatpush.bf16.msra.mxu0 %v3707
        %3767 = vmatpush.bf16.msra.mxu0 %v3704
        %3768 = vmatpush.bf16.msra.mxu0 %v3701
        %3769 = vmatmul.bf16.gmra.mxu0 %v3578
        %v3770 = vpop.f32.mrf.mxu0
        %v3771 = vadd.f32 %v3615, %v3770
        %v3772 = vpop.f32.mrf.mxu0
        %3773 = vdwg.mxu0
        %3774 = vmatpush.bf16.msra.mxu0 %v3723
        %3775 = vmatpush.bf16.msra.mxu0 %v3720
        %3776 = vmatpush.bf16.msra.mxu0 %v3717
        %3777 = vmatpush.bf16.msra.mxu0 %v3714
        %3778 = vmatpush.bf16.msra.mxu0 %v3711
        %3779 = vmatpush.bf16.msra.mxu0 %v3708
        %3780 = vmatpush.bf16.msra.mxu0 %v3705
        %3781 = vmatpush.bf16.msra.mxu0 %v3702
        %3782 = vmatmul.bf16.gmra.mxu0 %v3578
        %v3783 = vpop.f32.mrf.mxu0
        %v3784 = vadd.f32 %v3616, %v3783
        %v3785 = vpop.f32.mrf.mxu0
        %3786 = vdwg.mxu0
        %v3787 = vpack.c.bf16 %v3771, %v3771
        %v3788 = vpack.c.bf16 %v3784, %v3784
        %3789 = vmatpush.bf16.xpose.msra.mxu0 0
        %3790 = vmatpush.bf16.xpose.msra.mxu0 0
        %3791 = vmatpush.bf16.xpose.msra.mxu0 0
        %3792 = vmatpush.bf16.xpose.msra.mxu0 0
        %3793 = vmatpush.bf16.xpose.msra.mxu0 0
        %3794 = vmatpush.bf16.xpose.msra.mxu0 0
        %3795 = vmatpush.bf16.xpose.msra.mxu0 0
        %3796 = vmatpush.bf16.xpose.msra.mxu0 %v3788
        %3797 = vmatmul.bf16.gmra.mxu0 %v3787
        %v3798 = vpop.f32.mrf.mxu0
        %v3799 = vadd.f32 0.0, %v3798
        %v3800 = vpop.f32.mrf.mxu0
        %3801 = vdwg.mxu0
        %vm3802 = vcmask 27648
        %v3803 = vsel %vm3802, %v3799, -inf
        %3804 = vmax.xlane.f32.xlu0 %v3803
        %v3805 = vpop.xlane.xlu0 %3804
        %v3806 = vsub.f32 %v3799, %v3805
        %v3807 = vmul.f32 %v3806, 1.442695
        %v3808 = vpow.pop %v3807
        %v3809 = vsel %vm3802, %v3808, 0.0
        %3810 = vadd.xlane.f32.xlu0 %v3809
        %v3811 = vpop.xlane.xlu0 %3810
        %v3812 = vrcp.pop %v3811
        %v3813 = vmul.f32 %v3811, %v3812
        %v3814 = vsub.f32 1.0, %v3813
        %v3815 = vmul.f32 %v3812, %v3814
        %v3816 = vadd.f32 %v3812, %v3815
        %vm3817 = vweird.f32 %v3811
        %vm3818 = vweird.f32 %v3812
        %vm3819 = vmor %vm3817, %vm3818
        %v3820 = vsel %vm3819, %v3812, %v3816
        %v3821 = vand.u32 2147483647, %v3811
        %vm3822 = vcmp.eq.f32.partialorder %v3821, 8.507059e+37
        %v3823 = vand.u32 %v3811, 2147483648
        %v3824 = vor.u32 1.1754944e-38, %v3823
        %v3825 = vsel %vm3822, %v3824, %v3820
        %v3826 = vmul.f32 %v3808, %v3825
        %v3827 = vpack.c.bf16 %v3826, %v3826
        %v3828 = vpack.c.bf16 %v3758, %v3758
        %vm3829 = vcmask 31744
        %v3831 = vsel %vm3829, %v3827, 0
        %vm3833 = vcmask 1041408
        %v3835 = vsel %vm3833, %v3828, 0
        %3837 = vmatpush.bf16.msra.mxu0 0
        %3838 = vmatpush.bf16.msra.mxu0 0
        %3839 = vmatpush.bf16.msra.mxu0 0
        %3840 = vmatpush.bf16.msra.mxu0 0
        %3841 = vmatpush.bf16.msra.mxu0 0
        %3842 = vmatpush.bf16.msra.mxu0 0
        %3843 = vmatpush.bf16.msra.mxu0 0
        %3844 = vmatpush.bf16.msra.mxu0 %v3835
        %3845 = vmatmul.bf16.gmra.mxu0 %v3831
        %v3846 = vpop.f32.mrf.mxu0
        %v3847 = vadd.f32 %v3577, %v3846
        %v3848 = vpop.f32.mrf.mxu0
        %3849 = vdwg.mxu0
        %v3850 = vld [vmem:[#allocation5 + $0x82] ss:$0 sm:$0xff]
        %v3851 = vld [vmem:[#allocation5 + $0x83] ss:$0 sm:$0xff]
        %v3852 = vsel %vm3546, %v3847, 0.0
        %3853 = vadd.xlane.f32.xlu0 %v3852
        %v3854 = vpop.xlane.xlu0 %3853
        %v3855 = vmul.f32 %v3854, %v3556
        %v3856 = vsub.f32 %v3847, %v3855
        %v3857 = vmul.f32 %v3856, %v3856
        %v3858 = vsel %vm3546, %v3857, 0.0
        %3859 = vadd.xlane.f32.xlu0 %v3858
        %v3860 = vpop.xlane.xlu0 %3859
        %v3861 = vmul.f32 %v3860, %v3556
        %v3862 = vadd.f32 %v3861, 1e-05
        %v3863 = vrsqrt.pop %v3862
        %v3864 = vmul.f32 %v3863, %v3862
        %v3865 = vmul.f32 %v3864, %v3863
        %v3866 = vmul.f32 0.5, %v3865
        %v3867 = vsub.f32 1.5, %v3866
        %v3868 = vmul.f32 %v3863, %v3867
        %vm3869 = vweird.f32 %v3862
        %vm3870 = vweird.f32 %v3863
        %vm3871 = vmor %vm3869, %vm3870
        %v3872 = vsel %vm3871, %v3863, %v3868
        %v3873 = vmul.f32 %v3856, %v3872
        %v3874 = vmul.f32 %v3873, %v3850
        %v3875 = vadd.f32 %v3874, %v3851
        %v3876 = vpack.c.bf16 %v3875, %v3875
        %v3877 = vld [vmem:[#allocation2 + $0x960] sm:$0xf]
        %v3878 = vld [vmem:[#allocation2 + $0x970] sm:$0xf]
        %v3879 = vld [vmem:[#allocation2 + $0x980] sm:$0xf]
        %v3880 = vld [vmem:[#allocation2 + $0x990] sm:$0xf]
        %v3881 = vld [vmem:[#allocation2 + $0x9a0] sm:$0xf]
        %v3882 = vld [vmem:[#allocation2 + $0x9b0] sm:$0xf]
        %v3883 = vld [vmem:[#allocation2 + $0x9c0] sm:$0xf]
        %v3884 = vld [vmem:[#allocation2 + $0x9d0] sm:$0xf]
        %v3885 = vld [vmem:[#allocation2 + $0x9e0] sm:$0xf]
        %v3886 = vld [vmem:[#allocation2 + $0x9f0] sm:$0xf]
        %v3887 = vld [vmem:[#allocation2 + $0xa00] sm:$0xf]
        %v3888 = vld [vmem:[#allocation2 + $0xa10] sm:$0xf]
        %v3889 = vld [vmem:[#allocation2 + $0xa20] sm:$0xf]
        %v3890 = vld [vmem:[#allocation2 + $0xa30] sm:$0xf]
        %v3891 = vld [vmem:[#allocation2 + $0xa40] sm:$0xf]
        %v3892 = vld [vmem:[#allocation2 + $0xa50] sm:$0xf]
        %v3893 = vld [vmem:[#allocation5 + $0x84] ss:$0 sm:$0xff]
        %v3910 = vunpack.c.l.b16 %v3877
        %v3911 = vunpack.c.l.b16 %v3878
        %v3912 = vunpack.c.l.b16 %v3879
        %v3913 = vunpack.c.l.b16 %v3880
        %v3914 = vunpack.c.l.b16 %v3881
        %v3915 = vunpack.c.l.b16 %v3882
        %v3916 = vunpack.c.l.b16 %v3883
        %v3917 = vunpack.c.l.b16 %v3884
        %v3918 = vunpack.c.l.b16 %v3885
        %v3919 = vunpack.c.l.b16 %v3886
        %v3920 = vunpack.c.l.b16 %v3887
        %v3921 = vunpack.c.l.b16 %v3888
        %v3922 = vunpack.c.l.b16 %v3889
        %v3923 = vunpack.c.l.b16 %v3890
        %v3924 = vunpack.c.l.b16 %v3891
        %v3925 = vunpack.c.l.b16 %v3892
        %v3926 = vpack.c.b16 %v3911, %v3910
        %v3927 = vpack.c.b16 %v3913, %v3912
        %v3928 = vpack.c.b16 %v3915, %v3914
        %v3929 = vpack.c.b16 %v3917, %v3916
        %v3930 = vpack.c.b16 %v3919, %v3918
        %v3931 = vpack.c.b16 %v3921, %v3920
        %v3932 = vpack.c.b16 %v3923, %v3922
        %v3933 = vpack.c.b16 %v3925, %v3924
        %3942 = vmatpush.bf16.msra.mxu0 %v3933
        %3943 = vmatpush.bf16.msra.mxu0 %v3932
        %3944 = vmatpush.bf16.msra.mxu0 %v3931
        %3945 = vmatpush.bf16.msra.mxu0 %v3930
        %3946 = vmatpush.bf16.msra.mxu0 %v3929
        %3947 = vmatpush.bf16.msra.mxu0 %v3928
        %3948 = vmatpush.bf16.msra.mxu0 %v3927
        %3949 = vmatpush.bf16.msra.mxu0 %v3926
        %3950 = vmatmul.bf16.gmra.mxu0 %v3876
        %v3951 = vpop.f32.mrf.mxu0
        %v3952 = vadd.f32 %v3893, %v3951
        %v3953 = vpop.f32.mrf.mxu0
        %3954 = vdwg.mxu0
        %v3955 = vmax.f32 %v3952, 0.0
        %v3956 = vpack.c.bf16 %v3955, %v3955
        %v3957 = vld [vmem:[#allocation2 + $0xa60] sm:$0xf]
        %v3958 = vld [vmem:[#allocation2 + $0xa70] sm:$0xf]
        %v3959 = vld [vmem:[#allocation2 + $0xa80] sm:$0xf]
        %v3960 = vld [vmem:[#allocation2 + $0xa90] sm:$0xf]
        %v3961 = vld [vmem:[#allocation5 + $0x85] ss:$0 sm:$0xff]
        %v3966 = vunpack.c.l.b16 %v3957
        %v3967 = vunpack.c.l.b16 %v3958
        %v3968 = vunpack.c.l.b16 %v3959
        %v3969 = vunpack.c.l.b16 %v3960
        %v3970 = vpack.c.b16 %v3967, %v3966
        %v3971 = vpack.c.b16 %v3969, %v3968
        %v3975 = vsel %vm285, %v3956, 0
        %3977 = vmatpush.bf16.msra.mxu0 0
        %3978 = vmatpush.bf16.msra.mxu0 0
        %3979 = vmatpush.bf16.msra.mxu0 0
        %3980 = vmatpush.bf16.msra.mxu0 0
        %3981 = vmatpush.bf16.msra.mxu0 0
        %3982 = vmatpush.bf16.msra.mxu0 0
        %3983 = vmatpush.bf16.msra.mxu0 %v3971
        %3984 = vmatpush.bf16.msra.mxu0 %v3970
        %3985 = vmatmul.bf16.gmra.mxu0 %v3975
        %v3986 = vpop.f32.mrf.mxu0
        %v3987 = vadd.f32 %v3961, %v3986
        %v3988 = vpop.f32.mrf.mxu0
        %3989 = vdwg.mxu0
        %v3990 = vadd.f32 %v3987, %v3847
        %v3991 = vld [vmem:[#allocation5 + $0x86] ss:$0 sm:$0xff]
        %v3992 = vld [vmem:[#allocation5 + $0x87] ss:$0 sm:$0xff]
        %v3993 = vsel %vm3546, %v3990, 0.0
        %3994 = vadd.xlane.f32.xlu0 %v3993
        %v3995 = vpop.xlane.xlu0 %3994
        %v3996 = vmul.f32 %v3995, %v3556
        %v3997 = vsub.f32 %v3990, %v3996
        %v3998 = vmul.f32 %v3997, %v3997
        %v3999 = vsel %vm3546, %v3998, 0.0
        %4000 = vadd.xlane.f32.xlu0 %v3999
        %v4001 = vpop.xlane.xlu0 %4000
        %v4002 = vmul.f32 %v4001, %v3556
        %v4003 = vadd.f32 %v4002, 1e-05
        %v4004 = vrsqrt.pop %v4003
        %v4005 = vmul.f32 %v4004, %v4003
        %v4006 = vmul.f32 %v4005, %v4004
        %v4007 = vmul.f32 0.5, %v4006
        %v4008 = vsub.f32 1.5, %v4007
        %v4009 = vmul.f32 %v4004, %v4008
        %vm4010 = vweird.f32 %v4003
        %vm4011 = vweird.f32 %v4004
        %vm4012 = vmor %vm4010, %vm4011
        %v4013 = vsel %vm4012, %v4004, %v4009
        %v4014 = vmul.f32 %v3997, %v4013
        %v4015 = vmul.f32 %v4014, %v3991
        %v4016 = vadd.f32 %v4015, %v3992
        %v4017 = vpack.c.bf16 %v4016, %v4016
        %v4018 = vld [vmem:[#allocation2 + $0xaa0] sm:$0xff]
        %v4019 = vld [vmem:[#allocation2 + $0xaa8] sm:$0xf]
        %v4020 = vld [vmem:[#allocation2 + $0xab0] sm:$0xff]
        %v4021 = vld [vmem:[#allocation2 + $0xab8] sm:$0xf]
        %v4022 = vld [vmem:[#allocation2 + $0xac0] sm:$0xff]
        %v4023 = vld [vmem:[#allocation2 + $0xac8] sm:$0xf]
        %v4024 = vld [vmem:[#allocation2 + $0xad0] sm:$0xff]
        %v4025 = vld [vmem:[#allocation2 + $0xad8] sm:$0xf]
        %v4026 = vld [vmem:[#allocation2 + $0xae0] sm:$0xff]
        %v4027 = vld [vmem:[#allocation2 + $0xae8] sm:$0xf]
        %v4028 = vld [vmem:[#allocation2 + $0xaf0] sm:$0xff]
        %v4029 = vld [vmem:[#allocation2 + $0xaf8] sm:$0xf]
        %v4030 = vld [vmem:[#allocation2 + $0xb00] sm:$0xff]
        %v4031 = vld [vmem:[#allocation2 + $0xb08] sm:$0xf]
        %v4032 = vld [vmem:[#allocation2 + $0xb10] sm:$0xff]
        %v4033 = vld [vmem:[#allocation2 + $0xb18] sm:$0xf]
        %v4034 = vld [vmem:[#allocation2 + $0xb20] sm:$0xff]
        %v4035 = vld [vmem:[#allocation2 + $0xb28] sm:$0xf]
        %v4036 = vld [vmem:[#allocation2 + $0xb30] sm:$0xff]
        %v4037 = vld [vmem:[#allocation2 + $0xb38] sm:$0xf]
        %v4038 = vld [vmem:[#allocation2 + $0xb40] sm:$0xff]
        %v4039 = vld [vmem:[#allocation2 + $0xb48] sm:$0xf]
        %v4040 = vld [vmem:[#allocation2 + $0xb50] sm:$0xff]
        %v4041 = vld [vmem:[#allocation2 + $0xb58] sm:$0xf]
        %v4042 = vld [vmem:[#allocation2 + $0xb60] sm:$0xff]
        %v4043 = vld [vmem:[#allocation2 + $0xb68] sm:$0xf]
        %v4044 = vld [vmem:[#allocation2 + $0xb70] sm:$0xff]
        %v4045 = vld [vmem:[#allocation2 + $0xb78] sm:$0xf]
        %v4046 = vld [vmem:[#allocation2 + $0xb80] sm:$0xff]
        %v4047 = vld [vmem:[#allocation2 + $0xb88] sm:$0xf]
        %v4048 = vld [vmem:[#allocation2 + $0xb90] sm:$0xff]
        %v4049 = vld [vmem:[#allocation2 + $0xb98] sm:$0xf]
        %s4050 = scalar_lea.vmem [#allocation5], 160
        %v4051 = vld [vmem:[%s4050] ss:$8 sm:$0x7]
        %v4053 = vperm.slane %v4051, 0
        %v4054 = vperm.slane %v4051, 1
        %v4055 = vperm.slane %v4051, 2
        %v4091 = vunpack.c.l.b16 %v4018
        %v4092 = vunpack.c.h.b16 %v4018
        %v4093 = vunpack.c.l.b16 %v4019
        %v4094 = vunpack.c.l.b16 %v4020
        %v4095 = vunpack.c.h.b16 %v4020
        %v4096 = vunpack.c.l.b16 %v4021
        %v4097 = vunpack.c.l.b16 %v4022
        %v4098 = vunpack.c.h.b16 %v4022
        %v4099 = vunpack.c.l.b16 %v4023
        %v4100 = vunpack.c.l.b16 %v4024
        %v4101 = vunpack.c.h.b16 %v4024
        %v4102 = vunpack.c.l.b16 %v4025
        %v4103 = vunpack.c.l.b16 %v4026
        %v4104 = vunpack.c.h.b16 %v4026
        %v4105 = vunpack.c.l.b16 %v4027
        %v4106 = vunpack.c.l.b16 %v4028
        %v4107 = vunpack.c.h.b16 %v4028
        %v4108 = vunpack.c.l.b16 %v4029
        %v4109 = vunpack.c.l.b16 %v4030
        %v4110 = vunpack.c.h.b16 %v4030
        %v4111 = vunpack.c.l.b16 %v4031
        %v4112 = vunpack.c.l.b16 %v4032
        %v4113 = vunpack.c.h.b16 %v4032
        %v4114 = vunpack.c.l.b16 %v4033
        %v4115 = vunpack.c.l.b16 %v4034
        %v4116 = vunpack.c.h.b16 %v4034
        %v4117 = vunpack.c.l.b16 %v4035
        %v4118 = vunpack.c.l.b16 %v4036
        %v4119 = vunpack.c.h.b16 %v4036
        %v4120 = vunpack.c.l.b16 %v4037
        %v4121 = vunpack.c.l.b16 %v4038
        %v4122 = vunpack.c.h.b16 %v4038
        %v4123 = vunpack.c.l.b16 %v4039
        %v4124 = vunpack.c.l.b16 %v4040
        %v4125 = vunpack.c.h.b16 %v4040
        %v4126 = vunpack.c.l.b16 %v4041
        %v4127 = vunpack.c.l.b16 %v4042
        %v4128 = vunpack.c.h.b16 %v4042
        %v4129 = vunpack.c.l.b16 %v4043
        %v4130 = vunpack.c.l.b16 %v4044
        %v4131 = vunpack.c.h.b16 %v4044
        %v4132 = vunpack.c.l.b16 %v4045
        %v4133 = vunpack.c.l.b16 %v4046
        %v4134 = vunpack.c.h.b16 %v4046
        %v4135 = vunpack.c.l.b16 %v4047
        %v4136 = vunpack.c.l.b16 %v4048
        %v4137 = vunpack.c.h.b16 %v4048
        %v4138 = vunpack.c.l.b16 %v4049
        %v4139 = vpack.c.b16 %v4094, %v4091
        %v4140 = vpack.c.b16 %v4095, %v4092
        %v4141 = vpack.c.b16 %v4096, %v4093
        %v4142 = vpack.c.b16 %v4100, %v4097
        %v4143 = vpack.c.b16 %v4101, %v4098
        %v4144 = vpack.c.b16 %v4102, %v4099
        %v4145 = vpack.c.b16 %v4106, %v4103
        %v4146 = vpack.c.b16 %v4107, %v4104
        %v4147 = vpack.c.b16 %v4108, %v4105
        %v4148 = vpack.c.b16 %v4112, %v4109
        %v4149 = vpack.c.b16 %v4113, %v4110
        %v4150 = vpack.c.b16 %v4114, %v4111
        %v4151 = vpack.c.b16 %v4118, %v4115
        %v4152 = vpack.c.b16 %v4119, %v4116
        %v4153 = vpack.c.b16 %v4120, %v4117
        %v4154 = vpack.c.b16 %v4124, %v4121
        %v4155 = vpack.c.b16 %v4125, %v4122
        %v4156 = vpack.c.b16 %v4126, %v4123
        %v4157 = vpack.c.b16 %v4130, %v4127
        %v4158 = vpack.c.b16 %v4131, %v4128
        %v4159 = vpack.c.b16 %v4132, %v4129
        %v4160 = vpack.c.b16 %v4136, %v4133
        %v4161 = vpack.c.b16 %v4137, %v4134
        %v4162 = vpack.c.b16 %v4138, %v4135
        %4187 = vmatpush.bf16.msra.mxu0 %v4160
        %4188 = vmatpush.bf16.msra.mxu0 %v4157
        %4189 = vmatpush.bf16.msra.mxu0 %v4154
        %4190 = vmatpush.bf16.msra.mxu0 %v4151
        %4191 = vmatpush.bf16.msra.mxu0 %v4148
        %4192 = vmatpush.bf16.msra.mxu0 %v4145
        %4193 = vmatpush.bf16.msra.mxu0 %v4142
        %4194 = vmatpush.bf16.msra.mxu0 %v4139
        %4195 = vmatmul.bf16.gmra.mxu0 %v4017
        %v4196 = vpop.f32.mrf.mxu0
        %v4197 = vadd.f32 %v4053, %v4196
        %v4198 = vpop.f32.mrf.mxu0
        %4199 = vdwg.mxu0
        %4200 = vmatpush.bf16.msra.mxu0 %v4161
        %4201 = vmatpush.bf16.msra.mxu0 %v4158
        %4202 = vmatpush.bf16.msra.mxu0 %v4155
        %4203 = vmatpush.bf16.msra.mxu0 %v4152
        %4204 = vmatpush.bf16.msra.mxu0 %v4149
        %4205 = vmatpush.bf16.msra.mxu0 %v4146
        %4206 = vmatpush.bf16.msra.mxu0 %v4143
        %4207 = vmatpush.bf16.msra.mxu0 %v4140
        %4208 = vmatmul.bf16.gmra.mxu0 %v4017
        %v4209 = vpop.f32.mrf.mxu0
        %v4210 = vadd.f32 %v4054, %v4209
        %v4211 = vpop.f32.mrf.mxu0
        %4212 = vdwg.mxu0
        %4213 = vmatpush.bf16.msra.mxu0 %v4162
        %4214 = vmatpush.bf16.msra.mxu0 %v4159
        %4215 = vmatpush.bf16.msra.mxu0 %v4156
        %4216 = vmatpush.bf16.msra.mxu0 %v4153
        %4217 = vmatpush.bf16.msra.mxu0 %v4150
        %4218 = vmatpush.bf16.msra.mxu0 %v4147
        %4219 = vmatpush.bf16.msra.mxu0 %v4144
        %4220 = vmatpush.bf16.msra.mxu0 %v4141
        %4221 = vmatmul.bf16.gmra.mxu0 %v4017
        %v4222 = vpop.f32.mrf.mxu0
        %v4223 = vadd.f32 %v4055, %v4222
        %v4224 = vpop.f32.mrf.mxu0
        %4225 = vdwg.mxu0
        %v4226 = vpack.c.bf16 %v4210, %v4210
        %v4227 = vpack.c.bf16 %v4223, %v4223
        %4228 = vmatpush.bf16.xpose.msra.mxu0 0
        %4229 = vmatpush.bf16.xpose.msra.mxu0 0
        %4230 = vmatpush.bf16.xpose.msra.mxu0 0
        %4231 = vmatpush.bf16.xpose.msra.mxu0 0
        %4232 = vmatpush.bf16.xpose.msra.mxu0 0
        %4233 = vmatpush.bf16.xpose.msra.mxu0 0
        %4234 = vmatpush.bf16.xpose.msra.mxu0 0
        %4235 = vmatpush.bf16.xpose.msra.mxu0 %v4227
        %4236 = vmatmul.bf16.gmra.mxu0 %v4226
        %v4237 = vpop.f32.mrf.mxu0
        %v4238 = vadd.f32 0.0, %v4237
        %v4239 = vpop.f32.mrf.mxu0
        %4240 = vdwg.mxu0
        %v4241 = vsel %vm3802, %v4238, -inf
        %4242 = vmax.xlane.f32.xlu0 %v4241
        %v4243 = vpop.xlane.xlu0 %4242
        %v4244 = vsub.f32 %v4238, %v4243
        %v4245 = vmul.f32 %v4244, 1.442695
        %v4246 = vpow.pop %v4245
        %v4247 = vsel %vm3802, %v4246, 0.0
        %4248 = vadd.xlane.f32.xlu0 %v4247
        %v4249 = vpop.xlane.xlu0 %4248
        %v4250 = vrcp.pop %v4249
        %v4251 = vmul.f32 %v4249, %v4250
        %v4252 = vsub.f32 1.0, %v4251
        %v4253 = vmul.f32 %v4250, %v4252
        %v4254 = vadd.f32 %v4250, %v4253
        %vm4255 = vweird.f32 %v4249
        %vm4256 = vweird.f32 %v4250
        %vm4257 = vmor %vm4255, %vm4256
        %v4258 = vsel %vm4257, %v4250, %v4254
        %v4259 = vand.u32 2147483647, %v4249
        %vm4260 = vcmp.eq.f32.partialorder %v4259, 8.507059e+37
        %v4261 = vand.u32 %v4249, 2147483648
        %v4262 = vor.u32 1.1754944e-38, %v4261
        %v4263 = vsel %vm4260, %v4262, %v4258
        %v4264 = vmul.f32 %v4246, %v4263
        %v4265 = vpack.c.bf16 %v4264, %v4264
        %v4266 = vpack.c.bf16 %v4197, %v4197
        %v4268 = vsel %vm3829, %v4265, 0
        %v4271 = vsel %vm3833, %v4266, 0
        %4273 = vmatpush.bf16.msra.mxu0 0
        %4274 = vmatpush.bf16.msra.mxu0 0
        %4275 = vmatpush.bf16.msra.mxu0 0
        %4276 = vmatpush.bf16.msra.mxu0 0
        %4277 = vmatpush.bf16.msra.mxu0 0
        %4278 = vmatpush.bf16.msra.mxu0 0
        %4279 = vmatpush.bf16.msra.mxu0 0
        %4280 = vmatpush.bf16.msra.mxu0 %v4271
        %4281 = vmatmul.bf16.gmra.mxu0 %v4268
        %v4282 = vpop.f32.mrf.mxu0
        %v4283 = vadd.f32 %v4016, %v4282
        %v4284 = vpop.f32.mrf.mxu0
        %4285 = vdwg.mxu0
        %v4286 = vld [vmem:[#allocation5 + $0xa1] ss:$0 sm:$0xff]
        %v4287 = vld [vmem:[#allocation5 + $0xa2] ss:$0 sm:$0xff]
        %v4288 = vsel %vm3546, %v4283, 0.0
        %4289 = vadd.xlane.f32.xlu0 %v4288
        %v4290 = vpop.xlane.xlu0 %4289
        %v4291 = vmul.f32 %v4290, %v3556
        %v4292 = vsub.f32 %v4283, %v4291
        %v4293 = vmul.f32 %v4292, %v4292
        %v4294 = vsel %vm3546, %v4293, 0.0
        %4295 = vadd.xlane.f32.xlu0 %v4294
        %v4296 = vpop.xlane.xlu0 %4295
        %v4297 = vmul.f32 %v4296, %v3556
        %v4298 = vadd.f32 %v4297, 1e-05
        %v4299 = vrsqrt.pop %v4298
        %v4300 = vmul.f32 %v4299, %v4298
        %v4301 = vmul.f32 %v4300, %v4299
        %v4302 = vmul.f32 0.5, %v4301
        %v4303 = vsub.f32 1.5, %v4302
        %v4304 = vmul.f32 %v4299, %v4303
        %vm4305 = vweird.f32 %v4298
        %vm4306 = vweird.f32 %v4299
        %vm4307 = vmor %vm4305, %vm4306
        %v4308 = vsel %vm4307, %v4299, %v4304
        %v4309 = vmul.f32 %v4292, %v4308
        %v4310 = vmul.f32 %v4309, %v4286
        %v4311 = vadd.f32 %v4310, %v4287
        %v4312 = vpack.c.bf16 %v4311, %v4311
        %v4313 = vld [vmem:[#allocation2 + $0xba0] sm:$0xf]
        %v4314 = vld [vmem:[#allocation2 + $0xbb0] sm:$0xf]
        %v4315 = vld [vmem:[#allocation2 + $0xbc0] sm:$0xf]
        %v4316 = vld [vmem:[#allocation2 + $0xbd0] sm:$0xf]
        %v4317 = vld [vmem:[#allocation2 + $0xbe0] sm:$0xf]
        %v4318 = vld [vmem:[#allocation2 + $0xbf0] sm:$0xf]
        %v4319 = vld [vmem:[#allocation2 + $0xc00] sm:$0xf]
        %v4320 = vld [vmem:[#allocation2 + $0xc10] sm:$0xf]
        %v4321 = vld [vmem:[#allocation2 + $0xc20] sm:$0xf]
        %v4322 = vld [vmem:[#allocation2 + $0xc30] sm:$0xf]
        %v4323 = vld [vmem:[#allocation2 + $0xc40] sm:$0xf]
        %v4324 = vld [vmem:[#allocation2 + $0xc50] sm:$0xf]
        %v4325 = vld [vmem:[#allocation2 + $0xc60] sm:$0xf]
        %v4326 = vld [vmem:[#allocation2 + $0xc70] sm:$0xf]
        %v4327 = vld [vmem:[#allocation2 + $0xc80] sm:$0xf]
        %v4328 = vld [vmem:[#allocation2 + $0xc90] sm:$0xf]
        %v4329 = vld [vmem:[#allocation5 + $0xa3] ss:$0 sm:$0xff]
        %v4346 = vunpack.c.l.b16 %v4313
        %v4347 = vunpack.c.l.b16 %v4314
        %v4348 = vunpack.c.l.b16 %v4315
        %v4349 = vunpack.c.l.b16 %v4316
        %v4350 = vunpack.c.l.b16 %v4317
        %v4351 = vunpack.c.l.b16 %v4318
        %v4352 = vunpack.c.l.b16 %v4319
        %v4353 = vunpack.c.l.b16 %v4320
        %v4354 = vunpack.c.l.b16 %v4321
        %v4355 = vunpack.c.l.b16 %v4322
        %v4356 = vunpack.c.l.b16 %v4323
        %v4357 = vunpack.c.l.b16 %v4324
        %v4358 = vunpack.c.l.b16 %v4325
        %v4359 = vunpack.c.l.b16 %v4326
        %v4360 = vunpack.c.l.b16 %v4327
        %v4361 = vunpack.c.l.b16 %v4328
        %v4362 = vpack.c.b16 %v4347, %v4346
        %v4363 = vpack.c.b16 %v4349, %v4348
        %v4364 = vpack.c.b16 %v4351, %v4350
        %v4365 = vpack.c.b16 %v4353, %v4352
        %v4366 = vpack.c.b16 %v4355, %v4354
        %v4367 = vpack.c.b16 %v4357, %v4356
        %v4368 = vpack.c.b16 %v4359, %v4358
        %v4369 = vpack.c.b16 %v4361, %v4360
        %4378 = vmatpush.bf16.msra.mxu0 %v4369
        %4379 = vmatpush.bf16.msra.mxu0 %v4368
        %4380 = vmatpush.bf16.msra.mxu0 %v4367
        %4381 = vmatpush.bf16.msra.mxu0 %v4366
        %4382 = vmatpush.bf16.msra.mxu0 %v4365
        %4383 = vmatpush.bf16.msra.mxu0 %v4364
        %4384 = vmatpush.bf16.msra.mxu0 %v4363
        %4385 = vmatpush.bf16.msra.mxu0 %v4362
        %4386 = vmatmul.bf16.gmra.mxu0 %v4312
        %v4387 = vpop.f32.mrf.mxu0
        %v4388 = vadd.f32 %v4329, %v4387
        %v4389 = vpop.f32.mrf.mxu0
        %4390 = vdwg.mxu0
        %v4391 = vmax.f32 %v4388, 0.0
        %v4392 = vpack.c.bf16 %v4391, %v4391
        %v4393 = vld [vmem:[#allocation2 + $0xca0] sm:$0xf]
        %v4394 = vld [vmem:[#allocation2 + $0xcb0] sm:$0xf]
        %v4395 = vld [vmem:[#allocation2 + $0xcc0] sm:$0xf]
        %v4396 = vld [vmem:[#allocation2 + $0xcd0] sm:$0xf]
        %v4397 = vld [vmem:[#allocation5 + $0xa4] ss:$0 sm:$0xff]
        %v4402 = vunpack.c.l.b16 %v4393
        %v4403 = vunpack.c.l.b16 %v4394
        %v4404 = vunpack.c.l.b16 %v4395
        %v4405 = vunpack.c.l.b16 %v4396
        %v4406 = vpack.c.b16 %v4403, %v4402
        %v4407 = vpack.c.b16 %v4405, %v4404
        %v4411 = vsel %vm285, %v4392, 0
        %4413 = vmatpush.bf16.msra.mxu0 0
        %4414 = vmatpush.bf16.msra.mxu0 0
        %4415 = vmatpush.bf16.msra.mxu0 0
        %4416 = vmatpush.bf16.msra.mxu0 0
        %4417 = vmatpush.bf16.msra.mxu0 0
        %4418 = vmatpush.bf16.msra.mxu0 0
        %4419 = vmatpush.bf16.msra.mxu0 %v4407
        %4420 = vmatpush.bf16.msra.mxu0 %v4406
        %4421 = vmatmul.bf16.gmra.mxu0 %v4411
        %v4422 = vpop.f32.mrf.mxu0
        %v4423 = vadd.f32 %v4397, %v4422
        %v4424 = vpop.f32.mrf.mxu0
        %4425 = vdwg.mxu0
        %v4426 = vadd.f32 %v4423, %v4283
        %s4427 = scalar_lea.vmem [#allocation5], 165
        %v4428 = vld [vmem:[%s4427] ss:$8 sm:$0x3]
        %v4429 = vpack.c.bf16 %v4426, %v4426
        %v4430 = vld [vmem:[#allocation2 + $0xce0] sm:$0x1]
        %v4432 = vsel %vm3829, %v4430, 0
        %v4435 = vsel %vm3833, %v4429, 0
        %4437 = vmatpush.bf16.msra.mxu0 0
        %4438 = vmatpush.bf16.msra.mxu0 0
        %4439 = vmatpush.bf16.msra.mxu0 0
        %4440 = vmatpush.bf16.msra.mxu0 0
        %4441 = vmatpush.bf16.msra.mxu0 0
        %4442 = vmatpush.bf16.msra.mxu0 0
        %4443 = vmatpush.bf16.msra.mxu0 0
        %4444 = vmatpush.bf16.msra.mxu0 %v4435
        %4445 = vmatmul.bf16.gmra.mxu0 %v4432
        %v4446 = vpop.f32.mrf.mxu0
        %v4447 = vadd.f32 0.0, %v4446
        %v4448 = vpop.f32.mrf.mxu0
        %4449 = vdwg.mxu0
        %v4450 = vpack.c.bf16 %v4447, %v4447
        %v4451 = vld [vmem:[#allocation2 + $0xd60] sm:$0xff]
        %v4452 = vld [vmem:[#allocation2 + $0xd70] sm:$0xff]
        %v4453 = vld [vmem:[#allocation2 + $0xd80] sm:$0xff]
        %v4454 = vld [vmem:[#allocation2 + $0xd90] sm:$0xff]
        %v4455 = vld [vmem:[#allocation2 + $0xda0] sm:$0xff]
        %v4456 = vld [vmem:[#allocation2 + $0xdb0] sm:$0xff]
        %v4457 = vld [vmem:[#allocation2 + $0xdc0] sm:$0xff]
        %v4458 = vld [vmem:[#allocation2 + $0xdd0] sm:$0xff]
        %v4459 = vld [vmem:[#allocation2 + $0xde0] sm:$0xff]
        %v4460 = vld [vmem:[#allocation2 + $0xdf0] sm:$0xff]
        %v4461 = vld [vmem:[#allocation2 + $0xe00] sm:$0xff]
        %v4462 = vld [vmem:[#allocation2 + $0xe10] sm:$0xff]
        %v4463 = vld [vmem:[#allocation2 + $0xe20] sm:$0xff]
        %v4464 = vld [vmem:[#allocation2 + $0xe30] sm:$0xff]
        %v4465 = vld [vmem:[#allocation2 + $0xe40] sm:$0xff]
        %v4466 = vld [vmem:[#allocation2 + $0xe50] sm:$0xff]
        %v4467 = vld [vmem:[#allocation2 + $0xd00] sm:$0x1]
        %v4469 = vsel %vm3829, %v4467, 0
        %4471 = vmatpush.bf16.msra.mxu0 0
        %4472 = vmatpush.bf16.msra.mxu0 0
        %4473 = vmatpush.bf16.msra.mxu0 0
        %4474 = vmatpush.bf16.msra.mxu0 0
        %4475 = vmatpush.bf16.msra.mxu0 0
        %4476 = vmatpush.bf16.msra.mxu0 0
        %4477 = vmatpush.bf16.msra.mxu0 0
        %4478 = vmatpush.bf16.msra.mxu0 %v4435
        %4479 = vmatmul.bf16.gmra.mxu0 %v4469
        %v4480 = vpop.f32.mrf.mxu0
        %v4481 = vadd.f32 0.0, %v4480
        %v4482 = vpop.f32.mrf.mxu0
        %4483 = vdwg.mxu0
        %v4484 = vpack.c.bf16 %v4481, %v4481
        %v4485 = vld [vmem:[#allocation2 + $0xe60] sm:$0xff]
        %v4486 = vld [vmem:[#allocation2 + $0xe70] sm:$0xff]
        %v4487 = vld [vmem:[#allocation2 + $0xe80] sm:$0xff]
        %v4488 = vld [vmem:[#allocation2 + $0xe90] sm:$0xff]
        %v4489 = vld [vmem:[#allocation2 + $0xea0] sm:$0xff]
        %v4490 = vld [vmem:[#allocation2 + $0xeb0] sm:$0xff]
        %v4491 = vld [vmem:[#allocation2 + $0xec0] sm:$0xff]
        %v4492 = vld [vmem:[#allocation2 + $0xed0] sm:$0xff]
        %v4493 = vld [vmem:[#allocation2 + $0xee0] sm:$0xff]
        %v4494 = vld [vmem:[#allocation2 + $0xef0] sm:$0xff]
        %v4495 = vld [vmem:[#allocation2 + $0xf00] sm:$0xff]
        %v4496 = vld [vmem:[#allocation2 + $0xf10] sm:$0xff]
        %v4497 = vld [vmem:[#allocation2 + $0xf20] sm:$0xff]
        %v4498 = vld [vmem:[#allocation2 + $0xf30] sm:$0xff]
        %v4499 = vld [vmem:[#allocation2 + $0xf40] sm:$0xff]
        %v4500 = vld [vmem:[#allocation2 + $0xf50] sm:$0xff]
        %v4517 = vunpack.c.l.b16 %v4485
        %v4518 = vunpack.c.h.b16 %v4485
        %v4519 = vunpack.c.l.b16 %v4486
        %v4520 = vunpack.c.h.b16 %v4486
        %v4521 = vunpack.c.l.b16 %v4487
        %v4522 = vunpack.c.h.b16 %v4487
        %v4523 = vunpack.c.l.b16 %v4488
        %v4524 = vunpack.c.h.b16 %v4488
        %v4525 = vunpack.c.l.b16 %v4489
        %v4526 = vunpack.c.h.b16 %v4489
        %v4527 = vunpack.c.l.b16 %v4490
        %v4528 = vunpack.c.h.b16 %v4490
        %v4529 = vunpack.c.l.b16 %v4491
        %v4530 = vunpack.c.h.b16 %v4491
        %v4531 = vunpack.c.l.b16 %v4492
        %v4532 = vunpack.c.h.b16 %v4492
        %v4533 = vunpack.c.l.b16 %v4493
        %v4534 = vunpack.c.h.b16 %v4493
        %v4535 = vunpack.c.l.b16 %v4494
        %v4536 = vunpack.c.h.b16 %v4494
        %v4537 = vunpack.c.l.b16 %v4495
        %v4538 = vunpack.c.h.b16 %v4495
        %v4539 = vunpack.c.l.b16 %v4496
        %v4540 = vunpack.c.h.b16 %v4496
        %v4541 = vunpack.c.l.b16 %v4497
        %v4542 = vunpack.c.h.b16 %v4497
        %v4543 = vunpack.c.l.b16 %v4498
        %v4544 = vunpack.c.h.b16 %v4498
        %v4545 = vunpack.c.l.b16 %v4499
        %v4546 = vunpack.c.h.b16 %v4499
        %v4547 = vunpack.c.l.b16 %v4500
        %v4548 = vunpack.c.h.b16 %v4500
        %v4549 = vpack.c.b16 %v4519, %v4517
        %v4550 = vpack.c.b16 %v4520, %v4518
        %v4551 = vpack.c.b16 %v4523, %v4521
        %v4552 = vpack.c.b16 %v4524, %v4522
        %v4553 = vpack.c.b16 %v4527, %v4525
        %v4554 = vpack.c.b16 %v4528, %v4526
        %v4555 = vpack.c.b16 %v4531, %v4529
        %v4556 = vpack.c.b16 %v4532, %v4530
        %v4557 = vpack.c.b16 %v4535, %v4533
        %v4558 = vpack.c.b16 %v4536, %v4534
        %v4559 = vpack.c.b16 %v4539, %v4537
        %v4560 = vpack.c.b16 %v4540, %v4538
        %v4561 = vpack.c.b16 %v4543, %v4541
        %v4562 = vpack.c.b16 %v4544, %v4542
        %v4563 = vpack.c.b16 %v4547, %v4545
        %v4564 = vpack.c.b16 %v4548, %v4546
        %4581 = vmatpush.bf16.msra.mxu0 %v4563
        %4582 = vmatpush.bf16.msra.mxu0 %v4561
        %4583 = vmatpush.bf16.msra.mxu0 %v4559
        %4584 = vmatpush.bf16.msra.mxu0 %v4557
        %4585 = vmatpush.bf16.msra.mxu0 %v4555
        %4586 = vmatpush.bf16.msra.mxu0 %v4553
        %4587 = vmatpush.bf16.msra.mxu0 %v4551
        %4588 = vmatpush.bf16.msra.mxu0 %v4549
        %4589 = vmatmul.bf16.gmra.mxu0 %v4484
        %v4590 = vpop.f32.mrf.mxu0
        %v4591 = vadd.f32 0.0, %v4590
        %v4592 = vpop.f32.mrf.mxu0
        %4593 = vdwg.mxu0
        %4594 = vmatpush.bf16.msra.mxu0 %v4564
        %4595 = vmatpush.bf16.msra.mxu0 %v4562
        %4596 = vmatpush.bf16.msra.mxu0 %v4560
        %4597 = vmatpush.bf16.msra.mxu0 %v4558
        %4598 = vmatpush.bf16.msra.mxu0 %v4556
        %4599 = vmatpush.bf16.msra.mxu0 %v4554
        %4600 = vmatpush.bf16.msra.mxu0 %v4552
        %4601 = vmatpush.bf16.msra.mxu0 %v4550
        %4602 = vmatmul.bf16.gmra.mxu0 %v4484
        %v4603 = vpop.f32.mrf.mxu0
        %v4604 = vadd.f32 0.0, %v4603
        %v4605 = vpop.f32.mrf.mxu0
        %4606 = vdwg.mxu0
        %v4623 = vunpack.c.l.b16 %v4451
        %v4624 = vunpack.c.h.b16 %v4451
        %v4625 = vunpack.c.l.b16 %v4452
        %v4626 = vunpack.c.h.b16 %v4452
        %v4627 = vunpack.c.l.b16 %v4453
        %v4628 = vunpack.c.h.b16 %v4453
        %v4629 = vunpack.c.l.b16 %v4454
        %v4630 = vunpack.c.h.b16 %v4454
        %v4631 = vunpack.c.l.b16 %v4455
        %v4632 = vunpack.c.h.b16 %v4455
        %v4633 = vunpack.c.l.b16 %v4456
        %v4634 = vunpack.c.h.b16 %v4456
        %v4635 = vunpack.c.l.b16 %v4457
        %v4636 = vunpack.c.h.b16 %v4457
        %v4637 = vunpack.c.l.b16 %v4458
        %v4638 = vunpack.c.h.b16 %v4458
        %v4639 = vunpack.c.l.b16 %v4459
        %v4640 = vunpack.c.h.b16 %v4459
        %v4641 = vunpack.c.l.b16 %v4460
        %v4642 = vunpack.c.h.b16 %v4460
        %v4643 = vunpack.c.l.b16 %v4461
        %v4644 = vunpack.c.h.b16 %v4461
        %v4645 = vunpack.c.l.b16 %v4462
        %v4646 = vunpack.c.h.b16 %v4462
        %v4647 = vunpack.c.l.b16 %v4463
        %v4648 = vunpack.c.h.b16 %v4463
        %v4649 = vunpack.c.l.b16 %v4464
        %v4650 = vunpack.c.h.b16 %v4464
        %v4651 = vunpack.c.l.b16 %v4465
        %v4652 = vunpack.c.h.b16 %v4465
        %v4653 = vunpack.c.l.b16 %v4466
        %v4654 = vunpack.c.h.b16 %v4466
        %v4655 = vpack.c.b16 %v4625, %v4623
        %v4656 = vpack.c.b16 %v4626, %v4624
        %v4657 = vpack.c.b16 %v4629, %v4627
        %v4658 = vpack.c.b16 %v4630, %v4628
        %v4659 = vpack.c.b16 %v4633, %v4631
        %v4660 = vpack.c.b16 %v4634, %v4632
        %v4661 = vpack.c.b16 %v4637, %v4635
        %v4662 = vpack.c.b16 %v4638, %v4636
        %v4663 = vpack.c.b16 %v4641, %v4639
        %v4664 = vpack.c.b16 %v4642, %v4640
        %v4665 = vpack.c.b16 %v4645, %v4643
        %v4666 = vpack.c.b16 %v4646, %v4644
        %v4667 = vpack.c.b16 %v4649, %v4647
        %v4668 = vpack.c.b16 %v4650, %v4648
        %v4669 = vpack.c.b16 %v4653, %v4651
        %v4670 = vpack.c.b16 %v4654, %v4652
        %4687 = vmatpush.bf16.msra.mxu0 %v4669
        %4688 = vmatpush.bf16.msra.mxu0 %v4667
        %4689 = vmatpush.bf16.msra.mxu0 %v4665
        %4690 = vmatpush.bf16.msra.mxu0 %v4663
        %4691 = vmatpush.bf16.msra.mxu0 %v4661
        %4692 = vmatpush.bf16.msra.mxu0 %v4659
        %4693 = vmatpush.bf16.msra.mxu0 %v4657
        %4694 = vmatpush.bf16.msra.mxu0 %v4655
        %4695 = vmatmul.bf16.gmra.mxu0 %v4450
        %v4696 = vpop.f32.mrf.mxu0
        %v4697 = vadd.f32 %v4591, %v4696
        %v4698 = vpop.f32.mrf.mxu0
        %4699 = vdwg.mxu0
        %4700 = vmatpush.bf16.msra.mxu0 %v4670
        %4701 = vmatpush.bf16.msra.mxu0 %v4668
        %4702 = vmatpush.bf16.msra.mxu0 %v4666
        %4703 = vmatpush.bf16.msra.mxu0 %v4664
        %4704 = vmatpush.bf16.msra.mxu0 %v4662
        %4705 = vmatpush.bf16.msra.mxu0 %v4660
        %4706 = vmatpush.bf16.msra.mxu0 %v4658
        %4707 = vmatpush.bf16.msra.mxu0 %v4656
        %4708 = vmatmul.bf16.gmra.mxu0 %v4450
        %v4709 = vpop.f32.mrf.mxu0
        %v4710 = vadd.f32 %v4604, %v4709
        %v4711 = vpop.f32.mrf.mxu0
        %4712 = vdwg.mxu0
        %v4713 = vld [vmem:[#allocation2 + $0xd20] sm:$0x1]
        %v4715 = vsel %vm3829, %v4713, 0
        %4717 = vmatpush.bf16.msra.mxu0 0
        %4718 = vmatpush.bf16.msra.mxu0 0
        %4719 = vmatpush.bf16.msra.mxu0 0
        %4720 = vmatpush.bf16.msra.mxu0 0
        %4721 = vmatpush.bf16.msra.mxu0 0
        %4722 = vmatpush.bf16.msra.mxu0 0
        %4723 = vmatpush.bf16.msra.mxu0 0
        %4724 = vmatpush.bf16.msra.mxu0 %v4435
        %4725 = vmatmul.bf16.gmra.mxu0 %v4715
        %v4726 = vpop.f32.mrf.mxu0
        %v4727 = vadd.f32 0.0, %v4726
        %v4728 = vpop.f32.mrf.mxu0
        %4729 = vdwg.mxu0
        %v4730 = vpack.c.bf16 %v4727, %v4727
        %v4731 = vld [vmem:[#allocation2 + $0xf60] sm:$0xff]
        %v4732 = vld [vmem:[#allocation2 + $0xf70] sm:$0xff]
        %v4733 = vld [vmem:[#allocation2 + $0xf80] sm:$0xff]
        %v4734 = vld [vmem:[#allocation2 + $0xf90] sm:$0xff]
        %v4735 = vld [vmem:[#allocation2 + $0xfa0] sm:$0xff]
        %v4736 = vld [vmem:[#allocation2 + $0xfb0] sm:$0xff]
        %v4737 = vld [vmem:[#allocation2 + $0xfc0] sm:$0xff]
        %v4738 = vld [vmem:[#allocation2 + $0xfd0] sm:$0xff]
        %v4739 = vld [vmem:[#allocation2 + $0xfe0] sm:$0xff]
        %v4740 = vld [vmem:[#allocation2 + $0xff0] sm:$0xff]
        %v4741 = vld [vmem:[#allocation2 + $0x1000] sm:$0xff]
        %v4742 = vld [vmem:[#allocation2 + $0x1010] sm:$0xff]
        %v4743 = vld [vmem:[#allocation2 + $0x1020] sm:$0xff]
        %v4744 = vld [vmem:[#allocation2 + $0x1030] sm:$0xff]
        %v4745 = vld [vmem:[#allocation2 + $0x1040] sm:$0xff]
        %v4746 = vld [vmem:[#allocation2 + $0x1050] sm:$0xff]
        %v4763 = vunpack.c.l.b16 %v4731
        %v4764 = vunpack.c.h.b16 %v4731
        %v4765 = vunpack.c.l.b16 %v4732
        %v4766 = vunpack.c.h.b16 %v4732
        %v4767 = vunpack.c.l.b16 %v4733
        %v4768 = vunpack.c.h.b16 %v4733
        %v4769 = vunpack.c.l.b16 %v4734
        %v4770 = vunpack.c.h.b16 %v4734
        %v4771 = vunpack.c.l.b16 %v4735
        %v4772 = vunpack.c.h.b16 %v4735
        %v4773 = vunpack.c.l.b16 %v4736
        %v4774 = vunpack.c.h.b16 %v4736
        %v4775 = vunpack.c.l.b16 %v4737
        %v4776 = vunpack.c.h.b16 %v4737
        %v4777 = vunpack.c.l.b16 %v4738
        %v4778 = vunpack.c.h.b16 %v4738
        %v4779 = vunpack.c.l.b16 %v4739
        %v4780 = vunpack.c.h.b16 %v4739
        %v4781 = vunpack.c.l.b16 %v4740
        %v4782 = vunpack.c.h.b16 %v4740
        %v4783 = vunpack.c.l.b16 %v4741
        %v4784 = vunpack.c.h.b16 %v4741
        %v4785 = vunpack.c.l.b16 %v4742
        %v4786 = vunpack.c.h.b16 %v4742
        %v4787 = vunpack.c.l.b16 %v4743
        %v4788 = vunpack.c.h.b16 %v4743
        %v4789 = vunpack.c.l.b16 %v4744
        %v4790 = vunpack.c.h.b16 %v4744
        %v4791 = vunpack.c.l.b16 %v4745
        %v4792 = vunpack.c.h.b16 %v4745
        %v4793 = vunpack.c.l.b16 %v4746
        %v4794 = vunpack.c.h.b16 %v4746
        %v4795 = vpack.c.b16 %v4765, %v4763
        %v4796 = vpack.c.b16 %v4766, %v4764
        %v4797 = vpack.c.b16 %v4769, %v4767
        %v4798 = vpack.c.b16 %v4770, %v4768
        %v4799 = vpack.c.b16 %v4773, %v4771
        %v4800 = vpack.c.b16 %v4774, %v4772
        %v4801 = vpack.c.b16 %v4777, %v4775
        %v4802 = vpack.c.b16 %v4778, %v4776
        %v4803 = vpack.c.b16 %v4781, %v4779
        %v4804 = vpack.c.b16 %v4782, %v4780
        %v4805 = vpack.c.b16 %v4785, %v4783
        %v4806 = vpack.c.b16 %v4786, %v4784
        %v4807 = vpack.c.b16 %v4789, %v4787
        %v4808 = vpack.c.b16 %v4790, %v4788
        %v4809 = vpack.c.b16 %v4793, %v4791
        %v4810 = vpack.c.b16 %v4794, %v4792
        %4827 = vmatpush.bf16.msra.mxu0 %v4809
        %4828 = vmatpush.bf16.msra.mxu0 %v4807
        %4829 = vmatpush.bf16.msra.mxu0 %v4805
        %4830 = vmatpush.bf16.msra.mxu0 %v4803
        %4831 = vmatpush.bf16.msra.mxu0 %v4801
        %4832 = vmatpush.bf16.msra.mxu0 %v4799
        %4833 = vmatpush.bf16.msra.mxu0 %v4797
        %4834 = vmatpush.bf16.msra.mxu0 %v4795
        %4835 = vmatmul.bf16.gmra.mxu0 %v4730
        %v4836 = vpop.f32.mrf.mxu0
        %v4837 = vadd.f32 0.0, %v4836
        %v4838 = vpop.f32.mrf.mxu0
        %4839 = vdwg.mxu0
        %4840 = vmatpush.bf16.msra.mxu0 %v4810
        %4841 = vmatpush.bf16.msra.mxu0 %v4808
        %4842 = vmatpush.bf16.msra.mxu0 %v4806
        %4843 = vmatpush.bf16.msra.mxu0 %v4804
        %4844 = vmatpush.bf16.msra.mxu0 %v4802
        %4845 = vmatpush.bf16.msra.mxu0 %v4800
        %4846 = vmatpush.bf16.msra.mxu0 %v4798
        %4847 = vmatpush.bf16.msra.mxu0 %v4796
        %4848 = vmatmul.bf16.gmra.mxu0 %v4730
        %v4849 = vpop.f32.mrf.mxu0
        %v4850 = vadd.f32 0.0, %v4849
        %v4851 = vpop.f32.mrf.mxu0
        %4852 = vdwg.mxu0
        %v4853 = vadd.f32 %v4697, %v4837
        %v4854 = vadd.f32 %v4710, %v4850
        %v4855 = vld [vmem:[#allocation2 + $0xd40] sm:$0x1]
        %v4857 = vsel %vm3829, %v4855, 0
        %4859 = vmatpush.bf16.msra.mxu0 0
        %4860 = vmatpush.bf16.msra.mxu0 0
        %4861 = vmatpush.bf16.msra.mxu0 0
        %4862 = vmatpush.bf16.msra.mxu0 0
        %4863 = vmatpush.bf16.msra.mxu0 0
        %4864 = vmatpush.bf16.msra.mxu0 0
        %4865 = vmatpush.bf16.msra.mxu0 0
        %4866 = vmatpush.bf16.msra.mxu0 %v4435
        %4867 = vmatmul.bf16.gmra.mxu0 %v4857
        %v4868 = vpop.f32.mrf.mxu0
        %v4869 = vadd.f32 0.0, %v4868
        %v4870 = vpop.f32.mrf.mxu0
        %4871 = vdwg.mxu0
        %v4872 = vpack.c.bf16 %v4869, %v4869
        %v4873 = vld [vmem:[#allocation2 + $0x1060] sm:$0xff]
        %v4874 = vld [vmem:[#allocation2 + $0x1070] sm:$0xff]
        %v4875 = vld [vmem:[#allocation2 + $0x1080] sm:$0xff]
        %v4876 = vld [vmem:[#allocation2 + $0x1090] sm:$0xff]
        %v4877 = vld [vmem:[#allocation2 + $0x10a0] sm:$0xff]
        %v4878 = vld [vmem:[#allocation2 + $0x10b0] sm:$0xff]
        %v4879 = vld [vmem:[#allocation2 + $0x10c0] sm:$0xff]
        %v4880 = vld [vmem:[#allocation2 + $0x10d0] sm:$0xff]
        %v4881 = vld [vmem:[#allocation2 + $0x10e0] sm:$0xff]
        %v4882 = vld [vmem:[#allocation2 + $0x10f0] sm:$0xff]
        %v4883 = vld [vmem:[#allocation2 + $0x1100] sm:$0xff]
        %v4884 = vld [vmem:[#allocation2 + $0x1110] sm:$0xff]
        %v4885 = vld [vmem:[#allocation2 + $0x1120] sm:$0xff]
        %v4886 = vld [vmem:[#allocation2 + $0x1130] sm:$0xff]
        %v4887 = vld [vmem:[#allocation2 + $0x1140] sm:$0xff]
        %v4888 = vld [vmem:[#allocation2 + $0x1150] sm:$0xff]
        %v4905 = vunpack.c.l.b16 %v4873
        %v4906 = vunpack.c.h.b16 %v4873
        %v4907 = vunpack.c.l.b16 %v4874
        %v4908 = vunpack.c.h.b16 %v4874
        %v4909 = vunpack.c.l.b16 %v4875
        %v4910 = vunpack.c.h.b16 %v4875
        %v4911 = vunpack.c.l.b16 %v4876
        %v4912 = vunpack.c.h.b16 %v4876
        %v4913 = vunpack.c.l.b16 %v4877
        %v4914 = vunpack.c.h.b16 %v4877
        %v4915 = vunpack.c.l.b16 %v4878
        %v4916 = vunpack.c.h.b16 %v4878
        %v4917 = vunpack.c.l.b16 %v4879
        %v4918 = vunpack.c.h.b16 %v4879
        %v4919 = vunpack.c.l.b16 %v4880
        %v4920 = vunpack.c.h.b16 %v4880
        %v4921 = vunpack.c.l.b16 %v4881
        %v4922 = vunpack.c.h.b16 %v4881
        %v4923 = vunpack.c.l.b16 %v4882
        %v4924 = vunpack.c.h.b16 %v4882
        %v4925 = vunpack.c.l.b16 %v4883
        %v4926 = vunpack.c.h.b16 %v4883
        %v4927 = vunpack.c.l.b16 %v4884
        %v4928 = vunpack.c.h.b16 %v4884
        %v4929 = vunpack.c.l.b16 %v4885
        %v4930 = vunpack.c.h.b16 %v4885
        %v4931 = vunpack.c.l.b16 %v4886
        %v4932 = vunpack.c.h.b16 %v4886
        %v4933 = vunpack.c.l.b16 %v4887
        %v4934 = vunpack.c.h.b16 %v4887
        %v4935 = vunpack.c.l.b16 %v4888
        %v4936 = vunpack.c.h.b16 %v4888
        %v4937 = vpack.c.b16 %v4907, %v4905
        %v4938 = vpack.c.b16 %v4908, %v4906
        %v4939 = vpack.c.b16 %v4911, %v4909
        %v4940 = vpack.c.b16 %v4912, %v4910
        %v4941 = vpack.c.b16 %v4915, %v4913
        %v4942 = vpack.c.b16 %v4916, %v4914
        %v4943 = vpack.c.b16 %v4919, %v4917
        %v4944 = vpack.c.b16 %v4920, %v4918
        %v4945 = vpack.c.b16 %v4923, %v4921
        %v4946 = vpack.c.b16 %v4924, %v4922
        %v4947 = vpack.c.b16 %v4927, %v4925
        %v4948 = vpack.c.b16 %v4928, %v4926
        %v4949 = vpack.c.b16 %v4931, %v4929
        %v4950 = vpack.c.b16 %v4932, %v4930
        %v4951 = vpack.c.b16 %v4935, %v4933
        %v4952 = vpack.c.b16 %v4936, %v4934
        %4969 = vmatpush.bf16.msra.mxu0 %v4951
        %4970 = vmatpush.bf16.msra.mxu0 %v4949
        %4971 = vmatpush.bf16.msra.mxu0 %v4947
        %4972 = vmatpush.bf16.msra.mxu0 %v4945
        %4973 = vmatpush.bf16.msra.mxu0 %v4943
        %4974 = vmatpush.bf16.msra.mxu0 %v4941
        %4975 = vmatpush.bf16.msra.mxu0 %v4939
        %4976 = vmatpush.bf16.msra.mxu0 %v4937
        %4977 = vmatmul.bf16.gmra.mxu0 %v4872
        %v4978 = vpop.f32.mrf.mxu0
        %v4979 = vadd.f32 0.0, %v4978
        %v4980 = vpop.f32.mrf.mxu0
        %4981 = vdwg.mxu0
        %4982 = vmatpush.bf16.msra.mxu0 %v4952
        %4983 = vmatpush.bf16.msra.mxu0 %v4950
        %4984 = vmatpush.bf16.msra.mxu0 %v4948
        %4985 = vmatpush.bf16.msra.mxu0 %v4946
        %4986 = vmatpush.bf16.msra.mxu0 %v4944
        %4987 = vmatpush.bf16.msra.mxu0 %v4942
        %4988 = vmatpush.bf16.msra.mxu0 %v4940
        %4989 = vmatpush.bf16.msra.mxu0 %v4938
        %4990 = vmatmul.bf16.gmra.mxu0 %v4872
        %v4991 = vpop.f32.mrf.mxu0
        %v4992 = vadd.f32 0.0, %v4991
        %v4993 = vpop.f32.mrf.mxu0
        %4994 = vdwg.mxu0
        %v4995 = vadd.f32 %v4853, %v4979
        %v4996 = vadd.f32 %v4854, %v4992
        %v4998 = vperm.slane %v4428, 0
        %v4999 = vperm.slane %v4428, 1
        %v5002 = vadd.f32 %v4995, %v4998
        %v5003 = vadd.f32 %v4996, %v4999
        %s5004 = scalar_lea.vmem [#allocation5], 166
        %v5005 = vld [vmem:[%s5004] ss:$8 sm:$0x3]
        %s5006 = scalar_lea.vmem [#allocation5], 167
        %v5007 = vld [vmem:[%s5006] ss:$8 sm:$0x3]
        %vm5008 = vcmask 1040384
        %v5009 = vsel %vm5008, %v5002, 0.0
        %v5010 = vsel %vm5008, %v5003, 0.0
        %v5011 = vadd.f32 %v5009, %v5010
        %5012 = vadd.xlane.f32.xlu0 %v5011
        %v5013 = vpop.xlane.xlu0 %5012
        %v5014 = vrcp.pop 256.0
        %v5015 = vmul.f32 256.0, %v5014
        %v5016 = vsub.f32 1.0, %v5015
        %v5017 = vmul.f32 %v5014, %v5016
        %v5018 = vadd.f32 %v5014, %v5017
        %vm5019 = vweird.f32 %v5014
        %v5020 = vsel %vm5019, %v5014, %v5018
        %v5021 = vmul.f32 %v5013, %v5020
        %v5022 = vsub.f32 %v5002, %v5021
        %v5023 = vsub.f32 %v5003, %v5021
        %v5024 = vmul.f32 %v5022, %v5022
        %v5025 = vmul.f32 %v5023, %v5023
        %v5026 = vsel %vm5008, %v5024, 0.0
        %v5027 = vsel %vm5008, %v5025, 0.0
        %v5028 = vadd.f32 %v5026, %v5027
        %5029 = vadd.xlane.f32.xlu0 %v5028
        %v5030 = vpop.xlane.xlu0 %5029
        %v5031 = vmul.f32 %v5030, %v5020
        %v5032 = vadd.f32 %v5031, 1e-05
        %v5033 = vrsqrt.pop %v5032
        %v5034 = vmul.f32 %v5033, %v5032
        %v5035 = vmul.f32 %v5034, %v5033
        %v5036 = vmul.f32 0.5, %v5035
        %v5037 = vsub.f32 1.5, %v5036
        %v5038 = vmul.f32 %v5033, %v5037
        %vm5039 = vweird.f32 %v5032
        %vm5040 = vweird.f32 %v5033
        %vm5041 = vmor %vm5039, %vm5040
        %v5042 = vsel %vm5041, %v5033, %v5038
        %v5043 = vmul.f32 %v5022, %v5042
        %v5044 = vmul.f32 %v5023, %v5042
        %v5046 = vperm.slane %v5005, 0
        %v5047 = vperm.slane %v5005, 1
        %v5050 = vmul.f32 %v5043, %v5046
        %v5051 = vmul.f32 %v5044, %v5047
        %v5053 = vperm.slane %v5007, 0
        %v5054 = vperm.slane %v5007, 1
        %v5057 = vadd.f32 %v5050, %v5053
        %v5058 = vadd.f32 %v5051, %v5054
        %v5059 = vpack.c.bf16 %v5057, %v5057
        %v5060 = vpack.c.bf16 %v5058, %v5058
        %v5061 = vld [vmem:[#allocation2 + $0x1160] sm:$0xff]
        %v5062 = vld [vmem:[#allocation2 + $0x1168] sm:$0xff]
        %v5063 = vld [vmem:[#allocation2 + $0x1170] sm:$0xff]
        %v5064 = vld [vmem:[#allocation2 + $0x1178] sm:$0xff]
        %v5065 = vld [vmem:[#allocation2 + $0x1180] sm:$0xff]
        %v5066 = vld [vmem:[#allocation2 + $0x1188] sm:$0xff]
        %v5067 = vld [vmem:[#allocation2 + $0x1190] sm:$0xff]
        %v5068 = vld [vmem:[#allocation2 + $0x1198] sm:$0xff]
        %v5069 = vld [vmem:[#allocation2 + $0x11a0] sm:$0xff]
        %v5070 = vld [vmem:[#allocation2 + $0x11a8] sm:$0xff]
        %v5071 = vld [vmem:[#allocation2 + $0x11b0] sm:$0xff]
        %v5072 = vld [vmem:[#allocation2 + $0x11b8] sm:$0xff]
        %v5073 = vld [vmem:[#allocation2 + $0x11c0] sm:$0xff]
        %v5074 = vld [vmem:[#allocation2 + $0x11c8] sm:$0xff]
        %v5075 = vld [vmem:[#allocation2 + $0x11d0] sm:$0xff]
        %v5076 = vld [vmem:[#allocation2 + $0x11d8] sm:$0xff]
        %v5077 = vld [vmem:[#allocation2 + $0x11e0] sm:$0xff]
        %v5078 = vld [vmem:[#allocation2 + $0x11e8] sm:$0xff]
        %v5079 = vld [vmem:[#allocation2 + $0x11f0] sm:$0xff]
        %v5080 = vld [vmem:[#allocation2 + $0x11f8] sm:$0xff]
        %v5081 = vld [vmem:[#allocation2 + $0x1200] sm:$0xff]
        %v5082 = vld [vmem:[#allocation2 + $0x1208] sm:$0xff]
        %v5083 = vld [vmem:[#allocation2 + $0x1210] sm:$0xff]
        %v5084 = vld [vmem:[#allocation2 + $0x1218] sm:$0xff]
        %v5085 = vld [vmem:[#allocation2 + $0x1220] sm:$0xff]
        %v5086 = vld [vmem:[#allocation2 + $0x1228] sm:$0xff]
        %v5087 = vld [vmem:[#allocation2 + $0x1230] sm:$0xff]
        %v5088 = vld [vmem:[#allocation2 + $0x1238] sm:$0xff]
        %v5089 = vld [vmem:[#allocation2 + $0x1240] sm:$0xff]
        %v5090 = vld [vmem:[#allocation2 + $0x1248] sm:$0xff]
        %v5091 = vld [vmem:[#allocation2 + $0x1250] sm:$0xff]
        %v5092 = vld [vmem:[#allocation2 + $0x1258] sm:$0xff]
        %v5093 = vld [vmem:[#allocation2 + $0x1260] sm:$0xff]
        %v5094 = vld [vmem:[#allocation2 + $0x1268] sm:$0xff]
        %v5095 = vld [vmem:[#allocation2 + $0x1270] sm:$0xff]
        %v5096 = vld [vmem:[#allocation2 + $0x1278] sm:$0xff]
        %v5097 = vld [vmem:[#allocation2 + $0x1280] sm:$0xff]
        %v5098 = vld [vmem:[#allocation2 + $0x1288] sm:$0xff]
        %v5099 = vld [vmem:[#allocation2 + $0x1290] sm:$0xff]
        %v5100 = vld [vmem:[#allocation2 + $0x1298] sm:$0xff]
        %v5101 = vld [vmem:[#allocation2 + $0x12a0] sm:$0xff]
        %v5102 = vld [vmem:[#allocation2 + $0x12a8] sm:$0xff]
        %v5103 = vld [vmem:[#allocation2 + $0x12b0] sm:$0xff]
        %v5104 = vld [vmem:[#allocation2 + $0x12b8] sm:$0xff]
        %v5105 = vld [vmem:[#allocation2 + $0x12c0] sm:$0xff]
        %v5106 = vld [vmem:[#allocation2 + $0x12c8] sm:$0xff]
        %v5107 = vld [vmem:[#allocation2 + $0x12d0] sm:$0xff]
        %v5108 = vld [vmem:[#allocation2 + $0x12d8] sm:$0xff]
        %v5109 = vld [vmem:[#allocation2 + $0x12e0] sm:$0xff]
        %v5110 = vld [vmem:[#allocation2 + $0x12e8] sm:$0xff]
        %v5111 = vld [vmem:[#allocation2 + $0x12f0] sm:$0xff]
        %v5112 = vld [vmem:[#allocation2 + $0x12f8] sm:$0xff]
        %v5113 = vld [vmem:[#allocation2 + $0x1300] sm:$0xff]
        %v5114 = vld [vmem:[#allocation2 + $0x1308] sm:$0xff]
        %v5115 = vld [vmem:[#allocation2 + $0x1310] sm:$0xff]
        %v5116 = vld [vmem:[#allocation2 + $0x1318] sm:$0xff]
        %v5117 = vld [vmem:[#allocation2 + $0x1320] sm:$0xff]
        %v5118 = vld [vmem:[#allocation2 + $0x1328] sm:$0xff]
        %v5119 = vld [vmem:[#allocation2 + $0x1330] sm:$0xff]
        %v5120 = vld [vmem:[#allocation2 + $0x1338] sm:$0xff]
        %v5121 = vld [vmem:[#allocation2 + $0x1340] sm:$0xff]
        %v5122 = vld [vmem:[#allocation2 + $0x1348] sm:$0xff]
        %v5123 = vld [vmem:[#allocation2 + $0x1350] sm:$0xff]
        %v5124 = vld [vmem:[#allocation2 + $0x1358] sm:$0xff]
        %s5125 = scalar_lea.vmem [#allocation5], 192
        %v5126 = vld [vmem:[%s5125] ss:$8 sm:$0xf]
        %v5191 = vunpack.c.l.b16 %v5061
        %v5192 = vunpack.c.h.b16 %v5061
        %v5193 = vunpack.c.l.b16 %v5062
        %v5194 = vunpack.c.h.b16 %v5062
        %v5195 = vunpack.c.l.b16 %v5063
        %v5196 = vunpack.c.h.b16 %v5063
        %v5197 = vunpack.c.l.b16 %v5064
        %v5198 = vunpack.c.h.b16 %v5064
        %v5199 = vunpack.c.l.b16 %v5065
        %v5200 = vunpack.c.h.b16 %v5065
        %v5201 = vunpack.c.l.b16 %v5066
        %v5202 = vunpack.c.h.b16 %v5066
        %v5203 = vunpack.c.l.b16 %v5067
        %v5204 = vunpack.c.h.b16 %v5067
        %v5205 = vunpack.c.l.b16 %v5068
        %v5206 = vunpack.c.h.b16 %v5068
        %v5207 = vunpack.c.l.b16 %v5069
        %v5208 = vunpack.c.h.b16 %v5069
        %v5209 = vunpack.c.l.b16 %v5070
        %v5210 = vunpack.c.h.b16 %v5070
        %v5211 = vunpack.c.l.b16 %v5071
        %v5212 = vunpack.c.h.b16 %v5071
        %v5213 = vunpack.c.l.b16 %v5072
        %v5214 = vunpack.c.h.b16 %v5072
        %v5215 = vunpack.c.l.b16 %v5073
        %v5216 = vunpack.c.h.b16 %v5073
        %v5217 = vunpack.c.l.b16 %v5074
        %v5218 = vunpack.c.h.b16 %v5074
        %v5219 = vunpack.c.l.b16 %v5075
        %v5220 = vunpack.c.h.b16 %v5075
        %v5221 = vunpack.c.l.b16 %v5076
        %v5222 = vunpack.c.h.b16 %v5076
        %v5223 = vunpack.c.l.b16 %v5077
        %v5224 = vunpack.c.h.b16 %v5077
        %v5225 = vunpack.c.l.b16 %v5078
        %v5226 = vunpack.c.h.b16 %v5078
        %v5227 = vunpack.c.l.b16 %v5079
        %v5228 = vunpack.c.h.b16 %v5079
        %v5229 = vunpack.c.l.b16 %v5080
        %v5230 = vunpack.c.h.b16 %v5080
        %v5231 = vunpack.c.l.b16 %v5081
        %v5232 = vunpack.c.h.b16 %v5081
        %v5233 = vunpack.c.l.b16 %v5082
        %v5234 = vunpack.c.h.b16 %v5082
        %v5235 = vunpack.c.l.b16 %v5083
        %v5236 = vunpack.c.h.b16 %v5083
        %v5237 = vunpack.c.l.b16 %v5084
        %v5238 = vunpack.c.h.b16 %v5084
        %v5239 = vunpack.c.l.b16 %v5085
        %v5240 = vunpack.c.h.b16 %v5085
        %v5241 = vunpack.c.l.b16 %v5086
        %v5242 = vunpack.c.h.b16 %v5086
        %v5243 = vunpack.c.l.b16 %v5087
        %v5244 = vunpack.c.h.b16 %v5087
        %v5245 = vunpack.c.l.b16 %v5088
        %v5246 = vunpack.c.h.b16 %v5088
        %v5247 = vunpack.c.l.b16 %v5089
        %v5248 = vunpack.c.h.b16 %v5089
        %v5249 = vunpack.c.l.b16 %v5090
        %v5250 = vunpack.c.h.b16 %v5090
        %v5251 = vunpack.c.l.b16 %v5091
        %v5252 = vunpack.c.h.b16 %v5091
        %v5253 = vunpack.c.l.b16 %v5092
        %v5254 = vunpack.c.h.b16 %v5092
        %v5255 = vunpack.c.l.b16 %v5093
        %v5256 = vunpack.c.h.b16 %v5093
        %v5257 = vunpack.c.l.b16 %v5094
        %v5258 = vunpack.c.h.b16 %v5094
        %v5259 = vunpack.c.l.b16 %v5095
        %v5260 = vunpack.c.h.b16 %v5095
        %v5261 = vunpack.c.l.b16 %v5096
        %v5262 = vunpack.c.h.b16 %v5096
        %v5263 = vunpack.c.l.b16 %v5097
        %v5264 = vunpack.c.h.b16 %v5097
        %v5265 = vunpack.c.l.b16 %v5098
        %v5266 = vunpack.c.h.b16 %v5098
        %v5267 = vunpack.c.l.b16 %v5099
        %v5268 = vunpack.c.h.b16 %v5099
        %v5269 = vunpack.c.l.b16 %v5100
        %v5270 = vunpack.c.h.b16 %v5100
        %v5271 = vunpack.c.l.b16 %v5101
        %v5272 = vunpack.c.h.b16 %v5101
        %v5273 = vunpack.c.l.b16 %v5102
        %v5274 = vunpack.c.h.b16 %v5102
        %v5275 = vunpack.c.l.b16 %v5103
        %v5276 = vunpack.c.h.b16 %v5103
        %v5277 = vunpack.c.l.b16 %v5104
        %v5278 = vunpack.c.h.b16 %v5104
        %v5279 = vunpack.c.l.b16 %v5105
        %v5280 = vunpack.c.h.b16 %v5105
        %v5281 = vunpack.c.l.b16 %v5106
        %v5282 = vunpack.c.h.b16 %v5106
        %v5283 = vunpack.c.l.b16 %v5107
        %v5284 = vunpack.c.h.b16 %v5107
        %v5285 = vunpack.c.l.b16 %v5108
        %v5286 = vunpack.c.h.b16 %v5108
        %v5287 = vunpack.c.l.b16 %v5109
        %v5288 = vunpack.c.h.b16 %v5109
        %v5289 = vunpack.c.l.b16 %v5110
        %v5290 = vunpack.c.h.b16 %v5110
        %v5291 = vunpack.c.l.b16 %v5111
        %v5292 = vunpack.c.h.b16 %v5111
        %v5293 = vunpack.c.l.b16 %v5112
        %v5294 = vunpack.c.h.b16 %v5112
        %v5295 = vunpack.c.l.b16 %v5113
        %v5296 = vunpack.c.h.b16 %v5113
        %v5297 = vunpack.c.l.b16 %v5114
        %v5298 = vunpack.c.h.b16 %v5114
        %v5299 = vunpack.c.l.b16 %v5115
        %v5300 = vunpack.c.h.b16 %v5115
        %v5301 = vunpack.c.l.b16 %v5116
        %v5302 = vunpack.c.h.b16 %v5116
        %v5303 = vunpack.c.l.b16 %v5117
        %v5304 = vunpack.c.h.b16 %v5117
        %v5305 = vunpack.c.l.b16 %v5118
        %v5306 = vunpack.c.h.b16 %v5118
        %v5307 = vunpack.c.l.b16 %v5119
        %v5308 = vunpack.c.h.b16 %v5119
        %v5309 = vunpack.c.l.b16 %v5120
        %v5310 = vunpack.c.h.b16 %v5120
        %v5311 = vunpack.c.l.b16 %v5121
        %v5312 = vunpack.c.h.b16 %v5121
        %v5313 = vunpack.c.l.b16 %v5122
        %v5314 = vunpack.c.h.b16 %v5122
        %v5315 = vunpack.c.l.b16 %v5123
        %v5316 = vunpack.c.h.b16 %v5123
        %v5317 = vunpack.c.l.b16 %v5124
        %v5318 = vunpack.c.h.b16 %v5124
        %v5319 = vpack.c.b16 %v5195, %v5191
        %v5320 = vpack.c.b16 %v5196, %v5192
        %v5321 = vpack.c.b16 %v5197, %v5193
        %v5322 = vpack.c.b16 %v5198, %v5194
        %v5323 = vpack.c.b16 %v5203, %v5199
        %v5324 = vpack.c.b16 %v5204, %v5200
        %v5325 = vpack.c.b16 %v5205, %v5201
        %v5326 = vpack.c.b16 %v5206, %v5202
        %v5327 = vpack.c.b16 %v5211, %v5207
        %v5328 = vpack.c.b16 %v5212, %v5208
        %v5329 = vpack.c.b16 %v5213, %v5209
        %v5330 = vpack.c.b16 %v5214, %v5210
        %v5331 = vpack.c.b16 %v5219, %v5215
        %v5332 = vpack.c.b16 %v5220, %v5216
        %v5333 = vpack.c.b16 %v5221, %v5217
        %v5334 = vpack.c.b16 %v5222, %v5218
        %v5335 = vpack.c.b16 %v5227, %v5223
        %v5336 = vpack.c.b16 %v5228, %v5224
        %v5337 = vpack.c.b16 %v5229, %v5225
        %v5338 = vpack.c.b16 %v5230, %v5226
        %v5339 = vpack.c.b16 %v5235, %v5231
        %v5340 = vpack.c.b16 %v5236, %v5232
        %v5341 = vpack.c.b16 %v5237, %v5233
        %v5342 = vpack.c.b16 %v5238, %v5234
        %v5343 = vpack.c.b16 %v5243, %v5239
        %v5344 = vpack.c.b16 %v5244, %v5240
        %v5345 = vpack.c.b16 %v5245, %v5241
        %v5346 = vpack.c.b16 %v5246, %v5242
        %v5347 = vpack.c.b16 %v5251, %v5247
        %v5348 = vpack.c.b16 %v5252, %v5248
        %v5349 = vpack.c.b16 %v5253, %v5249
        %v5350 = vpack.c.b16 %v5254, %v5250
        %v5351 = vpack.c.b16 %v5259, %v5255
        %v5352 = vpack.c.b16 %v5260, %v5256
        %v5353 = vpack.c.b16 %v5261, %v5257
        %v5354 = vpack.c.b16 %v5262, %v5258
        %v5355 = vpack.c.b16 %v5267, %v5263
        %v5356 = vpack.c.b16 %v5268, %v5264
        %v5357 = vpack.c.b16 %v5269, %v5265
        %v5358 = vpack.c.b16 %v5270, %v5266
        %v5359 = vpack.c.b16 %v5275, %v5271
        %v5360 = vpack.c.b16 %v5276, %v5272
        %v5361 = vpack.c.b16 %v5277, %v5273
        %v5362 = vpack.c.b16 %v5278, %v5274
        %v5363 = vpack.c.b16 %v5283, %v5279
        %v5364 = vpack.c.b16 %v5284, %v5280
        %v5365 = vpack.c.b16 %v5285, %v5281
        %v5366 = vpack.c.b16 %v5286, %v5282
        %v5367 = vpack.c.b16 %v5291, %v5287
        %v5368 = vpack.c.b16 %v5292, %v5288
        %v5369 = vpack.c.b16 %v5293, %v5289
        %v5370 = vpack.c.b16 %v5294, %v5290
        %v5371 = vpack.c.b16 %v5299, %v5295
        %v5372 = vpack.c.b16 %v5300, %v5296
        %v5373 = vpack.c.b16 %v5301, %v5297
        %v5374 = vpack.c.b16 %v5302, %v5298
        %v5375 = vpack.c.b16 %v5307, %v5303
        %v5376 = vpack.c.b16 %v5308, %v5304
        %v5377 = vpack.c.b16 %v5309, %v5305
        %v5378 = vpack.c.b16 %v5310, %v5306
        %v5379 = vpack.c.b16 %v5315, %v5311
        %v5380 = vpack.c.b16 %v5316, %v5312
        %v5381 = vpack.c.b16 %v5317, %v5313
        %v5382 = vpack.c.b16 %v5318, %v5314
        %v5448 = vperm.slane %v5126, 0
        %v5449 = vperm.slane %v5126, 1
        %v5450 = vperm.slane %v5126, 2
        %v5451 = vperm.slane %v5126, 3
        %5456 = vmatpush.bf16.msra.mxu0 %v5347
        %5457 = vmatpush.bf16.msra.mxu0 %v5343
        %5458 = vmatpush.bf16.msra.mxu0 %v5339
        %5459 = vmatpush.bf16.msra.mxu0 %v5335
        %5460 = vmatpush.bf16.msra.mxu0 %v5331
        %5461 = vmatpush.bf16.msra.mxu0 %v5327
        %5462 = vmatpush.bf16.msra.mxu0 %v5323
        %5463 = vmatpush.bf16.msra.mxu0 %v5319
        %5464 = vmatmul.bf16.gmra.mxu0 %v5059
        %v5465 = vpop.f32.mrf.mxu0
        %v5466 = vadd.f32 %v5448, %v5465
        %v5467 = vpop.f32.mrf.mxu0
        %5468 = vdwg.mxu0
        %5469 = vmatpush.bf16.msra.mxu0 %v5379
        %5470 = vmatpush.bf16.msra.mxu0 %v5375
        %5471 = vmatpush.bf16.msra.mxu0 %v5371
        %5472 = vmatpush.bf16.msra.mxu0 %v5367
        %5473 = vmatpush.bf16.msra.mxu0 %v5363
        %5474 = vmatpush.bf16.msra.mxu0 %v5359
        %5475 = vmatpush.bf16.msra.mxu0 %v5355
        %5476 = vmatpush.bf16.msra.mxu0 %v5351
        %5477 = vmatmul.bf16.gmra.mxu0 %v5060
        %v5478 = vpop.f32.mrf.mxu0
        %v5479 = vadd.f32 %v5466, %v5478
        %v5480 = vpop.f32.mrf.mxu0
        %5481 = vdwg.mxu0
        %5482 = vmatpush.bf16.msra.mxu0 %v5348
        %5483 = vmatpush.bf16.msra.mxu0 %v5344
        %5484 = vmatpush.bf16.msra.mxu0 %v5340
        %5485 = vmatpush.bf16.msra.mxu0 %v5336
        %5486 = vmatpush.bf16.msra.mxu0 %v5332
        %5487 = vmatpush.bf16.msra.mxu0 %v5328
        %5488 = vmatpush.bf16.msra.mxu0 %v5324
        %5489 = vmatpush.bf16.msra.mxu0 %v5320
        %5490 = vmatmul.bf16.gmra.mxu0 %v5059
        %v5491 = vpop.f32.mrf.mxu0
        %v5492 = vadd.f32 %v5449, %v5491
        %v5493 = vpop.f32.mrf.mxu0
        %5494 = vdwg.mxu0
        %5495 = vmatpush.bf16.msra.mxu0 %v5380
        %5496 = vmatpush.bf16.msra.mxu0 %v5376
        %5497 = vmatpush.bf16.msra.mxu0 %v5372
        %5498 = vmatpush.bf16.msra.mxu0 %v5368
        %5499 = vmatpush.bf16.msra.mxu0 %v5364
        %5500 = vmatpush.bf16.msra.mxu0 %v5360
        %5501 = vmatpush.bf16.msra.mxu0 %v5356
        %5502 = vmatpush.bf16.msra.mxu0 %v5352
        %5503 = vmatmul.bf16.gmra.mxu0 %v5060
        %v5504 = vpop.f32.mrf.mxu0
        %v5505 = vadd.f32 %v5492, %v5504
        %v5506 = vpop.f32.mrf.mxu0
        %5507 = vdwg.mxu0
        %5508 = vmatpush.bf16.msra.mxu0 %v5349
        %5509 = vmatpush.bf16.msra.mxu0 %v5345
        %5510 = vmatpush.bf16.msra.mxu0 %v5341
        %5511 = vmatpush.bf16.msra.mxu0 %v5337
        %5512 = vmatpush.bf16.msra.mxu0 %v5333
        %5513 = vmatpush.bf16.msra.mxu0 %v5329
        %5514 = vmatpush.bf16.msra.mxu0 %v5325
        %5515 = vmatpush.bf16.msra.mxu0 %v5321
        %5516 = vmatmul.bf16.gmra.mxu0 %v5059
        %v5517 = vpop.f32.mrf.mxu0
        %v5518 = vadd.f32 %v5450, %v5517
        %v5519 = vpop.f32.mrf.mxu0
        %5520 = vdwg.mxu0
        %5521 = vmatpush.bf16.msra.mxu0 %v5381
        %5522 = vmatpush.bf16.msra.mxu0 %v5377
        %5523 = vmatpush.bf16.msra.mxu0 %v5373
        %5524 = vmatpush.bf16.msra.mxu0 %v5369
        %5525 = vmatpush.bf16.msra.mxu0 %v5365
        %5526 = vmatpush.bf16.msra.mxu0 %v5361
        %5527 = vmatpush.bf16.msra.mxu0 %v5357
        %5528 = vmatpush.bf16.msra.mxu0 %v5353
        %5529 = vmatmul.bf16.gmra.mxu0 %v5060
        %v5530 = vpop.f32.mrf.mxu0
        %v5531 = vadd.f32 %v5518, %v5530
        %v5532 = vpop.f32.mrf.mxu0
        %5533 = vdwg.mxu0
        %5534 = vmatpush.bf16.msra.mxu0 %v5350
        %5535 = vmatpush.bf16.msra.mxu0 %v5346
        %5536 = vmatpush.bf16.msra.mxu0 %v5342
        %5537 = vmatpush.bf16.msra.mxu0 %v5338
        %5538 = vmatpush.bf16.msra.mxu0 %v5334
        %5539 = vmatpush.bf16.msra.mxu0 %v5330
        %5540 = vmatpush.bf16.msra.mxu0 %v5326
        %5541 = vmatpush.bf16.msra.mxu0 %v5322
        %5542 = vmatmul.bf16.gmra.mxu0 %v5059
        %v5543 = vpop.f32.mrf.mxu0
        %v5544 = vadd.f32 %v5451, %v5543
        %v5545 = vpop.f32.mrf.mxu0
        %5546 = vdwg.mxu0
        %5547 = vmatpush.bf16.msra.mxu0 %v5382
        %5548 = vmatpush.bf16.msra.mxu0 %v5378
        %5549 = vmatpush.bf16.msra.mxu0 %v5374
        %5550 = vmatpush.bf16.msra.mxu0 %v5370
        %5551 = vmatpush.bf16.msra.mxu0 %v5366
        %5552 = vmatpush.bf16.msra.mxu0 %v5362
        %5553 = vmatpush.bf16.msra.mxu0 %v5358
        %5554 = vmatpush.bf16.msra.mxu0 %v5354
        %5555 = vmatmul.bf16.gmra.mxu0 %v5060
        %v5556 = vpop.f32.mrf.mxu0
        %v5557 = vadd.f32 %v5544, %v5556
        %v5558 = vpop.f32.mrf.mxu0
        %5559 = vdwg.mxu0
        %v5560 = vpack.c.bf16 %v5531, %v5531
        %v5561 = vpack.c.bf16 %v5557, %v5557
        %v5562 = vunpack.c.l.bf16 %v5560
        %v5563 = vunpack.c.l.bf16 %v5561
        %v5564 = vmul.f32 %v5562, %v5563
        %v5565 = vsel %vm5008, %v5564, 0.0
        %5566 = vadd.xlane.f32.xlu0 %v5565
        %v5567 = vpop.xlane.xlu0 %5566
        %v5568 = vsub.f32 %v5567, %v5567
        %v5569 = vmul.f32 %v5568, 1.442695
        %v5570 = vpow.pop %v5569
        %v5571 = vadd.f32 %v5570, 0.0
        %v5572 = vrcp.pop %v5571
        %v5573 = vmul.f32 %v5571, %v5572
        %v5574 = vsub.f32 1.0, %v5573
        %v5575 = vmul.f32 %v5572, %v5574
        %v5576 = vadd.f32 %v5572, %v5575
        %vm5577 = vweird.f32 %v5571
        %vm5578 = vweird.f32 %v5572
        %vm5579 = vmor %vm5577, %vm5578
        %v5580 = vsel %vm5579, %v5572, %v5576
        %v5581 = vand.u32 2147483647, %v5571
        %vm5582 = vcmp.eq.f32.partialorder %v5581, 8.507059e+37
        %v5583 = vand.u32 %v5571, 2147483648
        %v5584 = vor.u32 1.1754944e-38, %v5583
        %v5585 = vsel %vm5582, %v5584, %v5580
        %v5586 = vmul.f32 %v5570, %v5585
        %v5587 = vpack.c.bf16 %v5586, %v5586
        %v5588 = vpack.c.bf16 %v5479, %v5479
        %v5589 = vpack.c.bf16 %v5505, %v5505
        %vm5590 = vcmask 7168
        %v5592 = vsel %vm5590, %v5587, 0
        %v5594 = vsel 0, 4294967295, 65535
        %v5595 = vsel %vm5008, %v5594, 0
        %v5597 = vand.u32 %v5588, %v5595
        %v5600 = vand.u32 %v5589, %v5595
        %5602 = vmatpush.bf16.msra.mxu0 0
        %5603 = vmatpush.bf16.msra.mxu0 0
        %5604 = vmatpush.bf16.msra.mxu0 0
        %5605 = vmatpush.bf16.msra.mxu0 0
        %5606 = vmatpush.bf16.msra.mxu0 0
        %5607 = vmatpush.bf16.msra.mxu0 0
        %5608 = vmatpush.bf16.msra.mxu0 0
        %5609 = vmatpush.bf16.msra.mxu0 %v5597
        %5610 = vmatmul.bf16.gmra.mxu0 %v5592
        %v5611 = vpop.f32.mrf.mxu0
        %v5612 = vadd.f32 %v5057, %v5611
        %v5613 = vpop.f32.mrf.mxu0
        %5614 = vdwg.mxu0
        %5615 = vmatpush.bf16.msra.mxu0 0
        %5616 = vmatpush.bf16.msra.mxu0 0
        %5617 = vmatpush.bf16.msra.mxu0 0
        %5618 = vmatpush.bf16.msra.mxu0 0
        %5619 = vmatpush.bf16.msra.mxu0 0
        %5620 = vmatpush.bf16.msra.mxu0 0
        %5621 = vmatpush.bf16.msra.mxu0 0
        %5622 = vmatpush.bf16.msra.mxu0 %v5600
        %5623 = vmatmul.bf16.gmra.mxu0 %v5592
        %v5624 = vpop.f32.mrf.mxu0
        %v5625 = vadd.f32 %v5058, %v5624
        %v5626 = vpop.f32.mrf.mxu0
        %5627 = vdwg.mxu0
        %s5628 = scalar_lea.vmem [#allocation5], 193
        %v5629 = vld [vmem:[%s5628] ss:$8 sm:$0x3]
        %s5630 = scalar_lea.vmem [#allocation5], 194
        %v5631 = vld [vmem:[%s5630] ss:$8 sm:$0x3]
        %v5632 = vsel %vm5008, %v5612, 0.0
        %v5633 = vsel %vm5008, %v5625, 0.0
        %v5634 = vadd.f32 %v5632, %v5633
        %5635 = vadd.xlane.f32.xlu0 %v5634
        %v5636 = vpop.xlane.xlu0 %5635
        %v5637 = vmul.f32 %v5636, %v5020
        %v5638 = vsub.f32 %v5612, %v5637
        %v5639 = vsub.f32 %v5625, %v5637
        %v5640 = vmul.f32 %v5638, %v5638
        %v5641 = vmul.f32 %v5639, %v5639
        %v5642 = vsel %vm5008, %v5640, 0.0
        %v5643 = vsel %vm5008, %v5641, 0.0
        %v5644 = vadd.f32 %v5642, %v5643
        %5645 = vadd.xlane.f32.xlu0 %v5644
        %v5646 = vpop.xlane.xlu0 %5645
        %v5647 = vmul.f32 %v5646, %v5020
        %v5648 = vadd.f32 %v5647, 1e-05
        %v5649 = vrsqrt.pop %v5648
        %v5650 = vmul.f32 %v5649, %v5648
        %v5651 = vmul.f32 %v5650, %v5649
        %v5652 = vmul.f32 0.5, %v5651
        %v5653 = vsub.f32 1.5, %v5652
        %v5654 = vmul.f32 %v5649, %v5653
        %vm5655 = vweird.f32 %v5648
        %vm5656 = vweird.f32 %v5649
        %vm5657 = vmor %vm5655, %vm5656
        %v5658 = vsel %vm5657, %v5649, %v5654
        %v5659 = vmul.f32 %v5638, %v5658
        %v5660 = vmul.f32 %v5639, %v5658
        %v5662 = vperm.slane %v5629, 0
        %v5663 = vperm.slane %v5629, 1
        %v5666 = vmul.f32 %v5659, %v5662
        %v5667 = vmul.f32 %v5660, %v5663
        %v5669 = vperm.slane %v5631, 0
        %v5670 = vperm.slane %v5631, 1
        %v5673 = vadd.f32 %v5666, %v5669
        %v5674 = vadd.f32 %v5667, %v5670
        %v5675 = vpack.c.bf16 %v5673, %v5673
        %v5676 = vpack.c.bf16 %v5674, %v5674
        %v5677 = vld [vmem:[#allocation2 + $0x1360] sm:$0xf]
        %v5678 = vld [vmem:[#allocation2 + $0x1370] sm:$0xf]
        %v5679 = vld [vmem:[#allocation2 + $0x1380] sm:$0xf]
        %v5680 = vld [vmem:[#allocation2 + $0x1390] sm:$0xf]
        %v5681 = vld [vmem:[#allocation2 + $0x13a0] sm:$0xf]
        %v5682 = vld [vmem:[#allocation2 + $0x13b0] sm:$0xf]
        %v5683 = vld [vmem:[#allocation2 + $0x13c0] sm:$0xf]
        %v5684 = vld [vmem:[#allocation2 + $0x13d0] sm:$0xf]
        %v5685 = vld [vmem:[#allocation2 + $0x13e0] sm:$0xf]
        %v5686 = vld [vmem:[#allocation2 + $0x13f0] sm:$0xf]
        %v5687 = vld [vmem:[#allocation2 + $0x1400] sm:$0xf]
        %v5688 = vld [vmem:[#allocation2 + $0x1410] sm:$0xf]
        %v5689 = vld [vmem:[#allocation2 + $0x1420] sm:$0xf]
        %v5690 = vld [vmem:[#allocation2 + $0x1430] sm:$0xf]
        %v5691 = vld [vmem:[#allocation2 + $0x1440] sm:$0xf]
        %v5692 = vld [vmem:[#allocation2 + $0x1450] sm:$0xf]
        %v5693 = vld [vmem:[#allocation2 + $0x1460] sm:$0xf]
        %v5694 = vld [vmem:[#allocation2 + $0x1470] sm:$0xf]
        %v5695 = vld [vmem:[#allocation2 + $0x1480] sm:$0xf]
        %v5696 = vld [vmem:[#allocation2 + $0x1490] sm:$0xf]
        %v5697 = vld [vmem:[#allocation2 + $0x14a0] sm:$0xf]
        %v5698 = vld [vmem:[#allocation2 + $0x14b0] sm:$0xf]
        %v5699 = vld [vmem:[#allocation2 + $0x14c0] sm:$0xf]
        %v5700 = vld [vmem:[#allocation2 + $0x14d0] sm:$0xf]
        %v5701 = vld [vmem:[#allocation2 + $0x14e0] sm:$0xf]
        %v5702 = vld [vmem:[#allocation2 + $0x14f0] sm:$0xf]
        %v5703 = vld [vmem:[#allocation2 + $0x1500] sm:$0xf]
        %v5704 = vld [vmem:[#allocation2 + $0x1510] sm:$0xf]
        %v5705 = vld [vmem:[#allocation2 + $0x1520] sm:$0xf]
        %v5706 = vld [vmem:[#allocation2 + $0x1530] sm:$0xf]
        %v5707 = vld [vmem:[#allocation2 + $0x1540] sm:$0xf]
        %v5708 = vld [vmem:[#allocation2 + $0x1550] sm:$0xf]
        %v5709 = vld [vmem:[#allocation5 + $0xc3] ss:$0 sm:$0xff]
        %v5742 = vunpack.c.l.b16 %v5677
        %v5743 = vunpack.c.l.b16 %v5678
        %v5744 = vunpack.c.l.b16 %v5679
        %v5745 = vunpack.c.l.b16 %v5680
        %v5746 = vunpack.c.l.b16 %v5681
        %v5747 = vunpack.c.l.b16 %v5682
        %v5748 = vunpack.c.l.b16 %v5683
        %v5749 = vunpack.c.l.b16 %v5684
        %v5750 = vunpack.c.l.b16 %v5685
        %v5751 = vunpack.c.l.b16 %v5686
        %v5752 = vunpack.c.l.b16 %v5687
        %v5753 = vunpack.c.l.b16 %v5688
        %v5754 = vunpack.c.l.b16 %v5689
        %v5755 = vunpack.c.l.b16 %v5690
        %v5756 = vunpack.c.l.b16 %v5691
        %v5757 = vunpack.c.l.b16 %v5692
        %v5758 = vunpack.c.l.b16 %v5693
        %v5759 = vunpack.c.l.b16 %v5694
        %v5760 = vunpack.c.l.b16 %v5695
        %v5761 = vunpack.c.l.b16 %v5696
        %v5762 = vunpack.c.l.b16 %v5697
        %v5763 = vunpack.c.l.b16 %v5698
        %v5764 = vunpack.c.l.b16 %v5699
        %v5765 = vunpack.c.l.b16 %v5700
        %v5766 = vunpack.c.l.b16 %v5701
        %v5767 = vunpack.c.l.b16 %v5702
        %v5768 = vunpack.c.l.b16 %v5703
        %v5769 = vunpack.c.l.b16 %v5704
        %v5770 = vunpack.c.l.b16 %v5705
        %v5771 = vunpack.c.l.b16 %v5706
        %v5772 = vunpack.c.l.b16 %v5707
        %v5773 = vunpack.c.l.b16 %v5708
        %v5774 = vpack.c.b16 %v5743, %v5742
        %v5775 = vpack.c.b16 %v5745, %v5744
        %v5776 = vpack.c.b16 %v5747, %v5746
        %v5777 = vpack.c.b16 %v5749, %v5748
        %v5778 = vpack.c.b16 %v5751, %v5750
        %v5779 = vpack.c.b16 %v5753, %v5752
        %v5780 = vpack.c.b16 %v5755, %v5754
        %v5781 = vpack.c.b16 %v5757, %v5756
        %v5782 = vpack.c.b16 %v5759, %v5758
        %v5783 = vpack.c.b16 %v5761, %v5760
        %v5784 = vpack.c.b16 %v5763, %v5762
        %v5785 = vpack.c.b16 %v5765, %v5764
        %v5786 = vpack.c.b16 %v5767, %v5766
        %v5787 = vpack.c.b16 %v5769, %v5768
        %v5788 = vpack.c.b16 %v5771, %v5770
        %v5789 = vpack.c.b16 %v5773, %v5772
        %5806 = vmatpush.bf16.msra.mxu0 %v5781
        %5807 = vmatpush.bf16.msra.mxu0 %v5780
        %5808 = vmatpush.bf16.msra.mxu0 %v5779
        %5809 = vmatpush.bf16.msra.mxu0 %v5778
        %5810 = vmatpush.bf16.msra.mxu0 %v5777
        %5811 = vmatpush.bf16.msra.mxu0 %v5776
        %5812 = vmatpush.bf16.msra.mxu0 %v5775
        %5813 = vmatpush.bf16.msra.mxu0 %v5774
        %5814 = vmatmul.bf16.gmra.mxu0 %v5675
        %v5815 = vpop.f32.mrf.mxu0
        %v5816 = vadd.f32 %v5709, %v5815
        %v5817 = vpop.f32.mrf.mxu0
        %5818 = vdwg.mxu0
        %5819 = vmatpush.bf16.msra.mxu0 %v5789
        %5820 = vmatpush.bf16.msra.mxu0 %v5788
        %5821 = vmatpush.bf16.msra.mxu0 %v5787
        %5822 = vmatpush.bf16.msra.mxu0 %v5786
        %5823 = vmatpush.bf16.msra.mxu0 %v5785
        %5824 = vmatpush.bf16.msra.mxu0 %v5784
        %5825 = vmatpush.bf16.msra.mxu0 %v5783
        %5826 = vmatpush.bf16.msra.mxu0 %v5782
        %5827 = vmatmul.bf16.gmra.mxu0 %v5676
        %v5828 = vpop.f32.mrf.mxu0
        %v5829 = vadd.f32 %v5816, %v5828
        %v5830 = vpop.f32.mrf.mxu0
        %5831 = vdwg.mxu0
        %v5832 = vmax.f32 %v5829, 0.0
        %v5833 = vpack.c.bf16 %v5832, %v5832
        %v5834 = vld [vmem:[#allocation2 + $0x1560] sm:$0xff]
        %v5835 = vld [vmem:[#allocation2 + $0x1570] sm:$0xff]
        %v5836 = vld [vmem:[#allocation2 + $0x1580] sm:$0xff]
        %v5837 = vld [vmem:[#allocation2 + $0x1590] sm:$0xff]
        %s5838 = scalar_lea.vmem [#allocation5], 196
        %v5839 = vld [vmem:[%s5838] ss:$8 sm:$0x3]
        %v5844 = vunpack.c.l.b16 %v5834
        %v5845 = vunpack.c.h.b16 %v5834
        %v5846 = vunpack.c.l.b16 %v5835
        %v5847 = vunpack.c.h.b16 %v5835
        %v5848 = vunpack.c.l.b16 %v5836
        %v5849 = vunpack.c.h.b16 %v5836
        %v5850 = vunpack.c.l.b16 %v5837
        %v5851 = vunpack.c.h.b16 %v5837
        %v5852 = vpack.c.b16 %v5846, %v5844
        %v5853 = vpack.c.b16 %v5847, %v5845
        %v5854 = vpack.c.b16 %v5850, %v5848
        %v5855 = vpack.c.b16 %v5851, %v5849
        %v5861 = vperm.slane %v5839, 0
        %v5862 = vperm.slane %v5839, 1
        %v5866 = vsel %vm285, %v5833, 0
        %5868 = vmatpush.bf16.msra.mxu0 0
        %5869 = vmatpush.bf16.msra.mxu0 0
        %5870 = vmatpush.bf16.msra.mxu0 0
        %5871 = vmatpush.bf16.msra.mxu0 0
        %5872 = vmatpush.bf16.msra.mxu0 0
        %5873 = vmatpush.bf16.msra.mxu0 0
        %5874 = vmatpush.bf16.msra.mxu0 %v5854
        %5875 = vmatpush.bf16.msra.mxu0 %v5852
        %5876 = vmatmul.bf16.gmra.mxu0 %v5866
        %v5877 = vpop.f32.mrf.mxu0
        %v5878 = vadd.f32 %v5861, %v5877
        %v5879 = vpop.f32.mrf.mxu0
        %5880 = vdwg.mxu0
        %5881 = vmatpush.bf16.msra.mxu0 0
        %5882 = vmatpush.bf16.msra.mxu0 0
        %5883 = vmatpush.bf16.msra.mxu0 0
        %5884 = vmatpush.bf16.msra.mxu0 0
        %5885 = vmatpush.bf16.msra.mxu0 0
        %5886 = vmatpush.bf16.msra.mxu0 0
        %5887 = vmatpush.bf16.msra.mxu0 %v5855
        %5888 = vmatpush.bf16.msra.mxu0 %v5853
        %5889 = vmatmul.bf16.gmra.mxu0 %v5866
        %v5890 = vpop.f32.mrf.mxu0
        %v5891 = vadd.f32 %v5862, %v5890
        %v5892 = vpop.f32.mrf.mxu0
        %5893 = vdwg.mxu0
        %v5894 = vadd.f32 %v5878, %v5612
        %v5895 = vadd.f32 %v5891, %v5625
        %s5896 = scalar_lea.vmem [#allocation5], 197
        %v5897 = vld [vmem:[%s5896] ss:$8 sm:$0x3]
        %s5898 = scalar_lea.vmem [#allocation5], 198
        %v5899 = vld [vmem:[%s5898] ss:$8 sm:$0x3]
        %v5900 = vsel %vm5008, %v5894, 0.0
        %v5901 = vsel %vm5008, %v5895, 0.0
        %v5902 = vadd.f32 %v5900, %v5901
        %5903 = vadd.xlane.f32.xlu0 %v5902
        %v5904 = vpop.xlane.xlu0 %5903
        %v5905 = vmul.f32 %v5904, %v5020
        %v5906 = vsub.f32 %v5894, %v5905
        %v5907 = vsub.f32 %v5895, %v5905
        %v5908 = vmul.f32 %v5906, %v5906
        %v5909 = vmul.f32 %v5907, %v5907
        %v5910 = vsel %vm5008, %v5908, 0.0
        %v5911 = vsel %vm5008, %v5909, 0.0
        %v5912 = vadd.f32 %v5910, %v5911
        %5913 = vadd.xlane.f32.xlu0 %v5912
        %v5914 = vpop.xlane.xlu0 %5913
        %v5915 = vmul.f32 %v5914, %v5020
        %v5916 = vadd.f32 %v5915, 1e-05
        %v5917 = vrsqrt.pop %v5916
        %v5918 = vmul.f32 %v5917, %v5916
        %v5919 = vmul.f32 %v5918, %v5917
        %v5920 = vmul.f32 0.5, %v5919
        %v5921 = vsub.f32 1.5, %v5920
        %v5922 = vmul.f32 %v5917, %v5921
        %vm5923 = vweird.f32 %v5916
        %vm5924 = vweird.f32 %v5917
        %vm5925 = vmor %vm5923, %vm5924
        %v5926 = vsel %vm5925, %v5917, %v5922
        %v5927 = vmul.f32 %v5906, %v5926
        %v5928 = vmul.f32 %v5907, %v5926
        %v5930 = vperm.slane %v5897, 0
        %v5931 = vperm.slane %v5897, 1
        %v5934 = vmul.f32 %v5927, %v5930
        %v5935 = vmul.f32 %v5928, %v5931
        %v5937 = vperm.slane %v5899, 0
        %v5938 = vperm.slane %v5899, 1
        %v5941 = vadd.f32 %v5934, %v5937
        %v5942 = vadd.f32 %v5935, %v5938
        %v5943 = vpack.c.bf16 %v5941, %v5941
        %v5944 = vpack.c.bf16 %v5942, %v5942
        %v5945 = vld [vmem:[#allocation2 + $0x15a0] sm:$0xff]
        %v5946 = vld [vmem:[#allocation2 + $0x15a8] sm:$0xff]
        %v5947 = vld [vmem:[#allocation2 + $0x15b0] sm:$0xff]
        %v5948 = vld [vmem:[#allocation2 + $0x15b8] sm:$0xff]
        %v5949 = vld [vmem:[#allocation2 + $0x15c0] sm:$0xff]
        %v5950 = vld [vmem:[#allocation2 + $0x15c8] sm:$0xff]
        %v5951 = vld [vmem:[#allocation2 + $0x15d0] sm:$0xff]
        %v5952 = vld [vmem:[#allocation2 + $0x15d8] sm:$0xff]
        %v5953 = vld [vmem:[#allocation2 + $0x15e0] sm:$0xff]
        %v5954 = vld [vmem:[#allocation2 + $0x15e8] sm:$0xff]
        %v5955 = vld [vmem:[#allocation2 + $0x15f0] sm:$0xff]
        %v5956 = vld [vmem:[#allocation2 + $0x15f8] sm:$0xff]
        %v5957 = vld [vmem:[#allocation2 + $0x1600] sm:$0xff]
        %v5958 = vld [vmem:[#allocation2 + $0x1608] sm:$0xff]
        %v5959 = vld [vmem:[#allocation2 + $0x1610] sm:$0xff]
        %v5960 = vld [vmem:[#allocation2 + $0x1618] sm:$0xff]
        %v5961 = vld [vmem:[#allocation2 + $0x1620] sm:$0xff]
        %v5962 = vld [vmem:[#allocation2 + $0x1628] sm:$0xff]
        %v5963 = vld [vmem:[#allocation2 + $0x1630] sm:$0xff]
        %v5964 = vld [vmem:[#allocation2 + $0x1638] sm:$0xff]
        %v5965 = vld [vmem:[#allocation2 + $0x1640] sm:$0xff]
        %v5966 = vld [vmem:[#allocation2 + $0x1648] sm:$0xff]
        %v5967 = vld [vmem:[#allocation2 + $0x1650] sm:$0xff]
        %v5968 = vld [vmem:[#allocation2 + $0x1658] sm:$0xff]
        %v5969 = vld [vmem:[#allocation2 + $0x1660] sm:$0xff]
        %v5970 = vld [vmem:[#allocation2 + $0x1668] sm:$0xff]
        %v5971 = vld [vmem:[#allocation2 + $0x1670] sm:$0xff]
        %v5972 = vld [vmem:[#allocation2 + $0x1678] sm:$0xff]
        %v5973 = vld [vmem:[#allocation2 + $0x1680] sm:$0xff]
        %v5974 = vld [vmem:[#allocation2 + $0x1688] sm:$0xff]
        %v5975 = vld [vmem:[#allocation2 + $0x1690] sm:$0xff]
        %v5976 = vld [vmem:[#allocation2 + $0x1698] sm:$0xff]
        %v5977 = vld [vmem:[#allocation2 + $0x16a0] sm:$0xff]
        %v5978 = vld [vmem:[#allocation2 + $0x16a8] sm:$0xff]
        %v5979 = vld [vmem:[#allocation2 + $0x16b0] sm:$0xff]
        %v5980 = vld [vmem:[#allocation2 + $0x16b8] sm:$0xff]
        %v5981 = vld [vmem:[#allocation2 + $0x16c0] sm:$0xff]
        %v5982 = vld [vmem:[#allocation2 + $0x16c8] sm:$0xff]
        %v5983 = vld [vmem:[#allocation2 + $0x16d0] sm:$0xff]
        %v5984 = vld [vmem:[#allocation2 + $0x16d8] sm:$0xff]
        %v5985 = vld [vmem:[#allocation2 + $0x16e0] sm:$0xff]
        %v5986 = vld [vmem:[#allocation2 + $0x16e8] sm:$0xff]
        %v5987 = vld [vmem:[#allocation2 + $0x16f0] sm:$0xff]
        %v5988 = vld [vmem:[#allocation2 + $0x16f8] sm:$0xff]
        %v5989 = vld [vmem:[#allocation2 + $0x1700] sm:$0xff]
        %v5990 = vld [vmem:[#allocation2 + $0x1708] sm:$0xff]
        %v5991 = vld [vmem:[#allocation2 + $0x1710] sm:$0xff]
        %v5992 = vld [vmem:[#allocation2 + $0x1718] sm:$0xff]
        %v5993 = vld [vmem:[#allocation2 + $0x1720] sm:$0xff]
        %v5994 = vld [vmem:[#allocation2 + $0x1728] sm:$0xff]
        %v5995 = vld [vmem:[#allocation2 + $0x1730] sm:$0xff]
        %v5996 = vld [vmem:[#allocation2 + $0x1738] sm:$0xff]
        %v5997 = vld [vmem:[#allocation2 + $0x1740] sm:$0xff]
        %v5998 = vld [vmem:[#allocation2 + $0x1748] sm:$0xff]
        %v5999 = vld [vmem:[#allocation2 + $0x1750] sm:$0xff]
        %v6000 = vld [vmem:[#allocation2 + $0x1758] sm:$0xff]
        %v6001 = vld [vmem:[#allocation2 + $0x1760] sm:$0xff]
        %v6002 = vld [vmem:[#allocation2 + $0x1768] sm:$0xff]
        %v6003 = vld [vmem:[#allocation2 + $0x1770] sm:$0xff]
        %v6004 = vld [vmem:[#allocation2 + $0x1778] sm:$0xff]
        %v6005 = vld [vmem:[#allocation2 + $0x1780] sm:$0xff]
        %v6006 = vld [vmem:[#allocation2 + $0x1788] sm:$0xff]
        %v6007 = vld [vmem:[#allocation2 + $0x1790] sm:$0xff]
        %v6008 = vld [vmem:[#allocation2 + $0x1798] sm:$0xff]
        %s6009 = scalar_lea.vmem [#allocation5], 199
        %v6010 = vld [vmem:[%s6009] ss:$8 sm:$0xf]
        %v6075 = vunpack.c.l.b16 %v5945
        %v6076 = vunpack.c.h.b16 %v5945
        %v6077 = vunpack.c.l.b16 %v5946
        %v6078 = vunpack.c.h.b16 %v5946
        %v6079 = vunpack.c.l.b16 %v5947
        %v6080 = vunpack.c.h.b16 %v5947
        %v6081 = vunpack.c.l.b16 %v5948
        %v6082 = vunpack.c.h.b16 %v5948
        %v6083 = vunpack.c.l.b16 %v5949
        %v6084 = vunpack.c.h.b16 %v5949
        %v6085 = vunpack.c.l.b16 %v5950
        %v6086 = vunpack.c.h.b16 %v5950
        %v6087 = vunpack.c.l.b16 %v5951
        %v6088 = vunpack.c.h.b16 %v5951
        %v6089 = vunpack.c.l.b16 %v5952
        %v6090 = vunpack.c.h.b16 %v5952
        %v6091 = vunpack.c.l.b16 %v5953
        %v6092 = vunpack.c.h.b16 %v5953
        %v6093 = vunpack.c.l.b16 %v5954
        %v6094 = vunpack.c.h.b16 %v5954
        %v6095 = vunpack.c.l.b16 %v5955
        %v6096 = vunpack.c.h.b16 %v5955
        %v6097 = vunpack.c.l.b16 %v5956
        %v6098 = vunpack.c.h.b16 %v5956
        %v6099 = vunpack.c.l.b16 %v5957
        %v6100 = vunpack.c.h.b16 %v5957
        %v6101 = vunpack.c.l.b16 %v5958
        %v6102 = vunpack.c.h.b16 %v5958
        %v6103 = vunpack.c.l.b16 %v5959
        %v6104 = vunpack.c.h.b16 %v5959
        %v6105 = vunpack.c.l.b16 %v5960
        %v6106 = vunpack.c.h.b16 %v5960
        %v6107 = vunpack.c.l.b16 %v5961
        %v6108 = vunpack.c.h.b16 %v5961
        %v6109 = vunpack.c.l.b16 %v5962
        %v6110 = vunpack.c.h.b16 %v5962
        %v6111 = vunpack.c.l.b16 %v5963
        %v6112 = vunpack.c.h.b16 %v5963
        %v6113 = vunpack.c.l.b16 %v5964
        %v6114 = vunpack.c.h.b16 %v5964
        %v6115 = vunpack.c.l.b16 %v5965
        %v6116 = vunpack.c.h.b16 %v5965
        %v6117 = vunpack.c.l.b16 %v5966
        %v6118 = vunpack.c.h.b16 %v5966
        %v6119 = vunpack.c.l.b16 %v5967
        %v6120 = vunpack.c.h.b16 %v5967
        %v6121 = vunpack.c.l.b16 %v5968
        %v6122 = vunpack.c.h.b16 %v5968
        %v6123 = vunpack.c.l.b16 %v5969
        %v6124 = vunpack.c.h.b16 %v5969
        %v6125 = vunpack.c.l.b16 %v5970
        %v6126 = vunpack.c.h.b16 %v5970
        %v6127 = vunpack.c.l.b16 %v5971
        %v6128 = vunpack.c.h.b16 %v5971
        %v6129 = vunpack.c.l.b16 %v5972
        %v6130 = vunpack.c.h.b16 %v5972
        %v6131 = vunpack.c.l.b16 %v5973
        %v6132 = vunpack.c.h.b16 %v5973
        %v6133 = vunpack.c.l.b16 %v5974
        %v6134 = vunpack.c.h.b16 %v5974
        %v6135 = vunpack.c.l.b16 %v5975
        %v6136 = vunpack.c.h.b16 %v5975
        %v6137 = vunpack.c.l.b16 %v5976
        %v6138 = vunpack.c.h.b16 %v5976
        %v6139 = vunpack.c.l.b16 %v5977
        %v6140 = vunpack.c.h.b16 %v5977
        %v6141 = vunpack.c.l.b16 %v5978
        %v6142 = vunpack.c.h.b16 %v5978
        %v6143 = vunpack.c.l.b16 %v5979
        %v6144 = vunpack.c.h.b16 %v5979
        %v6145 = vunpack.c.l.b16 %v5980
        %v6146 = vunpack.c.h.b16 %v5980
        %v6147 = vunpack.c.l.b16 %v5981
        %v6148 = vunpack.c.h.b16 %v5981
        %v6149 = vunpack.c.l.b16 %v5982
        %v6150 = vunpack.c.h.b16 %v5982
        %v6151 = vunpack.c.l.b16 %v5983
        %v6152 = vunpack.c.h.b16 %v5983
        %v6153 = vunpack.c.l.b16 %v5984
        %v6154 = vunpack.c.h.b16 %v5984
        %v6155 = vunpack.c.l.b16 %v5985
        %v6156 = vunpack.c.h.b16 %v5985
        %v6157 = vunpack.c.l.b16 %v5986
        %v6158 = vunpack.c.h.b16 %v5986
        %v6159 = vunpack.c.l.b16 %v5987
        %v6160 = vunpack.c.h.b16 %v5987
        %v6161 = vunpack.c.l.b16 %v5988
        %v6162 = vunpack.c.h.b16 %v5988
        %v6163 = vunpack.c.l.b16 %v5989
        %v6164 = vunpack.c.h.b16 %v5989
        %v6165 = vunpack.c.l.b16 %v5990
        %v6166 = vunpack.c.h.b16 %v5990
        %v6167 = vunpack.c.l.b16 %v5991
        %v6168 = vunpack.c.h.b16 %v5991
        %v6169 = vunpack.c.l.b16 %v5992
        %v6170 = vunpack.c.h.b16 %v5992
        %v6171 = vunpack.c.l.b16 %v5993
        %v6172 = vunpack.c.h.b16 %v5993
        %v6173 = vunpack.c.l.b16 %v5994
        %v6174 = vunpack.c.h.b16 %v5994
        %v6175 = vunpack.c.l.b16 %v5995
        %v6176 = vunpack.c.h.b16 %v5995
        %v6177 = vunpack.c.l.b16 %v5996
        %v6178 = vunpack.c.h.b16 %v5996
        %v6179 = vunpack.c.l.b16 %v5997
        %v6180 = vunpack.c.h.b16 %v5997
        %v6181 = vunpack.c.l.b16 %v5998
        %v6182 = vunpack.c.h.b16 %v5998
        %v6183 = vunpack.c.l.b16 %v5999
        %v6184 = vunpack.c.h.b16 %v5999
        %v6185 = vunpack.c.l.b16 %v6000
        %v6186 = vunpack.c.h.b16 %v6000
        %v6187 = vunpack.c.l.b16 %v6001
        %v6188 = vunpack.c.h.b16 %v6001
        %v6189 = vunpack.c.l.b16 %v6002
        %v6190 = vunpack.c.h.b16 %v6002
        %v6191 = vunpack.c.l.b16 %v6003
        %v6192 = vunpack.c.h.b16 %v6003
        %v6193 = vunpack.c.l.b16 %v6004
        %v6194 = vunpack.c.h.b16 %v6004
        %v6195 = vunpack.c.l.b16 %v6005
        %v6196 = vunpack.c.h.b16 %v6005
        %v6197 = vunpack.c.l.b16 %v6006
        %v6198 = vunpack.c.h.b16 %v6006
        %v6199 = vunpack.c.l.b16 %v6007
        %v6200 = vunpack.c.h.b16 %v6007
        %v6201 = vunpack.c.l.b16 %v6008
        %v6202 = vunpack.c.h.b16 %v6008
        %v6203 = vpack.c.b16 %v6079, %v6075
        %v6204 = vpack.c.b16 %v6080, %v6076
        %v6205 = vpack.c.b16 %v6081, %v6077
        %v6206 = vpack.c.b16 %v6082, %v6078
        %v6207 = vpack.c.b16 %v6087, %v6083
        %v6208 = vpack.c.b16 %v6088, %v6084
        %v6209 = vpack.c.b16 %v6089, %v6085
        %v6210 = vpack.c.b16 %v6090, %v6086
        %v6211 = vpack.c.b16 %v6095, %v6091
        %v6212 = vpack.c.b16 %v6096, %v6092
        %v6213 = vpack.c.b16 %v6097, %v6093
        %v6214 = vpack.c.b16 %v6098, %v6094
        %v6215 = vpack.c.b16 %v6103, %v6099
        %v6216 = vpack.c.b16 %v6104, %v6100
        %v6217 = vpack.c.b16 %v6105, %v6101
        %v6218 = vpack.c.b16 %v6106, %v6102
        %v6219 = vpack.c.b16 %v6111, %v6107
        %v6220 = vpack.c.b16 %v6112, %v6108
        %v6221 = vpack.c.b16 %v6113, %v6109
        %v6222 = vpack.c.b16 %v6114, %v6110
        %v6223 = vpack.c.b16 %v6119, %v6115
        %v6224 = vpack.c.b16 %v6120, %v6116
        %v6225 = vpack.c.b16 %v6121, %v6117
        %v6226 = vpack.c.b16 %v6122, %v6118
        %v6227 = vpack.c.b16 %v6127, %v6123
        %v6228 = vpack.c.b16 %v6128, %v6124
        %v6229 = vpack.c.b16 %v6129, %v6125
        %v6230 = vpack.c.b16 %v6130, %v6126
        %v6231 = vpack.c.b16 %v6135, %v6131
        %v6232 = vpack.c.b16 %v6136, %v6132
        %v6233 = vpack.c.b16 %v6137, %v6133
        %v6234 = vpack.c.b16 %v6138, %v6134
        %v6235 = vpack.c.b16 %v6143, %v6139
        %v6236 = vpack.c.b16 %v6144, %v6140
        %v6237 = vpack.c.b16 %v6145, %v6141
        %v6238 = vpack.c.b16 %v6146, %v6142
        %v6239 = vpack.c.b16 %v6151, %v6147
        %v6240 = vpack.c.b16 %v6152, %v6148
        %v6241 = vpack.c.b16 %v6153, %v6149
        %v6242 = vpack.c.b16 %v6154, %v6150
        %v6243 = vpack.c.b16 %v6159, %v6155
        %v6244 = vpack.c.b16 %v6160, %v6156
        %v6245 = vpack.c.b16 %v6161, %v6157
        %v6246 = vpack.c.b16 %v6162, %v6158
        %v6247 = vpack.c.b16 %v6167, %v6163
        %v6248 = vpack.c.b16 %v6168, %v6164
        %v6249 = vpack.c.b16 %v6169, %v6165
        %v6250 = vpack.c.b16 %v6170, %v6166
        %v6251 = vpack.c.b16 %v6175, %v6171
        %v6252 = vpack.c.b16 %v6176, %v6172
        %v6253 = vpack.c.b16 %v6177, %v6173
        %v6254 = vpack.c.b16 %v6178, %v6174
        %v6255 = vpack.c.b16 %v6183, %v6179
        %v6256 = vpack.c.b16 %v6184, %v6180
        %v6257 = vpack.c.b16 %v6185, %v6181
        %v6258 = vpack.c.b16 %v6186, %v6182
        %v6259 = vpack.c.b16 %v6191, %v6187
        %v6260 = vpack.c.b16 %v6192, %v6188
        %v6261 = vpack.c.b16 %v6193, %v6189
        %v6262 = vpack.c.b16 %v6194, %v6190
        %v6263 = vpack.c.b16 %v6199, %v6195
        %v6264 = vpack.c.b16 %v6200, %v6196
        %v6265 = vpack.c.b16 %v6201, %v6197
        %v6266 = vpack.c.b16 %v6202, %v6198
        %v6332 = vperm.slane %v6010, 0
        %v6333 = vperm.slane %v6010, 1
        %v6334 = vperm.slane %v6010, 2
        %v6335 = vperm.slane %v6010, 3
        %6340 = vmatpush.bf16.msra.mxu0 %v6231
        %6341 = vmatpush.bf16.msra.mxu0 %v6227
        %6342 = vmatpush.bf16.msra.mxu0 %v6223
        %6343 = vmatpush.bf16.msra.mxu0 %v6219
        %6344 = vmatpush.bf16.msra.mxu0 %v6215
        %6345 = vmatpush.bf16.msra.mxu0 %v6211
        %6346 = vmatpush.bf16.msra.mxu0 %v6207
        %6347 = vmatpush.bf16.msra.mxu0 %v6203
        %6348 = vmatmul.bf16.gmra.mxu0 %v5943
        %v6349 = vpop.f32.mrf.mxu0
        %v6350 = vadd.f32 %v6332, %v6349
        %v6351 = vpop.f32.mrf.mxu0
        %6352 = vdwg.mxu0
        %6353 = vmatpush.bf16.msra.mxu0 %v6263
        %6354 = vmatpush.bf16.msra.mxu0 %v6259
        %6355 = vmatpush.bf16.msra.mxu0 %v6255
        %6356 = vmatpush.bf16.msra.mxu0 %v6251
        %6357 = vmatpush.bf16.msra.mxu0 %v6247
        %6358 = vmatpush.bf16.msra.mxu0 %v6243
        %6359 = vmatpush.bf16.msra.mxu0 %v6239
        %6360 = vmatpush.bf16.msra.mxu0 %v6235
        %6361 = vmatmul.bf16.gmra.mxu0 %v5944
        %v6362 = vpop.f32.mrf.mxu0
        %v6363 = vadd.f32 %v6350, %v6362
        %v6364 = vpop.f32.mrf.mxu0
        %6365 = vdwg.mxu0
        %6366 = vmatpush.bf16.msra.mxu0 %v6232
        %6367 = vmatpush.bf16.msra.mxu0 %v6228
        %6368 = vmatpush.bf16.msra.mxu0 %v6224
        %6369 = vmatpush.bf16.msra.mxu0 %v6220
        %6370 = vmatpush.bf16.msra.mxu0 %v6216
        %6371 = vmatpush.bf16.msra.mxu0 %v6212
        %6372 = vmatpush.bf16.msra.mxu0 %v6208
        %6373 = vmatpush.bf16.msra.mxu0 %v6204
        %6374 = vmatmul.bf16.gmra.mxu0 %v5943
        %v6375 = vpop.f32.mrf.mxu0
        %v6376 = vadd.f32 %v6333, %v6375
        %v6377 = vpop.f32.mrf.mxu0
        %6378 = vdwg.mxu0
        %6379 = vmatpush.bf16.msra.mxu0 %v6264
        %6380 = vmatpush.bf16.msra.mxu0 %v6260
        %6381 = vmatpush.bf16.msra.mxu0 %v6256
        %6382 = vmatpush.bf16.msra.mxu0 %v6252
        %6383 = vmatpush.bf16.msra.mxu0 %v6248
        %6384 = vmatpush.bf16.msra.mxu0 %v6244
        %6385 = vmatpush.bf16.msra.mxu0 %v6240
        %6386 = vmatpush.bf16.msra.mxu0 %v6236
        %6387 = vmatmul.bf16.gmra.mxu0 %v5944
        %v6388 = vpop.f32.mrf.mxu0
        %v6389 = vadd.f32 %v6376, %v6388
        %v6390 = vpop.f32.mrf.mxu0
        %6391 = vdwg.mxu0
        %6392 = vmatpush.bf16.msra.mxu0 %v6233
        %6393 = vmatpush.bf16.msra.mxu0 %v6229
        %6394 = vmatpush.bf16.msra.mxu0 %v6225
        %6395 = vmatpush.bf16.msra.mxu0 %v6221
        %6396 = vmatpush.bf16.msra.mxu0 %v6217
        %6397 = vmatpush.bf16.msra.mxu0 %v6213
        %6398 = vmatpush.bf16.msra.mxu0 %v6209
        %6399 = vmatpush.bf16.msra.mxu0 %v6205
        %6400 = vmatmul.bf16.gmra.mxu0 %v5943
        %v6401 = vpop.f32.mrf.mxu0
        %v6402 = vadd.f32 %v6334, %v6401
        %v6403 = vpop.f32.mrf.mxu0
        %6404 = vdwg.mxu0
        %6405 = vmatpush.bf16.msra.mxu0 %v6265
        %6406 = vmatpush.bf16.msra.mxu0 %v6261
        %6407 = vmatpush.bf16.msra.mxu0 %v6257
        %6408 = vmatpush.bf16.msra.mxu0 %v6253
        %6409 = vmatpush.bf16.msra.mxu0 %v6249
        %6410 = vmatpush.bf16.msra.mxu0 %v6245
        %6411 = vmatpush.bf16.msra.mxu0 %v6241
        %6412 = vmatpush.bf16.msra.mxu0 %v6237
        %6413 = vmatmul.bf16.gmra.mxu0 %v5944
        %v6414 = vpop.f32.mrf.mxu0
        %v6415 = vadd.f32 %v6402, %v6414
        %v6416 = vpop.f32.mrf.mxu0
        %6417 = vdwg.mxu0
        %6418 = vmatpush.bf16.msra.mxu0 %v6234
        %6419 = vmatpush.bf16.msra.mxu0 %v6230
        %6420 = vmatpush.bf16.msra.mxu0 %v6226
        %6421 = vmatpush.bf16.msra.mxu0 %v6222
        %6422 = vmatpush.bf16.msra.mxu0 %v6218
        %6423 = vmatpush.bf16.msra.mxu0 %v6214
        %6424 = vmatpush.bf16.msra.mxu0 %v6210
        %6425 = vmatpush.bf16.msra.mxu0 %v6206
        %6426 = vmatmul.bf16.gmra.mxu0 %v5943
        %v6427 = vpop.f32.mrf.mxu0
        %v6428 = vadd.f32 %v6335, %v6427
        %v6429 = vpop.f32.mrf.mxu0
        %6430 = vdwg.mxu0
        %6431 = vmatpush.bf16.msra.mxu0 %v6266
        %6432 = vmatpush.bf16.msra.mxu0 %v6262
        %6433 = vmatpush.bf16.msra.mxu0 %v6258
        %6434 = vmatpush.bf16.msra.mxu0 %v6254
        %6435 = vmatpush.bf16.msra.mxu0 %v6250
        %6436 = vmatpush.bf16.msra.mxu0 %v6246
        %6437 = vmatpush.bf16.msra.mxu0 %v6242
        %6438 = vmatpush.bf16.msra.mxu0 %v6238
        %6439 = vmatmul.bf16.gmra.mxu0 %v5944
        %v6440 = vpop.f32.mrf.mxu0
        %v6441 = vadd.f32 %v6428, %v6440
        %v6442 = vpop.f32.mrf.mxu0
        %6443 = vdwg.mxu0
        %v6444 = vpack.c.bf16 %v6415, %v6415
        %v6445 = vpack.c.bf16 %v6441, %v6441
        %v6446 = vunpack.c.l.bf16 %v6444
        %v6447 = vunpack.c.l.bf16 %v6445
        %v6448 = vmul.f32 %v6446, %v6447
        %v6449 = vsel %vm5008, %v6448, 0.0
        %6450 = vadd.xlane.f32.xlu0 %v6449
        %v6451 = vpop.xlane.xlu0 %6450
        %v6452 = vsub.f32 %v6451, %v6451
        %v6453 = vmul.f32 %v6452, 1.442695
        %v6454 = vpow.pop %v6453
        %v6455 = vadd.f32 %v6454, 0.0
        %v6456 = vrcp.pop %v6455
        %v6457 = vmul.f32 %v6455, %v6456
        %v6458 = vsub.f32 1.0, %v6457
        %v6459 = vmul.f32 %v6456, %v6458
        %v6460 = vadd.f32 %v6456, %v6459
        %vm6461 = vweird.f32 %v6455
        %vm6462 = vweird.f32 %v6456
        %vm6463 = vmor %vm6461, %vm6462
        %v6464 = vsel %vm6463, %v6456, %v6460
        %v6465 = vand.u32 2147483647, %v6455
        %vm6466 = vcmp.eq.f32.partialorder %v6465, 8.507059e+37
        %v6467 = vand.u32 %v6455, 2147483648
        %v6468 = vor.u32 1.1754944e-38, %v6467
        %v6469 = vsel %vm6466, %v6468, %v6464
        %v6470 = vmul.f32 %v6454, %v6469
        %v6471 = vpack.c.bf16 %v6470, %v6470
        %v6472 = vpack.c.bf16 %v6363, %v6363
        %v6473 = vpack.c.bf16 %v6389, %v6389
        %v6475 = vsel %vm5590, %v6471, 0
        %v6478 = vand.u32 %v6472, %v5595
        %v6481 = vand.u32 %v6473, %v5595
        %6483 = vmatpush.bf16.msra.mxu0 0
        %6484 = vmatpush.bf16.msra.mxu0 0
        %6485 = vmatpush.bf16.msra.mxu0 0
        %6486 = vmatpush.bf16.msra.mxu0 0
        %6487 = vmatpush.bf16.msra.mxu0 0
        %6488 = vmatpush.bf16.msra.mxu0 0
        %6489 = vmatpush.bf16.msra.mxu0 0
        %6490 = vmatpush.bf16.msra.mxu0 %v6478
        %6491 = vmatmul.bf16.gmra.mxu0 %v6475
        %v6492 = vpop.f32.mrf.mxu0
        %v6493 = vadd.f32 %v5941, %v6492
        %v6494 = vpop.f32.mrf.mxu0
        %6495 = vdwg.mxu0
        %6496 = vmatpush.bf16.msra.mxu0 0
        %6497 = vmatpush.bf16.msra.mxu0 0
        %6498 = vmatpush.bf16.msra.mxu0 0
        %6499 = vmatpush.bf16.msra.mxu0 0
        %6500 = vmatpush.bf16.msra.mxu0 0
        %6501 = vmatpush.bf16.msra.mxu0 0
        %6502 = vmatpush.bf16.msra.mxu0 0
        %6503 = vmatpush.bf16.msra.mxu0 %v6481
        %6504 = vmatmul.bf16.gmra.mxu0 %v6475
        %v6505 = vpop.f32.mrf.mxu0
        %v6506 = vadd.f32 %v5942, %v6505
        %v6507 = vpop.f32.mrf.mxu0
        %6508 = vdwg.mxu0
        %s6509 = scalar_lea.vmem [#allocation5], 224
        %v6510 = vld [vmem:[%s6509] ss:$8 sm:$0x3]
        %s6511 = scalar_lea.vmem [#allocation5], 225
        %v6512 = vld [vmem:[%s6511] ss:$8 sm:$0x3]
        %v6513 = vsel %vm5008, %v6493, 0.0
        %v6514 = vsel %vm5008, %v6506, 0.0
        %v6515 = vadd.f32 %v6513, %v6514
        %6516 = vadd.xlane.f32.xlu0 %v6515
        %v6517 = vpop.xlane.xlu0 %6516
        %v6518 = vmul.f32 %v6517, %v5020
        %v6519 = vsub.f32 %v6493, %v6518
        %v6520 = vsub.f32 %v6506, %v6518
        %v6521 = vmul.f32 %v6519, %v6519
        %v6522 = vmul.f32 %v6520, %v6520
        %v6523 = vsel %vm5008, %v6521, 0.0
        %v6524 = vsel %vm5008, %v6522, 0.0
        %v6525 = vadd.f32 %v6523, %v6524
        %6526 = vadd.xlane.f32.xlu0 %v6525
        %v6527 = vpop.xlane.xlu0 %6526
        %v6528 = vmul.f32 %v6527, %v5020
        %v6529 = vadd.f32 %v6528, 1e-05
        %v6530 = vrsqrt.pop %v6529
        %v6531 = vmul.f32 %v6530, %v6529
        %v6532 = vmul.f32 %v6531, %v6530
        %v6533 = vmul.f32 0.5, %v6532
        %v6534 = vsub.f32 1.5, %v6533
        %v6535 = vmul.f32 %v6530, %v6534
        %vm6536 = vweird.f32 %v6529
        %vm6537 = vweird.f32 %v6530
        %vm6538 = vmor %vm6536, %vm6537
        %v6539 = vsel %vm6538, %v6530, %v6535
        %v6540 = vmul.f32 %v6519, %v6539
        %v6541 = vmul.f32 %v6520, %v6539
        %v6543 = vperm.slane %v6510, 0
        %v6544 = vperm.slane %v6510, 1
        %v6547 = vmul.f32 %v6540, %v6543
        %v6548 = vmul.f32 %v6541, %v6544
        %v6550 = vperm.slane %v6512, 0
        %v6551 = vperm.slane %v6512, 1
        %v6554 = vadd.f32 %v6547, %v6550
        %v6555 = vadd.f32 %v6548, %v6551
        %v6556 = vpack.c.bf16 %v6554, %v6554
        %v6557 = vpack.c.bf16 %v6555, %v6555
        %v6558 = vld [vmem:[#allocation2 + $0x17a0] sm:$0xf]
        %v6559 = vld [vmem:[#allocation2 + $0x17b0] sm:$0xf]
        %v6560 = vld [vmem:[#allocation2 + $0x17c0] sm:$0xf]
        %v6561 = vld [vmem:[#allocation2 + $0x17d0] sm:$0xf]
        %v6562 = vld [vmem:[#allocation2 + $0x17e0] sm:$0xf]
        %v6563 = vld [vmem:[#allocation2 + $0x17f0] sm:$0xf]
        %v6564 = vld [vmem:[#allocation2 + $0x1800] sm:$0xf]
        %v6565 = vld [vmem:[#allocation2 + $0x1810] sm:$0xf]
        %v6566 = vld [vmem:[#allocation2 + $0x1820] sm:$0xf]
        %v6567 = vld [vmem:[#allocation2 + $0x1830] sm:$0xf]
        %v6568 = vld [vmem:[#allocation2 + $0x1840] sm:$0xf]
        %v6569 = vld [vmem:[#allocation2 + $0x1850] sm:$0xf]
        %v6570 = vld [vmem:[#allocation2 + $0x1860] sm:$0xf]
        %v6571 = vld [vmem:[#allocation2 + $0x1870] sm:$0xf]
        %v6572 = vld [vmem:[#allocation2 + $0x1880] sm:$0xf]
        %v6573 = vld [vmem:[#allocation2 + $0x1890] sm:$0xf]
        %v6574 = vld [vmem:[#allocation2 + $0x18a0] sm:$0xf]
        %v6575 = vld [vmem:[#allocation2 + $0x18b0] sm:$0xf]
        %v6576 = vld [vmem:[#allocation2 + $0x18c0] sm:$0xf]
        %v6577 = vld [vmem:[#allocation2 + $0x18d0] sm:$0xf]
        %v6578 = vld [vmem:[#allocation2 + $0x18e0] sm:$0xf]
        %v6579 = vld [vmem:[#allocation2 + $0x18f0] sm:$0xf]
        %v6580 = vld [vmem:[#allocation2 + $0x1900] sm:$0xf]
        %v6581 = vld [vmem:[#allocation2 + $0x1910] sm:$0xf]
        %v6582 = vld [vmem:[#allocation2 + $0x1920] sm:$0xf]
        %v6583 = vld [vmem:[#allocation2 + $0x1930] sm:$0xf]
        %v6584 = vld [vmem:[#allocation2 + $0x1940] sm:$0xf]
        %v6585 = vld [vmem:[#allocation2 + $0x1950] sm:$0xf]
        %v6586 = vld [vmem:[#allocation2 + $0x1960] sm:$0xf]
        %v6587 = vld [vmem:[#allocation2 + $0x1970] sm:$0xf]
        %v6588 = vld [vmem:[#allocation2 + $0x1980] sm:$0xf]
        %v6589 = vld [vmem:[#allocation2 + $0x1990] sm:$0xf]
        %v6590 = vld [vmem:[#allocation5 + $0xe2] ss:$0 sm:$0xff]
        %v6623 = vunpack.c.l.b16 %v6558
        %v6624 = vunpack.c.l.b16 %v6559
        %v6625 = vunpack.c.l.b16 %v6560
        %v6626 = vunpack.c.l.b16 %v6561
        %v6627 = vunpack.c.l.b16 %v6562
        %v6628 = vunpack.c.l.b16 %v6563
        %v6629 = vunpack.c.l.b16 %v6564
        %v6630 = vunpack.c.l.b16 %v6565
        %v6631 = vunpack.c.l.b16 %v6566
        %v6632 = vunpack.c.l.b16 %v6567
        %v6633 = vunpack.c.l.b16 %v6568
        %v6634 = vunpack.c.l.b16 %v6569
        %v6635 = vunpack.c.l.b16 %v6570
        %v6636 = vunpack.c.l.b16 %v6571
        %v6637 = vunpack.c.l.b16 %v6572
        %v6638 = vunpack.c.l.b16 %v6573
        %v6639 = vunpack.c.l.b16 %v6574
        %v6640 = vunpack.c.l.b16 %v6575
        %v6641 = vunpack.c.l.b16 %v6576
        %v6642 = vunpack.c.l.b16 %v6577
        %v6643 = vunpack.c.l.b16 %v6578
        %v6644 = vunpack.c.l.b16 %v6579
        %v6645 = vunpack.c.l.b16 %v6580
        %v6646 = vunpack.c.l.b16 %v6581
        %v6647 = vunpack.c.l.b16 %v6582
        %v6648 = vunpack.c.l.b16 %v6583
        %v6649 = vunpack.c.l.b16 %v6584
        %v6650 = vunpack.c.l.b16 %v6585
        %v6651 = vunpack.c.l.b16 %v6586
        %v6652 = vunpack.c.l.b16 %v6587
        %v6653 = vunpack.c.l.b16 %v6588
        %v6654 = vunpack.c.l.b16 %v6589
        %v6655 = vpack.c.b16 %v6624, %v6623
        %v6656 = vpack.c.b16 %v6626, %v6625
        %v6657 = vpack.c.b16 %v6628, %v6627
        %v6658 = vpack.c.b16 %v6630, %v6629
        %v6659 = vpack.c.b16 %v6632, %v6631
        %v6660 = vpack.c.b16 %v6634, %v6633
        %v6661 = vpack.c.b16 %v6636, %v6635
        %v6662 = vpack.c.b16 %v6638, %v6637
        %v6663 = vpack.c.b16 %v6640, %v6639
        %v6664 = vpack.c.b16 %v6642, %v6641
        %v6665 = vpack.c.b16 %v6644, %v6643
        %v6666 = vpack.c.b16 %v6646, %v6645
        %v6667 = vpack.c.b16 %v6648, %v6647
        %v6668 = vpack.c.b16 %v6650, %v6649
        %v6669 = vpack.c.b16 %v6652, %v6651
        %v6670 = vpack.c.b16 %v6654, %v6653
        %6687 = vmatpush.bf16.msra.mxu0 %v6662
        %6688 = vmatpush.bf16.msra.mxu0 %v6661
        %6689 = vmatpush.bf16.msra.mxu0 %v6660
        %6690 = vmatpush.bf16.msra.mxu0 %v6659
        %6691 = vmatpush.bf16.msra.mxu0 %v6658
        %6692 = vmatpush.bf16.msra.mxu0 %v6657
        %6693 = vmatpush.bf16.msra.mxu0 %v6656
        %6694 = vmatpush.bf16.msra.mxu0 %v6655
        %6695 = vmatmul.bf16.gmra.mxu0 %v6556
        %v6696 = vpop.f32.mrf.mxu0
        %v6697 = vadd.f32 %v6590, %v6696
        %v6698 = vpop.f32.mrf.mxu0
        %6699 = vdwg.mxu0
        %6700 = vmatpush.bf16.msra.mxu0 %v6670
        %6701 = vmatpush.bf16.msra.mxu0 %v6669
        %6702 = vmatpush.bf16.msra.mxu0 %v6668
        %6703 = vmatpush.bf16.msra.mxu0 %v6667
        %6704 = vmatpush.bf16.msra.mxu0 %v6666
        %6705 = vmatpush.bf16.msra.mxu0 %v6665
        %6706 = vmatpush.bf16.msra.mxu0 %v6664
        %6707 = vmatpush.bf16.msra.mxu0 %v6663
        %6708 = vmatmul.bf16.gmra.mxu0 %v6557
        %v6709 = vpop.f32.mrf.mxu0
        %v6710 = vadd.f32 %v6697, %v6709
        %v6711 = vpop.f32.mrf.mxu0
        %6712 = vdwg.mxu0
        %v6713 = vmax.f32 %v6710, 0.0
        %v6714 = vpack.c.bf16 %v6713, %v6713
        %v6715 = vld [vmem:[#allocation2 + $0x19a0] sm:$0xff]
        %v6716 = vld [vmem:[#allocation2 + $0x19b0] sm:$0xff]
        %v6717 = vld [vmem:[#allocation2 + $0x19c0] sm:$0xff]
        %v6718 = vld [vmem:[#allocation2 + $0x19d0] sm:$0xff]
        %s6719 = scalar_lea.vmem [#allocation5], 227
        %v6720 = vld [vmem:[%s6719] ss:$8 sm:$0x3]
        %v6725 = vunpack.c.l.b16 %v6715
        %v6726 = vunpack.c.h.b16 %v6715
        %v6727 = vunpack.c.l.b16 %v6716
        %v6728 = vunpack.c.h.b16 %v6716
        %v6729 = vunpack.c.l.b16 %v6717
        %v6730 = vunpack.c.h.b16 %v6717
        %v6731 = vunpack.c.l.b16 %v6718
        %v6732 = vunpack.c.h.b16 %v6718
        %v6733 = vpack.c.b16 %v6727, %v6725
        %v6734 = vpack.c.b16 %v6728, %v6726
        %v6735 = vpack.c.b16 %v6731, %v6729
        %v6736 = vpack.c.b16 %v6732, %v6730
        %v6742 = vperm.slane %v6720, 0
        %v6743 = vperm.slane %v6720, 1
        %v6747 = vsel %vm285, %v6714, 0
        %6749 = vmatpush.bf16.msra.mxu0 0
        %6750 = vmatpush.bf16.msra.mxu0 0
        %6751 = vmatpush.bf16.msra.mxu0 0
        %6752 = vmatpush.bf16.msra.mxu0 0
        %6753 = vmatpush.bf16.msra.mxu0 0
        %6754 = vmatpush.bf16.msra.mxu0 0
        %6755 = vmatpush.bf16.msra.mxu0 %v6735
        %6756 = vmatpush.bf16.msra.mxu0 %v6733
        %6757 = vmatmul.bf16.gmra.mxu0 %v6747
        %v6758 = vpop.f32.mrf.mxu0
        %v6759 = vadd.f32 %v6742, %v6758
        %v6760 = vpop.f32.mrf.mxu0
        %6761 = vdwg.mxu0
        %6762 = vmatpush.bf16.msra.mxu0 0
        %6763 = vmatpush.bf16.msra.mxu0 0
        %6764 = vmatpush.bf16.msra.mxu0 0
        %6765 = vmatpush.bf16.msra.mxu0 0
        %6766 = vmatpush.bf16.msra.mxu0 0
        %6767 = vmatpush.bf16.msra.mxu0 0
        %6768 = vmatpush.bf16.msra.mxu0 %v6736
        %6769 = vmatpush.bf16.msra.mxu0 %v6734
        %6770 = vmatmul.bf16.gmra.mxu0 %v6747
        %v6771 = vpop.f32.mrf.mxu0
        %v6772 = vadd.f32 %v6743, %v6771
        %v6773 = vpop.f32.mrf.mxu0
        %6774 = vdwg.mxu0
        %v6775 = vadd.f32 %v6759, %v6493
        %v6776 = vadd.f32 %v6772, %v6506
        %v6779 = vrot.slane %v6776, 7
        %v6780 = vsel %vm5008, %v6775, %v6779
        %v6782 = vlaneseq
        %vm6783 = vcmp.ge.s32.totalorder %v6782, 0
        %vm6784 = vcmp.lt.s32.totalorder %v6782, 256
        %vm6785 = vmand %vm6783, %vm6784
        %6786 = vst.msk [vmem:[%s197] sm:$0x3] %vm6785, %v6780
        %s6787 = sand.u32 %s95, 1
        %s6788 = scalar_lea.sflag [#allocation4], %s6787
        %s6789 = sand.u32 %s95, 1
        %s6790 = smul.addr %s6789, 2
        %s6791 = scalar_lea.vmem [#allocation7], %s6790
        // Predicated region
        $region41: #{_lambda_.1} parent=31 // pred_check
          %p6792 = pneg %p105
        $region42: #{_lambda_.1} parent=31 // pred_check_branch
          %6794 = sbr.rel (%p6792) target = $region44
        $region43: #{_lambda_.1} parent=31 // pred_region
          %6796 = vsyncadd %s6788, 0
          %s6797 = smul.addr %s19, 2
          %s6798 = scalar_lea.hbm %s3, %s6797
          %s6800 = sshll.u32 %s6791, 4
          %s6801 = int_to_ptr.vmem [resolvable:$true] %s6800
          %s6802 = sshll.u32 %s6798, 4
          %s6803 = int_to_ptr.hbm [resolvable:$true] %s6802
          %6805 = dma.vmem_to_hbm [thread:$0]  %s6801, 32, %s6803, %s6788
        $region44: #{_lambda_.1} parent=31 // pred_fallthru
          _
      $region32: #{_lambda_.1} parent=5 // pred_fallthru
        _
      %p6806 = scmp.le.s32.totalorder 2, %s14
      // Predicated region
      $region45: #{_lambda_.1} parent=5 // pred_check
        %p6807 = pneg %p6806
      $region46: #{_lambda_.1} parent=5 // pred_check_branch
        %6809 = sbr.rel (%p6807) target = $region48
      $region47: #{_lambda_.1} parent=5 // pred_region
        %s6810 = ssub.s32 %s14, 2
        // Predicated region
        $region49: #{_lambda_.1} parent=47 // pred_check
          %p6811 = pneg %p111
        $region50: #{_lambda_.1} parent=47 // pred_check_branch
          %6813 = sbr.rel (%p6811) target = $region52
        $region51: #{_lambda_.1} parent=47 // pred_region
          %s6814 = sand.u32 %s96, 1
          %s6815 = scalar_lea.sflag [#allocation4], %s6814
          %s6816 = sand.u32 %s96, 1
          %s6817 = smul.addr %s6816, 2
          %s6818 = scalar_lea.vmem [#allocation7], %s6817
          %6820 = dma.done %s6815, 32
        $region52: #{_lambda_.1} parent=47 // pred_fallthru
          _
      $region48: #{_lambda_.1} parent=5 // pred_fallthru
        _
    $region6: #{_lambda_.1} parent=1 // loop_footer
      %s18 = sadd.s32 1, %s14
    $region7: #{_lambda_.1} parent=1 // loop_footer_branch
      %13 = sbr.rel target = $region3
    $region8: #{_lambda_.1} parent=1 // loop_exit
      _
    %6821 = vsyncpa [#allocation3], 1
    %s6822 = scalar_lea.sflag [#allocation3], 1
    %6823 = vsyncpa %s6822, 1
    %6824 = vsyncpa [#allocation6], 1
    %6825 = vsyncpa [#allocation4], 1
    %s6826 = scalar_lea.sflag [#allocation4], 1
    %6827 = vsyncpa %s6826, 1

</llo_original>
